<compile_context>
chip_gen: v7x
topology: tpu7x:2x2x1
jax: 0.10.0
libtpu: 0.0.40
codegen_flags: <defaults>
</compile_context>

<pallas_src>
import jax
import jax.numpy as jnp
from jax import lax
from jax.experimental import pallas as pl
from jax.experimental.pallas import tpu as pltpu


# ----------------------------------------------------------------------------
# LSTM cell on fused gates: z is (B, 4H), gate order [i, f, g, o].
# Full-width sigmoid/tanh (one EUP sweep each over the 128-lane tile), then
# lane-slice the gates.
# ----------------------------------------------------------------------------
def _lstm_cell(z, c):
    H = z.shape[-1] // 4
    sig = jax.nn.sigmoid(z)
    tnh = jnp.tanh(z)
    i = sig[:, 0 * H:1 * H]
    f = sig[:, 1 * H:2 * H]
    g = tnh[:, 2 * H:3 * H]
    o = sig[:, 3 * H:4 * H]
    c_new = f * c + i * g
    h_new = o * jnp.tanh(c_new)
    return h_new, c_new


# ----------------------------------------------------------------------------
# Single fused NFETC forward kernel (everything resident in VMEM).
# ----------------------------------------------------------------------------
def _make_nfetc_kernel(B, Lme, Lw, H):
    H4 = 4 * H
    f32 = jnp.float32

    def kernel(me_ref, words_ref, ments_ref,
               e1_wih0_ref, e1_whh0_ref, e1_b0_ref,
               e1_wih1_ref, e1_whh1_ref, e1_b1_ref,
               e2_wih0_ref, e2_whh0f_ref, e2_whh0b_ref, e2_b0_ref,
               e2_wih1_fhalf_ref, e2_wih1_bhalf_ref,
               e2_whh1f_ref, e2_whh1b_ref, e2_b1_ref,
               fc1_wt_ref, fc1_b_ref, att_w_ref, att_b_ref,
               fc2_wt_ref, fc2_b_ref, tune_ref,
               out_ref):

        # ================= encoder1: 2-layer unidirectional LSTM ===========
        # Layer 0: batched input projection over all timesteps (1 MXU push).
        xp0 = (jnp.dot(me_ref[...], e1_wih0_ref[...],
                       preferred_element_type=f32) + e1_b0_ref[...])     # (Lme*B, 4H)
        whh0 = e1_whh0_ref[...]
        h = jnp.zeros((B, H), f32)
        c = jnp.zeros((B, H), f32)
        hs = []
        for t in range(Lme):
            z = xp0[t * B:(t + 1) * B, :] + jnp.dot(
                h, whh0, preferred_element_type=f32)
            h, c = _lstm_cell(z, c)
            hs.append(h)

        # Layer 1: batched input projection, off the recurrence chain.
        # (Inter-layer dropout is identity in eval mode.)
        h_all = jnp.concatenate(hs, axis=0)                              # (Lme*B, H)
        xp1 = (jnp.dot(h_all, e1_wih1_ref[...],
                       preferred_element_type=f32) + e1_b1_ref[...])     # (Lme*B, 4H)
        whh1 = e1_whh1_ref[...]
        h = jnp.zeros((B, H), f32)
        c = jnp.zeros((B, H), f32)
        for t in range(Lme):
            z = xp1[t * B:(t + 1) * B, :] + jnp.dot(
                h, whh1, preferred_element_type=f32)
            h, c = _lstm_cell(z, c)
        rl = h                                                           # (B, H) = outputs1[-1]

        # ================= encoder2: 2-layer bidirectional LSTM ============
        # Layer 0: fwd|bwd input projections fused along lanes -> (E, 8H).
        xw0 = (jnp.dot(words_ref[...], e2_wih0_ref[...],
                       preferred_element_type=f32) + e2_b0_ref[...])     # (Lw*B, 8H)
        whh0f = e2_whh0f_ref[...]
        whh0b = e2_whh0b_ref[...]
        hf = jnp.zeros((B, H), f32); cf = jnp.zeros((B, H), f32)
        hb = jnp.zeros((B, H), f32); cb = jnp.zeros((B, H), f32)
        h0f = [None] * Lw
        h0b = [None] * Lw
        for s in range(Lw):                      # fwd and bwd interleaved
            tb = Lw - 1 - s
            zf = xw0[s * B:(s + 1) * B, 0:H4] + jnp.dot(
                hf, whh0f, preferred_element_type=f32)
            zb = xw0[tb * B:(tb + 1) * B, H4:2 * H4] + jnp.dot(
                hb, whh0b, preferred_element_type=f32)
            hf, cf = _lstm_cell(zf, cf)
            hb, cb = _lstm_cell(zb, cb)
            h0f[s] = hf                          # fwd hidden at time s
            h0b[tb] = hb                         # bwd hidden at original time tb

        # Layer 1: batched input projection; layer-0 fwd/bwd feature halves as
        # two matmuls against lane-concatenated (H, 8H) weights.
        h0f_all = jnp.concatenate(h0f, axis=0)                           # (Lw*B, H)
        h0b_all = jnp.concatenate(h0b, axis=0)                           # (Lw*B, H)
        xw1 = (jnp.dot(h0f_all, e2_wih1_fhalf_ref[...],
                       preferred_element_type=f32)
               + jnp.dot(h0b_all, e2_wih1_bhalf_ref[...],
                         preferred_element_type=f32)
               + e2_b1_ref[...])                                         # (Lw*B, 8H)
        whh1f = e2_whh1f_ref[...]
        whh1b = e2_whh1b_ref[...]
        hf = jnp.zeros((B, H), f32); cf = jnp.zeros((B, H), f32)
        hb = jnp.zeros((B, H), f32); cb = jnp.zeros((B, H), f32)
        hf_first = hf
        hb_first = hb
        for s in range(Lw):
            tb = Lw - 1 - s
            zf = xw1[s * B:(s + 1) * B, 0:H4] + jnp.dot(
                hf, whh1f, preferred_element_type=f32)
            zb = xw1[tb * B:(tb + 1) * B, H4:2 * H4] + jnp.dot(
                hb, whh1b, preferred_element_type=f32)
            hf, cf = _lstm_cell(zf, cf)
            hb, cb = _lstm_cell(zb, cb)
            if s == 0:
                hf_first = hf                    # contributes to outputs2[0] (fwd half)
                hb_first = hb                    # contributes to outputs2[-1] (bwd half)
        # outputs_added = outputs2[0] + outputs2[-1], split into fwd/bwd halves
        xadd_f = hf_first + hf                                           # (B, H)
        xadd_b = hb_first + hb                                           # (B, H)

        # ================= head =============================================
        # average_encoder(mentions_embeds): static loop over the leading axis.
        Lm = ments_ref.shape[0]
        acc = ments_ref[0]
        for l in range(1, Lm):
            acc = acc + ments_ref[l]
        ment_avg = acc * (1.0 / Lm)                                      # (B, E)

        ra = jnp.dot(ment_avg, fc1_wt_ref[...],
                     preferred_element_type=f32) + fc1_b_ref[...]        # (B, H)

        # Inferred Attention over the 2 "positions" of outputs_added.reshape(B,2,H)
        aw = att_w_ref[...]                                              # (1, H)
        ab = att_b_ref[...]                                              # (1, 1)
        s0 = jnp.sum(xadd_f * aw, axis=-1, keepdims=True) + ab           # (B, 1)
        s1 = jnp.sum(xadd_b * aw, axis=-1, keepdims=True) + ab
        m = jnp.maximum(s0, s1)
        e0 = jnp.exp(s0 - m)
        e1 = jnp.exp(s1 - m)
        inv = pl.reciprocal(e0 + e1, approx=True)   # 2-elem softmax: approx is fine
        rc0 = (e0 * inv) * xadd_f
        rc1 = (e1 * inv) * xadd_b

        # ReLU -> dropout (identity, eval) -> BatchNorm1d(4, affine=False):
        # per-channel batch statistics over (B, H), biased variance, eps=1e-5.
        def bn_relu(x):
            x = jnp.maximum(x, 0.0)
            n = x.shape[0] * x.shape[1]
            mu = jnp.sum(jnp.sum(x, axis=1, keepdims=True),
                         axis=0, keepdims=True) * (1.0 / n)              # (1, 1)
            d = x - mu
            var = jnp.sum(jnp.sum(d * d, axis=1, keepdims=True),
                          axis=0, keepdims=True) * (1.0 / n)
            return d * lax.rsqrt(var + 1e-5)

        # Channel order matches torch.cat((rc, ra, rl), dim=1): [rc0, rc1, ra, rl].
        hcat = jnp.concatenate(
            [bn_relu(rc0), bn_relu(rc1), bn_relu(ra), bn_relu(rl)],
            axis=-1)                                                     # (B, 4H)

        # fc2 as a single lane-dense matmul over (B, 4H=128)
        scores = jnp.dot(hcat, fc2_wt_ref[...],
                         preferred_element_type=f32) + fc2_b_ref[...]    # (B, O)

        # softmax over classes (exact divide for the final probabilities)
        smax = jnp.max(scores, axis=-1, keepdims=True)
        ex = jnp.exp(scores - smax)
        proba = ex / jnp.sum(ex, axis=-1, keepdims=True)

        # adjusted_proba = clamp(proba @ tune, 1e-10, 1.0)
        adj = jnp.dot(proba, tune_ref[...], preferred_element_type=f32)
        out_ref[...] = jnp.clip(adj, 1e-10, 1.0)

    return kernel


# ----------------------------------------------------------------------------
# Parameter construction (deterministic, synthetic) in fused-gate layout.
# ----------------------------------------------------------------------------
def lstm_dir_params(key, in_dim, hidden):
    k = float(hidden) ** -0.5
    ks = jax.random.split(key, 4)
    w_ih = jax.random.uniform(ks[0], (4 * hidden, in_dim), minval=-k, maxval=k)
    w_hh = jax.random.uniform(ks[1], (4 * hidden, hidden), minval=-k, maxval=k)
    b_ih = jax.random.uniform(ks[2], (4 * hidden,), minval=-k, maxval=k)
    b_hh = jax.random.uniform(ks[3], (4 * hidden,), minval=-k, maxval=k)
    # Fused-gate layout: (I, 4H), (H, 4H), (1, 4H); gate order [i, f, g, o].
    return (w_ih.T, w_hh.T, (b_ih + b_hh).reshape(1, 4 * hidden))


def linear_params(key, in_dim, out_dim):
    k = float(in_dim) ** -0.5
    k1, k2 = jax.random.split(key)
    w = jax.random.uniform(k1, (out_dim, in_dim), minval=-k, maxval=k)
    b = jax.random.uniform(k2, (out_dim,), minval=-k, maxval=k)
    return w, b


def build_params(key, vocab_size, embed_size, num_hiddens, out_size):
    keys = jax.random.split(key, 10)
    H = num_hiddens
    E = embed_size
    p = {}
    p["embedding"] = jax.random.normal(keys[0], (vocab_size, E), dtype=jnp.float32)

    # encoder1: 2-layer unidirectional LSTM
    p["e1_wih0"], p["e1_whh0"], p["e1_b0"] = lstm_dir_params(keys[1], E, H)
    p["e1_wih1"], p["e1_whh1"], p["e1_b1"] = lstm_dir_params(keys[2], H, H)

    # encoder2 layer 0 (bidirectional): fwd|bwd input weights concatenated
    # along lanes -> one (E, 8H) projection matmul.
    f_wih, f_whh, f_b = lstm_dir_params(keys[3], E, H)
    b_wih, b_whh, b_b = lstm_dir_params(keys[4], E, H)
    p["e2_wih0_cat"] = jnp.concatenate([f_wih, b_wih], axis=1)      # (E, 8H)
    p["e2_b0_cat"] = jnp.concatenate([f_b, b_b], axis=1)            # (1, 8H)
    p["e2_whh0_f"], p["e2_whh0_b"] = f_whh, b_whh

    # encoder2 layer 1 (bidirectional, input dim 2H = concat(fwd, bwd) features).
    # Rows 0:H multiply the fwd-half features, rows H:2H the bwd-half.
    f_wih, f_whh, f_b = lstm_dir_params(keys[5], 2 * H, H)
    b_wih, b_whh, b_b = lstm_dir_params(keys[6], 2 * H, H)
    p["e2_wih1_fhalf"] = jnp.concatenate([f_wih[:H], b_wih[:H]], axis=1)   # (H, 8H)
    p["e2_wih1_bhalf"] = jnp.concatenate([f_wih[H:], b_wih[H:]], axis=1)   # (H, 8H)
    p["e2_b1_cat"] = jnp.concatenate([f_b, b_b], axis=1)                   # (1, 8H)
    p["e2_whh1_f"], p["e2_whh1_b"] = f_whh, b_whh

    # fc1: Linear(embed_size, num_hiddens)
    w1, bfc1 = linear_params(keys[7], E, H)
    p["fc1_wt"] = w1.T                                               # (E, H)
    p["fc1_b"] = bfc1.reshape(1, H)
    # attention: Linear(num_hiddens, 1)
    wa, ba = linear_params(keys[8], H, 1)
    p["att_w"] = wa                                                  # (1, H)
    p["att_b"] = ba.reshape(1, 1)
    # fc2: Linear(4*num_hiddens, out_size)
    w2, bfc2 = linear_params(keys[9], 4 * H, out_size)
    p["fc2_wt"] = w2.T                                               # (4H, O)
    p["fc2_b"] = bfc2.reshape(1, out_size)
    return p


# ----------------------------------------------------------------------------
# Full forward pass: embedding gathers in XLA glue, everything else in ONE
# fused Pallas kernel (no intermediate HBM round-trips, no extra launches).
# ----------------------------------------------------------------------------
def nfetc_forward(params, words, mentions, mentions_ext, tune):
    emb = params["embedding"]
    B, Lw = words.shape
    Lme = mentions_ext.shape[1]
    E = emb.shape[1]
    H = params["e1_whh0"].shape[0]
    O = tune.shape[1]

    me_embeds = jnp.take(emb, mentions_ext.T, axis=0).reshape(Lme * B, E)   # time-major
    words_embeds = jnp.take(emb, words.T, axis=0).reshape(Lw * B, E)        # time-major
    ments_embeds = jnp.take(emb, mentions.T, axis=0)                        # (Lm, B, E)

    args = (
        me_embeds, words_embeds, ments_embeds,
        params["e1_wih0"], params["e1_whh0"], params["e1_b0"],
        params["e1_wih1"], params["e1_whh1"], params["e1_b1"],
        params["e2_wih0_cat"], params["e2_whh0_f"], params["e2_whh0_b"],
        params["e2_b0_cat"],
        params["e2_wih1_fhalf"], params["e2_wih1_bhalf"],
        params["e2_whh1_f"], params["e2_whh1_b"], params["e2_b1_cat"],
        params["fc1_wt"], params["fc1_b"], params["att_w"], params["att_b"],
        params["fc2_wt"], params["fc2_b"], tune,
    )

    kernel = _make_nfetc_kernel(B, Lme, Lw, H)
    return pl.pallas_call(
        kernel,
        out_shape=jax.ShapeDtypeStruct((B, O), jnp.float32),
        in_specs=[pl.BlockSpec(memory_space=pltpu.MemorySpace.VMEM)
                  for _ in args],
        out_specs=pl.BlockSpec(memory_space=pltpu.MemorySpace.VMEM),
    )(*args)


if __name__ == "__main__":
    vocab_size, embed_size, num_hiddens, out_size = 50, 32, 32, 16
    B, Lw, Lm, Lme = 2, 8, 4, 6

    root = jax.random.PRNGKey(0)
    kp, kw, km, ke, kt = jax.random.split(root, 5)

    params = build_params(kp, vocab_size, embed_size, num_hiddens, out_size)

    words = jax.random.randint(kw, (B, Lw), 0, vocab_size, dtype=jnp.int32)
    mentions = jax.random.randint(km, (B, Lm), 0, vocab_size, dtype=jnp.int32)
    mentions_ext = jax.random.randint(ke, (B, Lme), 0, vocab_size, dtype=jnp.int32)
    tune = jax.random.uniform(kt, (out_size, out_size), dtype=jnp.float32)

    fwd = jax.jit(nfetc_forward)
    out = fwd(params, words, mentions, mentions_ext, tune)
    out = jax.block_until_ready(out)
    assert out.shape == (B, out_size)
    assert bool(jnp.all(jnp.isfinite(out)))
    print("KERNEL_OK")
</pallas_src>

<mosaic_0001>
module attributes {stable_mosaic.version = 11 : i64} {
  func.func @kernel(%arg0: memref<12x32xf32, #tpu.memory_space<vmem>>, %arg1: memref<16x32xf32, #tpu.memory_space<vmem>>, %arg2: memref<4x2x32xf32, #tpu.memory_space<vmem>>, %arg3: memref<32x128xf32, #tpu.memory_space<vmem>>, %arg4: memref<32x128xf32, #tpu.memory_space<vmem>>, %arg5: memref<1x128xf32, #tpu.memory_space<vmem>>, %arg6: memref<32x128xf32, #tpu.memory_space<vmem>>, %arg7: memref<32x128xf32, #tpu.memory_space<vmem>>, %arg8: memref<1x128xf32, #tpu.memory_space<vmem>>, %arg9: memref<32x256xf32, #tpu.memory_space<vmem>>, %arg10: memref<32x128xf32, #tpu.memory_space<vmem>>, %arg11: memref<32x128xf32, #tpu.memory_space<vmem>>, %arg12: memref<1x256xf32, #tpu.memory_space<vmem>>, %arg13: memref<32x256xf32, #tpu.memory_space<vmem>>, %arg14: memref<32x256xf32, #tpu.memory_space<vmem>>, %arg15: memref<32x128xf32, #tpu.memory_space<vmem>>, %arg16: memref<32x128xf32, #tpu.memory_space<vmem>>, %arg17: memref<1x256xf32, #tpu.memory_space<vmem>>, %arg18: memref<32x32xf32, #tpu.memory_space<vmem>>, %arg19: memref<1x32xf32, #tpu.memory_space<vmem>>, %arg20: memref<1x32xf32, #tpu.memory_space<vmem>>, %arg21: memref<1x1xf32, #tpu.memory_space<vmem>>, %arg22: memref<128x16xf32, #tpu.memory_space<vmem>>, %arg23: memref<1x16xf32, #tpu.memory_space<vmem>>, %arg24: memref<16x16xf32, #tpu.memory_space<vmem>>, %arg25: memref<2x16xf32, #tpu.memory_space<vmem>>) attributes {dimension_semantics = [], scalar_prefetch = 0 : i64, scratch_operands = 0 : i64, tpu.core_type = #tpu.core_type<tc>} {
    %c0 = arith.constant 0 : index
    %c0_0 = arith.constant 0 : index
    %0 = vector.load %arg0[%c0, %c0_0] : memref<12x32xf32, #tpu.memory_space<vmem>>, vector<12x32xf32>
    %c0_1 = arith.constant 0 : index
    %c0_2 = arith.constant 0 : index
    %1 = vector.load %arg3[%c0_1, %c0_2] : memref<32x128xf32, #tpu.memory_space<vmem>>, vector<32x128xf32>
    %cst = arith.constant dense<0.000000e+00> : vector<12x128xf32>
    %2 = tpu.matmul %0, %1, %cst {dimension_numbers = #tpu.dot_dimension_numbers<[1], [0], [0], [1], [0, 0, 1, 1], [], []>} : vector<12x32xf32>, vector<32x128xf32>, vector<12x128xf32> -> vector<12x128xf32>
    %c0_3 = arith.constant 0 : index
    %c0_4 = arith.constant 0 : index
    %3 = vector.load %arg5[%c0_3, %c0_4] : memref<1x128xf32, #tpu.memory_space<vmem>>, vector<1x128xf32>
    %4 = vector.broadcast %3 : vector<1x128xf32> to vector<12x128xf32>
    %5 = arith.addf %2, %4 : vector<12x128xf32>
    %c0_5 = arith.constant 0 : index
    %c0_6 = arith.constant 0 : index
    %6 = vector.load %arg4[%c0_5, %c0_6] : memref<32x128xf32, #tpu.memory_space<vmem>>, vector<32x128xf32>
    %cst_7 = arith.constant 0.000000e+00 : f32
    %7 = vector.broadcast %cst_7 : f32 to vector<2x32xf32>
    %cst_8 = arith.constant 0.000000e+00 : f32
    %8 = vector.broadcast %cst_8 : f32 to vector<2x32xf32>
    %9 = vector.extract_strided_slice %5 {offsets = [0, 0], sizes = [2, 128], strides = [1, 1]} : vector<12x128xf32> to vector<2x128xf32>
    %cst_9 = arith.constant dense<0.000000e+00> : vector<2x128xf32>
    %10 = tpu.matmul %7, %6, %cst_9 {dimension_numbers = #tpu.dot_dimension_numbers<[1], [0], [0], [1], [0, 0, 1, 1], [], []>} : vector<2x32xf32>, vector<32x128xf32>, vector<2x128xf32> -> vector<2x128xf32>
    %11 = arith.addf %9, %10 : vector<2x128xf32>
    %12 = arith.negf %11 : vector<2x128xf32>
    %13 = math.exp %12 : vector<2x128xf32>
    %cst_10 = arith.constant 1.000000e+00 : f32
    %14 = vector.broadcast %cst_10 : f32 to vector<2x128xf32>
    %15 = arith.addf %14, %13 : vector<2x128xf32>
    %16 = arith.divf %14, %15 : vector<2x128xf32>
    %17 = math.tanh %11 : vector<2x128xf32>
    %18 = vector.extract_strided_slice %16 {offsets = [0, 0], sizes = [2, 32], strides = [1, 1]} : vector<2x128xf32> to vector<2x32xf32>
    %19 = vector.extract_strided_slice %16 {offsets = [0, 32], sizes = [2, 32], strides = [1, 1]} : vector<2x128xf32> to vector<2x32xf32>
    %20 = vector.extract_strided_slice %17 {offsets = [0, 64], sizes = [2, 32], strides = [1, 1]} : vector<2x128xf32> to vector<2x32xf32>
    %21 = vector.extract_strided_slice %16 {offsets = [0, 96], sizes = [2, 32], strides = [1, 1]} : vector<2x128xf32> to vector<2x32xf32>
    %22 = arith.mulf %19, %8 : vector<2x32xf32>
    %23 = arith.mulf %18, %20 : vector<2x32xf32>
    %24 = arith.addf %22, %23 : vector<2x32xf32>
    %25 = math.tanh %24 : vector<2x32xf32>
    %26 = arith.mulf %21, %25 : vector<2x32xf32>
    %27 = vector.extract_strided_slice %5 {offsets = [2, 0], sizes = [2, 128], strides = [1, 1]} : vector<12x128xf32> to vector<2x128xf32>
    %cst_11 = arith.constant dense<0.000000e+00> : vector<2x128xf32>
    %28 = tpu.matmul %26, %6, %cst_11 {dimension_numbers = #tpu.dot_dimension_numbers<[1], [0], [0], [1], [0, 0, 1, 1], [], []>} : vector<2x32xf32>, vector<32x128xf32>, vector<2x128xf32> -> vector<2x128xf32>
    %29 = arith.addf %27, %28 : vector<2x128xf32>
    %30 = arith.negf %29 : vector<2x128xf32>
    %31 = math.exp %30 : vector<2x128xf32>
    %cst_12 = arith.constant 1.000000e+00 : f32
    %32 = vector.broadcast %cst_12 : f32 to vector<2x128xf32>
    %33 = arith.addf %32, %31 : vector<2x128xf32>
    %34 = arith.divf %32, %33 : vector<2x128xf32>
    %35 = math.tanh %29 : vector<2x128xf32>
    %36 = vector.extract_strided_slice %34 {offsets = [0, 0], sizes = [2, 32], strides = [1, 1]} : vector<2x128xf32> to vector<2x32xf32>
    %37 = vector.extract_strided_slice %34 {offsets = [0, 32], sizes = [2, 32], strides = [1, 1]} : vector<2x128xf32> to vector<2x32xf32>
    %38 = vector.extract_strided_slice %35 {offsets = [0, 64], sizes = [2, 32], strides = [1, 1]} : vector<2x128xf32> to vector<2x32xf32>
    %39 = vector.extract_strided_slice %34 {offsets = [0, 96], sizes = [2, 32], strides = [1, 1]} : vector<2x128xf32> to vector<2x32xf32>
    %40 = arith.mulf %37, %24 : vector<2x32xf32>
    %41 = arith.mulf %36, %38 : vector<2x32xf32>
    %42 = arith.addf %40, %41 : vector<2x32xf32>
    %43 = math.tanh %42 : vector<2x32xf32>
    %44 = arith.mulf %39, %43 : vector<2x32xf32>
    %45 = vector.extract_strided_slice %5 {offsets = [4, 0], sizes = [2, 128], strides = [1, 1]} : vector<12x128xf32> to vector<2x128xf32>
    %cst_13 = arith.constant dense<0.000000e+00> : vector<2x128xf32>
    %46 = tpu.matmul %44, %6, %cst_13 {dimension_numbers = #tpu.dot_dimension_numbers<[1], [0], [0], [1], [0, 0, 1, 1], [], []>} : vector<2x32xf32>, vector<32x128xf32>, vector<2x128xf32> -> vector<2x128xf32>
    %47 = arith.addf %45, %46 : vector<2x128xf32>
    %48 = arith.negf %47 : vector<2x128xf32>
    %49 = math.exp %48 : vector<2x128xf32>
    %cst_14 = arith.constant 1.000000e+00 : f32
    %50 = vector.broadcast %cst_14 : f32 to vector<2x128xf32>
    %51 = arith.addf %50, %49 : vector<2x128xf32>
    %52 = arith.divf %50, %51 : vector<2x128xf32>
    %53 = math.tanh %47 : vector<2x128xf32>
    %54 = vector.extract_strided_slice %52 {offsets = [0, 0], sizes = [2, 32], strides = [1, 1]} : vector<2x128xf32> to vector<2x32xf32>
    %55 = vector.extract_strided_slice %52 {offsets = [0, 32], sizes = [2, 32], strides = [1, 1]} : vector<2x128xf32> to vector<2x32xf32>
    %56 = vector.extract_strided_slice %53 {offsets = [0, 64], sizes = [2, 32], strides = [1, 1]} : vector<2x128xf32> to vector<2x32xf32>
    %57 = vector.extract_strided_slice %52 {offsets = [0, 96], sizes = [2, 32], strides = [1, 1]} : vector<2x128xf32> to vector<2x32xf32>
    %58 = arith.mulf %55, %42 : vector<2x32xf32>
    %59 = arith.mulf %54, %56 : vector<2x32xf32>
    %60 = arith.addf %58, %59 : vector<2x32xf32>
    %61 = math.tanh %60 : vector<2x32xf32>
    %62 = arith.mulf %57, %61 : vector<2x32xf32>
    %63 = vector.extract_strided_slice %5 {offsets = [6, 0], sizes = [2, 128], strides = [1, 1]} : vector<12x128xf32> to vector<2x128xf32>
    %cst_15 = arith.constant dense<0.000000e+00> : vector<2x128xf32>
    %64 = tpu.matmul %62, %6, %cst_15 {dimension_numbers = #tpu.dot_dimension_numbers<[1], [0], [0], [1], [0, 0, 1, 1], [], []>} : vector<2x32xf32>, vector<32x128xf32>, vector<2x128xf32> -> vector<2x128xf32>
    %65 = arith.addf %63, %64 : vector<2x128xf32>
    %66 = arith.negf %65 : vector<2x128xf32>
    %67 = math.exp %66 : vector<2x128xf32>
    %cst_16 = arith.constant 1.000000e+00 : f32
    %68 = vector.broadcast %cst_16 : f32 to vector<2x128xf32>
    %69 = arith.addf %68, %67 : vector<2x128xf32>
    %70 = arith.divf %68, %69 : vector<2x128xf32>
    %71 = math.tanh %65 : vector<2x128xf32>
    %72 = vector.extract_strided_slice %70 {offsets = [0, 0], sizes = [2, 32], strides = [1, 1]} : vector<2x128xf32> to vector<2x32xf32>
    %73 = vector.extract_strided_slice %70 {offsets = [0, 32], sizes = [2, 32], strides = [1, 1]} : vector<2x128xf32> to vector<2x32xf32>
    %74 = vector.extract_strided_slice %71 {offsets = [0, 64], sizes = [2, 32], strides = [1, 1]} : vector<2x128xf32> to vector<2x32xf32>
    %75 = vector.extract_strided_slice %70 {offsets = [0, 96], sizes = [2, 32], strides = [1, 1]} : vector<2x128xf32> to vector<2x32xf32>
    %76 = arith.mulf %73, %60 : vector<2x32xf32>
    %77 = arith.mulf %72, %74 : vector<2x32xf32>
    %78 = arith.addf %76, %77 : vector<2x32xf32>
    %79 = math.tanh %78 : vector<2x32xf32>
    %80 = arith.mulf %75, %79 : vector<2x32xf32>
    %81 = vector.extract_strided_slice %5 {offsets = [8, 0], sizes = [2, 128], strides = [1, 1]} : vector<12x128xf32> to vector<2x128xf32>
    %cst_17 = arith.constant dense<0.000000e+00> : vector<2x128xf32>
    %82 = tpu.matmul %80, %6, %cst_17 {dimension_numbers = #tpu.dot_dimension_numbers<[1], [0], [0], [1], [0, 0, 1, 1], [], []>} : vector<2x32xf32>, vector<32x128xf32>, vector<2x128xf32> -> vector<2x128xf32>
    %83 = arith.addf %81, %82 : vector<2x128xf32>
    %84 = arith.negf %83 : vector<2x128xf32>
    %85 = math.exp %84 : vector<2x128xf32>
    %cst_18 = arith.constant 1.000000e+00 : f32
    %86 = vector.broadcast %cst_18 : f32 to vector<2x128xf32>
    %87 = arith.addf %86, %85 : vector<2x128xf32>
    %88 = arith.divf %86, %87 : vector<2x128xf32>
    %89 = math.tanh %83 : vector<2x128xf32>
    %90 = vector.extract_strided_slice %88 {offsets = [0, 0], sizes = [2, 32], strides = [1, 1]} : vector<2x128xf32> to vector<2x32xf32>
    %91 = vector.extract_strided_slice %88 {offsets = [0, 32], sizes = [2, 32], strides = [1, 1]} : vector<2x128xf32> to vector<2x32xf32>
    %92 = vector.extract_strided_slice %89 {offsets = [0, 64], sizes = [2, 32], strides = [1, 1]} : vector<2x128xf32> to vector<2x32xf32>
    %93 = vector.extract_strided_slice %88 {offsets = [0, 96], sizes = [2, 32], strides = [1, 1]} : vector<2x128xf32> to vector<2x32xf32>
    %94 = arith.mulf %91, %78 : vector<2x32xf32>
    %95 = arith.mulf %90, %92 : vector<2x32xf32>
    %96 = arith.addf %94, %95 : vector<2x32xf32>
    %97 = math.tanh %96 : vector<2x32xf32>
    %98 = arith.mulf %93, %97 : vector<2x32xf32>
    %99 = vector.extract_strided_slice %5 {offsets = [10, 0], sizes = [2, 128], strides = [1, 1]} : vector<12x128xf32> to vector<2x128xf32>
    %cst_19 = arith.constant dense<0.000000e+00> : vector<2x128xf32>
    %100 = tpu.matmul %98, %6, %cst_19 {dimension_numbers = #tpu.dot_dimension_numbers<[1], [0], [0], [1], [0, 0, 1, 1], [], []>} : vector<2x32xf32>, vector<32x128xf32>, vector<2x128xf32> -> vector<2x128xf32>
    %101 = arith.addf %99, %100 : vector<2x128xf32>
    %102 = arith.negf %101 : vector<2x128xf32>
    %103 = math.exp %102 : vector<2x128xf32>
    %cst_20 = arith.constant 1.000000e+00 : f32
    %104 = vector.broadcast %cst_20 : f32 to vector<2x128xf32>
    %105 = arith.addf %104, %103 : vector<2x128xf32>
    %106 = arith.divf %104, %105 : vector<2x128xf32>
    %107 = math.tanh %101 : vector<2x128xf32>
    %108 = vector.extract_strided_slice %106 {offsets = [0, 0], sizes = [2, 32], strides = [1, 1]} : vector<2x128xf32> to vector<2x32xf32>
    %109 = vector.extract_strided_slice %106 {offsets = [0, 32], sizes = [2, 32], strides = [1, 1]} : vector<2x128xf32> to vector<2x32xf32>
    %110 = vector.extract_strided_slice %107 {offsets = [0, 64], sizes = [2, 32], strides = [1, 1]} : vector<2x128xf32> to vector<2x32xf32>
    %111 = vector.extract_strided_slice %106 {offsets = [0, 96], sizes = [2, 32], strides = [1, 1]} : vector<2x128xf32> to vector<2x32xf32>
    %112 = arith.mulf %109, %96 : vector<2x32xf32>
    %113 = arith.mulf %108, %110 : vector<2x32xf32>
    %114 = arith.addf %112, %113 : vector<2x32xf32>
    %115 = math.tanh %114 : vector<2x32xf32>
    %116 = arith.mulf %111, %115 : vector<2x32xf32>
    %117 = tpu.concatenate %26, %44, %62, %80, %98, %116 in 0 : vector<2x32xf32>, vector<2x32xf32>, vector<2x32xf32>, vector<2x32xf32>, vector<2x32xf32>, vector<2x32xf32> -> vector<12x32xf32>
    %c0_21 = arith.constant 0 : index
    %c0_22 = arith.constant 0 : index
    %118 = vector.load %arg6[%c0_21, %c0_22] : memref<32x128xf32, #tpu.memory_space<vmem>>, vector<32x128xf32>
    %cst_23 = arith.constant dense<0.000000e+00> : vector<12x128xf32>
    %119 = tpu.matmul %117, %118, %cst_23 {dimension_numbers = #tpu.dot_dimension_numbers<[1], [0], [0], [1], [0, 0, 1, 1], [], []>} : vector<12x32xf32>, vector<32x128xf32>, vector<12x128xf32> -> vector<12x128xf32>
    %c0_24 = arith.constant 0 : index
    %c0_25 = arith.constant 0 : index
    %120 = vector.load %arg8[%c0_24, %c0_25] : memref<1x128xf32, #tpu.memory_space<vmem>>, vector<1x128xf32>
    %121 = vector.broadcast %120 : vector<1x128xf32> to vector<12x128xf32>
    %122 = arith.addf %119, %121 : vector<12x128xf32>
    %c0_26 = arith.constant 0 : index
    %c0_27 = arith.constant 0 : index
    %123 = vector.load %arg7[%c0_26, %c0_27] : memref<32x128xf32, #tpu.memory_space<vmem>>, vector<32x128xf32>
    %cst_28 = arith.constant 0.000000e+00 : f32
    %124 = vector.broadcast %cst_28 : f32 to vector<2x32xf32>
    %cst_29 = arith.constant 0.000000e+00 : f32
    %125 = vector.broadcast %cst_29 : f32 to vector<2x32xf32>
    %126 = vector.extract_strided_slice %122 {offsets = [0, 0], sizes = [2, 128], strides = [1, 1]} : vector<12x128xf32> to vector<2x128xf32>
    %cst_30 = arith.constant dense<0.000000e+00> : vector<2x128xf32>
    %127 = tpu.matmul %124, %123, %cst_30 {dimension_numbers = #tpu.dot_dimension_numbers<[1], [0], [0], [1], [0, 0, 1, 1], [], []>} : vector<2x32xf32>, vector<32x128xf32>, vector<2x128xf32> -> vector<2x128xf32>
    %128 = arith.addf %126, %127 : vector<2x128xf32>
    %129 = arith.negf %128 : vector<2x128xf32>
    %130 = math.exp %129 : vector<2x128xf32>
    %cst_31 = arith.constant 1.000000e+00 : f32
    %131 = vector.broadcast %cst_31 : f32 to vector<2x128xf32>
    %132 = arith.addf %131, %130 : vector<2x128xf32>
    %133 = arith.divf %131, %132 : vector<2x128xf32>
    %134 = math.tanh %128 : vector<2x128xf32>
    %135 = vector.extract_strided_slice %133 {offsets = [0, 0], sizes = [2, 32], strides = [1, 1]} : vector<2x128xf32> to vector<2x32xf32>
    %136 = vector.extract_strided_slice %133 {offsets = [0, 32], sizes = [2, 32], strides = [1, 1]} : vector<2x128xf32> to vector<2x32xf32>
    %137 = vector.extract_strided_slice %134 {offsets = [0, 64], sizes = [2, 32], strides = [1, 1]} : vector<2x128xf32> to vector<2x32xf32>
    %138 = vector.extract_strided_slice %133 {offsets = [0, 96], sizes = [2, 32], strides = [1, 1]} : vector<2x128xf32> to vector<2x32xf32>
    %139 = arith.mulf %136, %125 : vector<2x32xf32>
    %140 = arith.mulf %135, %137 : vector<2x32xf32>
    %141 = arith.addf %139, %140 : vector<2x32xf32>
    %142 = math.tanh %141 : vector<2x32xf32>
    %143 = arith.mulf %138, %142 : vector<2x32xf32>
    %144 = vector.extract_strided_slice %122 {offsets = [2, 0], sizes = [2, 128], strides = [1, 1]} : vector<12x128xf32> to vector<2x128xf32>
    %cst_32 = arith.constant dense<0.000000e+00> : vector<2x128xf32>
    %145 = tpu.matmul %143, %123, %cst_32 {dimension_numbers = #tpu.dot_dimension_numbers<[1], [0], [0], [1], [0, 0, 1, 1], [], []>} : vector<2x32xf32>, vector<32x128xf32>, vector<2x128xf32> -> vector<2x128xf32>
    %146 = arith.addf %144, %145 : vector<2x128xf32>
    %147 = arith.negf %146 : vector<2x128xf32>
    %148 = math.exp %147 : vector<2x128xf32>
    %cst_33 = arith.constant 1.000000e+00 : f32
    %149 = vector.broadcast %cst_33 : f32 to vector<2x128xf32>
    %150 = arith.addf %149, %148 : vector<2x128xf32>
    %151 = arith.divf %149, %150 : vector<2x128xf32>
    %152 = math.tanh %146 : vector<2x128xf32>
    %153 = vector.extract_strided_slice %151 {offsets = [0, 0], sizes = [2, 32], strides = [1, 1]} : vector<2x128xf32> to vector<2x32xf32>
    %154 = vector.extract_strided_slice %151 {offsets = [0, 32], sizes = [2, 32], strides = [1, 1]} : vector<2x128xf32> to vector<2x32xf32>
    %155 = vector.extract_strided_slice %152 {offsets = [0, 64], sizes = [2, 32], strides = [1, 1]} : vector<2x128xf32> to vector<2x32xf32>
    %156 = vector.extract_strided_slice %151 {offsets = [0, 96], sizes = [2, 32], strides = [1, 1]} : vector<2x128xf32> to vector<2x32xf32>
    %157 = arith.mulf %154, %141 : vector<2x32xf32>
    %158 = arith.mulf %153, %155 : vector<2x32xf32>
    %159 = arith.addf %157, %158 : vector<2x32xf32>
    %160 = math.tanh %159 : vector<2x32xf32>
    %161 = arith.mulf %156, %160 : vector<2x32xf32>
    %162 = vector.extract_strided_slice %122 {offsets = [4, 0], sizes = [2, 128], strides = [1, 1]} : vector<12x128xf32> to vector<2x128xf32>
    %cst_34 = arith.constant dense<0.000000e+00> : vector<2x128xf32>
    %163 = tpu.matmul %161, %123, %cst_34 {dimension_numbers = #tpu.dot_dimension_numbers<[1], [0], [0], [1], [0, 0, 1, 1], [], []>} : vector<2x32xf32>, vector<32x128xf32>, vector<2x128xf32> -> vector<2x128xf32>
    %164 = arith.addf %162, %163 : vector<2x128xf32>
    %165 = arith.negf %164 : vector<2x128xf32>
    %166 = math.exp %165 : vector<2x128xf32>
    %cst_35 = arith.constant 1.000000e+00 : f32
    %167 = vector.broadcast %cst_35 : f32 to vector<2x128xf32>
    %168 = arith.addf %167, %166 : vector<2x128xf32>
    %169 = arith.divf %167, %168 : vector<2x128xf32>
    %170 = math.tanh %164 : vector<2x128xf32>
    %171 = vector.extract_strided_slice %169 {offsets = [0, 0], sizes = [2, 32], strides = [1, 1]} : vector<2x128xf32> to vector<2x32xf32>
    %172 = vector.extract_strided_slice %169 {offsets = [0, 32], sizes = [2, 32], strides = [1, 1]} : vector<2x128xf32> to vector<2x32xf32>
    %173 = vector.extract_strided_slice %170 {offsets = [0, 64], sizes = [2, 32], strides = [1, 1]} : vector<2x128xf32> to vector<2x32xf32>
    %174 = vector.extract_strided_slice %169 {offsets = [0, 96], sizes = [2, 32], strides = [1, 1]} : vector<2x128xf32> to vector<2x32xf32>
    %175 = arith.mulf %172, %159 : vector<2x32xf32>
    %176 = arith.mulf %171, %173 : vector<2x32xf32>
    %177 = arith.addf %175, %176 : vector<2x32xf32>
    %178 = math.tanh %177 : vector<2x32xf32>
    %179 = arith.mulf %174, %178 : vector<2x32xf32>
    %180 = vector.extract_strided_slice %122 {offsets = [6, 0], sizes = [2, 128], strides = [1, 1]} : vector<12x128xf32> to vector<2x128xf32>
    %cst_36 = arith.constant dense<0.000000e+00> : vector<2x128xf32>
    %181 = tpu.matmul %179, %123, %cst_36 {dimension_numbers = #tpu.dot_dimension_numbers<[1], [0], [0], [1], [0, 0, 1, 1], [], []>} : vector<2x32xf32>, vector<32x128xf32>, vector<2x128xf32> -> vector<2x128xf32>
    %182 = arith.addf %180, %181 : vector<2x128xf32>
    %183 = arith.negf %182 : vector<2x128xf32>
    %184 = math.exp %183 : vector<2x128xf32>
    %cst_37 = arith.constant 1.000000e+00 : f32
    %185 = vector.broadcast %cst_37 : f32 to vector<2x128xf32>
    %186 = arith.addf %185, %184 : vector<2x128xf32>
    %187 = arith.divf %185, %186 : vector<2x128xf32>
    %188 = math.tanh %182 : vector<2x128xf32>
    %189 = vector.extract_strided_slice %187 {offsets = [0, 0], sizes = [2, 32], strides = [1, 1]} : vector<2x128xf32> to vector<2x32xf32>
    %190 = vector.extract_strided_slice %187 {offsets = [0, 32], sizes = [2, 32], strides = [1, 1]} : vector<2x128xf32> to vector<2x32xf32>
    %191 = vector.extract_strided_slice %188 {offsets = [0, 64], sizes = [2, 32], strides = [1, 1]} : vector<2x128xf32> to vector<2x32xf32>
    %192 = vector.extract_strided_slice %187 {offsets = [0, 96], sizes = [2, 32], strides = [1, 1]} : vector<2x128xf32> to vector<2x32xf32>
    %193 = arith.mulf %190, %177 : vector<2x32xf32>
    %194 = arith.mulf %189, %191 : vector<2x32xf32>
    %195 = arith.addf %193, %194 : vector<2x32xf32>
    %196 = math.tanh %195 : vector<2x32xf32>
    %197 = arith.mulf %192, %196 : vector<2x32xf32>
    %198 = vector.extract_strided_slice %122 {offsets = [8, 0], sizes = [2, 128], strides = [1, 1]} : vector<12x128xf32> to vector<2x128xf32>
    %cst_38 = arith.constant dense<0.000000e+00> : vector<2x128xf32>
    %199 = tpu.matmul %197, %123, %cst_38 {dimension_numbers = #tpu.dot_dimension_numbers<[1], [0], [0], [1], [0, 0, 1, 1], [], []>} : vector<2x32xf32>, vector<32x128xf32>, vector<2x128xf32> -> vector<2x128xf32>
    %200 = arith.addf %198, %199 : vector<2x128xf32>
    %201 = arith.negf %200 : vector<2x128xf32>
    %202 = math.exp %201 : vector<2x128xf32>
    %cst_39 = arith.constant 1.000000e+00 : f32
    %203 = vector.broadcast %cst_39 : f32 to vector<2x128xf32>
    %204 = arith.addf %203, %202 : vector<2x128xf32>
    %205 = arith.divf %203, %204 : vector<2x128xf32>
    %206 = math.tanh %200 : vector<2x128xf32>
    %207 = vector.extract_strided_slice %205 {offsets = [0, 0], sizes = [2, 32], strides = [1, 1]} : vector<2x128xf32> to vector<2x32xf32>
    %208 = vector.extract_strided_slice %205 {offsets = [0, 32], sizes = [2, 32], strides = [1, 1]} : vector<2x128xf32> to vector<2x32xf32>
    %209 = vector.extract_strided_slice %206 {offsets = [0, 64], sizes = [2, 32], strides = [1, 1]} : vector<2x128xf32> to vector<2x32xf32>
    %210 = vector.extract_strided_slice %205 {offsets = [0, 96], sizes = [2, 32], strides = [1, 1]} : vector<2x128xf32> to vector<2x32xf32>
    %211 = arith.mulf %208, %195 : vector<2x32xf32>
    %212 = arith.mulf %207, %209 : vector<2x32xf32>
    %213 = arith.addf %211, %212 : vector<2x32xf32>
    %214 = math.tanh %213 : vector<2x32xf32>
    %215 = arith.mulf %210, %214 : vector<2x32xf32>
    %216 = vector.extract_strided_slice %122 {offsets = [10, 0], sizes = [2, 128], strides = [1, 1]} : vector<12x128xf32> to vector<2x128xf32>
    %cst_40 = arith.constant dense<0.000000e+00> : vector<2x128xf32>
    %217 = tpu.matmul %215, %123, %cst_40 {dimension_numbers = #tpu.dot_dimension_numbers<[1], [0], [0], [1], [0, 0, 1, 1], [], []>} : vector<2x32xf32>, vector<32x128xf32>, vector<2x128xf32> -> vector<2x128xf32>
    %218 = arith.addf %216, %217 : vector<2x128xf32>
    %219 = arith.negf %218 : vector<2x128xf32>
    %220 = math.exp %219 : vector<2x128xf32>
    %cst_41 = arith.constant 1.000000e+00 : f32
    %221 = vector.broadcast %cst_41 : f32 to vector<2x128xf32>
    %222 = arith.addf %221, %220 : vector<2x128xf32>
    %223 = arith.divf %221, %222 : vector<2x128xf32>
    %224 = math.tanh %218 : vector<2x128xf32>
    %225 = vector.extract_strided_slice %223 {offsets = [0, 0], sizes = [2, 32], strides = [1, 1]} : vector<2x128xf32> to vector<2x32xf32>
    %226 = vector.extract_strided_slice %223 {offsets = [0, 32], sizes = [2, 32], strides = [1, 1]} : vector<2x128xf32> to vector<2x32xf32>
    %227 = vector.extract_strided_slice %224 {offsets = [0, 64], sizes = [2, 32], strides = [1, 1]} : vector<2x128xf32> to vector<2x32xf32>
    %228 = vector.extract_strided_slice %223 {offsets = [0, 96], sizes = [2, 32], strides = [1, 1]} : vector<2x128xf32> to vector<2x32xf32>
    %229 = arith.mulf %226, %213 : vector<2x32xf32>
    %230 = arith.mulf %225, %227 : vector<2x32xf32>
    %231 = arith.addf %229, %230 : vector<2x32xf32>
    %232 = math.tanh %231 : vector<2x32xf32>
    %233 = arith.mulf %228, %232 : vector<2x32xf32>
    %c0_42 = arith.constant 0 : index
    %c0_43 = arith.constant 0 : index
    %234 = vector.load %arg1[%c0_42, %c0_43] : memref<16x32xf32, #tpu.memory_space<vmem>>, vector<16x32xf32>
    %c0_44 = arith.constant 0 : index
    %c0_45 = arith.constant 0 : index
    %235 = vector.load %arg9[%c0_44, %c0_45] : memref<32x256xf32, #tpu.memory_space<vmem>>, vector<32x256xf32>
    %cst_46 = arith.constant dense<0.000000e+00> : vector<16x256xf32>
    %236 = tpu.matmul %234, %235, %cst_46 {dimension_numbers = #tpu.dot_dimension_numbers<[1], [0], [0], [1], [0, 0, 1, 1], [], []>} : vector<16x32xf32>, vector<32x256xf32>, vector<16x256xf32> -> vector<16x256xf32>
    %c0_47 = arith.constant 0 : index
    %c0_48 = arith.constant 0 : index
    %237 = vector.load %arg12[%c0_47, %c0_48] : memref<1x256xf32, #tpu.memory_space<vmem>>, vector<1x256xf32>
    %238 = vector.broadcast %237 : vector<1x256xf32> to vector<16x256xf32>
    %239 = arith.addf %236, %238 : vector<16x256xf32>
    %c0_49 = arith.constant 0 : index
    %c0_50 = arith.constant 0 : index
    %240 = vector.load %arg10[%c0_49, %c0_50] : memref<32x128xf32, #tpu.memory_space<vmem>>, vector<32x128xf32>
    %c0_51 = arith.constant 0 : index
    %c0_52 = arith.constant 0 : index
    %241 = vector.load %arg11[%c0_51, %c0_52] : memref<32x128xf32, #tpu.memory_space<vmem>>, vector<32x128xf32>
    %cst_53 = arith.constant 0.000000e+00 : f32
    %242 = vector.broadcast %cst_53 : f32 to vector<2x32xf32>
    %cst_54 = arith.constant 0.000000e+00 : f32
    %243 = vector.broadcast %cst_54 : f32 to vector<2x32xf32>
    %cst_55 = arith.constant 0.000000e+00 : f32
    %244 = vector.broadcast %cst_55 : f32 to vector<2x32xf32>
    %cst_56 = arith.constant 0.000000e+00 : f32
    %245 = vector.broadcast %cst_56 : f32 to vector<2x32xf32>
    %246 = vector.extract_strided_slice %239 {offsets = [0, 0], sizes = [2, 128], strides = [1, 1]} : vector<16x256xf32> to vector<2x128xf32>
    %cst_57 = arith.constant dense<0.000000e+00> : vector<2x128xf32>
    %247 = tpu.matmul %242, %240, %cst_57 {dimension_numbers = #tpu.dot_dimension_numbers<[1], [0], [0], [1], [0, 0, 1, 1], [], []>} : vector<2x32xf32>, vector<32x128xf32>, vector<2x128xf32> -> vector<2x128xf32>
    %248 = arith.addf %246, %247 : vector<2x128xf32>
    %249 = vector.extract_strided_slice %239 {offsets = [14, 128], sizes = [2, 128], strides = [1, 1]} : vector<16x256xf32> to vector<2x128xf32>
    %cst_58 = arith.constant dense<0.000000e+00> : vector<2x128xf32>
    %250 = tpu.matmul %244, %241, %cst_58 {dimension_numbers = #tpu.dot_dimension_numbers<[1], [0], [0], [1], [0, 0, 1, 1], [], []>} : vector<2x32xf32>, vector<32x128xf32>, vector<2x128xf32> -> vector<2x128xf32>
    %251 = arith.addf %249, %250 : vector<2x128xf32>
    %252 = arith.negf %248 : vector<2x128xf32>
    %253 = math.exp %252 : vector<2x128xf32>
    %cst_59 = arith.constant 1.000000e+00 : f32
    %254 = vector.broadcast %cst_59 : f32 to vector<2x128xf32>
    %255 = arith.addf %254, %253 : vector<2x128xf32>
    %256 = arith.divf %254, %255 : vector<2x128xf32>
    %257 = math.tanh %248 : vector<2x128xf32>
    %258 = vector.extract_strided_slice %256 {offsets = [0, 0], sizes = [2, 32], strides = [1, 1]} : vector<2x128xf32> to vector<2x32xf32>
    %259 = vector.extract_strided_slice %256 {offsets = [0, 32], sizes = [2, 32], strides = [1, 1]} : vector<2x128xf32> to vector<2x32xf32>
    %260 = vector.extract_strided_slice %257 {offsets = [0, 64], sizes = [2, 32], strides = [1, 1]} : vector<2x128xf32> to vector<2x32xf32>
    %261 = vector.extract_strided_slice %256 {offsets = [0, 96], sizes = [2, 32], strides = [1, 1]} : vector<2x128xf32> to vector<2x32xf32>
    %262 = arith.mulf %259, %243 : vector<2x32xf32>
    %263 = arith.mulf %258, %260 : vector<2x32xf32>
    %264 = arith.addf %262, %263 : vector<2x32xf32>
    %265 = math.tanh %264 : vector<2x32xf32>
    %266 = arith.mulf %261, %265 : vector<2x32xf32>
    %267 = arith.negf %251 : vector<2x128xf32>
    %268 = math.exp %267 : vector<2x128xf32>
    %cst_60 = arith.constant 1.000000e+00 : f32
    %269 = vector.broadcast %cst_60 : f32 to vector<2x128xf32>
    %270 = arith.addf %269, %268 : vector<2x128xf32>
    %271 = arith.divf %269, %270 : vector<2x128xf32>
    %272 = math.tanh %251 : vector<2x128xf32>
    %273 = vector.extract_strided_slice %271 {offsets = [0, 0], sizes = [2, 32], strides = [1, 1]} : vector<2x128xf32> to vector<2x32xf32>
    %274 = vector.extract_strided_slice %271 {offsets = [0, 32], sizes = [2, 32], strides = [1, 1]} : vector<2x128xf32> to vector<2x32xf32>
    %275 = vector.extract_strided_slice %272 {offsets = [0, 64], sizes = [2, 32], strides = [1, 1]} : vector<2x128xf32> to vector<2x32xf32>
    %276 = vector.extract_strided_slice %271 {offsets = [0, 96], sizes = [2, 32], strides = [1, 1]} : vector<2x128xf32> to vector<2x32xf32>
    %277 = arith.mulf %274, %245 : vector<2x32xf32>
    %278 = arith.mulf %273, %275 : vector<2x32xf32>
    %279 = arith.addf %277, %278 : vector<2x32xf32>
    %280 = math.tanh %279 : vector<2x32xf32>
    %281 = arith.mulf %276, %280 : vector<2x32xf32>
    %282 = vector.extract_strided_slice %239 {offsets = [2, 0], sizes = [2, 128], strides = [1, 1]} : vector<16x256xf32> to vector<2x128xf32>
    %cst_61 = arith.constant dense<0.000000e+00> : vector<2x128xf32>
    %283 = tpu.matmul %266, %240, %cst_61 {dimension_numbers = #tpu.dot_dimension_numbers<[1], [0], [0], [1], [0, 0, 1, 1], [], []>} : vector<2x32xf32>, vector<32x128xf32>, vector<2x128xf32> -> vector<2x128xf32>
    %284 = arith.addf %282, %283 : vector<2x128xf32>
    %285 = vector.extract_strided_slice %239 {offsets = [12, 128], sizes = [2, 128], strides = [1, 1]} : vector<16x256xf32> to vector<2x128xf32>
    %cst_62 = arith.constant dense<0.000000e+00> : vector<2x128xf32>
    %286 = tpu.matmul %281, %241, %cst_62 {dimension_numbers = #tpu.dot_dimension_numbers<[1], [0], [0], [1], [0, 0, 1, 1], [], []>} : vector<2x32xf32>, vector<32x128xf32>, vector<2x128xf32> -> vector<2x128xf32>
    %287 = arith.addf %285, %286 : vector<2x128xf32>
    %288 = arith.negf %284 : vector<2x128xf32>
    %289 = math.exp %288 : vector<2x128xf32>
    %cst_63 = arith.constant 1.000000e+00 : f32
    %290 = vector.broadcast %cst_63 : f32 to vector<2x128xf32>
    %291 = arith.addf %290, %289 : vector<2x128xf32>
    %292 = arith.divf %290, %291 : vector<2x128xf32>
    %293 = math.tanh %284 : vector<2x128xf32>
    %294 = vector.extract_strided_slice %292 {offsets = [0, 0], sizes = [2, 32], strides = [1, 1]} : vector<2x128xf32> to vector<2x32xf32>
    %295 = vector.extract_strided_slice %292 {offsets = [0, 32], sizes = [2, 32], strides = [1, 1]} : vector<2x128xf32> to vector<2x32xf32>
    %296 = vector.extract_strided_slice %293 {offsets = [0, 64], sizes = [2, 32], strides = [1, 1]} : vector<2x128xf32> to vector<2x32xf32>
    %297 = vector.extract_strided_slice %292 {offsets = [0, 96], sizes = [2, 32], strides = [1, 1]} : vector<2x128xf32> to vector<2x32xf32>
    %298 = arith.mulf %295, %264 : vector<2x32xf32>
    %299 = arith.mulf %294, %296 : vector<2x32xf32>
    %300 = arith.addf %298, %299 : vector<2x32xf32>
    %301 = math.tanh %300 : vector<2x32xf32>
    %302 = arith.mulf %297, %301 : vector<2x32xf32>
    %303 = arith.negf %287 : vector<2x128xf32>
    %304 = math.exp %303 : vector<2x128xf32>
    %cst_64 = arith.constant 1.000000e+00 : f32
    %305 = vector.broadcast %cst_64 : f32 to vector<2x128xf32>
    %306 = arith.addf %305, %304 : vector<2x128xf32>
    %307 = arith.divf %305, %306 : vector<2x128xf32>
    %308 = math.tanh %287 : vector<2x128xf32>
    %309 = vector.extract_strided_slice %307 {offsets = [0, 0], sizes = [2, 32], strides = [1, 1]} : vector<2x128xf32> to vector<2x32xf32>
    %310 = vector.extract_strided_slice %307 {offsets = [0, 32], sizes = [2, 32], strides = [1, 1]} : vector<2x128xf32> to vector<2x32xf32>
    %311 = vector.extract_strided_slice %308 {offsets = [0, 64], sizes = [2, 32], strides = [1, 1]} : vector<2x128xf32> to vector<2x32xf32>
    %312 = vector.extract_strided_slice %307 {offsets = [0, 96], sizes = [2, 32], strides = [1, 1]} : vector<2x128xf32> to vector<2x32xf32>
    %313 = arith.mulf %310, %279 : vector<2x32xf32>
    %314 = arith.mulf %309, %311 : vector<2x32xf32>
    %315 = arith.addf %313, %314 : vector<2x32xf32>
    %316 = math.tanh %315 : vector<2x32xf32>
    %317 = arith.mulf %312, %316 : vector<2x32xf32>
    %318 = vector.extract_strided_slice %239 {offsets = [4, 0], sizes = [2, 128], strides = [1, 1]} : vector<16x256xf32> to vector<2x128xf32>
    %cst_65 = arith.constant dense<0.000000e+00> : vector<2x128xf32>
    %319 = tpu.matmul %302, %240, %cst_65 {dimension_numbers = #tpu.dot_dimension_numbers<[1], [0], [0], [1], [0, 0, 1, 1], [], []>} : vector<2x32xf32>, vector<32x128xf32>, vector<2x128xf32> -> vector<2x128xf32>
    %320 = arith.addf %318, %319 : vector<2x128xf32>
    %321 = vector.extract_strided_slice %239 {offsets = [10, 128], sizes = [2, 128], strides = [1, 1]} : vector<16x256xf32> to vector<2x128xf32>
    %cst_66 = arith.constant dense<0.000000e+00> : vector<2x128xf32>
    %322 = tpu.matmul %317, %241, %cst_66 {dimension_numbers = #tpu.dot_dimension_numbers<[1], [0], [0], [1], [0, 0, 1, 1], [], []>} : vector<2x32xf32>, vector<32x128xf32>, vector<2x128xf32> -> vector<2x128xf32>
    %323 = arith.addf %321, %322 : vector<2x128xf32>
    %324 = arith.negf %320 : vector<2x128xf32>
    %325 = math.exp %324 : vector<2x128xf32>
    %cst_67 = arith.constant 1.000000e+00 : f32
    %326 = vector.broadcast %cst_67 : f32 to vector<2x128xf32>
    %327 = arith.addf %326, %325 : vector<2x128xf32>
    %328 = arith.divf %326, %327 : vector<2x128xf32>
    %329 = math.tanh %320 : vector<2x128xf32>
    %330 = vector.extract_strided_slice %328 {offsets = [0, 0], sizes = [2, 32], strides = [1, 1]} : vector<2x128xf32> to vector<2x32xf32>
    %331 = vector.extract_strided_slice %328 {offsets = [0, 32], sizes = [2, 32], strides = [1, 1]} : vector<2x128xf32> to vector<2x32xf32>
    %332 = vector.extract_strided_slice %329 {offsets = [0, 64], sizes = [2, 32], strides = [1, 1]} : vector<2x128xf32> to vector<2x32xf32>
    %333 = vector.extract_strided_slice %328 {offsets = [0, 96], sizes = [2, 32], strides = [1, 1]} : vector<2x128xf32> to vector<2x32xf32>
    %334 = arith.mulf %331, %300 : vector<2x32xf32>
    %335 = arith.mulf %330, %332 : vector<2x32xf32>
    %336 = arith.addf %334, %335 : vector<2x32xf32>
    %337 = math.tanh %336 : vector<2x32xf32>
    %338 = arith.mulf %333, %337 : vector<2x32xf32>
    %339 = arith.negf %323 : vector<2x128xf32>
    %340 = math.exp %339 : vector<2x128xf32>
    %cst_68 = arith.constant 1.000000e+00 : f32
    %341 = vector.broadcast %cst_68 : f32 to vector<2x128xf32>
    %342 = arith.addf %341, %340 : vector<2x128xf32>
    %343 = arith.divf %341, %342 : vector<2x128xf32>
    %344 = math.tanh %323 : vector<2x128xf32>
    %345 = vector.extract_strided_slice %343 {offsets = [0, 0], sizes = [2, 32], strides = [1, 1]} : vector<2x128xf32> to vector<2x32xf32>
    %346 = vector.extract_strided_slice %343 {offsets = [0, 32], sizes = [2, 32], strides = [1, 1]} : vector<2x128xf32> to vector<2x32xf32>
    %347 = vector.extract_strided_slice %344 {offsets = [0, 64], sizes = [2, 32], strides = [1, 1]} : vector<2x128xf32> to vector<2x32xf32>
    %348 = vector.extract_strided_slice %343 {offsets = [0, 96], sizes = [2, 32], strides = [1, 1]} : vector<2x128xf32> to vector<2x32xf32>
    %349 = arith.mulf %346, %315 : vector<2x32xf32>
    %350 = arith.mulf %345, %347 : vector<2x32xf32>
    %351 = arith.addf %349, %350 : vector<2x32xf32>
    %352 = math.tanh %351 : vector<2x32xf32>
    %353 = arith.mulf %348, %352 : vector<2x32xf32>
    %354 = vector.extract_strided_slice %239 {offsets = [6, 0], sizes = [2, 128], strides = [1, 1]} : vector<16x256xf32> to vector<2x128xf32>
    %cst_69 = arith.constant dense<0.000000e+00> : vector<2x128xf32>
    %355 = tpu.matmul %338, %240, %cst_69 {dimension_numbers = #tpu.dot_dimension_numbers<[1], [0], [0], [1], [0, 0, 1, 1], [], []>} : vector<2x32xf32>, vector<32x128xf32>, vector<2x128xf32> -> vector<2x128xf32>
    %356 = arith.addf %354, %355 : vector<2x128xf32>
    %357 = vector.extract_strided_slice %239 {offsets = [8, 128], sizes = [2, 128], strides = [1, 1]} : vector<16x256xf32> to vector<2x128xf32>
    %cst_70 = arith.constant dense<0.000000e+00> : vector<2x128xf32>
    %358 = tpu.matmul %353, %241, %cst_70 {dimension_numbers = #tpu.dot_dimension_numbers<[1], [0], [0], [1], [0, 0, 1, 1], [], []>} : vector<2x32xf32>, vector<32x128xf32>, vector<2x128xf32> -> vector<2x128xf32>
    %359 = arith.addf %357, %358 : vector<2x128xf32>
    %360 = arith.negf %356 : vector<2x128xf32>
    %361 = math.exp %360 : vector<2x128xf32>
    %cst_71 = arith.constant 1.000000e+00 : f32
    %362 = vector.broadcast %cst_71 : f32 to vector<2x128xf32>
    %363 = arith.addf %362, %361 : vector<2x128xf32>
    %364 = arith.divf %362, %363 : vector<2x128xf32>
    %365 = math.tanh %356 : vector<2x128xf32>
    %366 = vector.extract_strided_slice %364 {offsets = [0, 0], sizes = [2, 32], strides = [1, 1]} : vector<2x128xf32> to vector<2x32xf32>
    %367 = vector.extract_strided_slice %364 {offsets = [0, 32], sizes = [2, 32], strides = [1, 1]} : vector<2x128xf32> to vector<2x32xf32>
    %368 = vector.extract_strided_slice %365 {offsets = [0, 64], sizes = [2, 32], strides = [1, 1]} : vector<2x128xf32> to vector<2x32xf32>
    %369 = vector.extract_strided_slice %364 {offsets = [0, 96], sizes = [2, 32], strides = [1, 1]} : vector<2x128xf32> to vector<2x32xf32>
    %370 = arith.mulf %367, %336 : vector<2x32xf32>
    %371 = arith.mulf %366, %368 : vector<2x32xf32>
    %372 = arith.addf %370, %371 : vector<2x32xf32>
    %373 = math.tanh %372 : vector<2x32xf32>
    %374 = arith.mulf %369, %373 : vector<2x32xf32>
    %375 = arith.negf %359 : vector<2x128xf32>
    %376 = math.exp %375 : vector<2x128xf32>
    %cst_72 = arith.constant 1.000000e+00 : f32
    %377 = vector.broadcast %cst_72 : f32 to vector<2x128xf32>
    %378 = arith.addf %377, %376 : vector<2x128xf32>
    %379 = arith.divf %377, %378 : vector<2x128xf32>
    %380 = math.tanh %359 : vector<2x128xf32>
    %381 = vector.extract_strided_slice %379 {offsets = [0, 0], sizes = [2, 32], strides = [1, 1]} : vector<2x128xf32> to vector<2x32xf32>
    %382 = vector.extract_strided_slice %379 {offsets = [0, 32], sizes = [2, 32], strides = [1, 1]} : vector<2x128xf32> to vector<2x32xf32>
    %383 = vector.extract_strided_slice %380 {offsets = [0, 64], sizes = [2, 32], strides = [1, 1]} : vector<2x128xf32> to vector<2x32xf32>
    %384 = vector.extract_strided_slice %379 {offsets = [0, 96], sizes = [2, 32], strides = [1, 1]} : vector<2x128xf32> to vector<2x32xf32>
    %385 = arith.mulf %382, %351 : vector<2x32xf32>
    %386 = arith.mulf %381, %383 : vector<2x32xf32>
    %387 = arith.addf %385, %386 : vector<2x32xf32>
    %388 = math.tanh %387 : vector<2x32xf32>
    %389 = arith.mulf %384, %388 : vector<2x32xf32>
    %390 = vector.extract_strided_slice %239 {offsets = [8, 0], sizes = [2, 128], strides = [1, 1]} : vector<16x256xf32> to vector<2x128xf32>
    %cst_73 = arith.constant dense<0.000000e+00> : vector<2x128xf32>
    %391 = tpu.matmul %374, %240, %cst_73 {dimension_numbers = #tpu.dot_dimension_numbers<[1], [0], [0], [1], [0, 0, 1, 1], [], []>} : vector<2x32xf32>, vector<32x128xf32>, vector<2x128xf32> -> vector<2x128xf32>
    %392 = arith.addf %390, %391 : vector<2x128xf32>
    %393 = vector.extract_strided_slice %239 {offsets = [6, 128], sizes = [2, 128], strides = [1, 1]} : vector<16x256xf32> to vector<2x128xf32>
    %cst_74 = arith.constant dense<0.000000e+00> : vector<2x128xf32>
    %394 = tpu.matmul %389, %241, %cst_74 {dimension_numbers = #tpu.dot_dimension_numbers<[1], [0], [0], [1], [0, 0, 1, 1], [], []>} : vector<2x32xf32>, vector<32x128xf32>, vector<2x128xf32> -> vector<2x128xf32>
    %395 = arith.addf %393, %394 : vector<2x128xf32>
    %396 = arith.negf %392 : vector<2x128xf32>
    %397 = math.exp %396 : vector<2x128xf32>
    %cst_75 = arith.constant 1.000000e+00 : f32
    %398 = vector.broadcast %cst_75 : f32 to vector<2x128xf32>
    %399 = arith.addf %398, %397 : vector<2x128xf32>
    %400 = arith.divf %398, %399 : vector<2x128xf32>
    %401 = math.tanh %392 : vector<2x128xf32>
    %402 = vector.extract_strided_slice %400 {offsets = [0, 0], sizes = [2, 32], strides = [1, 1]} : vector<2x128xf32> to vector<2x32xf32>
    %403 = vector.extract_strided_slice %400 {offsets = [0, 32], sizes = [2, 32], strides = [1, 1]} : vector<2x128xf32> to vector<2x32xf32>
    %404 = vector.extract_strided_slice %401 {offsets = [0, 64], sizes = [2, 32], strides = [1, 1]} : vector<2x128xf32> to vector<2x32xf32>
    %405 = vector.extract_strided_slice %400 {offsets = [0, 96], sizes = [2, 32], strides = [1, 1]} : vector<2x128xf32> to vector<2x32xf32>
    %406 = arith.mulf %403, %372 : vector<2x32xf32>
    %407 = arith.mulf %402, %404 : vector<2x32xf32>
    %408 = arith.addf %406, %407 : vector<2x32xf32>
    %409 = math.tanh %408 : vector<2x32xf32>
    %410 = arith.mulf %405, %409 : vector<2x32xf32>
    %411 = arith.negf %395 : vector<2x128xf32>
    %412 = math.exp %411 : vector<2x128xf32>
    %cst_76 = arith.constant 1.000000e+00 : f32
    %413 = vector.broadcast %cst_76 : f32 to vector<2x128xf32>
    %414 = arith.addf %413, %412 : vector<2x128xf32>
    %415 = arith.divf %413, %414 : vector<2x128xf32>
    %416 = math.tanh %395 : vector<2x128xf32>
    %417 = vector.extract_strided_slice %415 {offsets = [0, 0], sizes = [2, 32], strides = [1, 1]} : vector<2x128xf32> to vector<2x32xf32>
    %418 = vector.extract_strided_slice %415 {offsets = [0, 32], sizes = [2, 32], strides = [1, 1]} : vector<2x128xf32> to vector<2x32xf32>
    %419 = vector.extract_strided_slice %416 {offsets = [0, 64], sizes = [2, 32], strides = [1, 1]} : vector<2x128xf32> to vector<2x32xf32>
    %420 = vector.extract_strided_slice %415 {offsets = [0, 96], sizes = [2, 32], strides = [1, 1]} : vector<2x128xf32> to vector<2x32xf32>
    %421 = arith.mulf %418, %387 : vector<2x32xf32>
    %422 = arith.mulf %417, %419 : vector<2x32xf32>
    %423 = arith.addf %421, %422 : vector<2x32xf32>
    %424 = math.tanh %423 : vector<2x32xf32>
    %425 = arith.mulf %420, %424 : vector<2x32xf32>
    %426 = vector.extract_strided_slice %239 {offsets = [10, 0], sizes = [2, 128], strides = [1, 1]} : vector<16x256xf32> to vector<2x128xf32>
    %cst_77 = arith.constant dense<0.000000e+00> : vector<2x128xf32>
    %427 = tpu.matmul %410, %240, %cst_77 {dimension_numbers = #tpu.dot_dimension_numbers<[1], [0], [0], [1], [0, 0, 1, 1], [], []>} : vector<2x32xf32>, vector<32x128xf32>, vector<2x128xf32> -> vector<2x128xf32>
    %428 = arith.addf %426, %427 : vector<2x128xf32>
    %429 = vector.extract_strided_slice %239 {offsets = [4, 128], sizes = [2, 128], strides = [1, 1]} : vector<16x256xf32> to vector<2x128xf32>
    %cst_78 = arith.constant dense<0.000000e+00> : vector<2x128xf32>
    %430 = tpu.matmul %425, %241, %cst_78 {dimension_numbers = #tpu.dot_dimension_numbers<[1], [0], [0], [1], [0, 0, 1, 1], [], []>} : vector<2x32xf32>, vector<32x128xf32>, vector<2x128xf32> -> vector<2x128xf32>
    %431 = arith.addf %429, %430 : vector<2x128xf32>
    %432 = arith.negf %428 : vector<2x128xf32>
    %433 = math.exp %432 : vector<2x128xf32>
    %cst_79 = arith.constant 1.000000e+00 : f32
    %434 = vector.broadcast %cst_79 : f32 to vector<2x128xf32>
    %435 = arith.addf %434, %433 : vector<2x128xf32>
    %436 = arith.divf %434, %435 : vector<2x128xf32>
    %437 = math.tanh %428 : vector<2x128xf32>
    %438 = vector.extract_strided_slice %436 {offsets = [0, 0], sizes = [2, 32], strides = [1, 1]} : vector<2x128xf32> to vector<2x32xf32>
    %439 = vector.extract_strided_slice %436 {offsets = [0, 32], sizes = [2, 32], strides = [1, 1]} : vector<2x128xf32> to vector<2x32xf32>
    %440 = vector.extract_strided_slice %437 {offsets = [0, 64], sizes = [2, 32], strides = [1, 1]} : vector<2x128xf32> to vector<2x32xf32>
    %441 = vector.extract_strided_slice %436 {offsets = [0, 96], sizes = [2, 32], strides = [1, 1]} : vector<2x128xf32> to vector<2x32xf32>
    %442 = arith.mulf %439, %408 : vector<2x32xf32>
    %443 = arith.mulf %438, %440 : vector<2x32xf32>
    %444 = arith.addf %442, %443 : vector<2x32xf32>
    %445 = math.tanh %444 : vector<2x32xf32>
    %446 = arith.mulf %441, %445 : vector<2x32xf32>
    %447 = arith.negf %431 : vector<2x128xf32>
    %448 = math.exp %447 : vector<2x128xf32>
    %cst_80 = arith.constant 1.000000e+00 : f32
    %449 = vector.broadcast %cst_80 : f32 to vector<2x128xf32>
    %450 = arith.addf %449, %448 : vector<2x128xf32>
    %451 = arith.divf %449, %450 : vector<2x128xf32>
    %452 = math.tanh %431 : vector<2x128xf32>
    %453 = vector.extract_strided_slice %451 {offsets = [0, 0], sizes = [2, 32], strides = [1, 1]} : vector<2x128xf32> to vector<2x32xf32>
    %454 = vector.extract_strided_slice %451 {offsets = [0, 32], sizes = [2, 32], strides = [1, 1]} : vector<2x128xf32> to vector<2x32xf32>
    %455 = vector.extract_strided_slice %452 {offsets = [0, 64], sizes = [2, 32], strides = [1, 1]} : vector<2x128xf32> to vector<2x32xf32>
    %456 = vector.extract_strided_slice %451 {offsets = [0, 96], sizes = [2, 32], strides = [1, 1]} : vector<2x128xf32> to vector<2x32xf32>
    %457 = arith.mulf %454, %423 : vector<2x32xf32>
    %458 = arith.mulf %453, %455 : vector<2x32xf32>
    %459 = arith.addf %457, %458 : vector<2x32xf32>
    %460 = math.tanh %459 : vector<2x32xf32>
    %461 = arith.mulf %456, %460 : vector<2x32xf32>
    %462 = vector.extract_strided_slice %239 {offsets = [12, 0], sizes = [2, 128], strides = [1, 1]} : vector<16x256xf32> to vector<2x128xf32>
    %cst_81 = arith.constant dense<0.000000e+00> : vector<2x128xf32>
    %463 = tpu.matmul %446, %240, %cst_81 {dimension_numbers = #tpu.dot_dimension_numbers<[1], [0], [0], [1], [0, 0, 1, 1], [], []>} : vector<2x32xf32>, vector<32x128xf32>, vector<2x128xf32> -> vector<2x128xf32>
    %464 = arith.addf %462, %463 : vector<2x128xf32>
    %465 = vector.extract_strided_slice %239 {offsets = [2, 128], sizes = [2, 128], strides = [1, 1]} : vector<16x256xf32> to vector<2x128xf32>
    %cst_82 = arith.constant dense<0.000000e+00> : vector<2x128xf32>
    %466 = tpu.matmul %461, %241, %cst_82 {dimension_numbers = #tpu.dot_dimension_numbers<[1], [0], [0], [1], [0, 0, 1, 1], [], []>} : vector<2x32xf32>, vector<32x128xf32>, vector<2x128xf32> -> vector<2x128xf32>
    %467 = arith.addf %465, %466 : vector<2x128xf32>
    %468 = arith.negf %464 : vector<2x128xf32>
    %469 = math.exp %468 : vector<2x128xf32>
    %cst_83 = arith.constant 1.000000e+00 : f32
    %470 = vector.broadcast %cst_83 : f32 to vector<2x128xf32>
    %471 = arith.addf %470, %469 : vector<2x128xf32>
    %472 = arith.divf %470, %471 : vector<2x128xf32>
    %473 = math.tanh %464 : vector<2x128xf32>
    %474 = vector.extract_strided_slice %472 {offsets = [0, 0], sizes = [2, 32], strides = [1, 1]} : vector<2x128xf32> to vector<2x32xf32>
    %475 = vector.extract_strided_slice %472 {offsets = [0, 32], sizes = [2, 32], strides = [1, 1]} : vector<2x128xf32> to vector<2x32xf32>
    %476 = vector.extract_strided_slice %473 {offsets = [0, 64], sizes = [2, 32], strides = [1, 1]} : vector<2x128xf32> to vector<2x32xf32>
    %477 = vector.extract_strided_slice %472 {offsets = [0, 96], sizes = [2, 32], strides = [1, 1]} : vector<2x128xf32> to vector<2x32xf32>
    %478 = arith.mulf %475, %444 : vector<2x32xf32>
    %479 = arith.mulf %474, %476 : vector<2x32xf32>
    %480 = arith.addf %478, %479 : vector<2x32xf32>
    %481 = math.tanh %480 : vector<2x32xf32>
    %482 = arith.mulf %477, %481 : vector<2x32xf32>
    %483 = arith.negf %467 : vector<2x128xf32>
    %484 = math.exp %483 : vector<2x128xf32>
    %cst_84 = arith.constant 1.000000e+00 : f32
    %485 = vector.broadcast %cst_84 : f32 to vector<2x128xf32>
    %486 = arith.addf %485, %484 : vector<2x128xf32>
    %487 = arith.divf %485, %486 : vector<2x128xf32>
    %488 = math.tanh %467 : vector<2x128xf32>
    %489 = vector.extract_strided_slice %487 {offsets = [0, 0], sizes = [2, 32], strides = [1, 1]} : vector<2x128xf32> to vector<2x32xf32>
    %490 = vector.extract_strided_slice %487 {offsets = [0, 32], sizes = [2, 32], strides = [1, 1]} : vector<2x128xf32> to vector<2x32xf32>
    %491 = vector.extract_strided_slice %488 {offsets = [0, 64], sizes = [2, 32], strides = [1, 1]} : vector<2x128xf32> to vector<2x32xf32>
    %492 = vector.extract_strided_slice %487 {offsets = [0, 96], sizes = [2, 32], strides = [1, 1]} : vector<2x128xf32> to vector<2x32xf32>
    %493 = arith.mulf %490, %459 : vector<2x32xf32>
    %494 = arith.mulf %489, %491 : vector<2x32xf32>
    %495 = arith.addf %493, %494 : vector<2x32xf32>
    %496 = math.tanh %495 : vector<2x32xf32>
    %497 = arith.mulf %492, %496 : vector<2x32xf32>
    %498 = vector.extract_strided_slice %239 {offsets = [14, 0], sizes = [2, 128], strides = [1, 1]} : vector<16x256xf32> to vector<2x128xf32>
    %cst_85 = arith.constant dense<0.000000e+00> : vector<2x128xf32>
    %499 = tpu.matmul %482, %240, %cst_85 {dimension_numbers = #tpu.dot_dimension_numbers<[1], [0], [0], [1], [0, 0, 1, 1], [], []>} : vector<2x32xf32>, vector<32x128xf32>, vector<2x128xf32> -> vector<2x128xf32>
    %500 = arith.addf %498, %499 : vector<2x128xf32>
    %501 = vector.extract_strided_slice %239 {offsets = [0, 128], sizes = [2, 128], strides = [1, 1]} : vector<16x256xf32> to vector<2x128xf32>
    %cst_86 = arith.constant dense<0.000000e+00> : vector<2x128xf32>
    %502 = tpu.matmul %497, %241, %cst_86 {dimension_numbers = #tpu.dot_dimension_numbers<[1], [0], [0], [1], [0, 0, 1, 1], [], []>} : vector<2x32xf32>, vector<32x128xf32>, vector<2x128xf32> -> vector<2x128xf32>
    %503 = arith.addf %501, %502 : vector<2x128xf32>
    %504 = arith.negf %500 : vector<2x128xf32>
    %505 = math.exp %504 : vector<2x128xf32>
    %cst_87 = arith.constant 1.000000e+00 : f32
    %506 = vector.broadcast %cst_87 : f32 to vector<2x128xf32>
    %507 = arith.addf %506, %505 : vector<2x128xf32>
    %508 = arith.divf %506, %507 : vector<2x128xf32>
    %509 = math.tanh %500 : vector<2x128xf32>
    %510 = vector.extract_strided_slice %508 {offsets = [0, 0], sizes = [2, 32], strides = [1, 1]} : vector<2x128xf32> to vector<2x32xf32>
    %511 = vector.extract_strided_slice %508 {offsets = [0, 32], sizes = [2, 32], strides = [1, 1]} : vector<2x128xf32> to vector<2x32xf32>
    %512 = vector.extract_strided_slice %509 {offsets = [0, 64], sizes = [2, 32], strides = [1, 1]} : vector<2x128xf32> to vector<2x32xf32>
    %513 = vector.extract_strided_slice %508 {offsets = [0, 96], sizes = [2, 32], strides = [1, 1]} : vector<2x128xf32> to vector<2x32xf32>
    %514 = arith.mulf %511, %480 : vector<2x32xf32>
    %515 = arith.mulf %510, %512 : vector<2x32xf32>
    %516 = arith.addf %514, %515 : vector<2x32xf32>
    %517 = math.tanh %516 : vector<2x32xf32>
    %518 = arith.mulf %513, %517 : vector<2x32xf32>
    %519 = arith.negf %503 : vector<2x128xf32>
    %520 = math.exp %519 : vector<2x128xf32>
    %cst_88 = arith.constant 1.000000e+00 : f32
    %521 = vector.broadcast %cst_88 : f32 to vector<2x128xf32>
    %522 = arith.addf %521, %520 : vector<2x128xf32>
    %523 = arith.divf %521, %522 : vector<2x128xf32>
    %524 = math.tanh %503 : vector<2x128xf32>
    %525 = vector.extract_strided_slice %523 {offsets = [0, 0], sizes = [2, 32], strides = [1, 1]} : vector<2x128xf32> to vector<2x32xf32>
    %526 = vector.extract_strided_slice %523 {offsets = [0, 32], sizes = [2, 32], strides = [1, 1]} : vector<2x128xf32> to vector<2x32xf32>
    %527 = vector.extract_strided_slice %524 {offsets = [0, 64], sizes = [2, 32], strides = [1, 1]} : vector<2x128xf32> to vector<2x32xf32>
    %528 = vector.extract_strided_slice %523 {offsets = [0, 96], sizes = [2, 32], strides = [1, 1]} : vector<2x128xf32> to vector<2x32xf32>
    %529 = arith.mulf %526, %495 : vector<2x32xf32>
    %530 = arith.mulf %525, %527 : vector<2x32xf32>
    %531 = arith.addf %529, %530 : vector<2x32xf32>
    %532 = math.tanh %531 : vector<2x32xf32>
    %533 = arith.mulf %528, %532 : vector<2x32xf32>
    %534 = tpu.concatenate %266, %302, %338, %374, %410, %446, %482, %518 in 0 : vector<2x32xf32>, vector<2x32xf32>, vector<2x32xf32>, vector<2x32xf32>, vector<2x32xf32>, vector<2x32xf32>, vector<2x32xf32>, vector<2x32xf32> -> vector<16x32xf32>
    %535 = tpu.concatenate %533, %497, %461, %425, %389, %353, %317, %281 in 0 : vector<2x32xf32>, vector<2x32xf32>, vector<2x32xf32>, vector<2x32xf32>, vector<2x32xf32>, vector<2x32xf32>, vector<2x32xf32>, vector<2x32xf32> -> vector<16x32xf32>
    %c0_89 = arith.constant 0 : index
    %c0_90 = arith.constant 0 : index
    %536 = vector.load %arg13[%c0_89, %c0_90] : memref<32x256xf32, #tpu.memory_space<vmem>>, vector<32x256xf32>
    %cst_91 = arith.constant dense<0.000000e+00> : vector<16x256xf32>
    %537 = tpu.matmul %534, %536, %cst_91 {dimension_numbers = #tpu.dot_dimension_numbers<[1], [0], [0], [1], [0, 0, 1, 1], [], []>} : vector<16x32xf32>, vector<32x256xf32>, vector<16x256xf32> -> vector<16x256xf32>
    %c0_92 = arith.constant 0 : index
    %c0_93 = arith.constant 0 : index
    %538 = vector.load %arg14[%c0_92, %c0_93] : memref<32x256xf32, #tpu.memory_space<vmem>>, vector<32x256xf32>
    %cst_94 = arith.constant dense<0.000000e+00> : vector<16x256xf32>
    %539 = tpu.matmul %535, %538, %cst_94 {dimension_numbers = #tpu.dot_dimension_numbers<[1], [0], [0], [1], [0, 0, 1, 1], [], []>} : vector<16x32xf32>, vector<32x256xf32>, vector<16x256xf32> -> vector<16x256xf32>
    %540 = arith.addf %537, %539 : vector<16x256xf32>
    %c0_95 = arith.constant 0 : index
    %c0_96 = arith.constant 0 : index
    %541 = vector.load %arg17[%c0_95, %c0_96] : memref<1x256xf32, #tpu.memory_space<vmem>>, vector<1x256xf32>
    %542 = vector.broadcast %541 : vector<1x256xf32> to vector<16x256xf32>
    %543 = arith.addf %540, %542 : vector<16x256xf32>
    %c0_97 = arith.constant 0 : index
    %c0_98 = arith.constant 0 : index
    %544 = vector.load %arg15[%c0_97, %c0_98] : memref<32x128xf32, #tpu.memory_space<vmem>>, vector<32x128xf32>
    %c0_99 = arith.constant 0 : index
    %c0_100 = arith.constant 0 : index
    %545 = vector.load %arg16[%c0_99, %c0_100] : memref<32x128xf32, #tpu.memory_space<vmem>>, vector<32x128xf32>
    %cst_101 = arith.constant 0.000000e+00 : f32
    %546 = vector.broadcast %cst_101 : f32 to vector<2x32xf32>
    %cst_102 = arith.constant 0.000000e+00 : f32
    %547 = vector.broadcast %cst_102 : f32 to vector<2x32xf32>
    %cst_103 = arith.constant 0.000000e+00 : f32
    %548 = vector.broadcast %cst_103 : f32 to vector<2x32xf32>
    %cst_104 = arith.constant 0.000000e+00 : f32
    %549 = vector.broadcast %cst_104 : f32 to vector<2x32xf32>
    %550 = vector.extract_strided_slice %543 {offsets = [0, 0], sizes = [2, 128], strides = [1, 1]} : vector<16x256xf32> to vector<2x128xf32>
    %cst_105 = arith.constant dense<0.000000e+00> : vector<2x128xf32>
    %551 = tpu.matmul %546, %544, %cst_105 {dimension_numbers = #tpu.dot_dimension_numbers<[1], [0], [0], [1], [0, 0, 1, 1], [], []>} : vector<2x32xf32>, vector<32x128xf32>, vector<2x128xf32> -> vector<2x128xf32>
    %552 = arith.addf %550, %551 : vector<2x128xf32>
    %553 = vector.extract_strided_slice %543 {offsets = [14, 128], sizes = [2, 128], strides = [1, 1]} : vector<16x256xf32> to vector<2x128xf32>
    %cst_106 = arith.constant dense<0.000000e+00> : vector<2x128xf32>
    %554 = tpu.matmul %548, %545, %cst_106 {dimension_numbers = #tpu.dot_dimension_numbers<[1], [0], [0], [1], [0, 0, 1, 1], [], []>} : vector<2x32xf32>, vector<32x128xf32>, vector<2x128xf32> -> vector<2x128xf32>
    %555 = arith.addf %553, %554 : vector<2x128xf32>
    %556 = arith.negf %552 : vector<2x128xf32>
    %557 = math.exp %556 : vector<2x128xf32>
    %cst_107 = arith.constant 1.000000e+00 : f32
    %558 = vector.broadcast %cst_107 : f32 to vector<2x128xf32>
    %559 = arith.addf %558, %557 : vector<2x128xf32>
    %560 = arith.divf %558, %559 : vector<2x128xf32>
    %561 = math.tanh %552 : vector<2x128xf32>
    %562 = vector.extract_strided_slice %560 {offsets = [0, 0], sizes = [2, 32], strides = [1, 1]} : vector<2x128xf32> to vector<2x32xf32>
    %563 = vector.extract_strided_slice %560 {offsets = [0, 32], sizes = [2, 32], strides = [1, 1]} : vector<2x128xf32> to vector<2x32xf32>
    %564 = vector.extract_strided_slice %561 {offsets = [0, 64], sizes = [2, 32], strides = [1, 1]} : vector<2x128xf32> to vector<2x32xf32>
    %565 = vector.extract_strided_slice %560 {offsets = [0, 96], sizes = [2, 32], strides = [1, 1]} : vector<2x128xf32> to vector<2x32xf32>
    %566 = arith.mulf %563, %547 : vector<2x32xf32>
    %567 = arith.mulf %562, %564 : vector<2x32xf32>
    %568 = arith.addf %566, %567 : vector<2x32xf32>
    %569 = math.tanh %568 : vector<2x32xf32>
    %570 = arith.mulf %565, %569 : vector<2x32xf32>
    %571 = arith.negf %555 : vector<2x128xf32>
    %572 = math.exp %571 : vector<2x128xf32>
    %cst_108 = arith.constant 1.000000e+00 : f32
    %573 = vector.broadcast %cst_108 : f32 to vector<2x128xf32>
    %574 = arith.addf %573, %572 : vector<2x128xf32>
    %575 = arith.divf %573, %574 : vector<2x128xf32>
    %576 = math.tanh %555 : vector<2x128xf32>
    %577 = vector.extract_strided_slice %575 {offsets = [0, 0], sizes = [2, 32], strides = [1, 1]} : vector<2x128xf32> to vector<2x32xf32>
    %578 = vector.extract_strided_slice %575 {offsets = [0, 32], sizes = [2, 32], strides = [1, 1]} : vector<2x128xf32> to vector<2x32xf32>
    %579 = vector.extract_strided_slice %576 {offsets = [0, 64], sizes = [2, 32], strides = [1, 1]} : vector<2x128xf32> to vector<2x32xf32>
    %580 = vector.extract_strided_slice %575 {offsets = [0, 96], sizes = [2, 32], strides = [1, 1]} : vector<2x128xf32> to vector<2x32xf32>
    %581 = arith.mulf %578, %549 : vector<2x32xf32>
    %582 = arith.mulf %577, %579 : vector<2x32xf32>
    %583 = arith.addf %581, %582 : vector<2x32xf32>
    %584 = math.tanh %583 : vector<2x32xf32>
    %585 = arith.mulf %580, %584 : vector<2x32xf32>
    %586 = vector.extract_strided_slice %543 {offsets = [2, 0], sizes = [2, 128], strides = [1, 1]} : vector<16x256xf32> to vector<2x128xf32>
    %cst_109 = arith.constant dense<0.000000e+00> : vector<2x128xf32>
    %587 = tpu.matmul %570, %544, %cst_109 {dimension_numbers = #tpu.dot_dimension_numbers<[1], [0], [0], [1], [0, 0, 1, 1], [], []>} : vector<2x32xf32>, vector<32x128xf32>, vector<2x128xf32> -> vector<2x128xf32>
    %588 = arith.addf %586, %587 : vector<2x128xf32>
    %589 = vector.extract_strided_slice %543 {offsets = [12, 128], sizes = [2, 128], strides = [1, 1]} : vector<16x256xf32> to vector<2x128xf32>
    %cst_110 = arith.constant dense<0.000000e+00> : vector<2x128xf32>
    %590 = tpu.matmul %585, %545, %cst_110 {dimension_numbers = #tpu.dot_dimension_numbers<[1], [0], [0], [1], [0, 0, 1, 1], [], []>} : vector<2x32xf32>, vector<32x128xf32>, vector<2x128xf32> -> vector<2x128xf32>
    %591 = arith.addf %589, %590 : vector<2x128xf32>
    %592 = arith.negf %588 : vector<2x128xf32>
    %593 = math.exp %592 : vector<2x128xf32>
    %cst_111 = arith.constant 1.000000e+00 : f32
    %594 = vector.broadcast %cst_111 : f32 to vector<2x128xf32>
    %595 = arith.addf %594, %593 : vector<2x128xf32>
    %596 = arith.divf %594, %595 : vector<2x128xf32>
    %597 = math.tanh %588 : vector<2x128xf32>
    %598 = vector.extract_strided_slice %596 {offsets = [0, 0], sizes = [2, 32], strides = [1, 1]} : vector<2x128xf32> to vector<2x32xf32>
    %599 = vector.extract_strided_slice %596 {offsets = [0, 32], sizes = [2, 32], strides = [1, 1]} : vector<2x128xf32> to vector<2x32xf32>
    %600 = vector.extract_strided_slice %597 {offsets = [0, 64], sizes = [2, 32], strides = [1, 1]} : vector<2x128xf32> to vector<2x32xf32>
    %601 = vector.extract_strided_slice %596 {offsets = [0, 96], sizes = [2, 32], strides = [1, 1]} : vector<2x128xf32> to vector<2x32xf32>
    %602 = arith.mulf %599, %568 : vector<2x32xf32>
    %603 = arith.mulf %598, %600 : vector<2x32xf32>
    %604 = arith.addf %602, %603 : vector<2x32xf32>
    %605 = math.tanh %604 : vector<2x32xf32>
    %606 = arith.mulf %601, %605 : vector<2x32xf32>
    %607 = arith.negf %591 : vector<2x128xf32>
    %608 = math.exp %607 : vector<2x128xf32>
    %cst_112 = arith.constant 1.000000e+00 : f32
    %609 = vector.broadcast %cst_112 : f32 to vector<2x128xf32>
    %610 = arith.addf %609, %608 : vector<2x128xf32>
    %611 = arith.divf %609, %610 : vector<2x128xf32>
    %612 = math.tanh %591 : vector<2x128xf32>
    %613 = vector.extract_strided_slice %611 {offsets = [0, 0], sizes = [2, 32], strides = [1, 1]} : vector<2x128xf32> to vector<2x32xf32>
    %614 = vector.extract_strided_slice %611 {offsets = [0, 32], sizes = [2, 32], strides = [1, 1]} : vector<2x128xf32> to vector<2x32xf32>
    %615 = vector.extract_strided_slice %612 {offsets = [0, 64], sizes = [2, 32], strides = [1, 1]} : vector<2x128xf32> to vector<2x32xf32>
    %616 = vector.extract_strided_slice %611 {offsets = [0, 96], sizes = [2, 32], strides = [1, 1]} : vector<2x128xf32> to vector<2x32xf32>
    %617 = arith.mulf %614, %583 : vector<2x32xf32>
    %618 = arith.mulf %613, %615 : vector<2x32xf32>
    %619 = arith.addf %617, %618 : vector<2x32xf32>
    %620 = math.tanh %619 : vector<2x32xf32>
    %621 = arith.mulf %616, %620 : vector<2x32xf32>
    %622 = vector.extract_strided_slice %543 {offsets = [4, 0], sizes = [2, 128], strides = [1, 1]} : vector<16x256xf32> to vector<2x128xf32>
    %cst_113 = arith.constant dense<0.000000e+00> : vector<2x128xf32>
    %623 = tpu.matmul %606, %544, %cst_113 {dimension_numbers = #tpu.dot_dimension_numbers<[1], [0], [0], [1], [0, 0, 1, 1], [], []>} : vector<2x32xf32>, vector<32x128xf32>, vector<2x128xf32> -> vector<2x128xf32>
    %624 = arith.addf %622, %623 : vector<2x128xf32>
    %625 = vector.extract_strided_slice %543 {offsets = [10, 128], sizes = [2, 128], strides = [1, 1]} : vector<16x256xf32> to vector<2x128xf32>
    %cst_114 = arith.constant dense<0.000000e+00> : vector<2x128xf32>
    %626 = tpu.matmul %621, %545, %cst_114 {dimension_numbers = #tpu.dot_dimension_numbers<[1], [0], [0], [1], [0, 0, 1, 1], [], []>} : vector<2x32xf32>, vector<32x128xf32>, vector<2x128xf32> -> vector<2x128xf32>
    %627 = arith.addf %625, %626 : vector<2x128xf32>
    %628 = arith.negf %624 : vector<2x128xf32>
    %629 = math.exp %628 : vector<2x128xf32>
    %cst_115 = arith.constant 1.000000e+00 : f32
    %630 = vector.broadcast %cst_115 : f32 to vector<2x128xf32>
    %631 = arith.addf %630, %629 : vector<2x128xf32>
    %632 = arith.divf %630, %631 : vector<2x128xf32>
    %633 = math.tanh %624 : vector<2x128xf32>
    %634 = vector.extract_strided_slice %632 {offsets = [0, 0], sizes = [2, 32], strides = [1, 1]} : vector<2x128xf32> to vector<2x32xf32>
    %635 = vector.extract_strided_slice %632 {offsets = [0, 32], sizes = [2, 32], strides = [1, 1]} : vector<2x128xf32> to vector<2x32xf32>
    %636 = vector.extract_strided_slice %633 {offsets = [0, 64], sizes = [2, 32], strides = [1, 1]} : vector<2x128xf32> to vector<2x32xf32>
    %637 = vector.extract_strided_slice %632 {offsets = [0, 96], sizes = [2, 32], strides = [1, 1]} : vector<2x128xf32> to vector<2x32xf32>
    %638 = arith.mulf %635, %604 : vector<2x32xf32>
    %639 = arith.mulf %634, %636 : vector<2x32xf32>
    %640 = arith.addf %638, %639 : vector<2x32xf32>
    %641 = math.tanh %640 : vector<2x32xf32>
    %642 = arith.mulf %637, %641 : vector<2x32xf32>
    %643 = arith.negf %627 : vector<2x128xf32>
    %644 = math.exp %643 : vector<2x128xf32>
    %cst_116 = arith.constant 1.000000e+00 : f32
    %645 = vector.broadcast %cst_116 : f32 to vector<2x128xf32>
    %646 = arith.addf %645, %644 : vector<2x128xf32>
    %647 = arith.divf %645, %646 : vector<2x128xf32>
    %648 = math.tanh %627 : vector<2x128xf32>
    %649 = vector.extract_strided_slice %647 {offsets = [0, 0], sizes = [2, 32], strides = [1, 1]} : vector<2x128xf32> to vector<2x32xf32>
    %650 = vector.extract_strided_slice %647 {offsets = [0, 32], sizes = [2, 32], strides = [1, 1]} : vector<2x128xf32> to vector<2x32xf32>
    %651 = vector.extract_strided_slice %648 {offsets = [0, 64], sizes = [2, 32], strides = [1, 1]} : vector<2x128xf32> to vector<2x32xf32>
    %652 = vector.extract_strided_slice %647 {offsets = [0, 96], sizes = [2, 32], strides = [1, 1]} : vector<2x128xf32> to vector<2x32xf32>
    %653 = arith.mulf %650, %619 : vector<2x32xf32>
    %654 = arith.mulf %649, %651 : vector<2x32xf32>
    %655 = arith.addf %653, %654 : vector<2x32xf32>
    %656 = math.tanh %655 : vector<2x32xf32>
    %657 = arith.mulf %652, %656 : vector<2x32xf32>
    %658 = vector.extract_strided_slice %543 {offsets = [6, 0], sizes = [2, 128], strides = [1, 1]} : vector<16x256xf32> to vector<2x128xf32>
    %cst_117 = arith.constant dense<0.000000e+00> : vector<2x128xf32>
    %659 = tpu.matmul %642, %544, %cst_117 {dimension_numbers = #tpu.dot_dimension_numbers<[1], [0], [0], [1], [0, 0, 1, 1], [], []>} : vector<2x32xf32>, vector<32x128xf32>, vector<2x128xf32> -> vector<2x128xf32>
    %660 = arith.addf %658, %659 : vector<2x128xf32>
    %661 = vector.extract_strided_slice %543 {offsets = [8, 128], sizes = [2, 128], strides = [1, 1]} : vector<16x256xf32> to vector<2x128xf32>
    %cst_118 = arith.constant dense<0.000000e+00> : vector<2x128xf32>
    %662 = tpu.matmul %657, %545, %cst_118 {dimension_numbers = #tpu.dot_dimension_numbers<[1], [0], [0], [1], [0, 0, 1, 1], [], []>} : vector<2x32xf32>, vector<32x128xf32>, vector<2x128xf32> -> vector<2x128xf32>
    %663 = arith.addf %661, %662 : vector<2x128xf32>
    %664 = arith.negf %660 : vector<2x128xf32>
    %665 = math.exp %664 : vector<2x128xf32>
    %cst_119 = arith.constant 1.000000e+00 : f32
    %666 = vector.broadcast %cst_119 : f32 to vector<2x128xf32>
    %667 = arith.addf %666, %665 : vector<2x128xf32>
    %668 = arith.divf %666, %667 : vector<2x128xf32>
    %669 = math.tanh %660 : vector<2x128xf32>
    %670 = vector.extract_strided_slice %668 {offsets = [0, 0], sizes = [2, 32], strides = [1, 1]} : vector<2x128xf32> to vector<2x32xf32>
    %671 = vector.extract_strided_slice %668 {offsets = [0, 32], sizes = [2, 32], strides = [1, 1]} : vector<2x128xf32> to vector<2x32xf32>
    %672 = vector.extract_strided_slice %669 {offsets = [0, 64], sizes = [2, 32], strides = [1, 1]} : vector<2x128xf32> to vector<2x32xf32>
    %673 = vector.extract_strided_slice %668 {offsets = [0, 96], sizes = [2, 32], strides = [1, 1]} : vector<2x128xf32> to vector<2x32xf32>
    %674 = arith.mulf %671, %640 : vector<2x32xf32>
    %675 = arith.mulf %670, %672 : vector<2x32xf32>
    %676 = arith.addf %674, %675 : vector<2x32xf32>
    %677 = math.tanh %676 : vector<2x32xf32>
    %678 = arith.mulf %673, %677 : vector<2x32xf32>
    %679 = arith.negf %663 : vector<2x128xf32>
    %680 = math.exp %679 : vector<2x128xf32>
    %cst_120 = arith.constant 1.000000e+00 : f32
    %681 = vector.broadcast %cst_120 : f32 to vector<2x128xf32>
    %682 = arith.addf %681, %680 : vector<2x128xf32>
    %683 = arith.divf %681, %682 : vector<2x128xf32>
    %684 = math.tanh %663 : vector<2x128xf32>
    %685 = vector.extract_strided_slice %683 {offsets = [0, 0], sizes = [2, 32], strides = [1, 1]} : vector<2x128xf32> to vector<2x32xf32>
    %686 = vector.extract_strided_slice %683 {offsets = [0, 32], sizes = [2, 32], strides = [1, 1]} : vector<2x128xf32> to vector<2x32xf32>
    %687 = vector.extract_strided_slice %684 {offsets = [0, 64], sizes = [2, 32], strides = [1, 1]} : vector<2x128xf32> to vector<2x32xf32>
    %688 = vector.extract_strided_slice %683 {offsets = [0, 96], sizes = [2, 32], strides = [1, 1]} : vector<2x128xf32> to vector<2x32xf32>
    %689 = arith.mulf %686, %655 : vector<2x32xf32>
    %690 = arith.mulf %685, %687 : vector<2x32xf32>
    %691 = arith.addf %689, %690 : vector<2x32xf32>
    %692 = math.tanh %691 : vector<2x32xf32>
    %693 = arith.mulf %688, %692 : vector<2x32xf32>
    %694 = vector.extract_strided_slice %543 {offsets = [8, 0], sizes = [2, 128], strides = [1, 1]} : vector<16x256xf32> to vector<2x128xf32>
    %cst_121 = arith.constant dense<0.000000e+00> : vector<2x128xf32>
    %695 = tpu.matmul %678, %544, %cst_121 {dimension_numbers = #tpu.dot_dimension_numbers<[1], [0], [0], [1], [0, 0, 1, 1], [], []>} : vector<2x32xf32>, vector<32x128xf32>, vector<2x128xf32> -> vector<2x128xf32>
    %696 = arith.addf %694, %695 : vector<2x128xf32>
    %697 = vector.extract_strided_slice %543 {offsets = [6, 128], sizes = [2, 128], strides = [1, 1]} : vector<16x256xf32> to vector<2x128xf32>
    %cst_122 = arith.constant dense<0.000000e+00> : vector<2x128xf32>
    %698 = tpu.matmul %693, %545, %cst_122 {dimension_numbers = #tpu.dot_dimension_numbers<[1], [0], [0], [1], [0, 0, 1, 1], [], []>} : vector<2x32xf32>, vector<32x128xf32>, vector<2x128xf32> -> vector<2x128xf32>
    %699 = arith.addf %697, %698 : vector<2x128xf32>
    %700 = arith.negf %696 : vector<2x128xf32>
    %701 = math.exp %700 : vector<2x128xf32>
    %cst_123 = arith.constant 1.000000e+00 : f32
    %702 = vector.broadcast %cst_123 : f32 to vector<2x128xf32>
    %703 = arith.addf %702, %701 : vector<2x128xf32>
    %704 = arith.divf %702, %703 : vector<2x128xf32>
    %705 = math.tanh %696 : vector<2x128xf32>
    %706 = vector.extract_strided_slice %704 {offsets = [0, 0], sizes = [2, 32], strides = [1, 1]} : vector<2x128xf32> to vector<2x32xf32>
    %707 = vector.extract_strided_slice %704 {offsets = [0, 32], sizes = [2, 32], strides = [1, 1]} : vector<2x128xf32> to vector<2x32xf32>
    %708 = vector.extract_strided_slice %705 {offsets = [0, 64], sizes = [2, 32], strides = [1, 1]} : vector<2x128xf32> to vector<2x32xf32>
    %709 = vector.extract_strided_slice %704 {offsets = [0, 96], sizes = [2, 32], strides = [1, 1]} : vector<2x128xf32> to vector<2x32xf32>
    %710 = arith.mulf %707, %676 : vector<2x32xf32>
    %711 = arith.mulf %706, %708 : vector<2x32xf32>
    %712 = arith.addf %710, %711 : vector<2x32xf32>
    %713 = math.tanh %712 : vector<2x32xf32>
    %714 = arith.mulf %709, %713 : vector<2x32xf32>
    %715 = arith.negf %699 : vector<2x128xf32>
    %716 = math.exp %715 : vector<2x128xf32>
    %cst_124 = arith.constant 1.000000e+00 : f32
    %717 = vector.broadcast %cst_124 : f32 to vector<2x128xf32>
    %718 = arith.addf %717, %716 : vector<2x128xf32>
    %719 = arith.divf %717, %718 : vector<2x128xf32>
    %720 = math.tanh %699 : vector<2x128xf32>
    %721 = vector.extract_strided_slice %719 {offsets = [0, 0], sizes = [2, 32], strides = [1, 1]} : vector<2x128xf32> to vector<2x32xf32>
    %722 = vector.extract_strided_slice %719 {offsets = [0, 32], sizes = [2, 32], strides = [1, 1]} : vector<2x128xf32> to vector<2x32xf32>
    %723 = vector.extract_strided_slice %720 {offsets = [0, 64], sizes = [2, 32], strides = [1, 1]} : vector<2x128xf32> to vector<2x32xf32>
    %724 = vector.extract_strided_slice %719 {offsets = [0, 96], sizes = [2, 32], strides = [1, 1]} : vector<2x128xf32> to vector<2x32xf32>
    %725 = arith.mulf %722, %691 : vector<2x32xf32>
    %726 = arith.mulf %721, %723 : vector<2x32xf32>
    %727 = arith.addf %725, %726 : vector<2x32xf32>
    %728 = math.tanh %727 : vector<2x32xf32>
    %729 = arith.mulf %724, %728 : vector<2x32xf32>
    %730 = vector.extract_strided_slice %543 {offsets = [10, 0], sizes = [2, 128], strides = [1, 1]} : vector<16x256xf32> to vector<2x128xf32>
    %cst_125 = arith.constant dense<0.000000e+00> : vector<2x128xf32>
    %731 = tpu.matmul %714, %544, %cst_125 {dimension_numbers = #tpu.dot_dimension_numbers<[1], [0], [0], [1], [0, 0, 1, 1], [], []>} : vector<2x32xf32>, vector<32x128xf32>, vector<2x128xf32> -> vector<2x128xf32>
    %732 = arith.addf %730, %731 : vector<2x128xf32>
    %733 = vector.extract_strided_slice %543 {offsets = [4, 128], sizes = [2, 128], strides = [1, 1]} : vector<16x256xf32> to vector<2x128xf32>
    %cst_126 = arith.constant dense<0.000000e+00> : vector<2x128xf32>
    %734 = tpu.matmul %729, %545, %cst_126 {dimension_numbers = #tpu.dot_dimension_numbers<[1], [0], [0], [1], [0, 0, 1, 1], [], []>} : vector<2x32xf32>, vector<32x128xf32>, vector<2x128xf32> -> vector<2x128xf32>
    %735 = arith.addf %733, %734 : vector<2x128xf32>
    %736 = arith.negf %732 : vector<2x128xf32>
    %737 = math.exp %736 : vector<2x128xf32>
    %cst_127 = arith.constant 1.000000e+00 : f32
    %738 = vector.broadcast %cst_127 : f32 to vector<2x128xf32>
    %739 = arith.addf %738, %737 : vector<2x128xf32>
    %740 = arith.divf %738, %739 : vector<2x128xf32>
    %741 = math.tanh %732 : vector<2x128xf32>
    %742 = vector.extract_strided_slice %740 {offsets = [0, 0], sizes = [2, 32], strides = [1, 1]} : vector<2x128xf32> to vector<2x32xf32>
    %743 = vector.extract_strided_slice %740 {offsets = [0, 32], sizes = [2, 32], strides = [1, 1]} : vector<2x128xf32> to vector<2x32xf32>
    %744 = vector.extract_strided_slice %741 {offsets = [0, 64], sizes = [2, 32], strides = [1, 1]} : vector<2x128xf32> to vector<2x32xf32>
    %745 = vector.extract_strided_slice %740 {offsets = [0, 96], sizes = [2, 32], strides = [1, 1]} : vector<2x128xf32> to vector<2x32xf32>
    %746 = arith.mulf %743, %712 : vector<2x32xf32>
    %747 = arith.mulf %742, %744 : vector<2x32xf32>
    %748 = arith.addf %746, %747 : vector<2x32xf32>
    %749 = math.tanh %748 : vector<2x32xf32>
    %750 = arith.mulf %745, %749 : vector<2x32xf32>
    %751 = arith.negf %735 : vector<2x128xf32>
    %752 = math.exp %751 : vector<2x128xf32>
    %cst_128 = arith.constant 1.000000e+00 : f32
    %753 = vector.broadcast %cst_128 : f32 to vector<2x128xf32>
    %754 = arith.addf %753, %752 : vector<2x128xf32>
    %755 = arith.divf %753, %754 : vector<2x128xf32>
    %756 = math.tanh %735 : vector<2x128xf32>
    %757 = vector.extract_strided_slice %755 {offsets = [0, 0], sizes = [2, 32], strides = [1, 1]} : vector<2x128xf32> to vector<2x32xf32>
    %758 = vector.extract_strided_slice %755 {offsets = [0, 32], sizes = [2, 32], strides = [1, 1]} : vector<2x128xf32> to vector<2x32xf32>
    %759 = vector.extract_strided_slice %756 {offsets = [0, 64], sizes = [2, 32], strides = [1, 1]} : vector<2x128xf32> to vector<2x32xf32>
    %760 = vector.extract_strided_slice %755 {offsets = [0, 96], sizes = [2, 32], strides = [1, 1]} : vector<2x128xf32> to vector<2x32xf32>
    %761 = arith.mulf %758, %727 : vector<2x32xf32>
    %762 = arith.mulf %757, %759 : vector<2x32xf32>
    %763 = arith.addf %761, %762 : vector<2x32xf32>
    %764 = math.tanh %763 : vector<2x32xf32>
    %765 = arith.mulf %760, %764 : vector<2x32xf32>
    %766 = vector.extract_strided_slice %543 {offsets = [12, 0], sizes = [2, 128], strides = [1, 1]} : vector<16x256xf32> to vector<2x128xf32>
    %cst_129 = arith.constant dense<0.000000e+00> : vector<2x128xf32>
    %767 = tpu.matmul %750, %544, %cst_129 {dimension_numbers = #tpu.dot_dimension_numbers<[1], [0], [0], [1], [0, 0, 1, 1], [], []>} : vector<2x32xf32>, vector<32x128xf32>, vector<2x128xf32> -> vector<2x128xf32>
    %768 = arith.addf %766, %767 : vector<2x128xf32>
    %769 = vector.extract_strided_slice %543 {offsets = [2, 128], sizes = [2, 128], strides = [1, 1]} : vector<16x256xf32> to vector<2x128xf32>
    %cst_130 = arith.constant dense<0.000000e+00> : vector<2x128xf32>
    %770 = tpu.matmul %765, %545, %cst_130 {dimension_numbers = #tpu.dot_dimension_numbers<[1], [0], [0], [1], [0, 0, 1, 1], [], []>} : vector<2x32xf32>, vector<32x128xf32>, vector<2x128xf32> -> vector<2x128xf32>
    %771 = arith.addf %769, %770 : vector<2x128xf32>
    %772 = arith.negf %768 : vector<2x128xf32>
    %773 = math.exp %772 : vector<2x128xf32>
    %cst_131 = arith.constant 1.000000e+00 : f32
    %774 = vector.broadcast %cst_131 : f32 to vector<2x128xf32>
    %775 = arith.addf %774, %773 : vector<2x128xf32>
    %776 = arith.divf %774, %775 : vector<2x128xf32>
    %777 = math.tanh %768 : vector<2x128xf32>
    %778 = vector.extract_strided_slice %776 {offsets = [0, 0], sizes = [2, 32], strides = [1, 1]} : vector<2x128xf32> to vector<2x32xf32>
    %779 = vector.extract_strided_slice %776 {offsets = [0, 32], sizes = [2, 32], strides = [1, 1]} : vector<2x128xf32> to vector<2x32xf32>
    %780 = vector.extract_strided_slice %777 {offsets = [0, 64], sizes = [2, 32], strides = [1, 1]} : vector<2x128xf32> to vector<2x32xf32>
    %781 = vector.extract_strided_slice %776 {offsets = [0, 96], sizes = [2, 32], strides = [1, 1]} : vector<2x128xf32> to vector<2x32xf32>
    %782 = arith.mulf %779, %748 : vector<2x32xf32>
    %783 = arith.mulf %778, %780 : vector<2x32xf32>
    %784 = arith.addf %782, %783 : vector<2x32xf32>
    %785 = math.tanh %784 : vector<2x32xf32>
    %786 = arith.mulf %781, %785 : vector<2x32xf32>
    %787 = arith.negf %771 : vector<2x128xf32>
    %788 = math.exp %787 : vector<2x128xf32>
    %cst_132 = arith.constant 1.000000e+00 : f32
    %789 = vector.broadcast %cst_132 : f32 to vector<2x128xf32>
    %790 = arith.addf %789, %788 : vector<2x128xf32>
    %791 = arith.divf %789, %790 : vector<2x128xf32>
    %792 = math.tanh %771 : vector<2x128xf32>
    %793 = vector.extract_strided_slice %791 {offsets = [0, 0], sizes = [2, 32], strides = [1, 1]} : vector<2x128xf32> to vector<2x32xf32>
    %794 = vector.extract_strided_slice %791 {offsets = [0, 32], sizes = [2, 32], strides = [1, 1]} : vector<2x128xf32> to vector<2x32xf32>
    %795 = vector.extract_strided_slice %792 {offsets = [0, 64], sizes = [2, 32], strides = [1, 1]} : vector<2x128xf32> to vector<2x32xf32>
    %796 = vector.extract_strided_slice %791 {offsets = [0, 96], sizes = [2, 32], strides = [1, 1]} : vector<2x128xf32> to vector<2x32xf32>
    %797 = arith.mulf %794, %763 : vector<2x32xf32>
    %798 = arith.mulf %793, %795 : vector<2x32xf32>
    %799 = arith.addf %797, %798 : vector<2x32xf32>
    %800 = math.tanh %799 : vector<2x32xf32>
    %801 = arith.mulf %796, %800 : vector<2x32xf32>
    %802 = vector.extract_strided_slice %543 {offsets = [14, 0], sizes = [2, 128], strides = [1, 1]} : vector<16x256xf32> to vector<2x128xf32>
    %cst_133 = arith.constant dense<0.000000e+00> : vector<2x128xf32>
    %803 = tpu.matmul %786, %544, %cst_133 {dimension_numbers = #tpu.dot_dimension_numbers<[1], [0], [0], [1], [0, 0, 1, 1], [], []>} : vector<2x32xf32>, vector<32x128xf32>, vector<2x128xf32> -> vector<2x128xf32>
    %804 = arith.addf %802, %803 : vector<2x128xf32>
    %805 = vector.extract_strided_slice %543 {offsets = [0, 128], sizes = [2, 128], strides = [1, 1]} : vector<16x256xf32> to vector<2x128xf32>
    %cst_134 = arith.constant dense<0.000000e+00> : vector<2x128xf32>
    %806 = tpu.matmul %801, %545, %cst_134 {dimension_numbers = #tpu.dot_dimension_numbers<[1], [0], [0], [1], [0, 0, 1, 1], [], []>} : vector<2x32xf32>, vector<32x128xf32>, vector<2x128xf32> -> vector<2x128xf32>
    %807 = arith.addf %805, %806 : vector<2x128xf32>
    %808 = arith.negf %804 : vector<2x128xf32>
    %809 = math.exp %808 : vector<2x128xf32>
    %cst_135 = arith.constant 1.000000e+00 : f32
    %810 = vector.broadcast %cst_135 : f32 to vector<2x128xf32>
    %811 = arith.addf %810, %809 : vector<2x128xf32>
    %812 = arith.divf %810, %811 : vector<2x128xf32>
    %813 = math.tanh %804 : vector<2x128xf32>
    %814 = vector.extract_strided_slice %812 {offsets = [0, 0], sizes = [2, 32], strides = [1, 1]} : vector<2x128xf32> to vector<2x32xf32>
    %815 = vector.extract_strided_slice %812 {offsets = [0, 32], sizes = [2, 32], strides = [1, 1]} : vector<2x128xf32> to vector<2x32xf32>
    %816 = vector.extract_strided_slice %813 {offsets = [0, 64], sizes = [2, 32], strides = [1, 1]} : vector<2x128xf32> to vector<2x32xf32>
    %817 = vector.extract_strided_slice %812 {offsets = [0, 96], sizes = [2, 32], strides = [1, 1]} : vector<2x128xf32> to vector<2x32xf32>
    %818 = arith.mulf %815, %784 : vector<2x32xf32>
    %819 = arith.mulf %814, %816 : vector<2x32xf32>
    %820 = arith.addf %818, %819 : vector<2x32xf32>
    %821 = math.tanh %820 : vector<2x32xf32>
    %822 = arith.mulf %817, %821 : vector<2x32xf32>
    %823 = arith.negf %807 : vector<2x128xf32>
    %824 = math.exp %823 : vector<2x128xf32>
    %cst_136 = arith.constant 1.000000e+00 : f32
    %825 = vector.broadcast %cst_136 : f32 to vector<2x128xf32>
    %826 = arith.addf %825, %824 : vector<2x128xf32>
    %827 = arith.divf %825, %826 : vector<2x128xf32>
    %828 = math.tanh %807 : vector<2x128xf32>
    %829 = vector.extract_strided_slice %827 {offsets = [0, 0], sizes = [2, 32], strides = [1, 1]} : vector<2x128xf32> to vector<2x32xf32>
    %830 = vector.extract_strided_slice %827 {offsets = [0, 32], sizes = [2, 32], strides = [1, 1]} : vector<2x128xf32> to vector<2x32xf32>
    %831 = vector.extract_strided_slice %828 {offsets = [0, 64], sizes = [2, 32], strides = [1, 1]} : vector<2x128xf32> to vector<2x32xf32>
    %832 = vector.extract_strided_slice %827 {offsets = [0, 96], sizes = [2, 32], strides = [1, 1]} : vector<2x128xf32> to vector<2x32xf32>
    %833 = arith.mulf %830, %799 : vector<2x32xf32>
    %834 = arith.mulf %829, %831 : vector<2x32xf32>
    %835 = arith.addf %833, %834 : vector<2x32xf32>
    %836 = math.tanh %835 : vector<2x32xf32>
    %837 = arith.mulf %832, %836 : vector<2x32xf32>
    %838 = arith.addf %570, %822 : vector<2x32xf32>
    %839 = arith.addf %585, %837 : vector<2x32xf32>
    %c0_137 = arith.constant 0 : index
    %c0_138 = arith.constant 0 : index
    %c0_139 = arith.constant 0 : index
    %840 = vector.load %arg2[%c0_137, %c0_138, %c0_139] : memref<4x2x32xf32, #tpu.memory_space<vmem>>, vector<1x2x32xf32>
    %841 = vector.shape_cast %840 : vector<1x2x32xf32> to vector<2x32xf32>
    %c1 = arith.constant 1 : index
    %c0_140 = arith.constant 0 : index
    %c0_141 = arith.constant 0 : index
    %842 = vector.load %arg2[%c1, %c0_140, %c0_141] : memref<4x2x32xf32, #tpu.memory_space<vmem>>, vector<1x2x32xf32>
    %843 = vector.shape_cast %842 : vector<1x2x32xf32> to vector<2x32xf32>
    %844 = arith.addf %841, %843 : vector<2x32xf32>
    %c2 = arith.constant 2 : index
    %c0_142 = arith.constant 0 : index
    %c0_143 = arith.constant 0 : index
    %845 = vector.load %arg2[%c2, %c0_142, %c0_143] : memref<4x2x32xf32, #tpu.memory_space<vmem>>, vector<1x2x32xf32>
    %846 = vector.shape_cast %845 : vector<1x2x32xf32> to vector<2x32xf32>
    %847 = arith.addf %844, %846 : vector<2x32xf32>
    %c3 = arith.constant 3 : index
    %c0_144 = arith.constant 0 : index
    %c0_145 = arith.constant 0 : index
    %848 = vector.load %arg2[%c3, %c0_144, %c0_145] : memref<4x2x32xf32, #tpu.memory_space<vmem>>, vector<1x2x32xf32>
    %849 = vector.shape_cast %848 : vector<1x2x32xf32> to vector<2x32xf32>
    %850 = arith.addf %847, %849 : vector<2x32xf32>
    %cst_146 = arith.constant 2.500000e-01 : f32
    %851 = vector.broadcast %cst_146 : f32 to vector<2x32xf32>
    %852 = arith.mulf %850, %851 : vector<2x32xf32>
    %c0_147 = arith.constant 0 : index
    %c0_148 = arith.constant 0 : index
    %853 = vector.load %arg18[%c0_147, %c0_148] : memref<32x32xf32, #tpu.memory_space<vmem>>, vector<32x32xf32>
    %cst_149 = arith.constant dense<0.000000e+00> : vector<2x32xf32>
    %854 = tpu.matmul %852, %853, %cst_149 {dimension_numbers = #tpu.dot_dimension_numbers<[1], [0], [0], [1], [0, 0, 1, 1], [], []>} : vector<2x32xf32>, vector<32x32xf32>, vector<2x32xf32> -> vector<2x32xf32>
    %c0_150 = arith.constant 0 : index
    %c0_151 = arith.constant 0 : index
    %855 = vector.load %arg19[%c0_150, %c0_151] : memref<1x32xf32, #tpu.memory_space<vmem>>, vector<1x32xf32>
    %856 = vector.broadcast %855 : vector<1x32xf32> to vector<2x32xf32>
    %857 = arith.addf %854, %856 : vector<2x32xf32>
    %c0_152 = arith.constant 0 : index
    %c0_153 = arith.constant 0 : index
    %858 = vector.load %arg20[%c0_152, %c0_153] : memref<1x32xf32, #tpu.memory_space<vmem>>, vector<1x32xf32>
    %c0_154 = arith.constant 0 : index
    %c0_155 = arith.constant 0 : index
    %859 = vector.load %arg21[%c0_154, %c0_155] : memref<1x1xf32, #tpu.memory_space<vmem>>, vector<1x1xf32>
    %860 = vector.broadcast %858 : vector<1x32xf32> to vector<2x32xf32>
    %861 = arith.mulf %838, %860 : vector<2x32xf32>
    %cst_156 = arith.constant dense<0.000000e+00> : vector<2xf32>
    %862 = vector.multi_reduction <add>, %861, %cst_156 [1] : vector<2x32xf32> to vector<2xf32>
    %863 = vector.shape_cast %862 : vector<2xf32> to vector<2x1xf32>
    %864 = vector.broadcast %859 : vector<1x1xf32> to vector<2x1xf32>
    %865 = arith.addf %863, %864 : vector<2x1xf32>
    %866 = vector.broadcast %858 : vector<1x32xf32> to vector<2x32xf32>
    %867 = arith.mulf %839, %866 : vector<2x32xf32>
    %cst_157 = arith.constant dense<0.000000e+00> : vector<2xf32>
    %868 = vector.multi_reduction <add>, %867, %cst_157 [1] : vector<2x32xf32> to vector<2xf32>
    %869 = vector.shape_cast %868 : vector<2xf32> to vector<2x1xf32>
    %870 = vector.broadcast %859 : vector<1x1xf32> to vector<2x1xf32>
    %871 = arith.addf %869, %870 : vector<2x1xf32>
    %872 = arith.maximumf %865, %871 : vector<2x1xf32>
    %873 = arith.subf %865, %872 : vector<2x1xf32>
    %874 = math.exp %873 : vector<2x1xf32>
    %875 = arith.subf %871, %872 : vector<2x1xf32>
    %876 = math.exp %875 : vector<2x1xf32>
    %877 = arith.addf %874, %876 : vector<2x1xf32>
    %878 = tpu.reciprocal %877 {approx = true} : vector<2x1xf32> -> vector<2x1xf32>
    %879 = arith.mulf %874, %878 : vector<2x1xf32>
    %880 = vector.broadcast %879 : vector<2x1xf32> to vector<2x32xf32>
    %881 = arith.mulf %880, %838 : vector<2x32xf32>
    %882 = arith.mulf %876, %878 : vector<2x1xf32>
    %883 = vector.broadcast %882 : vector<2x1xf32> to vector<2x32xf32>
    %884 = arith.mulf %883, %839 : vector<2x32xf32>
    %cst_158 = arith.constant 0.000000e+00 : f32
    %885 = vector.broadcast %cst_158 : f32 to vector<2x32xf32>
    %886 = arith.maximumf %881, %885 : vector<2x32xf32>
    %cst_159 = arith.constant dense<0.000000e+00> : vector<2xf32>
    %887 = vector.multi_reduction <add>, %886, %cst_159 [1] : vector<2x32xf32> to vector<2xf32>
    %888 = vector.shape_cast %887 : vector<2xf32> to vector<2x1xf32>
    %cst_160 = arith.constant dense<0.000000e+00> : vector<1xf32>
    %889 = vector.multi_reduction <add>, %888, %cst_160 [0] : vector<2x1xf32> to vector<1xf32>
    %890 = vector.shape_cast %889 : vector<1xf32> to vector<1x1xf32>
    %cst_161 = arith.constant 1.562500e-02 : f32
    %891 = vector.broadcast %cst_161 : f32 to vector<1x1xf32>
    %892 = arith.mulf %890, %891 : vector<1x1xf32>
    %893 = vector.broadcast %892 : vector<1x1xf32> to vector<2x32xf32>
    %894 = arith.subf %886, %893 : vector<2x32xf32>
    %895 = arith.mulf %894, %894 : vector<2x32xf32>
    %cst_162 = arith.constant dense<0.000000e+00> : vector<2xf32>
    %896 = vector.multi_reduction <add>, %895, %cst_162 [1] : vector<2x32xf32> to vector<2xf32>
    %897 = vector.shape_cast %896 : vector<2xf32> to vector<2x1xf32>
    %cst_163 = arith.constant dense<0.000000e+00> : vector<1xf32>
    %898 = vector.multi_reduction <add>, %897, %cst_163 [0] : vector<2x1xf32> to vector<1xf32>
    %899 = vector.shape_cast %898 : vector<1xf32> to vector<1x1xf32>
    %cst_164 = arith.constant 1.562500e-02 : f32
    %900 = vector.broadcast %cst_164 : f32 to vector<1x1xf32>
    %901 = arith.mulf %899, %900 : vector<1x1xf32>
    %cst_165 = arith.constant 9.99999974E-6 : f32
    %902 = vector.broadcast %cst_165 : f32 to vector<1x1xf32>
    %903 = arith.addf %901, %902 : vector<1x1xf32>
    %904 = math.rsqrt %903 : vector<1x1xf32>
    %905 = vector.broadcast %904 : vector<1x1xf32> to vector<2x32xf32>
    %906 = arith.mulf %894, %905 : vector<2x32xf32>
    %cst_166 = arith.constant 0.000000e+00 : f32
    %907 = vector.broadcast %cst_166 : f32 to vector<2x32xf32>
    %908 = arith.maximumf %884, %907 : vector<2x32xf32>
    %cst_167 = arith.constant dense<0.000000e+00> : vector<2xf32>
    %909 = vector.multi_reduction <add>, %908, %cst_167 [1] : vector<2x32xf32> to vector<2xf32>
    %910 = vector.shape_cast %909 : vector<2xf32> to vector<2x1xf32>
    %cst_168 = arith.constant dense<0.000000e+00> : vector<1xf32>
    %911 = vector.multi_reduction <add>, %910, %cst_168 [0] : vector<2x1xf32> to vector<1xf32>
    %912 = vector.shape_cast %911 : vector<1xf32> to vector<1x1xf32>
    %cst_169 = arith.constant 1.562500e-02 : f32
    %913 = vector.broadcast %cst_169 : f32 to vector<1x1xf32>
    %914 = arith.mulf %912, %913 : vector<1x1xf32>
    %915 = vector.broadcast %914 : vector<1x1xf32> to vector<2x32xf32>
    %916 = arith.subf %908, %915 : vector<2x32xf32>
    %917 = arith.mulf %916, %916 : vector<2x32xf32>
    %cst_170 = arith.constant dense<0.000000e+00> : vector<2xf32>
    %918 = vector.multi_reduction <add>, %917, %cst_170 [1] : vector<2x32xf32> to vector<2xf32>
    %919 = vector.shape_cast %918 : vector<2xf32> to vector<2x1xf32>
    %cst_171 = arith.constant dense<0.000000e+00> : vector<1xf32>
    %920 = vector.multi_reduction <add>, %919, %cst_171 [0] : vector<2x1xf32> to vector<1xf32>
    %921 = vector.shape_cast %920 : vector<1xf32> to vector<1x1xf32>
    %cst_172 = arith.constant 1.562500e-02 : f32
    %922 = vector.broadcast %cst_172 : f32 to vector<1x1xf32>
    %923 = arith.mulf %921, %922 : vector<1x1xf32>
    %cst_173 = arith.constant 9.99999974E-6 : f32
    %924 = vector.broadcast %cst_173 : f32 to vector<1x1xf32>
    %925 = arith.addf %923, %924 : vector<1x1xf32>
    %926 = math.rsqrt %925 : vector<1x1xf32>
    %927 = vector.broadcast %926 : vector<1x1xf32> to vector<2x32xf32>
    %928 = arith.mulf %916, %927 : vector<2x32xf32>
    %cst_174 = arith.constant 0.000000e+00 : f32
    %929 = vector.broadcast %cst_174 : f32 to vector<2x32xf32>
    %930 = arith.maximumf %857, %929 : vector<2x32xf32>
    %cst_175 = arith.constant dense<0.000000e+00> : vector<2xf32>
    %931 = vector.multi_reduction <add>, %930, %cst_175 [1] : vector<2x32xf32> to vector<2xf32>
    %932 = vector.shape_cast %931 : vector<2xf32> to vector<2x1xf32>
    %cst_176 = arith.constant dense<0.000000e+00> : vector<1xf32>
    %933 = vector.multi_reduction <add>, %932, %cst_176 [0] : vector<2x1xf32> to vector<1xf32>
    %934 = vector.shape_cast %933 : vector<1xf32> to vector<1x1xf32>
    %cst_177 = arith.constant 1.562500e-02 : f32
    %935 = vector.broadcast %cst_177 : f32 to vector<1x1xf32>
    %936 = arith.mulf %934, %935 : vector<1x1xf32>
    %937 = vector.broadcast %936 : vector<1x1xf32> to vector<2x32xf32>
    %938 = arith.subf %930, %937 : vector<2x32xf32>
    %939 = arith.mulf %938, %938 : vector<2x32xf32>
    %cst_178 = arith.constant dense<0.000000e+00> : vector<2xf32>
    %940 = vector.multi_reduction <add>, %939, %cst_178 [1] : vector<2x32xf32> to vector<2xf32>
    %941 = vector.shape_cast %940 : vector<2xf32> to vector<2x1xf32>
    %cst_179 = arith.constant dense<0.000000e+00> : vector<1xf32>
    %942 = vector.multi_reduction <add>, %941, %cst_179 [0] : vector<2x1xf32> to vector<1xf32>
    %943 = vector.shape_cast %942 : vector<1xf32> to vector<1x1xf32>
    %cst_180 = arith.constant 1.562500e-02 : f32
    %944 = vector.broadcast %cst_180 : f32 to vector<1x1xf32>
    %945 = arith.mulf %943, %944 : vector<1x1xf32>
    %cst_181 = arith.constant 9.99999974E-6 : f32
    %946 = vector.broadcast %cst_181 : f32 to vector<1x1xf32>
    %947 = arith.addf %945, %946 : vector<1x1xf32>
    %948 = math.rsqrt %947 : vector<1x1xf32>
    %949 = vector.broadcast %948 : vector<1x1xf32> to vector<2x32xf32>
    %950 = arith.mulf %938, %949 : vector<2x32xf32>
    %cst_182 = arith.constant 0.000000e+00 : f32
    %951 = vector.broadcast %cst_182 : f32 to vector<2x32xf32>
    %952 = arith.maximumf %233, %951 : vector<2x32xf32>
    %cst_183 = arith.constant dense<0.000000e+00> : vector<2xf32>
    %953 = vector.multi_reduction <add>, %952, %cst_183 [1] : vector<2x32xf32> to vector<2xf32>
    %954 = vector.shape_cast %953 : vector<2xf32> to vector<2x1xf32>
    %cst_184 = arith.constant dense<0.000000e+00> : vector<1xf32>
    %955 = vector.multi_reduction <add>, %954, %cst_184 [0] : vector<2x1xf32> to vector<1xf32>
    %956 = vector.shape_cast %955 : vector<1xf32> to vector<1x1xf32>
    %cst_185 = arith.constant 1.562500e-02 : f32
    %957 = vector.broadcast %cst_185 : f32 to vector<1x1xf32>
    %958 = arith.mulf %956, %957 : vector<1x1xf32>
    %959 = vector.broadcast %958 : vector<1x1xf32> to vector<2x32xf32>
    %960 = arith.subf %952, %959 : vector<2x32xf32>
    %961 = arith.mulf %960, %960 : vector<2x32xf32>
    %cst_186 = arith.constant dense<0.000000e+00> : vector<2xf32>
    %962 = vector.multi_reduction <add>, %961, %cst_186 [1] : vector<2x32xf32> to vector<2xf32>
    %963 = vector.shape_cast %962 : vector<2xf32> to vector<2x1xf32>
    %cst_187 = arith.constant dense<0.000000e+00> : vector<1xf32>
    %964 = vector.multi_reduction <add>, %963, %cst_187 [0] : vector<2x1xf32> to vector<1xf32>
    %965 = vector.shape_cast %964 : vector<1xf32> to vector<1x1xf32>
    %cst_188 = arith.constant 1.562500e-02 : f32
    %966 = vector.broadcast %cst_188 : f32 to vector<1x1xf32>
    %967 = arith.mulf %965, %966 : vector<1x1xf32>
    %cst_189 = arith.constant 9.99999974E-6 : f32
    %968 = vector.broadcast %cst_189 : f32 to vector<1x1xf32>
    %969 = arith.addf %967, %968 : vector<1x1xf32>
    %970 = math.rsqrt %969 : vector<1x1xf32>
    %971 = vector.broadcast %970 : vector<1x1xf32> to vector<2x32xf32>
    %972 = arith.mulf %960, %971 : vector<2x32xf32>
    %973 = tpu.concatenate %906, %928, %950, %972 in 1 : vector<2x32xf32>, vector<2x32xf32>, vector<2x32xf32>, vector<2x32xf32> -> vector<2x128xf32>
    %c0_190 = arith.constant 0 : index
    %c0_191 = arith.constant 0 : index
    %974 = vector.load %arg22[%c0_190, %c0_191] : memref<128x16xf32, #tpu.memory_space<vmem>>, vector<128x16xf32>
    %cst_192 = arith.constant dense<0.000000e+00> : vector<2x16xf32>
    %975 = tpu.matmul %973, %974, %cst_192 {dimension_numbers = #tpu.dot_dimension_numbers<[1], [0], [0], [1], [0, 0, 1, 1], [], []>} : vector<2x128xf32>, vector<128x16xf32>, vector<2x16xf32> -> vector<2x16xf32>
    %c0_193 = arith.constant 0 : index
    %c0_194 = arith.constant 0 : index
    %976 = vector.load %arg23[%c0_193, %c0_194] : memref<1x16xf32, #tpu.memory_space<vmem>>, vector<1x16xf32>
    %977 = vector.broadcast %976 : vector<1x16xf32> to vector<2x16xf32>
    %978 = arith.addf %975, %977 : vector<2x16xf32>
    %cst_195 = arith.constant dense<0xFF800000> : vector<2xf32>
    %979 = vector.multi_reduction <maximumf>, %978, %cst_195 [1] : vector<2x16xf32> to vector<2xf32>
    %980 = vector.shape_cast %979 : vector<2xf32> to vector<2x1xf32>
    %981 = vector.broadcast %980 : vector<2x1xf32> to vector<2x16xf32>
    %982 = arith.subf %978, %981 : vector<2x16xf32>
    %983 = math.exp %982 : vector<2x16xf32>
    %cst_196 = arith.constant dense<0.000000e+00> : vector<2xf32>
    %984 = vector.multi_reduction <add>, %983, %cst_196 [1] : vector<2x16xf32> to vector<2xf32>
    %985 = vector.shape_cast %984 : vector<2xf32> to vector<2x1xf32>
    %986 = vector.broadcast %985 : vector<2x1xf32> to vector<2x16xf32>
    %987 = arith.divf %983, %986 : vector<2x16xf32>
    %c0_197 = arith.constant 0 : index
    %c0_198 = arith.constant 0 : index
    %988 = vector.load %arg24[%c0_197, %c0_198] : memref<16x16xf32, #tpu.memory_space<vmem>>, vector<16x16xf32>
    %cst_199 = arith.constant dense<0.000000e+00> : vector<2x16xf32>
    %989 = tpu.matmul %987, %988, %cst_199 {dimension_numbers = #tpu.dot_dimension_numbers<[1], [0], [0], [1], [0, 0, 1, 1], [], []>} : vector<2x16xf32>, vector<16x16xf32>, vector<2x16xf32> -> vector<2x16xf32>
    %cst_200 = arith.constant 1.000000e-10 : f32
    %cst_201 = arith.constant 1.000000e+00 : f32
    %990 = vector.broadcast %cst_200 : f32 to vector<2x16xf32>
    %991 = arith.maximumf %990, %989 : vector<2x16xf32>
    %992 = vector.broadcast %cst_201 : f32 to vector<2x16xf32>
    %993 = arith.minimumf %992, %991 : vector<2x16xf32>
    %c0_202 = arith.constant 0 : index
    %c0_203 = arith.constant 0 : index
    %994 = vector.load %arg25[%c0_202, %c0_203] : memref<2x16xf32, #tpu.memory_space<vmem>>, vector<2x16xf32>
    tpu.vector_store %arg25[%c0_202, %c0_203], %993 {strides = array<i32>} : memref<2x16xf32, #tpu.memory_space<vmem>>, vector<2x16xf32>,
    return
  }
}

</mosaic_0001>

<llo_original>
// kernel: nfetc_forward.1
$region0: #{nfetc_forward.1}
  #allocation0 [shape = 'u32[]', space=smem, size = 0x4, offset = 0x4, fixed_abs, tag = 'smem constant byte address 0x4 - core index']
  #allocation1 [shape = 'u32[144,128]{1,0:T(1,128)}', space=vmem, size = 0x12000, scoped, tag = 'internal scratch']
  #allocation2 [shape = 'f32[1,1]{1,0:T(1,128)S(1)}', space=vmem, size = 0x200, scoped, tag = 'scoped memory for nfetc_forward.1']
  %s0 = inlined_call_operand.vmem [shape: f32[12,32], index: 0, kind: input, shape index: {}]
  %s1 = inlined_call_operand.vmem [shape: f32[16,32], index: 1, kind: input, shape index: {}]
  %s2 = inlined_call_operand.vmem [shape: f32[4,2,32], index: 2, kind: input, shape index: {}]
  %s3 = inlined_call_operand.vmem [shape: f32[32,128], index: 3, kind: input, shape index: {}]
  %s4 = inlined_call_operand.vmem [shape: f32[32,128], index: 4, kind: input, shape index: {}]
  %s5 = inlined_call_operand.vmem [shape: f32[1,128], index: 5, kind: input, shape index: {}]
  %s6 = inlined_call_operand.vmem [shape: f32[32,128], index: 6, kind: input, shape index: {}]
  %s7 = inlined_call_operand.vmem [shape: f32[32,128], index: 7, kind: input, shape index: {}]
  %s8 = inlined_call_operand.vmem [shape: f32[1,128], index: 8, kind: input, shape index: {}]
  %s9 = inlined_call_operand.vmem [shape: f32[32,256], index: 9, kind: input, shape index: {}]
  %s10 = inlined_call_operand.vmem [shape: f32[32,128], index: 10, kind: input, shape index: {}]
  %s11 = inlined_call_operand.vmem [shape: f32[32,128], index: 11, kind: input, shape index: {}]
  %s12 = inlined_call_operand.vmem [shape: f32[1,256], index: 12, kind: input, shape index: {}]
  %s13 = inlined_call_operand.vmem [shape: f32[32,256], index: 13, kind: input, shape index: {}]
  %s14 = inlined_call_operand.vmem [shape: f32[32,256], index: 14, kind: input, shape index: {}]
  %s15 = inlined_call_operand.vmem [shape: f32[32,128], index: 15, kind: input, shape index: {}]
  %s16 = inlined_call_operand.vmem [shape: f32[32,128], index: 16, kind: input, shape index: {}]
  %s17 = inlined_call_operand.vmem [shape: f32[1,256], index: 17, kind: input, shape index: {}]
  %s18 = inlined_call_operand.vmem [shape: f32[32,32], index: 18, kind: input, shape index: {}]
  %s19 = inlined_call_operand.vmem [shape: f32[1,32], index: 19, kind: input, shape index: {}]
  %s20 = inlined_call_operand.vmem [shape: f32[1,32], index: 20, kind: input, shape index: {}]
  %s21 = inlined_call_operand.<no memory space> [shape: f32[1,1], index: 21, kind: input, shape index: {}]
  %s22 = inlined_call_operand.vmem [shape: f32[128,16], index: 22, kind: input, shape index: {}]
  %s23 = inlined_call_operand.vmem [shape: f32[1,16], index: 23, kind: input, shape index: {}]
  %s24 = inlined_call_operand.vmem [shape: f32[16,16], index: 24, kind: input, shape index: {}]
  %s25 = inlined_call_operand.hbm [shape: f32[2,16], index: 25, kind: output, shape index: {}]
  %s26 = sld [smem:[#allocation0]]
  $region110: #{nfetc_forward.1} parent=0
    _
  %s28 = ssub.s32 1, %s26
  %s29 = scalar_select 0, %s28, %s26
  %v30 = vstv %s21
  %31 = vst [vmem:[#allocation2] sm:$0x1] %v30
  $region1: #{nfetc_forward.1} parent=0
    #allocation3 [shape = 'u8[1024]{0}', space=vmem, size = 0x400, scoped, tag = 'output window, operand 0, single buffered']
    #allocation4 [shape = 's32[1]{0}', space=sflag, size = 0x4, scoped, tag = 'scoped memory for nfetc_forward.1']
    %32 = vsyncpa [#allocation4], 0
    // Predicated region
    $region2: #{nfetc_forward.1} parent=1 // pred_check
      _
    $region3: #{nfetc_forward.1} parent=1 // pred_check_branch
      %34 = sbr.rel (0) target = $region5
    $region4: #{nfetc_forward.1} parent=1 // pred_region
      _
    $region5: #{nfetc_forward.1} parent=1 // pred_fallthru
      _
    // Predicated region
    $region6: #{nfetc_forward.1} parent=1 // pred_check
      _
    $region7: #{nfetc_forward.1} parent=1 // pred_check_branch
      %36 = sbr.rel (0) target = $region9
    $region8: #{nfetc_forward.1} parent=1 // pred_region
      _
    $region9: #{nfetc_forward.1} parent=1 // pred_fallthru
      _
    // Predicated region
    $region10: #{nfetc_forward.1} parent=1 // pred_check
      _
    $region11: #{nfetc_forward.1} parent=1 // pred_check_branch
      %38 = sbr.rel (0) target = $region13
    $region12: #{nfetc_forward.1} parent=1 // pred_region
      _
    $region13: #{nfetc_forward.1} parent=1 // pred_fallthru
      _
    // Predicated region
    $region14: #{nfetc_forward.1} parent=1 // pred_check
      _
    $region15: #{nfetc_forward.1} parent=1 // pred_check_branch
      %40 = sbr.rel (0) target = $region17
    $region16: #{nfetc_forward.1} parent=1 // pred_region
      _
    $region17: #{nfetc_forward.1} parent=1 // pred_fallthru
      _
    // Predicated region
    $region18: #{nfetc_forward.1} parent=1 // pred_check
      _
    $region19: #{nfetc_forward.1} parent=1 // pred_check_branch
      %42 = sbr.rel (0) target = $region21
    $region20: #{nfetc_forward.1} parent=1 // pred_region
      _
    $region21: #{nfetc_forward.1} parent=1 // pred_fallthru
      _
    // Predicated region
    $region22: #{nfetc_forward.1} parent=1 // pred_check
      _
    $region23: #{nfetc_forward.1} parent=1 // pred_check_branch
      %44 = sbr.rel (0) target = $region25
    $region24: #{nfetc_forward.1} parent=1 // pred_region
      _
    $region25: #{nfetc_forward.1} parent=1 // pred_fallthru
      _
    // Predicated region
    $region26: #{nfetc_forward.1} parent=1 // pred_check
      _
    $region27: #{nfetc_forward.1} parent=1 // pred_check_branch
      %46 = sbr.rel (0) target = $region29
    $region28: #{nfetc_forward.1} parent=1 // pred_region
      _
    $region29: #{nfetc_forward.1} parent=1 // pred_fallthru
      _
    // Predicated region
    $region30: #{nfetc_forward.1} parent=1 // pred_check
      _
    $region31: #{nfetc_forward.1} parent=1 // pred_check_branch
      %48 = sbr.rel (0) target = $region33
    $region32: #{nfetc_forward.1} parent=1 // pred_region
      _
    $region33: #{nfetc_forward.1} parent=1 // pred_fallthru
      _
    // Predicated region
    $region34: #{nfetc_forward.1} parent=1 // pred_check
      _
    $region35: #{nfetc_forward.1} parent=1 // pred_check_branch
      %50 = sbr.rel (0) target = $region37
    $region36: #{nfetc_forward.1} parent=1 // pred_region
      _
    $region37: #{nfetc_forward.1} parent=1 // pred_fallthru
      _
    // Predicated region
    $region38: #{nfetc_forward.1} parent=1 // pred_check
      _
    $region39: #{nfetc_forward.1} parent=1 // pred_check_branch
      %52 = sbr.rel (0) target = $region41
    $region40: #{nfetc_forward.1} parent=1 // pred_region
      _
    $region41: #{nfetc_forward.1} parent=1 // pred_fallthru
      _
    // Predicated region
    $region42: #{nfetc_forward.1} parent=1 // pred_check
      _
    $region43: #{nfetc_forward.1} parent=1 // pred_check_branch
      %54 = sbr.rel (0) target = $region45
    $region44: #{nfetc_forward.1} parent=1 // pred_region
      _
    $region45: #{nfetc_forward.1} parent=1 // pred_fallthru
      _
    // Predicated region
    $region46: #{nfetc_forward.1} parent=1 // pred_check
      _
    $region47: #{nfetc_forward.1} parent=1 // pred_check_branch
      %56 = sbr.rel (0) target = $region49
    $region48: #{nfetc_forward.1} parent=1 // pred_region
      _
    $region49: #{nfetc_forward.1} parent=1 // pred_fallthru
      _
    // Predicated region
    $region50: #{nfetc_forward.1} parent=1 // pred_check
      _
    $region51: #{nfetc_forward.1} parent=1 // pred_check_branch
      %58 = sbr.rel (0) target = $region53
    $region52: #{nfetc_forward.1} parent=1 // pred_region
      _
    $region53: #{nfetc_forward.1} parent=1 // pred_fallthru
      _
    // Predicated region
    $region54: #{nfetc_forward.1} parent=1 // pred_check
      _
    $region55: #{nfetc_forward.1} parent=1 // pred_check_branch
      %60 = sbr.rel (0) target = $region57
    $region56: #{nfetc_forward.1} parent=1 // pred_region
      _
    $region57: #{nfetc_forward.1} parent=1 // pred_fallthru
      _
    // Predicated region
    $region58: #{nfetc_forward.1} parent=1 // pred_check
      _
    $region59: #{nfetc_forward.1} parent=1 // pred_check_branch
      %62 = sbr.rel (0) target = $region61
    $region60: #{nfetc_forward.1} parent=1 // pred_region
      _
    $region61: #{nfetc_forward.1} parent=1 // pred_fallthru
      _
    // Predicated region
    $region62: #{nfetc_forward.1} parent=1 // pred_check
      _
    $region63: #{nfetc_forward.1} parent=1 // pred_check_branch
      %64 = sbr.rel (0) target = $region65
    $region64: #{nfetc_forward.1} parent=1 // pred_region
      _
    $region65: #{nfetc_forward.1} parent=1 // pred_fallthru
      _
    // Predicated region
    $region66: #{nfetc_forward.1} parent=1 // pred_check
      _
    $region67: #{nfetc_forward.1} parent=1 // pred_check_branch
      %66 = sbr.rel (0) target = $region69
    $region68: #{nfetc_forward.1} parent=1 // pred_region
      _
    $region69: #{nfetc_forward.1} parent=1 // pred_fallthru
      _
    // Predicated region
    $region70: #{nfetc_forward.1} parent=1 // pred_check
      _
    $region71: #{nfetc_forward.1} parent=1 // pred_check_branch
      %68 = sbr.rel (0) target = $region73
    $region72: #{nfetc_forward.1} parent=1 // pred_region
      _
    $region73: #{nfetc_forward.1} parent=1 // pred_fallthru
      _
    // Predicated region
    $region74: #{nfetc_forward.1} parent=1 // pred_check
      _
    $region75: #{nfetc_forward.1} parent=1 // pred_check_branch
      %70 = sbr.rel (0) target = $region77
    $region76: #{nfetc_forward.1} parent=1 // pred_region
      _
    $region77: #{nfetc_forward.1} parent=1 // pred_fallthru
      _
    // Predicated region
    $region78: #{nfetc_forward.1} parent=1 // pred_check
      _
    $region79: #{nfetc_forward.1} parent=1 // pred_check_branch
      %72 = sbr.rel (0) target = $region81
    $region80: #{nfetc_forward.1} parent=1 // pred_region
      _
    $region81: #{nfetc_forward.1} parent=1 // pred_fallthru
      _
    // Predicated region
    $region82: #{nfetc_forward.1} parent=1 // pred_check
      _
    $region83: #{nfetc_forward.1} parent=1 // pred_check_branch
      %74 = sbr.rel (0) target = $region85
    $region84: #{nfetc_forward.1} parent=1 // pred_region
      _
    $region85: #{nfetc_forward.1} parent=1 // pred_fallthru
      _
    // Predicated region
    $region86: #{nfetc_forward.1} parent=1 // pred_check
      _
    $region87: #{nfetc_forward.1} parent=1 // pred_check_branch
      %76 = sbr.rel (0) target = $region89
    $region88: #{nfetc_forward.1} parent=1 // pred_region
      _
    $region89: #{nfetc_forward.1} parent=1 // pred_fallthru
      _
    // Predicated region
    $region90: #{nfetc_forward.1} parent=1 // pred_check
      _
    $region91: #{nfetc_forward.1} parent=1 // pred_check_branch
      %78 = sbr.rel (0) target = $region93
    $region92: #{nfetc_forward.1} parent=1 // pred_region
      _
    $region93: #{nfetc_forward.1} parent=1 // pred_fallthru
      _
    // Predicated region
    $region94: #{nfetc_forward.1} parent=1 // pred_check
      _
    $region95: #{nfetc_forward.1} parent=1 // pred_check_branch
      %80 = sbr.rel (0) target = $region97
    $region96: #{nfetc_forward.1} parent=1 // pred_region
      _
    $region97: #{nfetc_forward.1} parent=1 // pred_fallthru
      _
    // Predicated region
    $region98: #{nfetc_forward.1} parent=1 // pred_check
      _
    $region99: #{nfetc_forward.1} parent=1 // pred_check_branch
      %82 = sbr.rel (0) target = $region101
    $region100: #{nfetc_forward.1} parent=1 // pred_region
      _
    $region101: #{nfetc_forward.1} parent=1 // pred_fallthru
      _
    %v83 = vld [vmem:[%s0] sm:$0xff]
    %v84 = vld [vmem:[%s0 + $0x8] sm:$0xf]
    %v85 = vld [vmem:[%s3] sm:$0xff]
    %v86 = vld [vmem:[%s3 + $0x8] sm:$0xff]
    %v87 = vld [vmem:[%s3 + $0x10] sm:$0xff]
    %v88 = vld [vmem:[%s3 + $0x18] sm:$0xff]
    %v89 = vld [vmem:[%s5] sm:$0x1]
    %v91 = vlaneseq
    %v92 = vshrl.u32 %v91, 7
    %v93 = vsub.s32 0, %v92
    %v94 = vrot.slane %v89, %v93
    %vm96 = vcmask 261120
    %v98 = vsel %vm96, %v83, 0
    %v101 = vsel %vm96, %v84, 0
    %103 = vmatprep.subr.mxu0 0.0
    %104 = vmatpush1.msra.mxu0 %v85
    %105 = vmatprep.subr.mxu0 0.0
    %106 = vmatpush1.msra.mxu0 %v86
    %107 = vmatprep.subr.mxu0 0.0
    %108 = vmatpush1.msra.mxu0 %v87
    %109 = vmatprep.subr.mxu0 0.0
    %110 = vmatpush1.msra.mxu0 %v88
    %111 = vmatprep.subr.mxu0 0.0
    %112 = vmatpush1.msra.mxu0 0.0
    %113 = vmatprep.subr.mxu0 0.0
    %114 = vmatpush1.msra.mxu0 0.0
    %115 = vmatprep.subr.mxu0 0.0
    %116 = vmatpush1.msra.mxu0 0.0
    %117 = vmatprep.subr.mxu0 0.0
    %118 = vmatpush1.msra.mxu0 0.0
    %119 = vmatprep.subr.mxu0 0.0
    %120 = vmatpush1.msra.mxu0 0.0
    %121 = vmatprep.subr.mxu0 0.0
    %122 = vmatpush1.msra.mxu0 0.0
    %123 = vmatprep.subr.mxu0 0.0
    %124 = vmatpush1.msra.mxu0 0.0
    %125 = vmatprep.subr.mxu0 0.0
    %126 = vmatpush1.msra.mxu0 0.0
    %127 = vmatprep.subr.mxu0 0.0
    %128 = vmatpush1.msra.mxu0 0.0
    %129 = vmatprep.subr.mxu0 0.0
    %130 = vmatpush1.msra.mxu0 0.0
    %131 = vmatprep.subr.mxu0 0.0
    %132 = vmatpush1.msra.mxu0 0.0
    %133 = vmatprep.subr.mxu0 0.0
    %134 = vmatpush1.msra.mxu0 0.0
    %135 = vmatprep.subr.mxu0 0.0
    %136 = vmatpush1.msra.mxu0 0.0
    %137 = vmatprep.subr.mxu0 0.0
    %138 = vmatpush1.msra.mxu0 0.0
    %139 = vmatprep.subr.mxu0 0.0
    %140 = vmatpush1.msra.mxu0 0.0
    %141 = vmatprep.subr.mxu0 0.0
    %142 = vmatpush1.msra.mxu0 0.0
    %143 = vmatprep.subr.mxu0 0.0
    %144 = vmatpush1.msra.mxu0 0.0
    %145 = vmatprep.subr.mxu0 0.0
    %146 = vmatpush1.msra.mxu0 0.0
    %147 = vmatprep.subr.mxu0 0.0
    %148 = vmatpush1.msra.mxu0 0.0
    %149 = vmatprep.subr.mxu0 0.0
    %150 = vmatpush1.msra.mxu0 0.0
    %151 = vmatprep.subr.mxu0 0.0
    %152 = vmatpush1.msra.mxu0 0.0
    %153 = vmatprep.subr.mxu0 0.0
    %154 = vmatpush1.msra.mxu0 0.0
    %155 = vmatprep.subr.mxu0 0.0
    %156 = vmatpush1.msra.mxu0 0.0
    %157 = vmatprep.subr.mxu0 0.0
    %158 = vmatpush1.msra.mxu0 0.0
    %159 = vmatprep.subr.mxu0 0.0
    %160 = vmatpush1.msra.mxu0 0.0
    %161 = vmatprep.subr.mxu0 0.0
    %162 = vmatpush1.msra.mxu0 0.0
    %163 = vmatprep.subr.mxu0 0.0
    %164 = vmatpush1.msra.mxu0 0.0
    %165 = vmatprep.subr.mxu0 0.0
    %166 = vmatpush1.msra.mxu0 0.0
    %167 = vmatprep.mubr.f32.mxu0 0.0
    %168 = vmatmul.mubr.f32.gmra.mrb[0].mxu0 %v98
    %v169 = vpop.f32.mrb[0].mxu0
    %v170 = vadd.f32 %v94, %v169
    %v171 = vpop.f32.mrb[0].mxu0
    %172 = vmatprep.mubr.f32.mxu0 0.0
    %173 = vmatmul.mubr.f32.gmra.mrb[0].mxu0 %v101
    %v174 = vpop.f32.mrb[0].mxu0
    %v175 = vadd.f32 %v94, %v174
    %v176 = vpop.f32.mrb[0].mxu0
    %177 = vdwg.mxu0
    %v178 = vld [vmem:[%s4] sm:$0xff]
    %v179 = vld [vmem:[%s4 + $0x8] sm:$0xff]
    %v180 = vld [vmem:[%s4 + $0x10] sm:$0xff]
    %v181 = vld [vmem:[%s4 + $0x18] sm:$0xff]
    %v183 = vsel %vm96, 0.0, 0
    %185 = vmatprep.subr.mxu0 0.0
    %186 = vmatpush1.msra.mxu0 %v178
    %187 = vmatprep.subr.mxu0 0.0
    %188 = vmatpush1.msra.mxu0 %v179
    %189 = vmatprep.subr.mxu0 0.0
    %190 = vmatpush1.msra.mxu0 %v180
    %191 = vmatprep.subr.mxu0 0.0
    %192 = vmatpush1.msra.mxu0 %v181
    %193 = vmatprep.subr.mxu0 0.0
    %194 = vmatpush1.msra.mxu0 0.0
    %195 = vmatprep.subr.mxu0 0.0
    %196 = vmatpush1.msra.mxu0 0.0
    %197 = vmatprep.subr.mxu0 0.0
    %198 = vmatpush1.msra.mxu0 0.0
    %199 = vmatprep.subr.mxu0 0.0
    %200 = vmatpush1.msra.mxu0 0.0
    %201 = vmatprep.subr.mxu0 0.0
    %202 = vmatpush1.msra.mxu0 0.0
    %203 = vmatprep.subr.mxu0 0.0
    %204 = vmatpush1.msra.mxu0 0.0
    %205 = vmatprep.subr.mxu0 0.0
    %206 = vmatpush1.msra.mxu0 0.0
    %207 = vmatprep.subr.mxu0 0.0
    %208 = vmatpush1.msra.mxu0 0.0
    %209 = vmatprep.subr.mxu0 0.0
    %210 = vmatpush1.msra.mxu0 0.0
    %211 = vmatprep.subr.mxu0 0.0
    %212 = vmatpush1.msra.mxu0 0.0
    %213 = vmatprep.subr.mxu0 0.0
    %214 = vmatpush1.msra.mxu0 0.0
    %215 = vmatprep.subr.mxu0 0.0
    %216 = vmatpush1.msra.mxu0 0.0
    %217 = vmatprep.subr.mxu0 0.0
    %218 = vmatpush1.msra.mxu0 0.0
    %219 = vmatprep.subr.mxu0 0.0
    %220 = vmatpush1.msra.mxu0 0.0
    %221 = vmatprep.subr.mxu0 0.0
    %222 = vmatpush1.msra.mxu0 0.0
    %223 = vmatprep.subr.mxu0 0.0
    %224 = vmatpush1.msra.mxu0 0.0
    %225 = vmatprep.subr.mxu0 0.0
    %226 = vmatpush1.msra.mxu0 0.0
    %227 = vmatprep.subr.mxu0 0.0
    %228 = vmatpush1.msra.mxu0 0.0
    %229 = vmatprep.subr.mxu0 0.0
    %230 = vmatpush1.msra.mxu0 0.0
    %231 = vmatprep.subr.mxu0 0.0
    %232 = vmatpush1.msra.mxu0 0.0
    %233 = vmatprep.subr.mxu0 0.0
    %234 = vmatpush1.msra.mxu0 0.0
    %235 = vmatprep.subr.mxu0 0.0
    %236 = vmatpush1.msra.mxu0 0.0
    %237 = vmatprep.subr.mxu0 0.0
    %238 = vmatpush1.msra.mxu0 0.0
    %239 = vmatprep.subr.mxu0 0.0
    %240 = vmatpush1.msra.mxu0 0.0
    %241 = vmatprep.subr.mxu0 0.0
    %242 = vmatpush1.msra.mxu0 0.0
    %243 = vmatprep.subr.mxu0 0.0
    %244 = vmatpush1.msra.mxu0 0.0
    %245 = vmatprep.subr.mxu0 0.0
    %246 = vmatpush1.msra.mxu0 0.0
    %247 = vmatprep.subr.mxu0 0.0
    %248 = vmatpush1.msra.mxu0 0.0
    %249 = vmatprep.mubr.f32.mxu0 0.0
    %250 = vmatmul.mubr.f32.gmra.mrb[0].mxu0 %v183
    %v251 = vpop.f32.mrb[0].mxu0
    %v252 = vadd.f32 0.0, %v251
    %v253 = vpop.f32.mrb[0].mxu0
    %254 = vdwg.mxu0
    %v255 = vadd.f32 %v170, %v252
    %v256 = vxor.u32 %v255, 2147483648
    %v257 = vmul.f32 %v256, 1.442695
    %v258 = vpow.pop %v257
    %v259 = vadd.f32 %v258, 1.0
    %v260 = vrcp.pop %v259
    %v261 = vmul.f32 1.0, %v260
    %v262 = vtanh.pop %v255
    %v263 = vmul.f32 %v261, 0.0
    %265 = vrot.lane.b32.xlu0 %v262, 64
    %v266 = vpop.permute.xlu0 %265
    %v268 = vmul.f32 %v261, %v266
    %270 = vrot.lane.b32.xlu0 %v268, 32
    %v271 = vpop.permute.xlu0 %270
    %v273 = vadd.f32 %v263, %v271
    %v274 = vtanh.pop %v273
    %276 = vrot.lane.b32.xlu0 %v274, 64
    %v277 = vpop.permute.xlu0 %276
    %v279 = vmul.f32 %v261, %v277
    %281 = vrot.lane.b32.xlu0 %v279, 32
    %v282 = vpop.permute.xlu0 %281
    %v283 = vsel %vm96, %v282, 0
    %285 = vmatprep.subr.mxu0 0.0
    %286 = vmatpush1.msra.mxu0 %v178
    %287 = vmatprep.subr.mxu0 0.0
    %288 = vmatpush1.msra.mxu0 %v179
    %289 = vmatprep.subr.mxu0 0.0
    %290 = vmatpush1.msra.mxu0 %v180
    %291 = vmatprep.subr.mxu0 0.0
    %292 = vmatpush1.msra.mxu0 %v181
    %293 = vmatprep.subr.mxu0 0.0
    %294 = vmatpush1.msra.mxu0 0.0
    %295 = vmatprep.subr.mxu0 0.0
    %296 = vmatpush1.msra.mxu0 0.0
    %297 = vmatprep.subr.mxu0 0.0
    %298 = vmatpush1.msra.mxu0 0.0
    %299 = vmatprep.subr.mxu0 0.0
    %300 = vmatpush1.msra.mxu0 0.0
    %301 = vmatprep.subr.mxu0 0.0
    %302 = vmatpush1.msra.mxu0 0.0
    %303 = vmatprep.subr.mxu0 0.0
    %304 = vmatpush1.msra.mxu0 0.0
    %305 = vmatprep.subr.mxu0 0.0
    %306 = vmatpush1.msra.mxu0 0.0
    %307 = vmatprep.subr.mxu0 0.0
    %308 = vmatpush1.msra.mxu0 0.0
    %309 = vmatprep.subr.mxu0 0.0
    %310 = vmatpush1.msra.mxu0 0.0
    %311 = vmatprep.subr.mxu0 0.0
    %312 = vmatpush1.msra.mxu0 0.0
    %313 = vmatprep.subr.mxu0 0.0
    %314 = vmatpush1.msra.mxu0 0.0
    %315 = vmatprep.subr.mxu0 0.0
    %316 = vmatpush1.msra.mxu0 0.0
    %317 = vmatprep.subr.mxu0 0.0
    %318 = vmatpush1.msra.mxu0 0.0
    %319 = vmatprep.subr.mxu0 0.0
    %320 = vmatpush1.msra.mxu0 0.0
    %321 = vmatprep.subr.mxu0 0.0
    %322 = vmatpush1.msra.mxu0 0.0
    %323 = vmatprep.subr.mxu0 0.0
    %324 = vmatpush1.msra.mxu0 0.0
    %325 = vmatprep.subr.mxu0 0.0
    %326 = vmatpush1.msra.mxu0 0.0
    %327 = vmatprep.subr.mxu0 0.0
    %328 = vmatpush1.msra.mxu0 0.0
    %329 = vmatprep.subr.mxu0 0.0
    %330 = vmatpush1.msra.mxu0 0.0
    %331 = vmatprep.subr.mxu0 0.0
    %332 = vmatpush1.msra.mxu0 0.0
    %333 = vmatprep.subr.mxu0 0.0
    %334 = vmatpush1.msra.mxu0 0.0
    %335 = vmatprep.subr.mxu0 0.0
    %336 = vmatpush1.msra.mxu0 0.0
    %337 = vmatprep.subr.mxu0 0.0
    %338 = vmatpush1.msra.mxu0 0.0
    %339 = vmatprep.subr.mxu0 0.0
    %340 = vmatpush1.msra.mxu0 0.0
    %341 = vmatprep.subr.mxu0 0.0
    %342 = vmatpush1.msra.mxu0 0.0
    %343 = vmatprep.subr.mxu0 0.0
    %344 = vmatpush1.msra.mxu0 0.0
    %345 = vmatprep.subr.mxu0 0.0
    %346 = vmatpush1.msra.mxu0 0.0
    %347 = vmatprep.subr.mxu0 0.0
    %348 = vmatpush1.msra.mxu0 0.0
    %349 = vmatprep.mubr.f32.mxu0 0.0
    %350 = vmatmul.mubr.f32.gmra.mrb[0].mxu0 %v283
    %v351 = vpop.f32.mrb[0].mxu0
    %v352 = vadd.f32 0.0, %v351
    %v353 = vpop.f32.mrb[0].mxu0
    %354 = vdwg.mxu0
    %v356 = vrot.slane %v352, 6
    %v358 = vadd.f32 %v170, %v356
    %v359 = vxor.u32 %v358, 2147483648
    %v360 = vmul.f32 %v359, 1.442695
    %v361 = vpow.pop %v360
    %v362 = vadd.f32 %v361, 1.0
    %v363 = vrcp.pop %v362
    %v364 = vmul.f32 1.0, %v363
    %v365 = vtanh.pop %v358
    %v367 = vrot.slane %v273, 6
    %v369 = vmul.f32 %v364, %v367
    %371 = vrot.lane.b32.xlu0 %v365, 64
    %v372 = vpop.permute.xlu0 %371
    %v374 = vmul.f32 %v364, %v372
    %376 = vrot.lane.b32.xlu0 %v374, 32
    %v377 = vpop.permute.xlu0 %376
    %v379 = vadd.f32 %v369, %v377
    %v380 = vtanh.pop %v379
    %382 = vrot.lane.b32.xlu0 %v380, 64
    %v383 = vpop.permute.xlu0 %382
    %v385 = vmul.f32 %v364, %v383
    %v387 = vrot.slane %v385, 2
    %388 = vrot.lane.b32.xlu0 %v387, 32
    %v389 = vpop.permute.xlu0 %388
    %v390 = vsel %vm96, %v389, 0
    %392 = vmatprep.subr.mxu0 0.0
    %393 = vmatpush1.msra.mxu0 %v178
    %394 = vmatprep.subr.mxu0 0.0
    %395 = vmatpush1.msra.mxu0 %v179
    %396 = vmatprep.subr.mxu0 0.0
    %397 = vmatpush1.msra.mxu0 %v180
    %398 = vmatprep.subr.mxu0 0.0
    %399 = vmatpush1.msra.mxu0 %v181
    %400 = vmatprep.subr.mxu0 0.0
    %401 = vmatpush1.msra.mxu0 0.0
    %402 = vmatprep.subr.mxu0 0.0
    %403 = vmatpush1.msra.mxu0 0.0
    %404 = vmatprep.subr.mxu0 0.0
    %405 = vmatpush1.msra.mxu0 0.0
    %406 = vmatprep.subr.mxu0 0.0
    %407 = vmatpush1.msra.mxu0 0.0
    %408 = vmatprep.subr.mxu0 0.0
    %409 = vmatpush1.msra.mxu0 0.0
    %410 = vmatprep.subr.mxu0 0.0
    %411 = vmatpush1.msra.mxu0 0.0
    %412 = vmatprep.subr.mxu0 0.0
    %413 = vmatpush1.msra.mxu0 0.0
    %414 = vmatprep.subr.mxu0 0.0
    %415 = vmatpush1.msra.mxu0 0.0
    %416 = vmatprep.subr.mxu0 0.0
    %417 = vmatpush1.msra.mxu0 0.0
    %418 = vmatprep.subr.mxu0 0.0
    %419 = vmatpush1.msra.mxu0 0.0
    %420 = vmatprep.subr.mxu0 0.0
    %421 = vmatpush1.msra.mxu0 0.0
    %422 = vmatprep.subr.mxu0 0.0
    %423 = vmatpush1.msra.mxu0 0.0
    %424 = vmatprep.subr.mxu0 0.0
    %425 = vmatpush1.msra.mxu0 0.0
    %426 = vmatprep.subr.mxu0 0.0
    %427 = vmatpush1.msra.mxu0 0.0
    %428 = vmatprep.subr.mxu0 0.0
    %429 = vmatpush1.msra.mxu0 0.0
    %430 = vmatprep.subr.mxu0 0.0
    %431 = vmatpush1.msra.mxu0 0.0
    %432 = vmatprep.subr.mxu0 0.0
    %433 = vmatpush1.msra.mxu0 0.0
    %434 = vmatprep.subr.mxu0 0.0
    %435 = vmatpush1.msra.mxu0 0.0
    %436 = vmatprep.subr.mxu0 0.0
    %437 = vmatpush1.msra.mxu0 0.0
    %438 = vmatprep.subr.mxu0 0.0
    %439 = vmatpush1.msra.mxu0 0.0
    %440 = vmatprep.subr.mxu0 0.0
    %441 = vmatpush1.msra.mxu0 0.0
    %442 = vmatprep.subr.mxu0 0.0
    %443 = vmatpush1.msra.mxu0 0.0
    %444 = vmatprep.subr.mxu0 0.0
    %445 = vmatpush1.msra.mxu0 0.0
    %446 = vmatprep.subr.mxu0 0.0
    %447 = vmatpush1.msra.mxu0 0.0
    %448 = vmatprep.subr.mxu0 0.0
    %449 = vmatpush1.msra.mxu0 0.0
    %450 = vmatprep.subr.mxu0 0.0
    %451 = vmatpush1.msra.mxu0 0.0
    %452 = vmatprep.subr.mxu0 0.0
    %453 = vmatpush1.msra.mxu0 0.0
    %454 = vmatprep.subr.mxu0 0.0
    %455 = vmatpush1.msra.mxu0 0.0
    %456 = vmatprep.mubr.f32.mxu0 0.0
    %457 = vmatmul.mubr.f32.gmra.mrb[0].mxu0 %v390
    %v458 = vpop.f32.mrb[0].mxu0
    %v459 = vadd.f32 0.0, %v458
    %v460 = vpop.f32.mrb[0].mxu0
    %461 = vdwg.mxu0
    %v463 = vrot.slane %v459, 4
    %v465 = vadd.f32 %v170, %v463
    %v466 = vxor.u32 %v465, 2147483648
    %v467 = vmul.f32 %v466, 1.442695
    %v468 = vpow.pop %v467
    %v469 = vadd.f32 %v468, 1.0
    %v470 = vrcp.pop %v469
    %v471 = vmul.f32 1.0, %v470
    %v472 = vtanh.pop %v465
    %v474 = vrot.slane %v379, 6
    %v476 = vmul.f32 %v471, %v474
    %478 = vrot.lane.b32.xlu0 %v472, 64
    %v479 = vpop.permute.xlu0 %478
    %v481 = vmul.f32 %v471, %v479
    %483 = vrot.lane.b32.xlu0 %v481, 32
    %v484 = vpop.permute.xlu0 %483
    %v486 = vadd.f32 %v476, %v484
    %v487 = vtanh.pop %v486
    %489 = vrot.lane.b32.xlu0 %v487, 64
    %v490 = vpop.permute.xlu0 %489
    %v492 = vmul.f32 %v471, %v490
    %v494 = vrot.slane %v492, 4
    %495 = vrot.lane.b32.xlu0 %v494, 32
    %v496 = vpop.permute.xlu0 %495
    %v497 = vsel %vm96, %v496, 0
    %499 = vmatprep.subr.mxu0 0.0
    %500 = vmatpush1.msra.mxu0 %v178
    %501 = vmatprep.subr.mxu0 0.0
    %502 = vmatpush1.msra.mxu0 %v179
    %503 = vmatprep.subr.mxu0 0.0
    %504 = vmatpush1.msra.mxu0 %v180
    %505 = vmatprep.subr.mxu0 0.0
    %506 = vmatpush1.msra.mxu0 %v181
    %507 = vmatprep.subr.mxu0 0.0
    %508 = vmatpush1.msra.mxu0 0.0
    %509 = vmatprep.subr.mxu0 0.0
    %510 = vmatpush1.msra.mxu0 0.0
    %511 = vmatprep.subr.mxu0 0.0
    %512 = vmatpush1.msra.mxu0 0.0
    %513 = vmatprep.subr.mxu0 0.0
    %514 = vmatpush1.msra.mxu0 0.0
    %515 = vmatprep.subr.mxu0 0.0
    %516 = vmatpush1.msra.mxu0 0.0
    %517 = vmatprep.subr.mxu0 0.0
    %518 = vmatpush1.msra.mxu0 0.0
    %519 = vmatprep.subr.mxu0 0.0
    %520 = vmatpush1.msra.mxu0 0.0
    %521 = vmatprep.subr.mxu0 0.0
    %522 = vmatpush1.msra.mxu0 0.0
    %523 = vmatprep.subr.mxu0 0.0
    %524 = vmatpush1.msra.mxu0 0.0
    %525 = vmatprep.subr.mxu0 0.0
    %526 = vmatpush1.msra.mxu0 0.0
    %527 = vmatprep.subr.mxu0 0.0
    %528 = vmatpush1.msra.mxu0 0.0
    %529 = vmatprep.subr.mxu0 0.0
    %530 = vmatpush1.msra.mxu0 0.0
    %531 = vmatprep.subr.mxu0 0.0
    %532 = vmatpush1.msra.mxu0 0.0
    %533 = vmatprep.subr.mxu0 0.0
    %534 = vmatpush1.msra.mxu0 0.0
    %535 = vmatprep.subr.mxu0 0.0
    %536 = vmatpush1.msra.mxu0 0.0
    %537 = vmatprep.subr.mxu0 0.0
    %538 = vmatpush1.msra.mxu0 0.0
    %539 = vmatprep.subr.mxu0 0.0
    %540 = vmatpush1.msra.mxu0 0.0
    %541 = vmatprep.subr.mxu0 0.0
    %542 = vmatpush1.msra.mxu0 0.0
    %543 = vmatprep.subr.mxu0 0.0
    %544 = vmatpush1.msra.mxu0 0.0
    %545 = vmatprep.subr.mxu0 0.0
    %546 = vmatpush1.msra.mxu0 0.0
    %547 = vmatprep.subr.mxu0 0.0
    %548 = vmatpush1.msra.mxu0 0.0
    %549 = vmatprep.subr.mxu0 0.0
    %550 = vmatpush1.msra.mxu0 0.0
    %551 = vmatprep.subr.mxu0 0.0
    %552 = vmatpush1.msra.mxu0 0.0
    %553 = vmatprep.subr.mxu0 0.0
    %554 = vmatpush1.msra.mxu0 0.0
    %555 = vmatprep.subr.mxu0 0.0
    %556 = vmatpush1.msra.mxu0 0.0
    %557 = vmatprep.subr.mxu0 0.0
    %558 = vmatpush1.msra.mxu0 0.0
    %559 = vmatprep.subr.mxu0 0.0
    %560 = vmatpush1.msra.mxu0 0.0
    %561 = vmatprep.subr.mxu0 0.0
    %562 = vmatpush1.msra.mxu0 0.0
    %563 = vmatprep.mubr.f32.mxu0 0.0
    %564 = vmatmul.mubr.f32.gmra.mrb[0].mxu0 %v497
    %v565 = vpop.f32.mrb[0].mxu0
    %v566 = vadd.f32 0.0, %v565
    %v567 = vpop.f32.mrb[0].mxu0
    %568 = vdwg.mxu0
    %v570 = vrot.slane %v566, 2
    %v572 = vadd.f32 %v170, %v570
    %v573 = vxor.u32 %v572, 2147483648
    %v574 = vmul.f32 %v573, 1.442695
    %v575 = vpow.pop %v574
    %v576 = vadd.f32 %v575, 1.0
    %v577 = vrcp.pop %v576
    %v578 = vmul.f32 1.0, %v577
    %v579 = vtanh.pop %v572
    %v581 = vrot.slane %v486, 6
    %v583 = vmul.f32 %v578, %v581
    %585 = vrot.lane.b32.xlu0 %v579, 64
    %v586 = vpop.permute.xlu0 %585
    %v588 = vmul.f32 %v578, %v586
    %590 = vrot.lane.b32.xlu0 %v588, 32
    %v591 = vpop.permute.xlu0 %590
    %v593 = vadd.f32 %v583, %v591
    %v594 = vtanh.pop %v593
    %596 = vrot.lane.b32.xlu0 %v594, 64
    %v597 = vpop.permute.xlu0 %596
    %v599 = vmul.f32 %v578, %v597
    %v601 = vrot.slane %v599, 6
    %602 = vrot.lane.b32.xlu0 %v601, 32
    %v603 = vpop.permute.xlu0 %602
    %v604 = vsel %vm96, %v603, 0
    %606 = vmatprep.subr.mxu0 0.0
    %607 = vmatpush1.msra.mxu0 %v178
    %608 = vmatprep.subr.mxu0 0.0
    %609 = vmatpush1.msra.mxu0 %v179
    %610 = vmatprep.subr.mxu0 0.0
    %611 = vmatpush1.msra.mxu0 %v180
    %612 = vmatprep.subr.mxu0 0.0
    %613 = vmatpush1.msra.mxu0 %v181
    %614 = vmatprep.subr.mxu0 0.0
    %615 = vmatpush1.msra.mxu0 0.0
    %616 = vmatprep.subr.mxu0 0.0
    %617 = vmatpush1.msra.mxu0 0.0
    %618 = vmatprep.subr.mxu0 0.0
    %619 = vmatpush1.msra.mxu0 0.0
    %620 = vmatprep.subr.mxu0 0.0
    %621 = vmatpush1.msra.mxu0 0.0
    %622 = vmatprep.subr.mxu0 0.0
    %623 = vmatpush1.msra.mxu0 0.0
    %624 = vmatprep.subr.mxu0 0.0
    %625 = vmatpush1.msra.mxu0 0.0
    %626 = vmatprep.subr.mxu0 0.0
    %627 = vmatpush1.msra.mxu0 0.0
    %628 = vmatprep.subr.mxu0 0.0
    %629 = vmatpush1.msra.mxu0 0.0
    %630 = vmatprep.subr.mxu0 0.0
    %631 = vmatpush1.msra.mxu0 0.0
    %632 = vmatprep.subr.mxu0 0.0
    %633 = vmatpush1.msra.mxu0 0.0
    %634 = vmatprep.subr.mxu0 0.0
    %635 = vmatpush1.msra.mxu0 0.0
    %636 = vmatprep.subr.mxu0 0.0
    %637 = vmatpush1.msra.mxu0 0.0
    %638 = vmatprep.subr.mxu0 0.0
    %639 = vmatpush1.msra.mxu0 0.0
    %640 = vmatprep.subr.mxu0 0.0
    %641 = vmatpush1.msra.mxu0 0.0
    %642 = vmatprep.subr.mxu0 0.0
    %643 = vmatpush1.msra.mxu0 0.0
    %644 = vmatprep.subr.mxu0 0.0
    %645 = vmatpush1.msra.mxu0 0.0
    %646 = vmatprep.subr.mxu0 0.0
    %647 = vmatpush1.msra.mxu0 0.0
    %648 = vmatprep.subr.mxu0 0.0
    %649 = vmatpush1.msra.mxu0 0.0
    %650 = vmatprep.subr.mxu0 0.0
    %651 = vmatpush1.msra.mxu0 0.0
    %652 = vmatprep.subr.mxu0 0.0
    %653 = vmatpush1.msra.mxu0 0.0
    %654 = vmatprep.subr.mxu0 0.0
    %655 = vmatpush1.msra.mxu0 0.0
    %656 = vmatprep.subr.mxu0 0.0
    %657 = vmatpush1.msra.mxu0 0.0
    %658 = vmatprep.subr.mxu0 0.0
    %659 = vmatpush1.msra.mxu0 0.0
    %660 = vmatprep.subr.mxu0 0.0
    %661 = vmatpush1.msra.mxu0 0.0
    %662 = vmatprep.subr.mxu0 0.0
    %663 = vmatpush1.msra.mxu0 0.0
    %664 = vmatprep.subr.mxu0 0.0
    %665 = vmatpush1.msra.mxu0 0.0
    %666 = vmatprep.subr.mxu0 0.0
    %667 = vmatpush1.msra.mxu0 0.0
    %668 = vmatprep.subr.mxu0 0.0
    %669 = vmatpush1.msra.mxu0 0.0
    %670 = vmatprep.mubr.f32.mxu0 0.0
    %671 = vmatmul.mubr.f32.gmra.mrb[0].mxu0 %v604
    %v672 = vpop.f32.mrb[0].mxu0
    %v673 = vadd.f32 0.0, %v672
    %v674 = vpop.f32.mrb[0].mxu0
    %675 = vdwg.mxu0
    %v676 = vadd.f32 %v175, %v673
    %v677 = vxor.u32 %v676, 2147483648
    %v678 = vmul.f32 %v677, 1.442695
    %v679 = vpow.pop %v678
    %v680 = vadd.f32 %v679, 1.0
    %v681 = vrcp.pop %v680
    %v682 = vmul.f32 1.0, %v681
    %v683 = vtanh.pop %v676
    %v685 = vrot.slane %v593, 6
    %v687 = vmul.f32 %v682, %v685
    %689 = vrot.lane.b32.xlu0 %v683, 64
    %v690 = vpop.permute.xlu0 %689
    %v692 = vmul.f32 %v682, %v690
    %694 = vrot.lane.b32.xlu0 %v692, 32
    %v695 = vpop.permute.xlu0 %694
    %v697 = vadd.f32 %v687, %v695
    %v698 = vtanh.pop %v697
    %700 = vrot.lane.b32.xlu0 %v698, 64
    %v701 = vpop.permute.xlu0 %700
    %v703 = vmul.f32 %v682, %v701
    %705 = vrot.lane.b32.xlu0 %v703, 32
    %v706 = vpop.permute.xlu0 %705
    %v707 = vsel %vm96, %v706, 0
    %709 = vmatprep.subr.mxu0 0.0
    %710 = vmatpush1.msra.mxu0 %v178
    %711 = vmatprep.subr.mxu0 0.0
    %712 = vmatpush1.msra.mxu0 %v179
    %713 = vmatprep.subr.mxu0 0.0
    %714 = vmatpush1.msra.mxu0 %v180
    %715 = vmatprep.subr.mxu0 0.0
    %716 = vmatpush1.msra.mxu0 %v181
    %717 = vmatprep.subr.mxu0 0.0
    %718 = vmatpush1.msra.mxu0 0.0
    %719 = vmatprep.subr.mxu0 0.0
    %720 = vmatpush1.msra.mxu0 0.0
    %721 = vmatprep.subr.mxu0 0.0
    %722 = vmatpush1.msra.mxu0 0.0
    %723 = vmatprep.subr.mxu0 0.0
    %724 = vmatpush1.msra.mxu0 0.0
    %725 = vmatprep.subr.mxu0 0.0
    %726 = vmatpush1.msra.mxu0 0.0
    %727 = vmatprep.subr.mxu0 0.0
    %728 = vmatpush1.msra.mxu0 0.0
    %729 = vmatprep.subr.mxu0 0.0
    %730 = vmatpush1.msra.mxu0 0.0
    %731 = vmatprep.subr.mxu0 0.0
    %732 = vmatpush1.msra.mxu0 0.0
    %733 = vmatprep.subr.mxu0 0.0
    %734 = vmatpush1.msra.mxu0 0.0
    %735 = vmatprep.subr.mxu0 0.0
    %736 = vmatpush1.msra.mxu0 0.0
    %737 = vmatprep.subr.mxu0 0.0
    %738 = vmatpush1.msra.mxu0 0.0
    %739 = vmatprep.subr.mxu0 0.0
    %740 = vmatpush1.msra.mxu0 0.0
    %741 = vmatprep.subr.mxu0 0.0
    %742 = vmatpush1.msra.mxu0 0.0
    %743 = vmatprep.subr.mxu0 0.0
    %744 = vmatpush1.msra.mxu0 0.0
    %745 = vmatprep.subr.mxu0 0.0
    %746 = vmatpush1.msra.mxu0 0.0
    %747 = vmatprep.subr.mxu0 0.0
    %748 = vmatpush1.msra.mxu0 0.0
    %749 = vmatprep.subr.mxu0 0.0
    %750 = vmatpush1.msra.mxu0 0.0
    %751 = vmatprep.subr.mxu0 0.0
    %752 = vmatpush1.msra.mxu0 0.0
    %753 = vmatprep.subr.mxu0 0.0
    %754 = vmatpush1.msra.mxu0 0.0
    %755 = vmatprep.subr.mxu0 0.0
    %756 = vmatpush1.msra.mxu0 0.0
    %757 = vmatprep.subr.mxu0 0.0
    %758 = vmatpush1.msra.mxu0 0.0
    %759 = vmatprep.subr.mxu0 0.0
    %760 = vmatpush1.msra.mxu0 0.0
    %761 = vmatprep.subr.mxu0 0.0
    %762 = vmatpush1.msra.mxu0 0.0
    %763 = vmatprep.subr.mxu0 0.0
    %764 = vmatpush1.msra.mxu0 0.0
    %765 = vmatprep.subr.mxu0 0.0
    %766 = vmatpush1.msra.mxu0 0.0
    %767 = vmatprep.subr.mxu0 0.0
    %768 = vmatpush1.msra.mxu0 0.0
    %769 = vmatprep.subr.mxu0 0.0
    %770 = vmatpush1.msra.mxu0 0.0
    %771 = vmatprep.subr.mxu0 0.0
    %772 = vmatpush1.msra.mxu0 0.0
    %773 = vmatprep.mubr.f32.mxu0 0.0
    %774 = vmatmul.mubr.f32.gmra.mrb[0].mxu0 %v707
    %v775 = vpop.f32.mrb[0].mxu0
    %v776 = vadd.f32 0.0, %v775
    %v777 = vpop.f32.mrb[0].mxu0
    %778 = vdwg.mxu0
    %v780 = vrot.slane %v776, 6
    %v782 = vadd.f32 %v175, %v780
    %v783 = vxor.u32 %v782, 2147483648
    %v784 = vmul.f32 %v783, 1.442695
    %v785 = vpow.pop %v784
    %v786 = vadd.f32 %v785, 1.0
    %v787 = vrcp.pop %v786
    %v788 = vmul.f32 1.0, %v787
    %v789 = vtanh.pop %v782
    %v791 = vrot.slane %v697, 6
    %v793 = vmul.f32 %v788, %v791
    %795 = vrot.lane.b32.xlu0 %v789, 64
    %v796 = vpop.permute.xlu0 %795
    %v798 = vmul.f32 %v788, %v796
    %800 = vrot.lane.b32.xlu0 %v798, 32
    %v801 = vpop.permute.xlu0 %800
    %v803 = vadd.f32 %v793, %v801
    %v804 = vtanh.pop %v803
    %806 = vrot.lane.b32.xlu0 %v804, 64
    %v807 = vpop.permute.xlu0 %806
    %v809 = vmul.f32 %v788, %v807
    %vm810 = vcmask 1041408
    %v811 = vsel %vm810, %v279, %v385
    %vm812 = vcmask 1043456
    %v813 = vsel %vm812, %v811, %v492
    %vm814 = vcmask 1045504
    %v815 = vsel %vm814, %v813, %v599
    %v816 = vsel %vm810, %v703, %v809
    %v817 = vld [vmem:[%s6] sm:$0xff]
    %v818 = vld [vmem:[%s6 + $0x8] sm:$0xff]
    %v819 = vld [vmem:[%s6 + $0x10] sm:$0xff]
    %v820 = vld [vmem:[%s6 + $0x18] sm:$0xff]
    %v821 = vld [vmem:[%s8] sm:$0x1]
    %v823 = vlaneseq
    %v824 = vshrl.u32 %v823, 7
    %v825 = vsub.s32 0, %v824
    %v826 = vrot.slane %v821, %v825
    %830 = vrot.lane.b32.xlu0 %v815, 32
    %v831 = vpop.permute.xlu0 %830
    %832 = vrot.lane.b32.xlu0 %v816, 32
    %v833 = vpop.permute.xlu0 %832
    %v834 = vsel %vm96, %v831, 0
    %v836 = vsel %vm96, %v833, 0
    %838 = vmatprep.subr.mxu0 0.0
    %839 = vmatpush1.msra.mxu0 %v817
    %840 = vmatprep.subr.mxu0 0.0
    %841 = vmatpush1.msra.mxu0 %v818
    %842 = vmatprep.subr.mxu0 0.0
    %843 = vmatpush1.msra.mxu0 %v819
    %844 = vmatprep.subr.mxu0 0.0
    %845 = vmatpush1.msra.mxu0 %v820
    %846 = vmatprep.subr.mxu0 0.0
    %847 = vmatpush1.msra.mxu0 0.0
    %848 = vmatprep.subr.mxu0 0.0
    %849 = vmatpush1.msra.mxu0 0.0
    %850 = vmatprep.subr.mxu0 0.0
    %851 = vmatpush1.msra.mxu0 0.0
    %852 = vmatprep.subr.mxu0 0.0
    %853 = vmatpush1.msra.mxu0 0.0
    %854 = vmatprep.subr.mxu0 0.0
    %855 = vmatpush1.msra.mxu0 0.0
    %856 = vmatprep.subr.mxu0 0.0
    %857 = vmatpush1.msra.mxu0 0.0
    %858 = vmatprep.subr.mxu0 0.0
    %859 = vmatpush1.msra.mxu0 0.0
    %860 = vmatprep.subr.mxu0 0.0
    %861 = vmatpush1.msra.mxu0 0.0
    %862 = vmatprep.subr.mxu0 0.0
    %863 = vmatpush1.msra.mxu0 0.0
    %864 = vmatprep.subr.mxu0 0.0
    %865 = vmatpush1.msra.mxu0 0.0
    %866 = vmatprep.subr.mxu0 0.0
    %867 = vmatpush1.msra.mxu0 0.0
    %868 = vmatprep.subr.mxu0 0.0
    %869 = vmatpush1.msra.mxu0 0.0
    %870 = vmatprep.subr.mxu0 0.0
    %871 = vmatpush1.msra.mxu0 0.0
    %872 = vmatprep.subr.mxu0 0.0
    %873 = vmatpush1.msra.mxu0 0.0
    %874 = vmatprep.subr.mxu0 0.0
    %875 = vmatpush1.msra.mxu0 0.0
    %876 = vmatprep.subr.mxu0 0.0
    %877 = vmatpush1.msra.mxu0 0.0
    %878 = vmatprep.subr.mxu0 0.0
    %879 = vmatpush1.msra.mxu0 0.0
    %880 = vmatprep.subr.mxu0 0.0
    %881 = vmatpush1.msra.mxu0 0.0
    %882 = vmatprep.subr.mxu0 0.0
    %883 = vmatpush1.msra.mxu0 0.0
    %884 = vmatprep.subr.mxu0 0.0
    %885 = vmatpush1.msra.mxu0 0.0
    %886 = vmatprep.subr.mxu0 0.0
    %887 = vmatpush1.msra.mxu0 0.0
    %888 = vmatprep.subr.mxu0 0.0
    %889 = vmatpush1.msra.mxu0 0.0
    %890 = vmatprep.subr.mxu0 0.0
    %891 = vmatpush1.msra.mxu0 0.0
    %892 = vmatprep.subr.mxu0 0.0
    %893 = vmatpush1.msra.mxu0 0.0
    %894 = vmatprep.subr.mxu0 0.0
    %895 = vmatpush1.msra.mxu0 0.0
    %896 = vmatprep.subr.mxu0 0.0
    %897 = vmatpush1.msra.mxu0 0.0
    %898 = vmatprep.subr.mxu0 0.0
    %899 = vmatpush1.msra.mxu0 0.0
    %900 = vmatprep.subr.mxu0 0.0
    %901 = vmatpush1.msra.mxu0 0.0
    %902 = vmatprep.mubr.f32.mxu0 0.0
    %903 = vmatmul.mubr.f32.gmra.mrb[0].mxu0 %v834
    %v904 = vpop.f32.mrb[0].mxu0
    %v905 = vadd.f32 %v826, %v904
    %v906 = vpop.f32.mrb[0].mxu0
    %907 = vmatprep.mubr.f32.mxu0 0.0
    %908 = vmatmul.mubr.f32.gmra.mrb[0].mxu0 %v836
    %v909 = vpop.f32.mrb[0].mxu0
    %v910 = vadd.f32 %v826, %v909
    %v911 = vpop.f32.mrb[0].mxu0
    %912 = vdwg.mxu0
    %v913 = vld [vmem:[%s7] sm:$0xff]
    %v914 = vld [vmem:[%s7 + $0x8] sm:$0xff]
    %v915 = vld [vmem:[%s7 + $0x10] sm:$0xff]
    %v916 = vld [vmem:[%s7 + $0x18] sm:$0xff]
    %917 = vmatprep.subr.mxu0 0.0
    %918 = vmatpush1.msra.mxu0 %v913
    %919 = vmatprep.subr.mxu0 0.0
    %920 = vmatpush1.msra.mxu0 %v914
    %921 = vmatprep.subr.mxu0 0.0
    %922 = vmatpush1.msra.mxu0 %v915
    %923 = vmatprep.subr.mxu0 0.0
    %924 = vmatpush1.msra.mxu0 %v916
    %925 = vmatprep.subr.mxu0 0.0
    %926 = vmatpush1.msra.mxu0 0.0
    %927 = vmatprep.subr.mxu0 0.0
    %928 = vmatpush1.msra.mxu0 0.0
    %929 = vmatprep.subr.mxu0 0.0
    %930 = vmatpush1.msra.mxu0 0.0
    %931 = vmatprep.subr.mxu0 0.0
    %932 = vmatpush1.msra.mxu0 0.0
    %933 = vmatprep.subr.mxu0 0.0
    %934 = vmatpush1.msra.mxu0 0.0
    %935 = vmatprep.subr.mxu0 0.0
    %936 = vmatpush1.msra.mxu0 0.0
    %937 = vmatprep.subr.mxu0 0.0
    %938 = vmatpush1.msra.mxu0 0.0
    %939 = vmatprep.subr.mxu0 0.0
    %940 = vmatpush1.msra.mxu0 0.0
    %941 = vmatprep.subr.mxu0 0.0
    %942 = vmatpush1.msra.mxu0 0.0
    %943 = vmatprep.subr.mxu0 0.0
    %944 = vmatpush1.msra.mxu0 0.0
    %945 = vmatprep.subr.mxu0 0.0
    %946 = vmatpush1.msra.mxu0 0.0
    %947 = vmatprep.subr.mxu0 0.0
    %948 = vmatpush1.msra.mxu0 0.0
    %949 = vmatprep.subr.mxu0 0.0
    %950 = vmatpush1.msra.mxu0 0.0
    %951 = vmatprep.subr.mxu0 0.0
    %952 = vmatpush1.msra.mxu0 0.0
    %953 = vmatprep.subr.mxu0 0.0
    %954 = vmatpush1.msra.mxu0 0.0
    %955 = vmatprep.subr.mxu0 0.0
    %956 = vmatpush1.msra.mxu0 0.0
    %957 = vmatprep.subr.mxu0 0.0
    %958 = vmatpush1.msra.mxu0 0.0
    %959 = vmatprep.subr.mxu0 0.0
    %960 = vmatpush1.msra.mxu0 0.0
    %961 = vmatprep.subr.mxu0 0.0
    %962 = vmatpush1.msra.mxu0 0.0
    %963 = vmatprep.subr.mxu0 0.0
    %964 = vmatpush1.msra.mxu0 0.0
    %965 = vmatprep.subr.mxu0 0.0
    %966 = vmatpush1.msra.mxu0 0.0
    %967 = vmatprep.subr.mxu0 0.0
    %968 = vmatpush1.msra.mxu0 0.0
    %969 = vmatprep.subr.mxu0 0.0
    %970 = vmatpush1.msra.mxu0 0.0
    %971 = vmatprep.subr.mxu0 0.0
    %972 = vmatpush1.msra.mxu0 0.0
    %973 = vmatprep.subr.mxu0 0.0
    %974 = vmatpush1.msra.mxu0 0.0
    %975 = vmatprep.subr.mxu0 0.0
    %976 = vmatpush1.msra.mxu0 0.0
    %977 = vmatprep.subr.mxu0 0.0
    %978 = vmatpush1.msra.mxu0 0.0
    %979 = vmatprep.subr.mxu0 0.0
    %980 = vmatpush1.msra.mxu0 0.0
    %981 = vmatprep.mubr.f32.mxu0 0.0
    %982 = vmatmul.mubr.f32.gmra.mrb[0].mxu0 %v183
    %v983 = vpop.f32.mrb[0].mxu0
    %v984 = vadd.f32 0.0, %v983
    %v985 = vpop.f32.mrb[0].mxu0
    %986 = vdwg.mxu0
    %v987 = vadd.f32 %v905, %v984
    %v988 = vxor.u32 %v987, 2147483648
    %v989 = vmul.f32 %v988, 1.442695
    %v990 = vpow.pop %v989
    %v991 = vadd.f32 %v990, 1.0
    %v992 = vrcp.pop %v991
    %v993 = vmul.f32 1.0, %v992
    %v994 = vtanh.pop %v987
    %v995 = vmul.f32 %v993, 0.0
    %997 = vrot.lane.b32.xlu0 %v994, 64
    %v998 = vpop.permute.xlu0 %997
    %v1000 = vmul.f32 %v993, %v998
    %1002 = vrot.lane.b32.xlu0 %v1000, 32
    %v1003 = vpop.permute.xlu0 %1002
    %v1005 = vadd.f32 %v995, %v1003
    %v1006 = vtanh.pop %v1005
    %1008 = vrot.lane.b32.xlu0 %v1006, 64
    %v1009 = vpop.permute.xlu0 %1008
    %v1011 = vmul.f32 %v993, %v1009
    %1013 = vrot.lane.b32.xlu0 %v1011, 32
    %v1014 = vpop.permute.xlu0 %1013
    %v1015 = vsel %vm96, %v1014, 0
    %1017 = vmatprep.subr.mxu0 0.0
    %1018 = vmatpush1.msra.mxu0 %v913
    %1019 = vmatprep.subr.mxu0 0.0
    %1020 = vmatpush1.msra.mxu0 %v914
    %1021 = vmatprep.subr.mxu0 0.0
    %1022 = vmatpush1.msra.mxu0 %v915
    %1023 = vmatprep.subr.mxu0 0.0
    %1024 = vmatpush1.msra.mxu0 %v916
    %1025 = vmatprep.subr.mxu0 0.0
    %1026 = vmatpush1.msra.mxu0 0.0
    %1027 = vmatprep.subr.mxu0 0.0
    %1028 = vmatpush1.msra.mxu0 0.0
    %1029 = vmatprep.subr.mxu0 0.0
    %1030 = vmatpush1.msra.mxu0 0.0
    %1031 = vmatprep.subr.mxu0 0.0
    %1032 = vmatpush1.msra.mxu0 0.0
    %1033 = vmatprep.subr.mxu0 0.0
    %1034 = vmatpush1.msra.mxu0 0.0
    %1035 = vmatprep.subr.mxu0 0.0
    %1036 = vmatpush1.msra.mxu0 0.0
    %1037 = vmatprep.subr.mxu0 0.0
    %1038 = vmatpush1.msra.mxu0 0.0
    %1039 = vmatprep.subr.mxu0 0.0
    %1040 = vmatpush1.msra.mxu0 0.0
    %1041 = vmatprep.subr.mxu0 0.0
    %1042 = vmatpush1.msra.mxu0 0.0
    %1043 = vmatprep.subr.mxu0 0.0
    %1044 = vmatpush1.msra.mxu0 0.0
    %1045 = vmatprep.subr.mxu0 0.0
    %1046 = vmatpush1.msra.mxu0 0.0
    %1047 = vmatprep.subr.mxu0 0.0
    %1048 = vmatpush1.msra.mxu0 0.0
    %1049 = vmatprep.subr.mxu0 0.0
    %1050 = vmatpush1.msra.mxu0 0.0
    %1051 = vmatprep.subr.mxu0 0.0
    %1052 = vmatpush1.msra.mxu0 0.0
    %1053 = vmatprep.subr.mxu0 0.0
    %1054 = vmatpush1.msra.mxu0 0.0
    %1055 = vmatprep.subr.mxu0 0.0
    %1056 = vmatpush1.msra.mxu0 0.0
    %1057 = vmatprep.subr.mxu0 0.0
    %1058 = vmatpush1.msra.mxu0 0.0
    %1059 = vmatprep.subr.mxu0 0.0
    %1060 = vmatpush1.msra.mxu0 0.0
    %1061 = vmatprep.subr.mxu0 0.0
    %1062 = vmatpush1.msra.mxu0 0.0
    %1063 = vmatprep.subr.mxu0 0.0
    %1064 = vmatpush1.msra.mxu0 0.0
    %1065 = vmatprep.subr.mxu0 0.0
    %1066 = vmatpush1.msra.mxu0 0.0
    %1067 = vmatprep.subr.mxu0 0.0
    %1068 = vmatpush1.msra.mxu0 0.0
    %1069 = vmatprep.subr.mxu0 0.0
    %1070 = vmatpush1.msra.mxu0 0.0
    %1071 = vmatprep.subr.mxu0 0.0
    %1072 = vmatpush1.msra.mxu0 0.0
    %1073 = vmatprep.subr.mxu0 0.0
    %1074 = vmatpush1.msra.mxu0 0.0
    %1075 = vmatprep.subr.mxu0 0.0
    %1076 = vmatpush1.msra.mxu0 0.0
    %1077 = vmatprep.subr.mxu0 0.0
    %1078 = vmatpush1.msra.mxu0 0.0
    %1079 = vmatprep.subr.mxu0 0.0
    %1080 = vmatpush1.msra.mxu0 0.0
    %1081 = vmatprep.mubr.f32.mxu0 0.0
    %1082 = vmatmul.mubr.f32.gmra.mrb[0].mxu0 %v1015
    %v1083 = vpop.f32.mrb[0].mxu0
    %v1084 = vadd.f32 0.0, %v1083
    %v1085 = vpop.f32.mrb[0].mxu0
    %1086 = vdwg.mxu0
    %v1088 = vrot.slane %v1084, 6
    %v1090 = vadd.f32 %v905, %v1088
    %v1091 = vxor.u32 %v1090, 2147483648
    %v1092 = vmul.f32 %v1091, 1.442695
    %v1093 = vpow.pop %v1092
    %v1094 = vadd.f32 %v1093, 1.0
    %v1095 = vrcp.pop %v1094
    %v1096 = vmul.f32 1.0, %v1095
    %v1097 = vtanh.pop %v1090
    %v1099 = vrot.slane %v1005, 6
    %v1101 = vmul.f32 %v1096, %v1099
    %1103 = vrot.lane.b32.xlu0 %v1097, 64
    %v1104 = vpop.permute.xlu0 %1103
    %v1106 = vmul.f32 %v1096, %v1104
    %1108 = vrot.lane.b32.xlu0 %v1106, 32
    %v1109 = vpop.permute.xlu0 %1108
    %v1111 = vadd.f32 %v1101, %v1109
    %v1112 = vtanh.pop %v1111
    %1114 = vrot.lane.b32.xlu0 %v1112, 64
    %v1115 = vpop.permute.xlu0 %1114
    %v1117 = vmul.f32 %v1096, %v1115
    %v1119 = vrot.slane %v1117, 2
    %1120 = vrot.lane.b32.xlu0 %v1119, 32
    %v1121 = vpop.permute.xlu0 %1120
    %v1122 = vsel %vm96, %v1121, 0
    %1124 = vmatprep.subr.mxu0 0.0
    %1125 = vmatpush1.msra.mxu0 %v913
    %1126 = vmatprep.subr.mxu0 0.0
    %1127 = vmatpush1.msra.mxu0 %v914
    %1128 = vmatprep.subr.mxu0 0.0
    %1129 = vmatpush1.msra.mxu0 %v915
    %1130 = vmatprep.subr.mxu0 0.0
    %1131 = vmatpush1.msra.mxu0 %v916
    %1132 = vmatprep.subr.mxu0 0.0
    %1133 = vmatpush1.msra.mxu0 0.0
    %1134 = vmatprep.subr.mxu0 0.0
    %1135 = vmatpush1.msra.mxu0 0.0
    %1136 = vmatprep.subr.mxu0 0.0
    %1137 = vmatpush1.msra.mxu0 0.0
    %1138 = vmatprep.subr.mxu0 0.0
    %1139 = vmatpush1.msra.mxu0 0.0
    %1140 = vmatprep.subr.mxu0 0.0
    %1141 = vmatpush1.msra.mxu0 0.0
    %1142 = vmatprep.subr.mxu0 0.0
    %1143 = vmatpush1.msra.mxu0 0.0
    %1144 = vmatprep.subr.mxu0 0.0
    %1145 = vmatpush1.msra.mxu0 0.0
    %1146 = vmatprep.subr.mxu0 0.0
    %1147 = vmatpush1.msra.mxu0 0.0
    %1148 = vmatprep.subr.mxu0 0.0
    %1149 = vmatpush1.msra.mxu0 0.0
    %1150 = vmatprep.subr.mxu0 0.0
    %1151 = vmatpush1.msra.mxu0 0.0
    %1152 = vmatprep.subr.mxu0 0.0
    %1153 = vmatpush1.msra.mxu0 0.0
    %1154 = vmatprep.subr.mxu0 0.0
    %1155 = vmatpush1.msra.mxu0 0.0
    %1156 = vmatprep.subr.mxu0 0.0
    %1157 = vmatpush1.msra.mxu0 0.0
    %1158 = vmatprep.subr.mxu0 0.0
    %1159 = vmatpush1.msra.mxu0 0.0
    %1160 = vmatprep.subr.mxu0 0.0
    %1161 = vmatpush1.msra.mxu0 0.0
    %1162 = vmatprep.subr.mxu0 0.0
    %1163 = vmatpush1.msra.mxu0 0.0
    %1164 = vmatprep.subr.mxu0 0.0
    %1165 = vmatpush1.msra.mxu0 0.0
    %1166 = vmatprep.subr.mxu0 0.0
    %1167 = vmatpush1.msra.mxu0 0.0
    %1168 = vmatprep.subr.mxu0 0.0
    %1169 = vmatpush1.msra.mxu0 0.0
    %1170 = vmatprep.subr.mxu0 0.0
    %1171 = vmatpush1.msra.mxu0 0.0
    %1172 = vmatprep.subr.mxu0 0.0
    %1173 = vmatpush1.msra.mxu0 0.0
    %1174 = vmatprep.subr.mxu0 0.0
    %1175 = vmatpush1.msra.mxu0 0.0
    %1176 = vmatprep.subr.mxu0 0.0
    %1177 = vmatpush1.msra.mxu0 0.0
    %1178 = vmatprep.subr.mxu0 0.0
    %1179 = vmatpush1.msra.mxu0 0.0
    %1180 = vmatprep.subr.mxu0 0.0
    %1181 = vmatpush1.msra.mxu0 0.0
    %1182 = vmatprep.subr.mxu0 0.0
    %1183 = vmatpush1.msra.mxu0 0.0
    %1184 = vmatprep.subr.mxu0 0.0
    %1185 = vmatpush1.msra.mxu0 0.0
    %1186 = vmatprep.subr.mxu0 0.0
    %1187 = vmatpush1.msra.mxu0 0.0
    %1188 = vmatprep.mubr.f32.mxu0 0.0
    %1189 = vmatmul.mubr.f32.gmra.mrb[0].mxu0 %v1122
    %v1190 = vpop.f32.mrb[0].mxu0
    %v1191 = vadd.f32 0.0, %v1190
    %v1192 = vpop.f32.mrb[0].mxu0
    %1193 = vdwg.mxu0
    %v1195 = vrot.slane %v1191, 4
    %v1197 = vadd.f32 %v905, %v1195
    %v1198 = vxor.u32 %v1197, 2147483648
    %v1199 = vmul.f32 %v1198, 1.442695
    %v1200 = vpow.pop %v1199
    %v1201 = vadd.f32 %v1200, 1.0
    %v1202 = vrcp.pop %v1201
    %v1203 = vmul.f32 1.0, %v1202
    %v1204 = vtanh.pop %v1197
    %v1206 = vrot.slane %v1111, 6
    %v1208 = vmul.f32 %v1203, %v1206
    %1210 = vrot.lane.b32.xlu0 %v1204, 64
    %v1211 = vpop.permute.xlu0 %1210
    %v1213 = vmul.f32 %v1203, %v1211
    %1215 = vrot.lane.b32.xlu0 %v1213, 32
    %v1216 = vpop.permute.xlu0 %1215
    %v1218 = vadd.f32 %v1208, %v1216
    %v1219 = vtanh.pop %v1218
    %1221 = vrot.lane.b32.xlu0 %v1219, 64
    %v1222 = vpop.permute.xlu0 %1221
    %v1224 = vmul.f32 %v1203, %v1222
    %v1226 = vrot.slane %v1224, 4
    %1227 = vrot.lane.b32.xlu0 %v1226, 32
    %v1228 = vpop.permute.xlu0 %1227
    %v1229 = vsel %vm96, %v1228, 0
    %1231 = vmatprep.subr.mxu0 0.0
    %1232 = vmatpush1.msra.mxu0 %v913
    %1233 = vmatprep.subr.mxu0 0.0
    %1234 = vmatpush1.msra.mxu0 %v914
    %1235 = vmatprep.subr.mxu0 0.0
    %1236 = vmatpush1.msra.mxu0 %v915
    %1237 = vmatprep.subr.mxu0 0.0
    %1238 = vmatpush1.msra.mxu0 %v916
    %1239 = vmatprep.subr.mxu0 0.0
    %1240 = vmatpush1.msra.mxu0 0.0
    %1241 = vmatprep.subr.mxu0 0.0
    %1242 = vmatpush1.msra.mxu0 0.0
    %1243 = vmatprep.subr.mxu0 0.0
    %1244 = vmatpush1.msra.mxu0 0.0
    %1245 = vmatprep.subr.mxu0 0.0
    %1246 = vmatpush1.msra.mxu0 0.0
    %1247 = vmatprep.subr.mxu0 0.0
    %1248 = vmatpush1.msra.mxu0 0.0
    %1249 = vmatprep.subr.mxu0 0.0
    %1250 = vmatpush1.msra.mxu0 0.0
    %1251 = vmatprep.subr.mxu0 0.0
    %1252 = vmatpush1.msra.mxu0 0.0
    %1253 = vmatprep.subr.mxu0 0.0
    %1254 = vmatpush1.msra.mxu0 0.0
    %1255 = vmatprep.subr.mxu0 0.0
    %1256 = vmatpush1.msra.mxu0 0.0
    %1257 = vmatprep.subr.mxu0 0.0
    %1258 = vmatpush1.msra.mxu0 0.0
    %1259 = vmatprep.subr.mxu0 0.0
    %1260 = vmatpush1.msra.mxu0 0.0
    %1261 = vmatprep.subr.mxu0 0.0
    %1262 = vmatpush1.msra.mxu0 0.0
    %1263 = vmatprep.subr.mxu0 0.0
    %1264 = vmatpush1.msra.mxu0 0.0
    %1265 = vmatprep.subr.mxu0 0.0
    %1266 = vmatpush1.msra.mxu0 0.0
    %1267 = vmatprep.subr.mxu0 0.0
    %1268 = vmatpush1.msra.mxu0 0.0
    %1269 = vmatprep.subr.mxu0 0.0
    %1270 = vmatpush1.msra.mxu0 0.0
    %1271 = vmatprep.subr.mxu0 0.0
    %1272 = vmatpush1.msra.mxu0 0.0
    %1273 = vmatprep.subr.mxu0 0.0
    %1274 = vmatpush1.msra.mxu0 0.0
    %1275 = vmatprep.subr.mxu0 0.0
    %1276 = vmatpush1.msra.mxu0 0.0
    %1277 = vmatprep.subr.mxu0 0.0
    %1278 = vmatpush1.msra.mxu0 0.0
    %1279 = vmatprep.subr.mxu0 0.0
    %1280 = vmatpush1.msra.mxu0 0.0
    %1281 = vmatprep.subr.mxu0 0.0
    %1282 = vmatpush1.msra.mxu0 0.0
    %1283 = vmatprep.subr.mxu0 0.0
    %1284 = vmatpush1.msra.mxu0 0.0
    %1285 = vmatprep.subr.mxu0 0.0
    %1286 = vmatpush1.msra.mxu0 0.0
    %1287 = vmatprep.subr.mxu0 0.0
    %1288 = vmatpush1.msra.mxu0 0.0
    %1289 = vmatprep.subr.mxu0 0.0
    %1290 = vmatpush1.msra.mxu0 0.0
    %1291 = vmatprep.subr.mxu0 0.0
    %1292 = vmatpush1.msra.mxu0 0.0
    %1293 = vmatprep.subr.mxu0 0.0
    %1294 = vmatpush1.msra.mxu0 0.0
    %1295 = vmatprep.mubr.f32.mxu0 0.0
    %1296 = vmatmul.mubr.f32.gmra.mrb[0].mxu0 %v1229
    %v1297 = vpop.f32.mrb[0].mxu0
    %v1298 = vadd.f32 0.0, %v1297
    %v1299 = vpop.f32.mrb[0].mxu0
    %1300 = vdwg.mxu0
    %v1302 = vrot.slane %v1298, 2
    %v1304 = vadd.f32 %v905, %v1302
    %v1305 = vxor.u32 %v1304, 2147483648
    %v1306 = vmul.f32 %v1305, 1.442695
    %v1307 = vpow.pop %v1306
    %v1308 = vadd.f32 %v1307, 1.0
    %v1309 = vrcp.pop %v1308
    %v1310 = vmul.f32 1.0, %v1309
    %v1311 = vtanh.pop %v1304
    %v1313 = vrot.slane %v1218, 6
    %v1315 = vmul.f32 %v1310, %v1313
    %1317 = vrot.lane.b32.xlu0 %v1311, 64
    %v1318 = vpop.permute.xlu0 %1317
    %v1320 = vmul.f32 %v1310, %v1318
    %1322 = vrot.lane.b32.xlu0 %v1320, 32
    %v1323 = vpop.permute.xlu0 %1322
    %v1325 = vadd.f32 %v1315, %v1323
    %v1326 = vtanh.pop %v1325
    %1328 = vrot.lane.b32.xlu0 %v1326, 64
    %v1329 = vpop.permute.xlu0 %1328
    %v1331 = vmul.f32 %v1310, %v1329
    %v1333 = vrot.slane %v1331, 6
    %1334 = vrot.lane.b32.xlu0 %v1333, 32
    %v1335 = vpop.permute.xlu0 %1334
    %v1336 = vsel %vm96, %v1335, 0
    %1338 = vmatprep.subr.mxu0 0.0
    %1339 = vmatpush1.msra.mxu0 %v913
    %1340 = vmatprep.subr.mxu0 0.0
    %1341 = vmatpush1.msra.mxu0 %v914
    %1342 = vmatprep.subr.mxu0 0.0
    %1343 = vmatpush1.msra.mxu0 %v915
    %1344 = vmatprep.subr.mxu0 0.0
    %1345 = vmatpush1.msra.mxu0 %v916
    %1346 = vmatprep.subr.mxu0 0.0
    %1347 = vmatpush1.msra.mxu0 0.0
    %1348 = vmatprep.subr.mxu0 0.0
    %1349 = vmatpush1.msra.mxu0 0.0
    %1350 = vmatprep.subr.mxu0 0.0
    %1351 = vmatpush1.msra.mxu0 0.0
    %1352 = vmatprep.subr.mxu0 0.0
    %1353 = vmatpush1.msra.mxu0 0.0
    %1354 = vmatprep.subr.mxu0 0.0
    %1355 = vmatpush1.msra.mxu0 0.0
    %1356 = vmatprep.subr.mxu0 0.0
    %1357 = vmatpush1.msra.mxu0 0.0
    %1358 = vmatprep.subr.mxu0 0.0
    %1359 = vmatpush1.msra.mxu0 0.0
    %1360 = vmatprep.subr.mxu0 0.0
    %1361 = vmatpush1.msra.mxu0 0.0
    %1362 = vmatprep.subr.mxu0 0.0
    %1363 = vmatpush1.msra.mxu0 0.0
    %1364 = vmatprep.subr.mxu0 0.0
    %1365 = vmatpush1.msra.mxu0 0.0
    %1366 = vmatprep.subr.mxu0 0.0
    %1367 = vmatpush1.msra.mxu0 0.0
    %1368 = vmatprep.subr.mxu0 0.0
    %1369 = vmatpush1.msra.mxu0 0.0
    %1370 = vmatprep.subr.mxu0 0.0
    %1371 = vmatpush1.msra.mxu0 0.0
    %1372 = vmatprep.subr.mxu0 0.0
    %1373 = vmatpush1.msra.mxu0 0.0
    %1374 = vmatprep.subr.mxu0 0.0
    %1375 = vmatpush1.msra.mxu0 0.0
    %1376 = vmatprep.subr.mxu0 0.0
    %1377 = vmatpush1.msra.mxu0 0.0
    %1378 = vmatprep.subr.mxu0 0.0
    %1379 = vmatpush1.msra.mxu0 0.0
    %1380 = vmatprep.subr.mxu0 0.0
    %1381 = vmatpush1.msra.mxu0 0.0
    %1382 = vmatprep.subr.mxu0 0.0
    %1383 = vmatpush1.msra.mxu0 0.0
    %1384 = vmatprep.subr.mxu0 0.0
    %1385 = vmatpush1.msra.mxu0 0.0
    %1386 = vmatprep.subr.mxu0 0.0
    %1387 = vmatpush1.msra.mxu0 0.0
    %1388 = vmatprep.subr.mxu0 0.0
    %1389 = vmatpush1.msra.mxu0 0.0
    %1390 = vmatprep.subr.mxu0 0.0
    %1391 = vmatpush1.msra.mxu0 0.0
    %1392 = vmatprep.subr.mxu0 0.0
    %1393 = vmatpush1.msra.mxu0 0.0
    %1394 = vmatprep.subr.mxu0 0.0
    %1395 = vmatpush1.msra.mxu0 0.0
    %1396 = vmatprep.subr.mxu0 0.0
    %1397 = vmatpush1.msra.mxu0 0.0
    %1398 = vmatprep.subr.mxu0 0.0
    %1399 = vmatpush1.msra.mxu0 0.0
    %1400 = vmatprep.subr.mxu0 0.0
    %1401 = vmatpush1.msra.mxu0 0.0
    %1402 = vmatprep.mubr.f32.mxu0 0.0
    %1403 = vmatmul.mubr.f32.gmra.mrb[0].mxu0 %v1336
    %v1404 = vpop.f32.mrb[0].mxu0
    %v1405 = vadd.f32 0.0, %v1404
    %v1406 = vpop.f32.mrb[0].mxu0
    %1407 = vdwg.mxu0
    %v1408 = vadd.f32 %v910, %v1405
    %v1409 = vxor.u32 %v1408, 2147483648
    %v1410 = vmul.f32 %v1409, 1.442695
    %v1411 = vpow.pop %v1410
    %v1412 = vadd.f32 %v1411, 1.0
    %v1413 = vrcp.pop %v1412
    %v1414 = vmul.f32 1.0, %v1413
    %v1415 = vtanh.pop %v1408
    %v1417 = vrot.slane %v1325, 6
    %v1419 = vmul.f32 %v1414, %v1417
    %1421 = vrot.lane.b32.xlu0 %v1415, 64
    %v1422 = vpop.permute.xlu0 %1421
    %v1424 = vmul.f32 %v1414, %v1422
    %1426 = vrot.lane.b32.xlu0 %v1424, 32
    %v1427 = vpop.permute.xlu0 %1426
    %v1429 = vadd.f32 %v1419, %v1427
    %v1430 = vtanh.pop %v1429
    %1432 = vrot.lane.b32.xlu0 %v1430, 64
    %v1433 = vpop.permute.xlu0 %1432
    %v1435 = vmul.f32 %v1414, %v1433
    %1437 = vrot.lane.b32.xlu0 %v1435, 32
    %v1438 = vpop.permute.xlu0 %1437
    %v1439 = vsel %vm96, %v1438, 0
    %1441 = vmatprep.subr.mxu0 0.0
    %1442 = vmatpush1.msra.mxu0 %v913
    %1443 = vmatprep.subr.mxu0 0.0
    %1444 = vmatpush1.msra.mxu0 %v914
    %1445 = vmatprep.subr.mxu0 0.0
    %1446 = vmatpush1.msra.mxu0 %v915
    %1447 = vmatprep.subr.mxu0 0.0
    %1448 = vmatpush1.msra.mxu0 %v916
    %1449 = vmatprep.subr.mxu0 0.0
    %1450 = vmatpush1.msra.mxu0 0.0
    %1451 = vmatprep.subr.mxu0 0.0
    %1452 = vmatpush1.msra.mxu0 0.0
    %1453 = vmatprep.subr.mxu0 0.0
    %1454 = vmatpush1.msra.mxu0 0.0
    %1455 = vmatprep.subr.mxu0 0.0
    %1456 = vmatpush1.msra.mxu0 0.0
    %1457 = vmatprep.subr.mxu0 0.0
    %1458 = vmatpush1.msra.mxu0 0.0
    %1459 = vmatprep.subr.mxu0 0.0
    %1460 = vmatpush1.msra.mxu0 0.0
    %1461 = vmatprep.subr.mxu0 0.0
    %1462 = vmatpush1.msra.mxu0 0.0
    %1463 = vmatprep.subr.mxu0 0.0
    %1464 = vmatpush1.msra.mxu0 0.0
    %1465 = vmatprep.subr.mxu0 0.0
    %1466 = vmatpush1.msra.mxu0 0.0
    %1467 = vmatprep.subr.mxu0 0.0
    %1468 = vmatpush1.msra.mxu0 0.0
    %1469 = vmatprep.subr.mxu0 0.0
    %1470 = vmatpush1.msra.mxu0 0.0
    %1471 = vmatprep.subr.mxu0 0.0
    %1472 = vmatpush1.msra.mxu0 0.0
    %1473 = vmatprep.subr.mxu0 0.0
    %1474 = vmatpush1.msra.mxu0 0.0
    %1475 = vmatprep.subr.mxu0 0.0
    %1476 = vmatpush1.msra.mxu0 0.0
    %1477 = vmatprep.subr.mxu0 0.0
    %1478 = vmatpush1.msra.mxu0 0.0
    %1479 = vmatprep.subr.mxu0 0.0
    %1480 = vmatpush1.msra.mxu0 0.0
    %1481 = vmatprep.subr.mxu0 0.0
    %1482 = vmatpush1.msra.mxu0 0.0
    %1483 = vmatprep.subr.mxu0 0.0
    %1484 = vmatpush1.msra.mxu0 0.0
    %1485 = vmatprep.subr.mxu0 0.0
    %1486 = vmatpush1.msra.mxu0 0.0
    %1487 = vmatprep.subr.mxu0 0.0
    %1488 = vmatpush1.msra.mxu0 0.0
    %1489 = vmatprep.subr.mxu0 0.0
    %1490 = vmatpush1.msra.mxu0 0.0
    %1491 = vmatprep.subr.mxu0 0.0
    %1492 = vmatpush1.msra.mxu0 0.0
    %1493 = vmatprep.subr.mxu0 0.0
    %1494 = vmatpush1.msra.mxu0 0.0
    %1495 = vmatprep.subr.mxu0 0.0
    %1496 = vmatpush1.msra.mxu0 0.0
    %1497 = vmatprep.subr.mxu0 0.0
    %1498 = vmatpush1.msra.mxu0 0.0
    %1499 = vmatprep.subr.mxu0 0.0
    %1500 = vmatpush1.msra.mxu0 0.0
    %1501 = vmatprep.subr.mxu0 0.0
    %1502 = vmatpush1.msra.mxu0 0.0
    %1503 = vmatprep.subr.mxu0 0.0
    %1504 = vmatpush1.msra.mxu0 0.0
    %1505 = vmatprep.mubr.f32.mxu0 0.0
    %1506 = vmatmul.mubr.f32.gmra.mrb[0].mxu0 %v1439
    %v1507 = vpop.f32.mrb[0].mxu0
    %v1508 = vadd.f32 0.0, %v1507
    %v1509 = vpop.f32.mrb[0].mxu0
    %1510 = vdwg.mxu0
    %v1512 = vrot.slane %v1508, 6
    %v1514 = vadd.f32 %v910, %v1512
    %v1515 = vxor.u32 %v1514, 2147483648
    %v1516 = vmul.f32 %v1515, 1.442695
    %v1517 = vpow.pop %v1516
    %v1518 = vadd.f32 %v1517, 1.0
    %v1519 = vrcp.pop %v1518
    %v1520 = vmul.f32 1.0, %v1519
    %v1521 = vtanh.pop %v1514
    %v1523 = vrot.slane %v1429, 6
    %v1525 = vmul.f32 %v1520, %v1523
    %1527 = vrot.lane.b32.xlu0 %v1521, 64
    %v1528 = vpop.permute.xlu0 %1527
    %v1530 = vmul.f32 %v1520, %v1528
    %1532 = vrot.lane.b32.xlu0 %v1530, 32
    %v1533 = vpop.permute.xlu0 %1532
    %v1535 = vadd.f32 %v1525, %v1533
    %v1536 = vtanh.pop %v1535
    %1538 = vrot.lane.b32.xlu0 %v1536, 64
    %v1539 = vpop.permute.xlu0 %1538
    %v1541 = vmul.f32 %v1520, %v1539
    %v1542 = vld [vmem:[%s1] sm:$0xff]
    %v1543 = vld [vmem:[%s1 + $0x8] sm:$0xff]
    %v1544 = vld [vmem:[%s9] sm:$0xff]
    %v1545 = vld [vmem:[%s9 + $0x8] sm:$0xff]
    %v1546 = vld [vmem:[%s9 + $0x10] sm:$0xff]
    %v1547 = vld [vmem:[%s9 + $0x18] sm:$0xff]
    %v1548 = vld [vmem:[%s9 + $0x20] sm:$0xff]
    %v1549 = vld [vmem:[%s9 + $0x28] sm:$0xff]
    %v1550 = vld [vmem:[%s9 + $0x30] sm:$0xff]
    %v1551 = vld [vmem:[%s9 + $0x38] sm:$0xff]
    %v1552 = vld [vmem:[%s12] sm:$0x3]
    %v1554 = vlaneseq
    %v1555 = vshrl.u32 %v1554, 7
    %v1556 = vsub.s32 0, %v1555
    %v1557 = vrot.slane %v1552, %v1556
    %v1558 = vlaneseq
    %v1559 = vshrl.u32 %v1558, 7
    %v1560 = vsub.s32 1, %v1559
    %v1561 = vrot.slane %v1552, %v1560
    %v1565 = vsel %vm96, %v1542, 0
    %v1568 = vsel %vm96, %v1543, 0
    %1570 = vmatprep.subr.mxu0 %v1545
    %1571 = vmatpush1.msra.mxu0 %v1544
    %1572 = vmatprep.subr.mxu0 %v1547
    %1573 = vmatpush1.msra.mxu0 %v1546
    %1574 = vmatprep.subr.mxu0 %v1549
    %1575 = vmatpush1.msra.mxu0 %v1548
    %1576 = vmatprep.subr.mxu0 %v1551
    %1577 = vmatpush1.msra.mxu0 %v1550
    %1578 = vmatprep.subr.mxu0 0.0
    %1579 = vmatpush1.msra.mxu0 0.0
    %1580 = vmatprep.subr.mxu0 0.0
    %1581 = vmatpush1.msra.mxu0 0.0
    %1582 = vmatprep.subr.mxu0 0.0
    %1583 = vmatpush1.msra.mxu0 0.0
    %1584 = vmatprep.subr.mxu0 0.0
    %1585 = vmatpush1.msra.mxu0 0.0
    %1586 = vmatprep.subr.mxu0 0.0
    %1587 = vmatpush1.msra.mxu0 0.0
    %1588 = vmatprep.subr.mxu0 0.0
    %1589 = vmatpush1.msra.mxu0 0.0
    %1590 = vmatprep.subr.mxu0 0.0
    %1591 = vmatpush1.msra.mxu0 0.0
    %1592 = vmatprep.subr.mxu0 0.0
    %1593 = vmatpush1.msra.mxu0 0.0
    %1594 = vmatprep.subr.mxu0 0.0
    %1595 = vmatpush1.msra.mxu0 0.0
    %1596 = vmatprep.subr.mxu0 0.0
    %1597 = vmatpush1.msra.mxu0 0.0
    %1598 = vmatprep.subr.mxu0 0.0
    %1599 = vmatpush1.msra.mxu0 0.0
    %1600 = vmatprep.subr.mxu0 0.0
    %1601 = vmatpush1.msra.mxu0 0.0
    %1602 = vmatprep.subr.mxu0 0.0
    %1603 = vmatpush1.msra.mxu0 0.0
    %1604 = vmatprep.subr.mxu0 0.0
    %1605 = vmatpush1.msra.mxu0 0.0
    %1606 = vmatprep.subr.mxu0 0.0
    %1607 = vmatpush1.msra.mxu0 0.0
    %1608 = vmatprep.subr.mxu0 0.0
    %1609 = vmatpush1.msra.mxu0 0.0
    %1610 = vmatprep.subr.mxu0 0.0
    %1611 = vmatpush1.msra.mxu0 0.0
    %1612 = vmatprep.subr.mxu0 0.0
    %1613 = vmatpush1.msra.mxu0 0.0
    %1614 = vmatprep.subr.mxu0 0.0
    %1615 = vmatpush1.msra.mxu0 0.0
    %1616 = vmatprep.subr.mxu0 0.0
    %1617 = vmatpush1.msra.mxu0 0.0
    %1618 = vmatprep.subr.mxu0 0.0
    %1619 = vmatpush1.msra.mxu0 0.0
    %1620 = vmatprep.subr.mxu0 0.0
    %1621 = vmatpush1.msra.mxu0 0.0
    %1622 = vmatprep.subr.mxu0 0.0
    %1623 = vmatpush1.msra.mxu0 0.0
    %1624 = vmatprep.subr.mxu0 0.0
    %1625 = vmatpush1.msra.mxu0 0.0
    %1626 = vmatprep.subr.mxu0 0.0
    %1627 = vmatpush1.msra.mxu0 0.0
    %1628 = vmatprep.subr.mxu0 0.0
    %1629 = vmatpush1.msra.mxu0 0.0
    %1630 = vmatprep.subr.mxu0 0.0
    %1631 = vmatpush1.msra.mxu0 0.0
    %1632 = vmatprep.subr.mxu0 0.0
    %1633 = vmatpush1.msra.mxu0 0.0
    %1634 = vmatprep.mubr.f32.mxu0 0.0
    %1635 = vmatmul.mubr.f32.gmra.mrb[0].mxu0 %v1565
    %v1636 = vpop.f32.mrb[0].mxu0
    %v1637 = vadd.f32 %v1557, %v1636
    %v1638 = vpop.f32.mrb[0].mxu0
    %v1639 = vadd.f32 %v1561, %v1638
    %1640 = vmatprep.mubr.f32.mxu0 0.0
    %1641 = vmatmul.mubr.f32.gmra.mrb[0].mxu0 %v1568
    %v1642 = vpop.f32.mrb[0].mxu0
    %v1643 = vadd.f32 %v1557, %v1642
    %v1644 = vpop.f32.mrb[0].mxu0
    %v1645 = vadd.f32 %v1561, %v1644
    %1646 = vdwg.mxu0
    %v1647 = vld [vmem:[%s10] sm:$0xff]
    %v1648 = vld [vmem:[%s10 + $0x8] sm:$0xff]
    %v1649 = vld [vmem:[%s10 + $0x10] sm:$0xff]
    %v1650 = vld [vmem:[%s10 + $0x18] sm:$0xff]
    %v1651 = vld [vmem:[%s11] sm:$0xff]
    %v1652 = vld [vmem:[%s11 + $0x8] sm:$0xff]
    %v1653 = vld [vmem:[%s11 + $0x10] sm:$0xff]
    %v1654 = vld [vmem:[%s11 + $0x18] sm:$0xff]
    %1655 = vmatprep.subr.mxu0 0.0
    %1656 = vmatpush1.msra.mxu0 %v1647
    %1657 = vmatprep.subr.mxu0 0.0
    %1658 = vmatpush1.msra.mxu0 %v1648
    %1659 = vmatprep.subr.mxu0 0.0
    %1660 = vmatpush1.msra.mxu0 %v1649
    %1661 = vmatprep.subr.mxu0 0.0
    %1662 = vmatpush1.msra.mxu0 %v1650
    %1663 = vmatprep.subr.mxu0 0.0
    %1664 = vmatpush1.msra.mxu0 0.0
    %1665 = vmatprep.subr.mxu0 0.0
    %1666 = vmatpush1.msra.mxu0 0.0
    %1667 = vmatprep.subr.mxu0 0.0
    %1668 = vmatpush1.msra.mxu0 0.0
    %1669 = vmatprep.subr.mxu0 0.0
    %1670 = vmatpush1.msra.mxu0 0.0
    %1671 = vmatprep.subr.mxu0 0.0
    %1672 = vmatpush1.msra.mxu0 0.0
    %1673 = vmatprep.subr.mxu0 0.0
    %1674 = vmatpush1.msra.mxu0 0.0
    %1675 = vmatprep.subr.mxu0 0.0
    %1676 = vmatpush1.msra.mxu0 0.0
    %1677 = vmatprep.subr.mxu0 0.0
    %1678 = vmatpush1.msra.mxu0 0.0
    %1679 = vmatprep.subr.mxu0 0.0
    %1680 = vmatpush1.msra.mxu0 0.0
    %1681 = vmatprep.subr.mxu0 0.0
    %1682 = vmatpush1.msra.mxu0 0.0
    %1683 = vmatprep.subr.mxu0 0.0
    %1684 = vmatpush1.msra.mxu0 0.0
    %1685 = vmatprep.subr.mxu0 0.0
    %1686 = vmatpush1.msra.mxu0 0.0
    %1687 = vmatprep.subr.mxu0 0.0
    %1688 = vmatpush1.msra.mxu0 0.0
    %1689 = vmatprep.subr.mxu0 0.0
    %1690 = vmatpush1.msra.mxu0 0.0
    %1691 = vmatprep.subr.mxu0 0.0
    %1692 = vmatpush1.msra.mxu0 0.0
    %1693 = vmatprep.subr.mxu0 0.0
    %1694 = vmatpush1.msra.mxu0 0.0
    %1695 = vmatprep.subr.mxu0 0.0
    %1696 = vmatpush1.msra.mxu0 0.0
    %1697 = vmatprep.subr.mxu0 0.0
    %1698 = vmatpush1.msra.mxu0 0.0
    %1699 = vmatprep.subr.mxu0 0.0
    %1700 = vmatpush1.msra.mxu0 0.0
    %1701 = vmatprep.subr.mxu0 0.0
    %1702 = vmatpush1.msra.mxu0 0.0
    %1703 = vmatprep.subr.mxu0 0.0
    %1704 = vmatpush1.msra.mxu0 0.0
    %1705 = vmatprep.subr.mxu0 0.0
    %1706 = vmatpush1.msra.mxu0 0.0
    %1707 = vmatprep.subr.mxu0 0.0
    %1708 = vmatpush1.msra.mxu0 0.0
    %1709 = vmatprep.subr.mxu0 0.0
    %1710 = vmatpush1.msra.mxu0 0.0
    %1711 = vmatprep.subr.mxu0 0.0
    %1712 = vmatpush1.msra.mxu0 0.0
    %1713 = vmatprep.subr.mxu0 0.0
    %1714 = vmatpush1.msra.mxu0 0.0
    %1715 = vmatprep.subr.mxu0 0.0
    %1716 = vmatpush1.msra.mxu0 0.0
    %1717 = vmatprep.subr.mxu0 0.0
    %1718 = vmatpush1.msra.mxu0 0.0
    %1719 = vmatprep.mubr.f32.mxu0 0.0
    %1720 = vmatmul.mubr.f32.gmra.mrb[0].mxu0 %v183
    %v1721 = vpop.f32.mrb[0].mxu0
    %v1722 = vadd.f32 0.0, %v1721
    %v1723 = vpop.f32.mrb[0].mxu0
    %1724 = vdwg.mxu0
    %v1725 = vadd.f32 %v1637, %v1722
    %1726 = vmatprep.subr.mxu0 0.0
    %1727 = vmatpush1.msra.mxu0 %v1651
    %1728 = vmatprep.subr.mxu0 0.0
    %1729 = vmatpush1.msra.mxu0 %v1652
    %1730 = vmatprep.subr.mxu0 0.0
    %1731 = vmatpush1.msra.mxu0 %v1653
    %1732 = vmatprep.subr.mxu0 0.0
    %1733 = vmatpush1.msra.mxu0 %v1654
    %1734 = vmatprep.subr.mxu0 0.0
    %1735 = vmatpush1.msra.mxu0 0.0
    %1736 = vmatprep.subr.mxu0 0.0
    %1737 = vmatpush1.msra.mxu0 0.0
    %1738 = vmatprep.subr.mxu0 0.0
    %1739 = vmatpush1.msra.mxu0 0.0
    %1740 = vmatprep.subr.mxu0 0.0
    %1741 = vmatpush1.msra.mxu0 0.0
    %1742 = vmatprep.subr.mxu0 0.0
    %1743 = vmatpush1.msra.mxu0 0.0
    %1744 = vmatprep.subr.mxu0 0.0
    %1745 = vmatpush1.msra.mxu0 0.0
    %1746 = vmatprep.subr.mxu0 0.0
    %1747 = vmatpush1.msra.mxu0 0.0
    %1748 = vmatprep.subr.mxu0 0.0
    %1749 = vmatpush1.msra.mxu0 0.0
    %1750 = vmatprep.subr.mxu0 0.0
    %1751 = vmatpush1.msra.mxu0 0.0
    %1752 = vmatprep.subr.mxu0 0.0
    %1753 = vmatpush1.msra.mxu0 0.0
    %1754 = vmatprep.subr.mxu0 0.0
    %1755 = vmatpush1.msra.mxu0 0.0
    %1756 = vmatprep.subr.mxu0 0.0
    %1757 = vmatpush1.msra.mxu0 0.0
    %1758 = vmatprep.subr.mxu0 0.0
    %1759 = vmatpush1.msra.mxu0 0.0
    %1760 = vmatprep.subr.mxu0 0.0
    %1761 = vmatpush1.msra.mxu0 0.0
    %1762 = vmatprep.subr.mxu0 0.0
    %1763 = vmatpush1.msra.mxu0 0.0
    %1764 = vmatprep.subr.mxu0 0.0
    %1765 = vmatpush1.msra.mxu0 0.0
    %1766 = vmatprep.subr.mxu0 0.0
    %1767 = vmatpush1.msra.mxu0 0.0
    %1768 = vmatprep.subr.mxu0 0.0
    %1769 = vmatpush1.msra.mxu0 0.0
    %1770 = vmatprep.subr.mxu0 0.0
    %1771 = vmatpush1.msra.mxu0 0.0
    %1772 = vmatprep.subr.mxu0 0.0
    %1773 = vmatpush1.msra.mxu0 0.0
    %1774 = vmatprep.subr.mxu0 0.0
    %1775 = vmatpush1.msra.mxu0 0.0
    %1776 = vmatprep.subr.mxu0 0.0
    %1777 = vmatpush1.msra.mxu0 0.0
    %1778 = vmatprep.subr.mxu0 0.0
    %1779 = vmatpush1.msra.mxu0 0.0
    %1780 = vmatprep.subr.mxu0 0.0
    %1781 = vmatpush1.msra.mxu0 0.0
    %1782 = vmatprep.subr.mxu0 0.0
    %1783 = vmatpush1.msra.mxu0 0.0
    %1784 = vmatprep.subr.mxu0 0.0
    %1785 = vmatpush1.msra.mxu0 0.0
    %1786 = vmatprep.subr.mxu0 0.0
    %1787 = vmatpush1.msra.mxu0 0.0
    %1788 = vmatprep.subr.mxu0 0.0
    %1789 = vmatpush1.msra.mxu0 0.0
    %1790 = vmatprep.mubr.f32.mxu0 0.0
    %1791 = vmatmul.mubr.f32.gmra.mrb[0].mxu0 %v183
    %v1792 = vpop.f32.mrb[0].mxu0
    %v1793 = vadd.f32 0.0, %v1792
    %v1794 = vpop.f32.mrb[0].mxu0
    %1795 = vdwg.mxu0
    %v1797 = vrot.slane %v1793, 2
    %v1799 = vadd.f32 %v1645, %v1797
    %v1800 = vxor.u32 %v1725, 2147483648
    %v1801 = vmul.f32 %v1800, 1.442695
    %v1802 = vpow.pop %v1801
    %v1803 = vadd.f32 %v1802, 1.0
    %v1804 = vrcp.pop %v1803
    %v1805 = vmul.f32 1.0, %v1804
    %v1806 = vtanh.pop %v1725
    %v1807 = vmul.f32 %v1805, 0.0
    %1809 = vrot.lane.b32.xlu0 %v1806, 64
    %v1810 = vpop.permute.xlu0 %1809
    %v1812 = vmul.f32 %v1805, %v1810
    %1814 = vrot.lane.b32.xlu0 %v1812, 32
    %v1815 = vpop.permute.xlu0 %1814
    %v1817 = vadd.f32 %v1807, %v1815
    %v1818 = vtanh.pop %v1817
    %1820 = vrot.lane.b32.xlu0 %v1818, 64
    %v1821 = vpop.permute.xlu0 %1820
    %v1823 = vmul.f32 %v1805, %v1821
    %v1824 = vxor.u32 %v1799, 2147483648
    %v1825 = vmul.f32 %v1824, 1.442695
    %v1826 = vpow.pop %v1825
    %v1827 = vadd.f32 %v1826, 1.0
    %v1828 = vrcp.pop %v1827
    %v1829 = vmul.f32 1.0, %v1828
    %v1830 = vtanh.pop %v1799
    %v1831 = vmul.f32 %v1829, 0.0
    %1833 = vrot.lane.b32.xlu0 %v1830, 64
    %v1834 = vpop.permute.xlu0 %1833
    %v1836 = vmul.f32 %v1829, %v1834
    %1838 = vrot.lane.b32.xlu0 %v1836, 32
    %v1839 = vpop.permute.xlu0 %1838
    %v1841 = vadd.f32 %v1831, %v1839
    %v1842 = vtanh.pop %v1841
    %1844 = vrot.lane.b32.xlu0 %v1842, 64
    %v1845 = vpop.permute.xlu0 %1844
    %v1847 = vmul.f32 %v1829, %v1845
    %1849 = vrot.lane.b32.xlu0 %v1823, 32
    %v1850 = vpop.permute.xlu0 %1849
    %v1851 = vsel %vm96, %v1850, 0
    %1853 = vmatprep.subr.mxu0 0.0
    %1854 = vmatpush1.msra.mxu0 %v1647
    %1855 = vmatprep.subr.mxu0 0.0
    %1856 = vmatpush1.msra.mxu0 %v1648
    %1857 = vmatprep.subr.mxu0 0.0
    %1858 = vmatpush1.msra.mxu0 %v1649
    %1859 = vmatprep.subr.mxu0 0.0
    %1860 = vmatpush1.msra.mxu0 %v1650
    %1861 = vmatprep.subr.mxu0 0.0
    %1862 = vmatpush1.msra.mxu0 0.0
    %1863 = vmatprep.subr.mxu0 0.0
    %1864 = vmatpush1.msra.mxu0 0.0
    %1865 = vmatprep.subr.mxu0 0.0
    %1866 = vmatpush1.msra.mxu0 0.0
    %1867 = vmatprep.subr.mxu0 0.0
    %1868 = vmatpush1.msra.mxu0 0.0
    %1869 = vmatprep.subr.mxu0 0.0
    %1870 = vmatpush1.msra.mxu0 0.0
    %1871 = vmatprep.subr.mxu0 0.0
    %1872 = vmatpush1.msra.mxu0 0.0
    %1873 = vmatprep.subr.mxu0 0.0
    %1874 = vmatpush1.msra.mxu0 0.0
    %1875 = vmatprep.subr.mxu0 0.0
    %1876 = vmatpush1.msra.mxu0 0.0
    %1877 = vmatprep.subr.mxu0 0.0
    %1878 = vmatpush1.msra.mxu0 0.0
    %1879 = vmatprep.subr.mxu0 0.0
    %1880 = vmatpush1.msra.mxu0 0.0
    %1881 = vmatprep.subr.mxu0 0.0
    %1882 = vmatpush1.msra.mxu0 0.0
    %1883 = vmatprep.subr.mxu0 0.0
    %1884 = vmatpush1.msra.mxu0 0.0
    %1885 = vmatprep.subr.mxu0 0.0
    %1886 = vmatpush1.msra.mxu0 0.0
    %1887 = vmatprep.subr.mxu0 0.0
    %1888 = vmatpush1.msra.mxu0 0.0
    %1889 = vmatprep.subr.mxu0 0.0
    %1890 = vmatpush1.msra.mxu0 0.0
    %1891 = vmatprep.subr.mxu0 0.0
    %1892 = vmatpush1.msra.mxu0 0.0
    %1893 = vmatprep.subr.mxu0 0.0
    %1894 = vmatpush1.msra.mxu0 0.0
    %1895 = vmatprep.subr.mxu0 0.0
    %1896 = vmatpush1.msra.mxu0 0.0
    %1897 = vmatprep.subr.mxu0 0.0
    %1898 = vmatpush1.msra.mxu0 0.0
    %1899 = vmatprep.subr.mxu0 0.0
    %1900 = vmatpush1.msra.mxu0 0.0
    %1901 = vmatprep.subr.mxu0 0.0
    %1902 = vmatpush1.msra.mxu0 0.0
    %1903 = vmatprep.subr.mxu0 0.0
    %1904 = vmatpush1.msra.mxu0 0.0
    %1905 = vmatprep.subr.mxu0 0.0
    %1906 = vmatpush1.msra.mxu0 0.0
    %1907 = vmatprep.subr.mxu0 0.0
    %1908 = vmatpush1.msra.mxu0 0.0
    %1909 = vmatprep.subr.mxu0 0.0
    %1910 = vmatpush1.msra.mxu0 0.0
    %1911 = vmatprep.subr.mxu0 0.0
    %1912 = vmatpush1.msra.mxu0 0.0
    %1913 = vmatprep.subr.mxu0 0.0
    %1914 = vmatpush1.msra.mxu0 0.0
    %1915 = vmatprep.subr.mxu0 0.0
    %1916 = vmatpush1.msra.mxu0 0.0
    %1917 = vmatprep.mubr.f32.mxu0 0.0
    %1918 = vmatmul.mubr.f32.gmra.mrb[0].mxu0 %v1851
    %v1919 = vpop.f32.mrb[0].mxu0
    %v1920 = vadd.f32 0.0, %v1919
    %v1921 = vpop.f32.mrb[0].mxu0
    %1922 = vdwg.mxu0
    %v1924 = vrot.slane %v1920, 6
    %v1926 = vadd.f32 %v1637, %v1924
    %v1928 = vrot.slane %v1847, 6
    %1929 = vrot.lane.b32.xlu0 %v1928, 32
    %v1930 = vpop.permute.xlu0 %1929
    %v1931 = vsel %vm96, %v1930, 0
    %1933 = vmatprep.subr.mxu0 0.0
    %1934 = vmatpush1.msra.mxu0 %v1651
    %1935 = vmatprep.subr.mxu0 0.0
    %1936 = vmatpush1.msra.mxu0 %v1652
    %1937 = vmatprep.subr.mxu0 0.0
    %1938 = vmatpush1.msra.mxu0 %v1653
    %1939 = vmatprep.subr.mxu0 0.0
    %1940 = vmatpush1.msra.mxu0 %v1654
    %1941 = vmatprep.subr.mxu0 0.0
    %1942 = vmatpush1.msra.mxu0 0.0
    %1943 = vmatprep.subr.mxu0 0.0
    %1944 = vmatpush1.msra.mxu0 0.0
    %1945 = vmatprep.subr.mxu0 0.0
    %1946 = vmatpush1.msra.mxu0 0.0
    %1947 = vmatprep.subr.mxu0 0.0
    %1948 = vmatpush1.msra.mxu0 0.0
    %1949 = vmatprep.subr.mxu0 0.0
    %1950 = vmatpush1.msra.mxu0 0.0
    %1951 = vmatprep.subr.mxu0 0.0
    %1952 = vmatpush1.msra.mxu0 0.0
    %1953 = vmatprep.subr.mxu0 0.0
    %1954 = vmatpush1.msra.mxu0 0.0
    %1955 = vmatprep.subr.mxu0 0.0
    %1956 = vmatpush1.msra.mxu0 0.0
    %1957 = vmatprep.subr.mxu0 0.0
    %1958 = vmatpush1.msra.mxu0 0.0
    %1959 = vmatprep.subr.mxu0 0.0
    %1960 = vmatpush1.msra.mxu0 0.0
    %1961 = vmatprep.subr.mxu0 0.0
    %1962 = vmatpush1.msra.mxu0 0.0
    %1963 = vmatprep.subr.mxu0 0.0
    %1964 = vmatpush1.msra.mxu0 0.0
    %1965 = vmatprep.subr.mxu0 0.0
    %1966 = vmatpush1.msra.mxu0 0.0
    %1967 = vmatprep.subr.mxu0 0.0
    %1968 = vmatpush1.msra.mxu0 0.0
    %1969 = vmatprep.subr.mxu0 0.0
    %1970 = vmatpush1.msra.mxu0 0.0
    %1971 = vmatprep.subr.mxu0 0.0
    %1972 = vmatpush1.msra.mxu0 0.0
    %1973 = vmatprep.subr.mxu0 0.0
    %1974 = vmatpush1.msra.mxu0 0.0
    %1975 = vmatprep.subr.mxu0 0.0
    %1976 = vmatpush1.msra.mxu0 0.0
    %1977 = vmatprep.subr.mxu0 0.0
    %1978 = vmatpush1.msra.mxu0 0.0
    %1979 = vmatprep.subr.mxu0 0.0
    %1980 = vmatpush1.msra.mxu0 0.0
    %1981 = vmatprep.subr.mxu0 0.0
    %1982 = vmatpush1.msra.mxu0 0.0
    %1983 = vmatprep.subr.mxu0 0.0
    %1984 = vmatpush1.msra.mxu0 0.0
    %1985 = vmatprep.subr.mxu0 0.0
    %1986 = vmatpush1.msra.mxu0 0.0
    %1987 = vmatprep.subr.mxu0 0.0
    %1988 = vmatpush1.msra.mxu0 0.0
    %1989 = vmatprep.subr.mxu0 0.0
    %1990 = vmatpush1.msra.mxu0 0.0
    %1991 = vmatprep.subr.mxu0 0.0
    %1992 = vmatpush1.msra.mxu0 0.0
    %1993 = vmatprep.subr.mxu0 0.0
    %1994 = vmatpush1.msra.mxu0 0.0
    %1995 = vmatprep.subr.mxu0 0.0
    %1996 = vmatpush1.msra.mxu0 0.0
    %1997 = vmatprep.mubr.f32.mxu0 0.0
    %1998 = vmatmul.mubr.f32.gmra.mrb[0].mxu0 %v1931
    %v1999 = vpop.f32.mrb[0].mxu0
    %v2000 = vadd.f32 0.0, %v1999
    %v2001 = vpop.f32.mrb[0].mxu0
    %2002 = vdwg.mxu0
    %v2004 = vrot.slane %v2000, 4
    %v2006 = vadd.f32 %v1645, %v2004
    %v2007 = vxor.u32 %v1926, 2147483648
    %v2008 = vmul.f32 %v2007, 1.442695
    %v2009 = vpow.pop %v2008
    %v2010 = vadd.f32 %v2009, 1.0
    %v2011 = vrcp.pop %v2010
    %v2012 = vmul.f32 1.0, %v2011
    %v2013 = vtanh.pop %v1926
    %v2015 = vrot.slane %v1817, 6
    %v2017 = vmul.f32 %v2012, %v2015
    %2019 = vrot.lane.b32.xlu0 %v2013, 64
    %v2020 = vpop.permute.xlu0 %2019
    %v2022 = vmul.f32 %v2012, %v2020
    %2024 = vrot.lane.b32.xlu0 %v2022, 32
    %v2025 = vpop.permute.xlu0 %2024
    %v2027 = vadd.f32 %v2017, %v2025
    %v2028 = vtanh.pop %v2027
    %2030 = vrot.lane.b32.xlu0 %v2028, 64
    %v2031 = vpop.permute.xlu0 %2030
    %v2033 = vmul.f32 %v2012, %v2031
    %v2034 = vxor.u32 %v2006, 2147483648
    %v2035 = vmul.f32 %v2034, 1.442695
    %v2036 = vpow.pop %v2035
    %v2037 = vadd.f32 %v2036, 1.0
    %v2038 = vrcp.pop %v2037
    %v2039 = vmul.f32 1.0, %v2038
    %v2040 = vtanh.pop %v2006
    %v2042 = vrot.slane %v1841, 2
    %v2044 = vmul.f32 %v2039, %v2042
    %2046 = vrot.lane.b32.xlu0 %v2040, 64
    %v2047 = vpop.permute.xlu0 %2046
    %v2049 = vmul.f32 %v2039, %v2047
    %2051 = vrot.lane.b32.xlu0 %v2049, 32
    %v2052 = vpop.permute.xlu0 %2051
    %v2054 = vadd.f32 %v2044, %v2052
    %v2055 = vtanh.pop %v2054
    %2057 = vrot.lane.b32.xlu0 %v2055, 64
    %v2058 = vpop.permute.xlu0 %2057
    %v2060 = vmul.f32 %v2039, %v2058
    %v2062 = vrot.slane %v2033, 2
    %2063 = vrot.lane.b32.xlu0 %v2062, 32
    %v2064 = vpop.permute.xlu0 %2063
    %v2065 = vsel %vm96, %v2064, 0
    %2067 = vmatprep.subr.mxu0 0.0
    %2068 = vmatpush1.msra.mxu0 %v1647
    %2069 = vmatprep.subr.mxu0 0.0
    %2070 = vmatpush1.msra.mxu0 %v1648
    %2071 = vmatprep.subr.mxu0 0.0
    %2072 = vmatpush1.msra.mxu0 %v1649
    %2073 = vmatprep.subr.mxu0 0.0
    %2074 = vmatpush1.msra.mxu0 %v1650
    %2075 = vmatprep.subr.mxu0 0.0
    %2076 = vmatpush1.msra.mxu0 0.0
    %2077 = vmatprep.subr.mxu0 0.0
    %2078 = vmatpush1.msra.mxu0 0.0
    %2079 = vmatprep.subr.mxu0 0.0
    %2080 = vmatpush1.msra.mxu0 0.0
    %2081 = vmatprep.subr.mxu0 0.0
    %2082 = vmatpush1.msra.mxu0 0.0
    %2083 = vmatprep.subr.mxu0 0.0
    %2084 = vmatpush1.msra.mxu0 0.0
    %2085 = vmatprep.subr.mxu0 0.0
    %2086 = vmatpush1.msra.mxu0 0.0
    %2087 = vmatprep.subr.mxu0 0.0
    %2088 = vmatpush1.msra.mxu0 0.0
    %2089 = vmatprep.subr.mxu0 0.0
    %2090 = vmatpush1.msra.mxu0 0.0
    %2091 = vmatprep.subr.mxu0 0.0
    %2092 = vmatpush1.msra.mxu0 0.0
    %2093 = vmatprep.subr.mxu0 0.0
    %2094 = vmatpush1.msra.mxu0 0.0
    %2095 = vmatprep.subr.mxu0 0.0
    %2096 = vmatpush1.msra.mxu0 0.0
    %2097 = vmatprep.subr.mxu0 0.0
    %2098 = vmatpush1.msra.mxu0 0.0
    %2099 = vmatprep.subr.mxu0 0.0
    %2100 = vmatpush1.msra.mxu0 0.0
    %2101 = vmatprep.subr.mxu0 0.0
    %2102 = vmatpush1.msra.mxu0 0.0
    %2103 = vmatprep.subr.mxu0 0.0
    %2104 = vmatpush1.msra.mxu0 0.0
    %2105 = vmatprep.subr.mxu0 0.0
    %2106 = vmatpush1.msra.mxu0 0.0
    %2107 = vmatprep.subr.mxu0 0.0
    %2108 = vmatpush1.msra.mxu0 0.0
    %2109 = vmatprep.subr.mxu0 0.0
    %2110 = vmatpush1.msra.mxu0 0.0
    %2111 = vmatprep.subr.mxu0 0.0
    %2112 = vmatpush1.msra.mxu0 0.0
    %2113 = vmatprep.subr.mxu0 0.0
    %2114 = vmatpush1.msra.mxu0 0.0
    %2115 = vmatprep.subr.mxu0 0.0
    %2116 = vmatpush1.msra.mxu0 0.0
    %2117 = vmatprep.subr.mxu0 0.0
    %2118 = vmatpush1.msra.mxu0 0.0
    %2119 = vmatprep.subr.mxu0 0.0
    %2120 = vmatpush1.msra.mxu0 0.0
    %2121 = vmatprep.subr.mxu0 0.0
    %2122 = vmatpush1.msra.mxu0 0.0
    %2123 = vmatprep.subr.mxu0 0.0
    %2124 = vmatpush1.msra.mxu0 0.0
    %2125 = vmatprep.subr.mxu0 0.0
    %2126 = vmatpush1.msra.mxu0 0.0
    %2127 = vmatprep.subr.mxu0 0.0
    %2128 = vmatpush1.msra.mxu0 0.0
    %2129 = vmatprep.subr.mxu0 0.0
    %2130 = vmatpush1.msra.mxu0 0.0
    %2131 = vmatprep.mubr.f32.mxu0 0.0
    %2132 = vmatmul.mubr.f32.gmra.mrb[0].mxu0 %v2065
    %v2133 = vpop.f32.mrb[0].mxu0
    %v2134 = vadd.f32 0.0, %v2133
    %v2135 = vpop.f32.mrb[0].mxu0
    %2136 = vdwg.mxu0
    %v2138 = vrot.slane %v2134, 4
    %v2140 = vadd.f32 %v1637, %v2138
    %v2142 = vrot.slane %v2060, 4
    %2143 = vrot.lane.b32.xlu0 %v2142, 32
    %v2144 = vpop.permute.xlu0 %2143
    %v2145 = vsel %vm96, %v2144, 0
    %2147 = vmatprep.subr.mxu0 0.0
    %2148 = vmatpush1.msra.mxu0 %v1651
    %2149 = vmatprep.subr.mxu0 0.0
    %2150 = vmatpush1.msra.mxu0 %v1652
    %2151 = vmatprep.subr.mxu0 0.0
    %2152 = vmatpush1.msra.mxu0 %v1653
    %2153 = vmatprep.subr.mxu0 0.0
    %2154 = vmatpush1.msra.mxu0 %v1654
    %2155 = vmatprep.subr.mxu0 0.0
    %2156 = vmatpush1.msra.mxu0 0.0
    %2157 = vmatprep.subr.mxu0 0.0
    %2158 = vmatpush1.msra.mxu0 0.0
    %2159 = vmatprep.subr.mxu0 0.0
    %2160 = vmatpush1.msra.mxu0 0.0
    %2161 = vmatprep.subr.mxu0 0.0
    %2162 = vmatpush1.msra.mxu0 0.0
    %2163 = vmatprep.subr.mxu0 0.0
    %2164 = vmatpush1.msra.mxu0 0.0
    %2165 = vmatprep.subr.mxu0 0.0
    %2166 = vmatpush1.msra.mxu0 0.0
    %2167 = vmatprep.subr.mxu0 0.0
    %2168 = vmatpush1.msra.mxu0 0.0
    %2169 = vmatprep.subr.mxu0 0.0
    %2170 = vmatpush1.msra.mxu0 0.0
    %2171 = vmatprep.subr.mxu0 0.0
    %2172 = vmatpush1.msra.mxu0 0.0
    %2173 = vmatprep.subr.mxu0 0.0
    %2174 = vmatpush1.msra.mxu0 0.0
    %2175 = vmatprep.subr.mxu0 0.0
    %2176 = vmatpush1.msra.mxu0 0.0
    %2177 = vmatprep.subr.mxu0 0.0
    %2178 = vmatpush1.msra.mxu0 0.0
    %2179 = vmatprep.subr.mxu0 0.0
    %2180 = vmatpush1.msra.mxu0 0.0
    %2181 = vmatprep.subr.mxu0 0.0
    %2182 = vmatpush1.msra.mxu0 0.0
    %2183 = vmatprep.subr.mxu0 0.0
    %2184 = vmatpush1.msra.mxu0 0.0
    %2185 = vmatprep.subr.mxu0 0.0
    %2186 = vmatpush1.msra.mxu0 0.0
    %2187 = vmatprep.subr.mxu0 0.0
    %2188 = vmatpush1.msra.mxu0 0.0
    %2189 = vmatprep.subr.mxu0 0.0
    %2190 = vmatpush1.msra.mxu0 0.0
    %2191 = vmatprep.subr.mxu0 0.0
    %2192 = vmatpush1.msra.mxu0 0.0
    %2193 = vmatprep.subr.mxu0 0.0
    %2194 = vmatpush1.msra.mxu0 0.0
    %2195 = vmatprep.subr.mxu0 0.0
    %2196 = vmatpush1.msra.mxu0 0.0
    %2197 = vmatprep.subr.mxu0 0.0
    %2198 = vmatpush1.msra.mxu0 0.0
    %2199 = vmatprep.subr.mxu0 0.0
    %2200 = vmatpush1.msra.mxu0 0.0
    %2201 = vmatprep.subr.mxu0 0.0
    %2202 = vmatpush1.msra.mxu0 0.0
    %2203 = vmatprep.subr.mxu0 0.0
    %2204 = vmatpush1.msra.mxu0 0.0
    %2205 = vmatprep.subr.mxu0 0.0
    %2206 = vmatpush1.msra.mxu0 0.0
    %2207 = vmatprep.subr.mxu0 0.0
    %2208 = vmatpush1.msra.mxu0 0.0
    %2209 = vmatprep.subr.mxu0 0.0
    %2210 = vmatpush1.msra.mxu0 0.0
    %2211 = vmatprep.mubr.f32.mxu0 0.0
    %2212 = vmatmul.mubr.f32.gmra.mrb[0].mxu0 %v2145
    %v2213 = vpop.f32.mrb[0].mxu0
    %v2214 = vadd.f32 0.0, %v2213
    %v2215 = vpop.f32.mrb[0].mxu0
    %2216 = vdwg.mxu0
    %v2218 = vrot.slane %v2214, 6
    %v2220 = vadd.f32 %v1645, %v2218
    %v2221 = vxor.u32 %v2140, 2147483648
    %v2222 = vmul.f32 %v2221, 1.442695
    %v2223 = vpow.pop %v2222
    %v2224 = vadd.f32 %v2223, 1.0
    %v2225 = vrcp.pop %v2224
    %v2226 = vmul.f32 1.0, %v2225
    %v2227 = vtanh.pop %v2140
    %v2229 = vrot.slane %v2027, 6
    %v2231 = vmul.f32 %v2226, %v2229
    %2233 = vrot.lane.b32.xlu0 %v2227, 64
    %v2234 = vpop.permute.xlu0 %2233
    %v2236 = vmul.f32 %v2226, %v2234
    %2238 = vrot.lane.b32.xlu0 %v2236, 32
    %v2239 = vpop.permute.xlu0 %2238
    %v2241 = vadd.f32 %v2231, %v2239
    %v2242 = vtanh.pop %v2241
    %2244 = vrot.lane.b32.xlu0 %v2242, 64
    %v2245 = vpop.permute.xlu0 %2244
    %v2247 = vmul.f32 %v2226, %v2245
    %v2248 = vxor.u32 %v2220, 2147483648
    %v2249 = vmul.f32 %v2248, 1.442695
    %v2250 = vpow.pop %v2249
    %v2251 = vadd.f32 %v2250, 1.0
    %v2252 = vrcp.pop %v2251
    %v2253 = vmul.f32 1.0, %v2252
    %v2254 = vtanh.pop %v2220
    %v2256 = vrot.slane %v2054, 2
    %v2258 = vmul.f32 %v2253, %v2256
    %2260 = vrot.lane.b32.xlu0 %v2254, 64
    %v2261 = vpop.permute.xlu0 %2260
    %v2263 = vmul.f32 %v2253, %v2261
    %2265 = vrot.lane.b32.xlu0 %v2263, 32
    %v2266 = vpop.permute.xlu0 %2265
    %v2268 = vadd.f32 %v2258, %v2266
    %v2269 = vtanh.pop %v2268
    %2271 = vrot.lane.b32.xlu0 %v2269, 64
    %v2272 = vpop.permute.xlu0 %2271
    %v2274 = vmul.f32 %v2253, %v2272
    %v2276 = vrot.slane %v2247, 4
    %2277 = vrot.lane.b32.xlu0 %v2276, 32
    %v2278 = vpop.permute.xlu0 %2277
    %v2279 = vsel %vm96, %v2278, 0
    %2281 = vmatprep.subr.mxu0 0.0
    %2282 = vmatpush1.msra.mxu0 %v1647
    %2283 = vmatprep.subr.mxu0 0.0
    %2284 = vmatpush1.msra.mxu0 %v1648
    %2285 = vmatprep.subr.mxu0 0.0
    %2286 = vmatpush1.msra.mxu0 %v1649
    %2287 = vmatprep.subr.mxu0 0.0
    %2288 = vmatpush1.msra.mxu0 %v1650
    %2289 = vmatprep.subr.mxu0 0.0
    %2290 = vmatpush1.msra.mxu0 0.0
    %2291 = vmatprep.subr.mxu0 0.0
    %2292 = vmatpush1.msra.mxu0 0.0
    %2293 = vmatprep.subr.mxu0 0.0
    %2294 = vmatpush1.msra.mxu0 0.0
    %2295 = vmatprep.subr.mxu0 0.0
    %2296 = vmatpush1.msra.mxu0 0.0
    %2297 = vmatprep.subr.mxu0 0.0
    %2298 = vmatpush1.msra.mxu0 0.0
    %2299 = vmatprep.subr.mxu0 0.0
    %2300 = vmatpush1.msra.mxu0 0.0
    %2301 = vmatprep.subr.mxu0 0.0
    %2302 = vmatpush1.msra.mxu0 0.0
    %2303 = vmatprep.subr.mxu0 0.0
    %2304 = vmatpush1.msra.mxu0 0.0
    %2305 = vmatprep.subr.mxu0 0.0
    %2306 = vmatpush1.msra.mxu0 0.0
    %2307 = vmatprep.subr.mxu0 0.0
    %2308 = vmatpush1.msra.mxu0 0.0
    %2309 = vmatprep.subr.mxu0 0.0
    %2310 = vmatpush1.msra.mxu0 0.0
    %2311 = vmatprep.subr.mxu0 0.0
    %2312 = vmatpush1.msra.mxu0 0.0
    %2313 = vmatprep.subr.mxu0 0.0
    %2314 = vmatpush1.msra.mxu0 0.0
    %2315 = vmatprep.subr.mxu0 0.0
    %2316 = vmatpush1.msra.mxu0 0.0
    %2317 = vmatprep.subr.mxu0 0.0
    %2318 = vmatpush1.msra.mxu0 0.0
    %2319 = vmatprep.subr.mxu0 0.0
    %2320 = vmatpush1.msra.mxu0 0.0
    %2321 = vmatprep.subr.mxu0 0.0
    %2322 = vmatpush1.msra.mxu0 0.0
    %2323 = vmatprep.subr.mxu0 0.0
    %2324 = vmatpush1.msra.mxu0 0.0
    %2325 = vmatprep.subr.mxu0 0.0
    %2326 = vmatpush1.msra.mxu0 0.0
    %2327 = vmatprep.subr.mxu0 0.0
    %2328 = vmatpush1.msra.mxu0 0.0
    %2329 = vmatprep.subr.mxu0 0.0
    %2330 = vmatpush1.msra.mxu0 0.0
    %2331 = vmatprep.subr.mxu0 0.0
    %2332 = vmatpush1.msra.mxu0 0.0
    %2333 = vmatprep.subr.mxu0 0.0
    %2334 = vmatpush1.msra.mxu0 0.0
    %2335 = vmatprep.subr.mxu0 0.0
    %2336 = vmatpush1.msra.mxu0 0.0
    %2337 = vmatprep.subr.mxu0 0.0
    %2338 = vmatpush1.msra.mxu0 0.0
    %2339 = vmatprep.subr.mxu0 0.0
    %2340 = vmatpush1.msra.mxu0 0.0
    %2341 = vmatprep.subr.mxu0 0.0
    %2342 = vmatpush1.msra.mxu0 0.0
    %2343 = vmatprep.subr.mxu0 0.0
    %2344 = vmatpush1.msra.mxu0 0.0
    %2345 = vmatprep.mubr.f32.mxu0 0.0
    %2346 = vmatmul.mubr.f32.gmra.mrb[0].mxu0 %v2279
    %v2347 = vpop.f32.mrb[0].mxu0
    %v2348 = vadd.f32 0.0, %v2347
    %v2349 = vpop.f32.mrb[0].mxu0
    %2350 = vdwg.mxu0
    %v2352 = vrot.slane %v2348, 2
    %v2354 = vadd.f32 %v1637, %v2352
    %v2356 = vrot.slane %v2274, 2
    %2357 = vrot.lane.b32.xlu0 %v2356, 32
    %v2358 = vpop.permute.xlu0 %2357
    %v2359 = vsel %vm96, %v2358, 0
    %2361 = vmatprep.subr.mxu0 0.0
    %2362 = vmatpush1.msra.mxu0 %v1651
    %2363 = vmatprep.subr.mxu0 0.0
    %2364 = vmatpush1.msra.mxu0 %v1652
    %2365 = vmatprep.subr.mxu0 0.0
    %2366 = vmatpush1.msra.mxu0 %v1653
    %2367 = vmatprep.subr.mxu0 0.0
    %2368 = vmatpush1.msra.mxu0 %v1654
    %2369 = vmatprep.subr.mxu0 0.0
    %2370 = vmatpush1.msra.mxu0 0.0
    %2371 = vmatprep.subr.mxu0 0.0
    %2372 = vmatpush1.msra.mxu0 0.0
    %2373 = vmatprep.subr.mxu0 0.0
    %2374 = vmatpush1.msra.mxu0 0.0
    %2375 = vmatprep.subr.mxu0 0.0
    %2376 = vmatpush1.msra.mxu0 0.0
    %2377 = vmatprep.subr.mxu0 0.0
    %2378 = vmatpush1.msra.mxu0 0.0
    %2379 = vmatprep.subr.mxu0 0.0
    %2380 = vmatpush1.msra.mxu0 0.0
    %2381 = vmatprep.subr.mxu0 0.0
    %2382 = vmatpush1.msra.mxu0 0.0
    %2383 = vmatprep.subr.mxu0 0.0
    %2384 = vmatpush1.msra.mxu0 0.0
    %2385 = vmatprep.subr.mxu0 0.0
    %2386 = vmatpush1.msra.mxu0 0.0
    %2387 = vmatprep.subr.mxu0 0.0
    %2388 = vmatpush1.msra.mxu0 0.0
    %2389 = vmatprep.subr.mxu0 0.0
    %2390 = vmatpush1.msra.mxu0 0.0
    %2391 = vmatprep.subr.mxu0 0.0
    %2392 = vmatpush1.msra.mxu0 0.0
    %2393 = vmatprep.subr.mxu0 0.0
    %2394 = vmatpush1.msra.mxu0 0.0
    %2395 = vmatprep.subr.mxu0 0.0
    %2396 = vmatpush1.msra.mxu0 0.0
    %2397 = vmatprep.subr.mxu0 0.0
    %2398 = vmatpush1.msra.mxu0 0.0
    %2399 = vmatprep.subr.mxu0 0.0
    %2400 = vmatpush1.msra.mxu0 0.0
    %2401 = vmatprep.subr.mxu0 0.0
    %2402 = vmatpush1.msra.mxu0 0.0
    %2403 = vmatprep.subr.mxu0 0.0
    %2404 = vmatpush1.msra.mxu0 0.0
    %2405 = vmatprep.subr.mxu0 0.0
    %2406 = vmatpush1.msra.mxu0 0.0
    %2407 = vmatprep.subr.mxu0 0.0
    %2408 = vmatpush1.msra.mxu0 0.0
    %2409 = vmatprep.subr.mxu0 0.0
    %2410 = vmatpush1.msra.mxu0 0.0
    %2411 = vmatprep.subr.mxu0 0.0
    %2412 = vmatpush1.msra.mxu0 0.0
    %2413 = vmatprep.subr.mxu0 0.0
    %2414 = vmatpush1.msra.mxu0 0.0
    %2415 = vmatprep.subr.mxu0 0.0
    %2416 = vmatpush1.msra.mxu0 0.0
    %2417 = vmatprep.subr.mxu0 0.0
    %2418 = vmatpush1.msra.mxu0 0.0
    %2419 = vmatprep.subr.mxu0 0.0
    %2420 = vmatpush1.msra.mxu0 0.0
    %2421 = vmatprep.subr.mxu0 0.0
    %2422 = vmatpush1.msra.mxu0 0.0
    %2423 = vmatprep.subr.mxu0 0.0
    %2424 = vmatpush1.msra.mxu0 0.0
    %2425 = vmatprep.mubr.f32.mxu0 0.0
    %2426 = vmatmul.mubr.f32.gmra.mrb[0].mxu0 %v2359
    %v2427 = vpop.f32.mrb[0].mxu0
    %v2428 = vadd.f32 0.0, %v2427
    %v2429 = vpop.f32.mrb[0].mxu0
    %2430 = vdwg.mxu0
    %v2431 = vadd.f32 %v1645, %v2428
    %v2432 = vxor.u32 %v2354, 2147483648
    %v2433 = vmul.f32 %v2432, 1.442695
    %v2434 = vpow.pop %v2433
    %v2435 = vadd.f32 %v2434, 1.0
    %v2436 = vrcp.pop %v2435
    %v2437 = vmul.f32 1.0, %v2436
    %v2438 = vtanh.pop %v2354
    %v2440 = vrot.slane %v2241, 6
    %v2442 = vmul.f32 %v2437, %v2440
    %2444 = vrot.lane.b32.xlu0 %v2438, 64
    %v2445 = vpop.permute.xlu0 %2444
    %v2447 = vmul.f32 %v2437, %v2445
    %2449 = vrot.lane.b32.xlu0 %v2447, 32
    %v2450 = vpop.permute.xlu0 %2449
    %v2452 = vadd.f32 %v2442, %v2450
    %v2453 = vtanh.pop %v2452
    %2455 = vrot.lane.b32.xlu0 %v2453, 64
    %v2456 = vpop.permute.xlu0 %2455
    %v2458 = vmul.f32 %v2437, %v2456
    %v2459 = vxor.u32 %v2431, 2147483648
    %v2460 = vmul.f32 %v2459, 1.442695
    %v2461 = vpow.pop %v2460
    %v2462 = vadd.f32 %v2461, 1.0
    %v2463 = vrcp.pop %v2462
    %v2464 = vmul.f32 1.0, %v2463
    %v2465 = vtanh.pop %v2431
    %v2467 = vrot.slane %v2268, 2
    %v2469 = vmul.f32 %v2464, %v2467
    %2471 = vrot.lane.b32.xlu0 %v2465, 64
    %v2472 = vpop.permute.xlu0 %2471
    %v2474 = vmul.f32 %v2464, %v2472
    %2476 = vrot.lane.b32.xlu0 %v2474, 32
    %v2477 = vpop.permute.xlu0 %2476
    %v2479 = vadd.f32 %v2469, %v2477
    %v2480 = vtanh.pop %v2479
    %2482 = vrot.lane.b32.xlu0 %v2480, 64
    %v2483 = vpop.permute.xlu0 %2482
    %v2485 = vmul.f32 %v2464, %v2483
    %v2487 = vrot.slane %v2458, 6
    %2488 = vrot.lane.b32.xlu0 %v2487, 32
    %v2489 = vpop.permute.xlu0 %2488
    %v2490 = vsel %vm96, %v2489, 0
    %2492 = vmatprep.subr.mxu0 0.0
    %2493 = vmatpush1.msra.mxu0 %v1647
    %2494 = vmatprep.subr.mxu0 0.0
    %2495 = vmatpush1.msra.mxu0 %v1648
    %2496 = vmatprep.subr.mxu0 0.0
    %2497 = vmatpush1.msra.mxu0 %v1649
    %2498 = vmatprep.subr.mxu0 0.0
    %2499 = vmatpush1.msra.mxu0 %v1650
    %2500 = vmatprep.subr.mxu0 0.0
    %2501 = vmatpush1.msra.mxu0 0.0
    %2502 = vmatprep.subr.mxu0 0.0
    %2503 = vmatpush1.msra.mxu0 0.0
    %2504 = vmatprep.subr.mxu0 0.0
    %2505 = vmatpush1.msra.mxu0 0.0
    %2506 = vmatprep.subr.mxu0 0.0
    %2507 = vmatpush1.msra.mxu0 0.0
    %2508 = vmatprep.subr.mxu0 0.0
    %2509 = vmatpush1.msra.mxu0 0.0
    %2510 = vmatprep.subr.mxu0 0.0
    %2511 = vmatpush1.msra.mxu0 0.0
    %2512 = vmatprep.subr.mxu0 0.0
    %2513 = vmatpush1.msra.mxu0 0.0
    %2514 = vmatprep.subr.mxu0 0.0
    %2515 = vmatpush1.msra.mxu0 0.0
    %2516 = vmatprep.subr.mxu0 0.0
    %2517 = vmatpush1.msra.mxu0 0.0
    %2518 = vmatprep.subr.mxu0 0.0
    %2519 = vmatpush1.msra.mxu0 0.0
    %2520 = vmatprep.subr.mxu0 0.0
    %2521 = vmatpush1.msra.mxu0 0.0
    %2522 = vmatprep.subr.mxu0 0.0
    %2523 = vmatpush1.msra.mxu0 0.0
    %2524 = vmatprep.subr.mxu0 0.0
    %2525 = vmatpush1.msra.mxu0 0.0
    %2526 = vmatprep.subr.mxu0 0.0
    %2527 = vmatpush1.msra.mxu0 0.0
    %2528 = vmatprep.subr.mxu0 0.0
    %2529 = vmatpush1.msra.mxu0 0.0
    %2530 = vmatprep.subr.mxu0 0.0
    %2531 = vmatpush1.msra.mxu0 0.0
    %2532 = vmatprep.subr.mxu0 0.0
    %2533 = vmatpush1.msra.mxu0 0.0
    %2534 = vmatprep.subr.mxu0 0.0
    %2535 = vmatpush1.msra.mxu0 0.0
    %2536 = vmatprep.subr.mxu0 0.0
    %2537 = vmatpush1.msra.mxu0 0.0
    %2538 = vmatprep.subr.mxu0 0.0
    %2539 = vmatpush1.msra.mxu0 0.0
    %2540 = vmatprep.subr.mxu0 0.0
    %2541 = vmatpush1.msra.mxu0 0.0
    %2542 = vmatprep.subr.mxu0 0.0
    %2543 = vmatpush1.msra.mxu0 0.0
    %2544 = vmatprep.subr.mxu0 0.0
    %2545 = vmatpush1.msra.mxu0 0.0
    %2546 = vmatprep.subr.mxu0 0.0
    %2547 = vmatpush1.msra.mxu0 0.0
    %2548 = vmatprep.subr.mxu0 0.0
    %2549 = vmatpush1.msra.mxu0 0.0
    %2550 = vmatprep.subr.mxu0 0.0
    %2551 = vmatpush1.msra.mxu0 0.0
    %2552 = vmatprep.subr.mxu0 0.0
    %2553 = vmatpush1.msra.mxu0 0.0
    %2554 = vmatprep.subr.mxu0 0.0
    %2555 = vmatpush1.msra.mxu0 0.0
    %2556 = vmatprep.mubr.f32.mxu0 0.0
    %2557 = vmatmul.mubr.f32.gmra.mrb[0].mxu0 %v2490
    %v2558 = vpop.f32.mrb[0].mxu0
    %v2559 = vadd.f32 0.0, %v2558
    %v2560 = vpop.f32.mrb[0].mxu0
    %2561 = vdwg.mxu0
    %v2562 = vadd.f32 %v1643, %v2559
    %2564 = vrot.lane.b32.xlu0 %v2485, 32
    %v2565 = vpop.permute.xlu0 %2564
    %v2566 = vsel %vm96, %v2565, 0
    %2568 = vmatprep.subr.mxu0 0.0
    %2569 = vmatpush1.msra.mxu0 %v1651
    %2570 = vmatprep.subr.mxu0 0.0
    %2571 = vmatpush1.msra.mxu0 %v1652
    %2572 = vmatprep.subr.mxu0 0.0
    %2573 = vmatpush1.msra.mxu0 %v1653
    %2574 = vmatprep.subr.mxu0 0.0
    %2575 = vmatpush1.msra.mxu0 %v1654
    %2576 = vmatprep.subr.mxu0 0.0
    %2577 = vmatpush1.msra.mxu0 0.0
    %2578 = vmatprep.subr.mxu0 0.0
    %2579 = vmatpush1.msra.mxu0 0.0
    %2580 = vmatprep.subr.mxu0 0.0
    %2581 = vmatpush1.msra.mxu0 0.0
    %2582 = vmatprep.subr.mxu0 0.0
    %2583 = vmatpush1.msra.mxu0 0.0
    %2584 = vmatprep.subr.mxu0 0.0
    %2585 = vmatpush1.msra.mxu0 0.0
    %2586 = vmatprep.subr.mxu0 0.0
    %2587 = vmatpush1.msra.mxu0 0.0
    %2588 = vmatprep.subr.mxu0 0.0
    %2589 = vmatpush1.msra.mxu0 0.0
    %2590 = vmatprep.subr.mxu0 0.0
    %2591 = vmatpush1.msra.mxu0 0.0
    %2592 = vmatprep.subr.mxu0 0.0
    %2593 = vmatpush1.msra.mxu0 0.0
    %2594 = vmatprep.subr.mxu0 0.0
    %2595 = vmatpush1.msra.mxu0 0.0
    %2596 = vmatprep.subr.mxu0 0.0
    %2597 = vmatpush1.msra.mxu0 0.0
    %2598 = vmatprep.subr.mxu0 0.0
    %2599 = vmatpush1.msra.mxu0 0.0
    %2600 = vmatprep.subr.mxu0 0.0
    %2601 = vmatpush1.msra.mxu0 0.0
    %2602 = vmatprep.subr.mxu0 0.0
    %2603 = vmatpush1.msra.mxu0 0.0
    %2604 = vmatprep.subr.mxu0 0.0
    %2605 = vmatpush1.msra.mxu0 0.0
    %2606 = vmatprep.subr.mxu0 0.0
    %2607 = vmatpush1.msra.mxu0 0.0
    %2608 = vmatprep.subr.mxu0 0.0
    %2609 = vmatpush1.msra.mxu0 0.0
    %2610 = vmatprep.subr.mxu0 0.0
    %2611 = vmatpush1.msra.mxu0 0.0
    %2612 = vmatprep.subr.mxu0 0.0
    %2613 = vmatpush1.msra.mxu0 0.0
    %2614 = vmatprep.subr.mxu0 0.0
    %2615 = vmatpush1.msra.mxu0 0.0
    %2616 = vmatprep.subr.mxu0 0.0
    %2617 = vmatpush1.msra.mxu0 0.0
    %2618 = vmatprep.subr.mxu0 0.0
    %2619 = vmatpush1.msra.mxu0 0.0
    %2620 = vmatprep.subr.mxu0 0.0
    %2621 = vmatpush1.msra.mxu0 0.0
    %2622 = vmatprep.subr.mxu0 0.0
    %2623 = vmatpush1.msra.mxu0 0.0
    %2624 = vmatprep.subr.mxu0 0.0
    %2625 = vmatpush1.msra.mxu0 0.0
    %2626 = vmatprep.subr.mxu0 0.0
    %2627 = vmatpush1.msra.mxu0 0.0
    %2628 = vmatprep.subr.mxu0 0.0
    %2629 = vmatpush1.msra.mxu0 0.0
    %2630 = vmatprep.subr.mxu0 0.0
    %2631 = vmatpush1.msra.mxu0 0.0
    %2632 = vmatprep.mubr.f32.mxu0 0.0
    %2633 = vmatmul.mubr.f32.gmra.mrb[0].mxu0 %v2566
    %v2634 = vpop.f32.mrb[0].mxu0
    %v2635 = vadd.f32 0.0, %v2634
    %v2636 = vpop.f32.mrb[0].mxu0
    %2637 = vdwg.mxu0
    %v2639 = vrot.slane %v2635, 2
    %v2641 = vadd.f32 %v1639, %v2639
    %v2642 = vxor.u32 %v2562, 2147483648
    %v2643 = vmul.f32 %v2642, 1.442695
    %v2644 = vpow.pop %v2643
    %v2645 = vadd.f32 %v2644, 1.0
    %v2646 = vrcp.pop %v2645
    %v2647 = vmul.f32 1.0, %v2646
    %v2648 = vtanh.pop %v2562
    %v2650 = vrot.slane %v2452, 6
    %v2652 = vmul.f32 %v2647, %v2650
    %2654 = vrot.lane.b32.xlu0 %v2648, 64
    %v2655 = vpop.permute.xlu0 %2654
    %v2657 = vmul.f32 %v2647, %v2655
    %2659 = vrot.lane.b32.xlu0 %v2657, 32
    %v2660 = vpop.permute.xlu0 %2659
    %v2662 = vadd.f32 %v2652, %v2660
    %v2663 = vtanh.pop %v2662
    %2665 = vrot.lane.b32.xlu0 %v2663, 64
    %v2666 = vpop.permute.xlu0 %2665
    %v2668 = vmul.f32 %v2647, %v2666
    %v2669 = vxor.u32 %v2641, 2147483648
    %v2670 = vmul.f32 %v2669, 1.442695
    %v2671 = vpow.pop %v2670
    %v2672 = vadd.f32 %v2671, 1.0
    %v2673 = vrcp.pop %v2672
    %v2674 = vmul.f32 1.0, %v2673
    %v2675 = vtanh.pop %v2641
    %v2677 = vrot.slane %v2479, 2
    %v2679 = vmul.f32 %v2674, %v2677
    %2681 = vrot.lane.b32.xlu0 %v2675, 64
    %v2682 = vpop.permute.xlu0 %2681
    %v2684 = vmul.f32 %v2674, %v2682
    %2686 = vrot.lane.b32.xlu0 %v2684, 32
    %v2687 = vpop.permute.xlu0 %2686
    %v2689 = vadd.f32 %v2679, %v2687
    %v2690 = vtanh.pop %v2689
    %2692 = vrot.lane.b32.xlu0 %v2690, 64
    %v2693 = vpop.permute.xlu0 %2692
    %v2695 = vmul.f32 %v2674, %v2693
    %2697 = vrot.lane.b32.xlu0 %v2668, 32
    %v2698 = vpop.permute.xlu0 %2697
    %v2699 = vsel %vm96, %v2698, 0
    %2701 = vmatprep.subr.mxu0 0.0
    %2702 = vmatpush1.msra.mxu0 %v1647
    %2703 = vmatprep.subr.mxu0 0.0
    %2704 = vmatpush1.msra.mxu0 %v1648
    %2705 = vmatprep.subr.mxu0 0.0
    %2706 = vmatpush1.msra.mxu0 %v1649
    %2707 = vmatprep.subr.mxu0 0.0
    %2708 = vmatpush1.msra.mxu0 %v1650
    %2709 = vmatprep.subr.mxu0 0.0
    %2710 = vmatpush1.msra.mxu0 0.0
    %2711 = vmatprep.subr.mxu0 0.0
    %2712 = vmatpush1.msra.mxu0 0.0
    %2713 = vmatprep.subr.mxu0 0.0
    %2714 = vmatpush1.msra.mxu0 0.0
    %2715 = vmatprep.subr.mxu0 0.0
    %2716 = vmatpush1.msra.mxu0 0.0
    %2717 = vmatprep.subr.mxu0 0.0
    %2718 = vmatpush1.msra.mxu0 0.0
    %2719 = vmatprep.subr.mxu0 0.0
    %2720 = vmatpush1.msra.mxu0 0.0
    %2721 = vmatprep.subr.mxu0 0.0
    %2722 = vmatpush1.msra.mxu0 0.0
    %2723 = vmatprep.subr.mxu0 0.0
    %2724 = vmatpush1.msra.mxu0 0.0
    %2725 = vmatprep.subr.mxu0 0.0
    %2726 = vmatpush1.msra.mxu0 0.0
    %2727 = vmatprep.subr.mxu0 0.0
    %2728 = vmatpush1.msra.mxu0 0.0
    %2729 = vmatprep.subr.mxu0 0.0
    %2730 = vmatpush1.msra.mxu0 0.0
    %2731 = vmatprep.subr.mxu0 0.0
    %2732 = vmatpush1.msra.mxu0 0.0
    %2733 = vmatprep.subr.mxu0 0.0
    %2734 = vmatpush1.msra.mxu0 0.0
    %2735 = vmatprep.subr.mxu0 0.0
    %2736 = vmatpush1.msra.mxu0 0.0
    %2737 = vmatprep.subr.mxu0 0.0
    %2738 = vmatpush1.msra.mxu0 0.0
    %2739 = vmatprep.subr.mxu0 0.0
    %2740 = vmatpush1.msra.mxu0 0.0
    %2741 = vmatprep.subr.mxu0 0.0
    %2742 = vmatpush1.msra.mxu0 0.0
    %2743 = vmatprep.subr.mxu0 0.0
    %2744 = vmatpush1.msra.mxu0 0.0
    %2745 = vmatprep.subr.mxu0 0.0
    %2746 = vmatpush1.msra.mxu0 0.0
    %2747 = vmatprep.subr.mxu0 0.0
    %2748 = vmatpush1.msra.mxu0 0.0
    %2749 = vmatprep.subr.mxu0 0.0
    %2750 = vmatpush1.msra.mxu0 0.0
    %2751 = vmatprep.subr.mxu0 0.0
    %2752 = vmatpush1.msra.mxu0 0.0
    %2753 = vmatprep.subr.mxu0 0.0
    %2754 = vmatpush1.msra.mxu0 0.0
    %2755 = vmatprep.subr.mxu0 0.0
    %2756 = vmatpush1.msra.mxu0 0.0
    %2757 = vmatprep.subr.mxu0 0.0
    %2758 = vmatpush1.msra.mxu0 0.0
    %2759 = vmatprep.subr.mxu0 0.0
    %2760 = vmatpush1.msra.mxu0 0.0
    %2761 = vmatprep.subr.mxu0 0.0
    %2762 = vmatpush1.msra.mxu0 0.0
    %2763 = vmatprep.subr.mxu0 0.0
    %2764 = vmatpush1.msra.mxu0 0.0
    %2765 = vmatprep.mubr.f32.mxu0 0.0
    %2766 = vmatmul.mubr.f32.gmra.mrb[0].mxu0 %v2699
    %v2767 = vpop.f32.mrb[0].mxu0
    %v2768 = vadd.f32 0.0, %v2767
    %v2769 = vpop.f32.mrb[0].mxu0
    %2770 = vdwg.mxu0
    %v2772 = vrot.slane %v2768, 6
    %v2774 = vadd.f32 %v1643, %v2772
    %v2776 = vrot.slane %v2695, 6
    %2777 = vrot.lane.b32.xlu0 %v2776, 32
    %v2778 = vpop.permute.xlu0 %2777
    %v2779 = vsel %vm96, %v2778, 0
    %2781 = vmatprep.subr.mxu0 0.0
    %2782 = vmatpush1.msra.mxu0 %v1651
    %2783 = vmatprep.subr.mxu0 0.0
    %2784 = vmatpush1.msra.mxu0 %v1652
    %2785 = vmatprep.subr.mxu0 0.0
    %2786 = vmatpush1.msra.mxu0 %v1653
    %2787 = vmatprep.subr.mxu0 0.0
    %2788 = vmatpush1.msra.mxu0 %v1654
    %2789 = vmatprep.subr.mxu0 0.0
    %2790 = vmatpush1.msra.mxu0 0.0
    %2791 = vmatprep.subr.mxu0 0.0
    %2792 = vmatpush1.msra.mxu0 0.0
    %2793 = vmatprep.subr.mxu0 0.0
    %2794 = vmatpush1.msra.mxu0 0.0
    %2795 = vmatprep.subr.mxu0 0.0
    %2796 = vmatpush1.msra.mxu0 0.0
    %2797 = vmatprep.subr.mxu0 0.0
    %2798 = vmatpush1.msra.mxu0 0.0
    %2799 = vmatprep.subr.mxu0 0.0
    %2800 = vmatpush1.msra.mxu0 0.0
    %2801 = vmatprep.subr.mxu0 0.0
    %2802 = vmatpush1.msra.mxu0 0.0
    %2803 = vmatprep.subr.mxu0 0.0
    %2804 = vmatpush1.msra.mxu0 0.0
    %2805 = vmatprep.subr.mxu0 0.0
    %2806 = vmatpush1.msra.mxu0 0.0
    %2807 = vmatprep.subr.mxu0 0.0
    %2808 = vmatpush1.msra.mxu0 0.0
    %2809 = vmatprep.subr.mxu0 0.0
    %2810 = vmatpush1.msra.mxu0 0.0
    %2811 = vmatprep.subr.mxu0 0.0
    %2812 = vmatpush1.msra.mxu0 0.0
    %2813 = vmatprep.subr.mxu0 0.0
    %2814 = vmatpush1.msra.mxu0 0.0
    %2815 = vmatprep.subr.mxu0 0.0
    %2816 = vmatpush1.msra.mxu0 0.0
    %2817 = vmatprep.subr.mxu0 0.0
    %2818 = vmatpush1.msra.mxu0 0.0
    %2819 = vmatprep.subr.mxu0 0.0
    %2820 = vmatpush1.msra.mxu0 0.0
    %2821 = vmatprep.subr.mxu0 0.0
    %2822 = vmatpush1.msra.mxu0 0.0
    %2823 = vmatprep.subr.mxu0 0.0
    %2824 = vmatpush1.msra.mxu0 0.0
    %2825 = vmatprep.subr.mxu0 0.0
    %2826 = vmatpush1.msra.mxu0 0.0
    %2827 = vmatprep.subr.mxu0 0.0
    %2828 = vmatpush1.msra.mxu0 0.0
    %2829 = vmatprep.subr.mxu0 0.0
    %2830 = vmatpush1.msra.mxu0 0.0
    %2831 = vmatprep.subr.mxu0 0.0
    %2832 = vmatpush1.msra.mxu0 0.0
    %2833 = vmatprep.subr.mxu0 0.0
    %2834 = vmatpush1.msra.mxu0 0.0
    %2835 = vmatprep.subr.mxu0 0.0
    %2836 = vmatpush1.msra.mxu0 0.0
    %2837 = vmatprep.subr.mxu0 0.0
    %2838 = vmatpush1.msra.mxu0 0.0
    %2839 = vmatprep.subr.mxu0 0.0
    %2840 = vmatpush1.msra.mxu0 0.0
    %2841 = vmatprep.subr.mxu0 0.0
    %2842 = vmatpush1.msra.mxu0 0.0
    %2843 = vmatprep.subr.mxu0 0.0
    %2844 = vmatpush1.msra.mxu0 0.0
    %2845 = vmatprep.mubr.f32.mxu0 0.0
    %2846 = vmatmul.mubr.f32.gmra.mrb[0].mxu0 %v2779
    %v2847 = vpop.f32.mrb[0].mxu0
    %v2848 = vadd.f32 0.0, %v2847
    %v2849 = vpop.f32.mrb[0].mxu0
    %2850 = vdwg.mxu0
    %v2852 = vrot.slane %v2848, 4
    %v2854 = vadd.f32 %v1639, %v2852
    %v2855 = vxor.u32 %v2774, 2147483648
    %v2856 = vmul.f32 %v2855, 1.442695
    %v2857 = vpow.pop %v2856
    %v2858 = vadd.f32 %v2857, 1.0
    %v2859 = vrcp.pop %v2858
    %v2860 = vmul.f32 1.0, %v2859
    %v2861 = vtanh.pop %v2774
    %v2863 = vrot.slane %v2662, 6
    %v2865 = vmul.f32 %v2860, %v2863
    %2867 = vrot.lane.b32.xlu0 %v2861, 64
    %v2868 = vpop.permute.xlu0 %2867
    %v2870 = vmul.f32 %v2860, %v2868
    %2872 = vrot.lane.b32.xlu0 %v2870, 32
    %v2873 = vpop.permute.xlu0 %2872
    %v2875 = vadd.f32 %v2865, %v2873
    %v2876 = vtanh.pop %v2875
    %2878 = vrot.lane.b32.xlu0 %v2876, 64
    %v2879 = vpop.permute.xlu0 %2878
    %v2881 = vmul.f32 %v2860, %v2879
    %v2882 = vxor.u32 %v2854, 2147483648
    %v2883 = vmul.f32 %v2882, 1.442695
    %v2884 = vpow.pop %v2883
    %v2885 = vadd.f32 %v2884, 1.0
    %v2886 = vrcp.pop %v2885
    %v2887 = vmul.f32 1.0, %v2886
    %v2888 = vtanh.pop %v2854
    %v2890 = vrot.slane %v2689, 2
    %v2892 = vmul.f32 %v2887, %v2890
    %2894 = vrot.lane.b32.xlu0 %v2888, 64
    %v2895 = vpop.permute.xlu0 %2894
    %v2897 = vmul.f32 %v2887, %v2895
    %2899 = vrot.lane.b32.xlu0 %v2897, 32
    %v2900 = vpop.permute.xlu0 %2899
    %v2902 = vadd.f32 %v2892, %v2900
    %v2903 = vtanh.pop %v2902
    %2905 = vrot.lane.b32.xlu0 %v2903, 64
    %v2906 = vpop.permute.xlu0 %2905
    %v2908 = vmul.f32 %v2887, %v2906
    %v2910 = vrot.slane %v2881, 2
    %2911 = vrot.lane.b32.xlu0 %v2910, 32
    %v2912 = vpop.permute.xlu0 %2911
    %v2913 = vsel %vm96, %v2912, 0
    %2915 = vmatprep.subr.mxu0 0.0
    %2916 = vmatpush1.msra.mxu0 %v1647
    %2917 = vmatprep.subr.mxu0 0.0
    %2918 = vmatpush1.msra.mxu0 %v1648
    %2919 = vmatprep.subr.mxu0 0.0
    %2920 = vmatpush1.msra.mxu0 %v1649
    %2921 = vmatprep.subr.mxu0 0.0
    %2922 = vmatpush1.msra.mxu0 %v1650
    %2923 = vmatprep.subr.mxu0 0.0
    %2924 = vmatpush1.msra.mxu0 0.0
    %2925 = vmatprep.subr.mxu0 0.0
    %2926 = vmatpush1.msra.mxu0 0.0
    %2927 = vmatprep.subr.mxu0 0.0
    %2928 = vmatpush1.msra.mxu0 0.0
    %2929 = vmatprep.subr.mxu0 0.0
    %2930 = vmatpush1.msra.mxu0 0.0
    %2931 = vmatprep.subr.mxu0 0.0
    %2932 = vmatpush1.msra.mxu0 0.0
    %2933 = vmatprep.subr.mxu0 0.0
    %2934 = vmatpush1.msra.mxu0 0.0
    %2935 = vmatprep.subr.mxu0 0.0
    %2936 = vmatpush1.msra.mxu0 0.0
    %2937 = vmatprep.subr.mxu0 0.0
    %2938 = vmatpush1.msra.mxu0 0.0
    %2939 = vmatprep.subr.mxu0 0.0
    %2940 = vmatpush1.msra.mxu0 0.0
    %2941 = vmatprep.subr.mxu0 0.0
    %2942 = vmatpush1.msra.mxu0 0.0
    %2943 = vmatprep.subr.mxu0 0.0
    %2944 = vmatpush1.msra.mxu0 0.0
    %2945 = vmatprep.subr.mxu0 0.0
    %2946 = vmatpush1.msra.mxu0 0.0
    %2947 = vmatprep.subr.mxu0 0.0
    %2948 = vmatpush1.msra.mxu0 0.0
    %2949 = vmatprep.subr.mxu0 0.0
    %2950 = vmatpush1.msra.mxu0 0.0
    %2951 = vmatprep.subr.mxu0 0.0
    %2952 = vmatpush1.msra.mxu0 0.0
    %2953 = vmatprep.subr.mxu0 0.0
    %2954 = vmatpush1.msra.mxu0 0.0
    %2955 = vmatprep.subr.mxu0 0.0
    %2956 = vmatpush1.msra.mxu0 0.0
    %2957 = vmatprep.subr.mxu0 0.0
    %2958 = vmatpush1.msra.mxu0 0.0
    %2959 = vmatprep.subr.mxu0 0.0
    %2960 = vmatpush1.msra.mxu0 0.0
    %2961 = vmatprep.subr.mxu0 0.0
    %2962 = vmatpush1.msra.mxu0 0.0
    %2963 = vmatprep.subr.mxu0 0.0
    %2964 = vmatpush1.msra.mxu0 0.0
    %2965 = vmatprep.subr.mxu0 0.0
    %2966 = vmatpush1.msra.mxu0 0.0
    %2967 = vmatprep.subr.mxu0 0.0
    %2968 = vmatpush1.msra.mxu0 0.0
    %2969 = vmatprep.subr.mxu0 0.0
    %2970 = vmatpush1.msra.mxu0 0.0
    %2971 = vmatprep.subr.mxu0 0.0
    %2972 = vmatpush1.msra.mxu0 0.0
    %2973 = vmatprep.subr.mxu0 0.0
    %2974 = vmatpush1.msra.mxu0 0.0
    %2975 = vmatprep.subr.mxu0 0.0
    %2976 = vmatpush1.msra.mxu0 0.0
    %2977 = vmatprep.subr.mxu0 0.0
    %2978 = vmatpush1.msra.mxu0 0.0
    %2979 = vmatprep.mubr.f32.mxu0 0.0
    %2980 = vmatmul.mubr.f32.gmra.mrb[0].mxu0 %v2913
    %v2981 = vpop.f32.mrb[0].mxu0
    %v2982 = vadd.f32 0.0, %v2981
    %v2983 = vpop.f32.mrb[0].mxu0
    %2984 = vdwg.mxu0
    %v2986 = vrot.slane %v2982, 4
    %v2988 = vadd.f32 %v1643, %v2986
    %v2990 = vrot.slane %v2908, 4
    %2991 = vrot.lane.b32.xlu0 %v2990, 32
    %v2992 = vpop.permute.xlu0 %2991
    %v2993 = vsel %vm96, %v2992, 0
    %2995 = vmatprep.subr.mxu0 0.0
    %2996 = vmatpush1.msra.mxu0 %v1651
    %2997 = vmatprep.subr.mxu0 0.0
    %2998 = vmatpush1.msra.mxu0 %v1652
    %2999 = vmatprep.subr.mxu0 0.0
    %3000 = vmatpush1.msra.mxu0 %v1653
    %3001 = vmatprep.subr.mxu0 0.0
    %3002 = vmatpush1.msra.mxu0 %v1654
    %3003 = vmatprep.subr.mxu0 0.0
    %3004 = vmatpush1.msra.mxu0 0.0
    %3005 = vmatprep.subr.mxu0 0.0
    %3006 = vmatpush1.msra.mxu0 0.0
    %3007 = vmatprep.subr.mxu0 0.0
    %3008 = vmatpush1.msra.mxu0 0.0
    %3009 = vmatprep.subr.mxu0 0.0
    %3010 = vmatpush1.msra.mxu0 0.0
    %3011 = vmatprep.subr.mxu0 0.0
    %3012 = vmatpush1.msra.mxu0 0.0
    %3013 = vmatprep.subr.mxu0 0.0
    %3014 = vmatpush1.msra.mxu0 0.0
    %3015 = vmatprep.subr.mxu0 0.0
    %3016 = vmatpush1.msra.mxu0 0.0
    %3017 = vmatprep.subr.mxu0 0.0
    %3018 = vmatpush1.msra.mxu0 0.0
    %3019 = vmatprep.subr.mxu0 0.0
    %3020 = vmatpush1.msra.mxu0 0.0
    %3021 = vmatprep.subr.mxu0 0.0
    %3022 = vmatpush1.msra.mxu0 0.0
    %3023 = vmatprep.subr.mxu0 0.0
    %3024 = vmatpush1.msra.mxu0 0.0
    %3025 = vmatprep.subr.mxu0 0.0
    %3026 = vmatpush1.msra.mxu0 0.0
    %3027 = vmatprep.subr.mxu0 0.0
    %3028 = vmatpush1.msra.mxu0 0.0
    %3029 = vmatprep.subr.mxu0 0.0
    %3030 = vmatpush1.msra.mxu0 0.0
    %3031 = vmatprep.subr.mxu0 0.0
    %3032 = vmatpush1.msra.mxu0 0.0
    %3033 = vmatprep.subr.mxu0 0.0
    %3034 = vmatpush1.msra.mxu0 0.0
    %3035 = vmatprep.subr.mxu0 0.0
    %3036 = vmatpush1.msra.mxu0 0.0
    %3037 = vmatprep.subr.mxu0 0.0
    %3038 = vmatpush1.msra.mxu0 0.0
    %3039 = vmatprep.subr.mxu0 0.0
    %3040 = vmatpush1.msra.mxu0 0.0
    %3041 = vmatprep.subr.mxu0 0.0
    %3042 = vmatpush1.msra.mxu0 0.0
    %3043 = vmatprep.subr.mxu0 0.0
    %3044 = vmatpush1.msra.mxu0 0.0
    %3045 = vmatprep.subr.mxu0 0.0
    %3046 = vmatpush1.msra.mxu0 0.0
    %3047 = vmatprep.subr.mxu0 0.0
    %3048 = vmatpush1.msra.mxu0 0.0
    %3049 = vmatprep.subr.mxu0 0.0
    %3050 = vmatpush1.msra.mxu0 0.0
    %3051 = vmatprep.subr.mxu0 0.0
    %3052 = vmatpush1.msra.mxu0 0.0
    %3053 = vmatprep.subr.mxu0 0.0
    %3054 = vmatpush1.msra.mxu0 0.0
    %3055 = vmatprep.subr.mxu0 0.0
    %3056 = vmatpush1.msra.mxu0 0.0
    %3057 = vmatprep.subr.mxu0 0.0
    %3058 = vmatpush1.msra.mxu0 0.0
    %3059 = vmatprep.mubr.f32.mxu0 0.0
    %3060 = vmatmul.mubr.f32.gmra.mrb[0].mxu0 %v2993
    %v3061 = vpop.f32.mrb[0].mxu0
    %v3062 = vadd.f32 0.0, %v3061
    %v3063 = vpop.f32.mrb[0].mxu0
    %3064 = vdwg.mxu0
    %v3066 = vrot.slane %v3062, 6
    %v3068 = vadd.f32 %v1639, %v3066
    %v3069 = vxor.u32 %v2988, 2147483648
    %v3070 = vmul.f32 %v3069, 1.442695
    %v3071 = vpow.pop %v3070
    %v3072 = vadd.f32 %v3071, 1.0
    %v3073 = vrcp.pop %v3072
    %v3074 = vmul.f32 1.0, %v3073
    %v3075 = vtanh.pop %v2988
    %v3077 = vrot.slane %v2875, 6
    %v3079 = vmul.f32 %v3074, %v3077
    %3081 = vrot.lane.b32.xlu0 %v3075, 64
    %v3082 = vpop.permute.xlu0 %3081
    %v3084 = vmul.f32 %v3074, %v3082
    %3086 = vrot.lane.b32.xlu0 %v3084, 32
    %v3087 = vpop.permute.xlu0 %3086
    %v3089 = vadd.f32 %v3079, %v3087
    %v3090 = vtanh.pop %v3089
    %3092 = vrot.lane.b32.xlu0 %v3090, 64
    %v3093 = vpop.permute.xlu0 %3092
    %v3095 = vmul.f32 %v3074, %v3093
    %v3096 = vxor.u32 %v3068, 2147483648
    %v3097 = vmul.f32 %v3096, 1.442695
    %v3098 = vpow.pop %v3097
    %v3099 = vadd.f32 %v3098, 1.0
    %v3100 = vrcp.pop %v3099
    %v3101 = vmul.f32 1.0, %v3100
    %v3102 = vtanh.pop %v3068
    %v3104 = vrot.slane %v2902, 2
    %v3106 = vmul.f32 %v3101, %v3104
    %3108 = vrot.lane.b32.xlu0 %v3102, 64
    %v3109 = vpop.permute.xlu0 %3108
    %v3111 = vmul.f32 %v3101, %v3109
    %3113 = vrot.lane.b32.xlu0 %v3111, 32
    %v3114 = vpop.permute.xlu0 %3113
    %v3116 = vadd.f32 %v3106, %v3114
    %v3117 = vtanh.pop %v3116
    %3119 = vrot.lane.b32.xlu0 %v3117, 64
    %v3120 = vpop.permute.xlu0 %3119
    %v3122 = vmul.f32 %v3101, %v3120
    %v3124 = vrot.slane %v3095, 4
    %3125 = vrot.lane.b32.xlu0 %v3124, 32
    %v3126 = vpop.permute.xlu0 %3125
    %v3127 = vsel %vm96, %v3126, 0
    %3129 = vmatprep.subr.mxu0 0.0
    %3130 = vmatpush1.msra.mxu0 %v1647
    %3131 = vmatprep.subr.mxu0 0.0
    %3132 = vmatpush1.msra.mxu0 %v1648
    %3133 = vmatprep.subr.mxu0 0.0
    %3134 = vmatpush1.msra.mxu0 %v1649
    %3135 = vmatprep.subr.mxu0 0.0
    %3136 = vmatpush1.msra.mxu0 %v1650
    %3137 = vmatprep.subr.mxu0 0.0
    %3138 = vmatpush1.msra.mxu0 0.0
    %3139 = vmatprep.subr.mxu0 0.0
    %3140 = vmatpush1.msra.mxu0 0.0
    %3141 = vmatprep.subr.mxu0 0.0
    %3142 = vmatpush1.msra.mxu0 0.0
    %3143 = vmatprep.subr.mxu0 0.0
    %3144 = vmatpush1.msra.mxu0 0.0
    %3145 = vmatprep.subr.mxu0 0.0
    %3146 = vmatpush1.msra.mxu0 0.0
    %3147 = vmatprep.subr.mxu0 0.0
    %3148 = vmatpush1.msra.mxu0 0.0
    %3149 = vmatprep.subr.mxu0 0.0
    %3150 = vmatpush1.msra.mxu0 0.0
    %3151 = vmatprep.subr.mxu0 0.0
    %3152 = vmatpush1.msra.mxu0 0.0
    %3153 = vmatprep.subr.mxu0 0.0
    %3154 = vmatpush1.msra.mxu0 0.0
    %3155 = vmatprep.subr.mxu0 0.0
    %3156 = vmatpush1.msra.mxu0 0.0
    %3157 = vmatprep.subr.mxu0 0.0
    %3158 = vmatpush1.msra.mxu0 0.0
    %3159 = vmatprep.subr.mxu0 0.0
    %3160 = vmatpush1.msra.mxu0 0.0
    %3161 = vmatprep.subr.mxu0 0.0
    %3162 = vmatpush1.msra.mxu0 0.0
    %3163 = vmatprep.subr.mxu0 0.0
    %3164 = vmatpush1.msra.mxu0 0.0
    %3165 = vmatprep.subr.mxu0 0.0
    %3166 = vmatpush1.msra.mxu0 0.0
    %3167 = vmatprep.subr.mxu0 0.0
    %3168 = vmatpush1.msra.mxu0 0.0
    %3169 = vmatprep.subr.mxu0 0.0
    %3170 = vmatpush1.msra.mxu0 0.0
    %3171 = vmatprep.subr.mxu0 0.0
    %3172 = vmatpush1.msra.mxu0 0.0
    %3173 = vmatprep.subr.mxu0 0.0
    %3174 = vmatpush1.msra.mxu0 0.0
    %3175 = vmatprep.subr.mxu0 0.0
    %3176 = vmatpush1.msra.mxu0 0.0
    %3177 = vmatprep.subr.mxu0 0.0
    %3178 = vmatpush1.msra.mxu0 0.0
    %3179 = vmatprep.subr.mxu0 0.0
    %3180 = vmatpush1.msra.mxu0 0.0
    %3181 = vmatprep.subr.mxu0 0.0
    %3182 = vmatpush1.msra.mxu0 0.0
    %3183 = vmatprep.subr.mxu0 0.0
    %3184 = vmatpush1.msra.mxu0 0.0
    %3185 = vmatprep.subr.mxu0 0.0
    %3186 = vmatpush1.msra.mxu0 0.0
    %3187 = vmatprep.subr.mxu0 0.0
    %3188 = vmatpush1.msra.mxu0 0.0
    %3189 = vmatprep.subr.mxu0 0.0
    %3190 = vmatpush1.msra.mxu0 0.0
    %3191 = vmatprep.subr.mxu0 0.0
    %3192 = vmatpush1.msra.mxu0 0.0
    %3193 = vmatprep.mubr.f32.mxu0 0.0
    %3194 = vmatmul.mubr.f32.gmra.mrb[0].mxu0 %v3127
    %v3195 = vpop.f32.mrb[0].mxu0
    %v3196 = vadd.f32 0.0, %v3195
    %v3197 = vpop.f32.mrb[0].mxu0
    %3198 = vdwg.mxu0
    %v3200 = vrot.slane %v3196, 2
    %v3202 = vadd.f32 %v1643, %v3200
    %v3204 = vrot.slane %v3122, 2
    %3205 = vrot.lane.b32.xlu0 %v3204, 32
    %v3206 = vpop.permute.xlu0 %3205
    %v3207 = vsel %vm96, %v3206, 0
    %3209 = vmatprep.subr.mxu0 0.0
    %3210 = vmatpush1.msra.mxu0 %v1651
    %3211 = vmatprep.subr.mxu0 0.0
    %3212 = vmatpush1.msra.mxu0 %v1652
    %3213 = vmatprep.subr.mxu0 0.0
    %3214 = vmatpush1.msra.mxu0 %v1653
    %3215 = vmatprep.subr.mxu0 0.0
    %3216 = vmatpush1.msra.mxu0 %v1654
    %3217 = vmatprep.subr.mxu0 0.0
    %3218 = vmatpush1.msra.mxu0 0.0
    %3219 = vmatprep.subr.mxu0 0.0
    %3220 = vmatpush1.msra.mxu0 0.0
    %3221 = vmatprep.subr.mxu0 0.0
    %3222 = vmatpush1.msra.mxu0 0.0
    %3223 = vmatprep.subr.mxu0 0.0
    %3224 = vmatpush1.msra.mxu0 0.0
    %3225 = vmatprep.subr.mxu0 0.0
    %3226 = vmatpush1.msra.mxu0 0.0
    %3227 = vmatprep.subr.mxu0 0.0
    %3228 = vmatpush1.msra.mxu0 0.0
    %3229 = vmatprep.subr.mxu0 0.0
    %3230 = vmatpush1.msra.mxu0 0.0
    %3231 = vmatprep.subr.mxu0 0.0
    %3232 = vmatpush1.msra.mxu0 0.0
    %3233 = vmatprep.subr.mxu0 0.0
    %3234 = vmatpush1.msra.mxu0 0.0
    %3235 = vmatprep.subr.mxu0 0.0
    %3236 = vmatpush1.msra.mxu0 0.0
    %3237 = vmatprep.subr.mxu0 0.0
    %3238 = vmatpush1.msra.mxu0 0.0
    %3239 = vmatprep.subr.mxu0 0.0
    %3240 = vmatpush1.msra.mxu0 0.0
    %3241 = vmatprep.subr.mxu0 0.0
    %3242 = vmatpush1.msra.mxu0 0.0
    %3243 = vmatprep.subr.mxu0 0.0
    %3244 = vmatpush1.msra.mxu0 0.0
    %3245 = vmatprep.subr.mxu0 0.0
    %3246 = vmatpush1.msra.mxu0 0.0
    %3247 = vmatprep.subr.mxu0 0.0
    %3248 = vmatpush1.msra.mxu0 0.0
    %3249 = vmatprep.subr.mxu0 0.0
    %3250 = vmatpush1.msra.mxu0 0.0
    %3251 = vmatprep.subr.mxu0 0.0
    %3252 = vmatpush1.msra.mxu0 0.0
    %3253 = vmatprep.subr.mxu0 0.0
    %3254 = vmatpush1.msra.mxu0 0.0
    %3255 = vmatprep.subr.mxu0 0.0
    %3256 = vmatpush1.msra.mxu0 0.0
    %3257 = vmatprep.subr.mxu0 0.0
    %3258 = vmatpush1.msra.mxu0 0.0
    %3259 = vmatprep.subr.mxu0 0.0
    %3260 = vmatpush1.msra.mxu0 0.0
    %3261 = vmatprep.subr.mxu0 0.0
    %3262 = vmatpush1.msra.mxu0 0.0
    %3263 = vmatprep.subr.mxu0 0.0
    %3264 = vmatpush1.msra.mxu0 0.0
    %3265 = vmatprep.subr.mxu0 0.0
    %3266 = vmatpush1.msra.mxu0 0.0
    %3267 = vmatprep.subr.mxu0 0.0
    %3268 = vmatpush1.msra.mxu0 0.0
    %3269 = vmatprep.subr.mxu0 0.0
    %3270 = vmatpush1.msra.mxu0 0.0
    %3271 = vmatprep.subr.mxu0 0.0
    %3272 = vmatpush1.msra.mxu0 0.0
    %3273 = vmatprep.mubr.f32.mxu0 0.0
    %3274 = vmatmul.mubr.f32.gmra.mrb[0].mxu0 %v3207
    %v3275 = vpop.f32.mrb[0].mxu0
    %v3276 = vadd.f32 0.0, %v3275
    %v3277 = vpop.f32.mrb[0].mxu0
    %3278 = vdwg.mxu0
    %v3279 = vadd.f32 %v1639, %v3276
    %v3280 = vxor.u32 %v3202, 2147483648
    %v3281 = vmul.f32 %v3280, 1.442695
    %v3282 = vpow.pop %v3281
    %v3283 = vadd.f32 %v3282, 1.0
    %v3284 = vrcp.pop %v3283
    %v3285 = vmul.f32 1.0, %v3284
    %v3286 = vtanh.pop %v3202
    %v3288 = vrot.slane %v3089, 6
    %v3290 = vmul.f32 %v3285, %v3288
    %3292 = vrot.lane.b32.xlu0 %v3286, 64
    %v3293 = vpop.permute.xlu0 %3292
    %v3295 = vmul.f32 %v3285, %v3293
    %3297 = vrot.lane.b32.xlu0 %v3295, 32
    %v3298 = vpop.permute.xlu0 %3297
    %v3300 = vadd.f32 %v3290, %v3298
    %v3301 = vtanh.pop %v3300
    %3303 = vrot.lane.b32.xlu0 %v3301, 64
    %v3304 = vpop.permute.xlu0 %3303
    %v3306 = vmul.f32 %v3285, %v3304
    %v3307 = vxor.u32 %v3279, 2147483648
    %v3308 = vmul.f32 %v3307, 1.442695
    %v3309 = vpow.pop %v3308
    %v3310 = vadd.f32 %v3309, 1.0
    %v3311 = vrcp.pop %v3310
    %v3312 = vmul.f32 1.0, %v3311
    %v3313 = vtanh.pop %v3279
    %v3315 = vrot.slane %v3116, 2
    %v3317 = vmul.f32 %v3312, %v3315
    %3319 = vrot.lane.b32.xlu0 %v3313, 64
    %v3320 = vpop.permute.xlu0 %3319
    %v3322 = vmul.f32 %v3312, %v3320
    %3324 = vrot.lane.b32.xlu0 %v3322, 32
    %v3325 = vpop.permute.xlu0 %3324
    %v3327 = vadd.f32 %v3317, %v3325
    %v3328 = vtanh.pop %v3327
    %3330 = vrot.lane.b32.xlu0 %v3328, 64
    %v3331 = vpop.permute.xlu0 %3330
    %v3333 = vmul.f32 %v3312, %v3331
    %v3334 = vsel %vm810, %v1823, %v2033
    %v3335 = vsel %vm812, %v3334, %v2247
    %v3336 = vsel %vm814, %v3335, %v2458
    %v3337 = vsel %vm810, %v2668, %v2881
    %v3338 = vsel %vm812, %v3337, %v3095
    %v3339 = vsel %vm814, %v3338, %v3306
    %v3340 = vsel %vm810, %v3333, %v3122
    %v3341 = vsel %vm812, %v3340, %v2908
    %v3342 = vsel %vm814, %v3341, %v2695
    %v3343 = vsel %vm810, %v2485, %v2274
    %v3344 = vsel %vm812, %v3343, %v2060
    %v3345 = vsel %vm814, %v3344, %v1847
    %v3346 = vld [vmem:[%s13] sm:$0xff]
    %v3347 = vld [vmem:[%s13 + $0x8] sm:$0xff]
    %v3348 = vld [vmem:[%s13 + $0x10] sm:$0xff]
    %v3349 = vld [vmem:[%s13 + $0x18] sm:$0xff]
    %v3350 = vld [vmem:[%s13 + $0x20] sm:$0xff]
    %v3351 = vld [vmem:[%s13 + $0x28] sm:$0xff]
    %v3352 = vld [vmem:[%s13 + $0x30] sm:$0xff]
    %v3353 = vld [vmem:[%s13 + $0x38] sm:$0xff]
    %v3354 = vld [vmem:[%s14] sm:$0xff]
    %v3355 = vld [vmem:[%s14 + $0x8] sm:$0xff]
    %v3356 = vld [vmem:[%s14 + $0x10] sm:$0xff]
    %v3357 = vld [vmem:[%s14 + $0x18] sm:$0xff]
    %v3358 = vld [vmem:[%s14 + $0x20] sm:$0xff]
    %v3359 = vld [vmem:[%s14 + $0x28] sm:$0xff]
    %v3360 = vld [vmem:[%s14 + $0x30] sm:$0xff]
    %v3361 = vld [vmem:[%s14 + $0x38] sm:$0xff]
    %3364 = vrot.lane.b32.xlu0 %v3342, 32
    %v3365 = vpop.permute.xlu0 %3364
    %3366 = vrot.lane.b32.xlu0 %v3345, 32
    %v3367 = vpop.permute.xlu0 %3366
    %v3368 = vsel %vm96, %v3365, 0
    %v3370 = vsel %vm96, %v3367, 0
    %3372 = vmatprep.subr.mxu0 %v3355
    %3373 = vmatpush1.msra.mxu0 %v3354
    %3374 = vmatprep.subr.mxu0 %v3357
    %3375 = vmatpush1.msra.mxu0 %v3356
    %3376 = vmatprep.subr.mxu0 %v3359
    %3377 = vmatpush1.msra.mxu0 %v3358
    %3378 = vmatprep.subr.mxu0 %v3361
    %3379 = vmatpush1.msra.mxu0 %v3360
    %3380 = vmatprep.subr.mxu0 0.0
    %3381 = vmatpush1.msra.mxu0 0.0
    %3382 = vmatprep.subr.mxu0 0.0
    %3383 = vmatpush1.msra.mxu0 0.0
    %3384 = vmatprep.subr.mxu0 0.0
    %3385 = vmatpush1.msra.mxu0 0.0
    %3386 = vmatprep.subr.mxu0 0.0
    %3387 = vmatpush1.msra.mxu0 0.0
    %3388 = vmatprep.subr.mxu0 0.0
    %3389 = vmatpush1.msra.mxu0 0.0
    %3390 = vmatprep.subr.mxu0 0.0
    %3391 = vmatpush1.msra.mxu0 0.0
    %3392 = vmatprep.subr.mxu0 0.0
    %3393 = vmatpush1.msra.mxu0 0.0
    %3394 = vmatprep.subr.mxu0 0.0
    %3395 = vmatpush1.msra.mxu0 0.0
    %3396 = vmatprep.subr.mxu0 0.0
    %3397 = vmatpush1.msra.mxu0 0.0
    %3398 = vmatprep.subr.mxu0 0.0
    %3399 = vmatpush1.msra.mxu0 0.0
    %3400 = vmatprep.subr.mxu0 0.0
    %3401 = vmatpush1.msra.mxu0 0.0
    %3402 = vmatprep.subr.mxu0 0.0
    %3403 = vmatpush1.msra.mxu0 0.0
    %3404 = vmatprep.subr.mxu0 0.0
    %3405 = vmatpush1.msra.mxu0 0.0
    %3406 = vmatprep.subr.mxu0 0.0
    %3407 = vmatpush1.msra.mxu0 0.0
    %3408 = vmatprep.subr.mxu0 0.0
    %3409 = vmatpush1.msra.mxu0 0.0
    %3410 = vmatprep.subr.mxu0 0.0
    %3411 = vmatpush1.msra.mxu0 0.0
    %3412 = vmatprep.subr.mxu0 0.0
    %3413 = vmatpush1.msra.mxu0 0.0
    %3414 = vmatprep.subr.mxu0 0.0
    %3415 = vmatpush1.msra.mxu0 0.0
    %3416 = vmatprep.subr.mxu0 0.0
    %3417 = vmatpush1.msra.mxu0 0.0
    %3418 = vmatprep.subr.mxu0 0.0
    %3419 = vmatpush1.msra.mxu0 0.0
    %3420 = vmatprep.subr.mxu0 0.0
    %3421 = vmatpush1.msra.mxu0 0.0
    %3422 = vmatprep.subr.mxu0 0.0
    %3423 = vmatpush1.msra.mxu0 0.0
    %3424 = vmatprep.subr.mxu0 0.0
    %3425 = vmatpush1.msra.mxu0 0.0
    %3426 = vmatprep.subr.mxu0 0.0
    %3427 = vmatpush1.msra.mxu0 0.0
    %3428 = vmatprep.subr.mxu0 0.0
    %3429 = vmatpush1.msra.mxu0 0.0
    %3430 = vmatprep.subr.mxu0 0.0
    %3431 = vmatpush1.msra.mxu0 0.0
    %3432 = vmatprep.subr.mxu0 0.0
    %3433 = vmatpush1.msra.mxu0 0.0
    %3434 = vmatprep.subr.mxu0 0.0
    %3435 = vmatpush1.msra.mxu0 0.0
    %3436 = vmatprep.mubr.f32.mxu0 0.0
    %3437 = vmatmul.mubr.f32.gmra.mrb[0].mxu0 %v3368
    %v3438 = vpop.f32.mrb[0].mxu0
    %v3439 = vadd.f32 0.0, %v3438
    %v3440 = vpop.f32.mrb[0].mxu0
    %v3441 = vadd.f32 0.0, %v3440
    %3442 = vmatprep.mubr.f32.mxu0 0.0
    %3443 = vmatmul.mubr.f32.gmra.mrb[0].mxu0 %v3370
    %v3444 = vpop.f32.mrb[0].mxu0
    %v3445 = vadd.f32 0.0, %v3444
    %v3446 = vpop.f32.mrb[0].mxu0
    %v3447 = vadd.f32 0.0, %v3446
    %3448 = vdwg.mxu0
    %3451 = vrot.lane.b32.xlu0 %v3336, 32
    %v3452 = vpop.permute.xlu0 %3451
    %3453 = vrot.lane.b32.xlu0 %v3339, 32
    %v3454 = vpop.permute.xlu0 %3453
    %v3455 = vsel %vm96, %v3452, 0
    %v3457 = vsel %vm96, %v3454, 0
    %3459 = vmatprep.subr.mxu0 %v3347
    %3460 = vmatpush1.msra.mxu0 %v3346
    %3461 = vmatprep.subr.mxu0 %v3349
    %3462 = vmatpush1.msra.mxu0 %v3348
    %3463 = vmatprep.subr.mxu0 %v3351
    %3464 = vmatpush1.msra.mxu0 %v3350
    %3465 = vmatprep.subr.mxu0 %v3353
    %3466 = vmatpush1.msra.mxu0 %v3352
    %3467 = vmatprep.subr.mxu0 0.0
    %3468 = vmatpush1.msra.mxu0 0.0
    %3469 = vmatprep.subr.mxu0 0.0
    %3470 = vmatpush1.msra.mxu0 0.0
    %3471 = vmatprep.subr.mxu0 0.0
    %3472 = vmatpush1.msra.mxu0 0.0
    %3473 = vmatprep.subr.mxu0 0.0
    %3474 = vmatpush1.msra.mxu0 0.0
    %3475 = vmatprep.subr.mxu0 0.0
    %3476 = vmatpush1.msra.mxu0 0.0
    %3477 = vmatprep.subr.mxu0 0.0
    %3478 = vmatpush1.msra.mxu0 0.0
    %3479 = vmatprep.subr.mxu0 0.0
    %3480 = vmatpush1.msra.mxu0 0.0
    %3481 = vmatprep.subr.mxu0 0.0
    %3482 = vmatpush1.msra.mxu0 0.0
    %3483 = vmatprep.subr.mxu0 0.0
    %3484 = vmatpush1.msra.mxu0 0.0
    %3485 = vmatprep.subr.mxu0 0.0
    %3486 = vmatpush1.msra.mxu0 0.0
    %3487 = vmatprep.subr.mxu0 0.0
    %3488 = vmatpush1.msra.mxu0 0.0
    %3489 = vmatprep.subr.mxu0 0.0
    %3490 = vmatpush1.msra.mxu0 0.0
    %3491 = vmatprep.subr.mxu0 0.0
    %3492 = vmatpush1.msra.mxu0 0.0
    %3493 = vmatprep.subr.mxu0 0.0
    %3494 = vmatpush1.msra.mxu0 0.0
    %3495 = vmatprep.subr.mxu0 0.0
    %3496 = vmatpush1.msra.mxu0 0.0
    %3497 = vmatprep.subr.mxu0 0.0
    %3498 = vmatpush1.msra.mxu0 0.0
    %3499 = vmatprep.subr.mxu0 0.0
    %3500 = vmatpush1.msra.mxu0 0.0
    %3501 = vmatprep.subr.mxu0 0.0
    %3502 = vmatpush1.msra.mxu0 0.0
    %3503 = vmatprep.subr.mxu0 0.0
    %3504 = vmatpush1.msra.mxu0 0.0
    %3505 = vmatprep.subr.mxu0 0.0
    %3506 = vmatpush1.msra.mxu0 0.0
    %3507 = vmatprep.subr.mxu0 0.0
    %3508 = vmatpush1.msra.mxu0 0.0
    %3509 = vmatprep.subr.mxu0 0.0
    %3510 = vmatpush1.msra.mxu0 0.0
    %3511 = vmatprep.subr.mxu0 0.0
    %3512 = vmatpush1.msra.mxu0 0.0
    %3513 = vmatprep.subr.mxu0 0.0
    %3514 = vmatpush1.msra.mxu0 0.0
    %3515 = vmatprep.subr.mxu0 0.0
    %3516 = vmatpush1.msra.mxu0 0.0
    %3517 = vmatprep.subr.mxu0 0.0
    %3518 = vmatpush1.msra.mxu0 0.0
    %3519 = vmatprep.subr.mxu0 0.0
    %3520 = vmatpush1.msra.mxu0 0.0
    %3521 = vmatprep.subr.mxu0 0.0
    %3522 = vmatpush1.msra.mxu0 0.0
    %3523 = vmatprep.mubr.f32.mxu0 0.0
    %3524 = vmatmul.mubr.f32.gmra.mrb[0].mxu0 %v3455
    %v3525 = vpop.f32.mrb[0].mxu0
    %v3526 = vadd.f32 %v3439, %v3525
    %v3527 = vpop.f32.mrb[0].mxu0
    %v3528 = vadd.f32 %v3441, %v3527
    %3529 = vmatprep.mubr.f32.mxu0 0.0
    %3530 = vmatmul.mubr.f32.gmra.mrb[0].mxu0 %v3457
    %v3531 = vpop.f32.mrb[0].mxu0
    %v3532 = vadd.f32 %v3445, %v3531
    %v3533 = vpop.f32.mrb[0].mxu0
    %v3534 = vadd.f32 %v3447, %v3533
    %3535 = vdwg.mxu0
    %v3536 = vld [vmem:[%s17] sm:$0x3]
    %v3538 = vlaneseq
    %v3539 = vshrl.u32 %v3538, 7
    %v3540 = vsub.s32 0, %v3539
    %v3541 = vrot.slane %v3536, %v3540
    %v3542 = vlaneseq
    %v3543 = vshrl.u32 %v3542, 7
    %v3544 = vsub.s32 1, %v3543
    %v3545 = vrot.slane %v3536, %v3544
    %v3548 = vadd.f32 %v3526, %v3541
    %v3549 = vadd.f32 %v3528, %v3545
    %v3550 = vadd.f32 %v3532, %v3541
    %v3551 = vadd.f32 %v3534, %v3545
    %v3552 = vld [vmem:[%s15] sm:$0xff]
    %v3553 = vld [vmem:[%s15 + $0x8] sm:$0xff]
    %v3554 = vld [vmem:[%s15 + $0x10] sm:$0xff]
    %v3555 = vld [vmem:[%s15 + $0x18] sm:$0xff]
    %v3556 = vld [vmem:[%s16] sm:$0xff]
    %v3557 = vld [vmem:[%s16 + $0x8] sm:$0xff]
    %v3558 = vld [vmem:[%s16 + $0x10] sm:$0xff]
    %v3559 = vld [vmem:[%s16 + $0x18] sm:$0xff]
    %3560 = vmatprep.subr.mxu0 0.0
    %3561 = vmatpush1.msra.mxu0 %v3552
    %3562 = vmatprep.subr.mxu0 0.0
    %3563 = vmatpush1.msra.mxu0 %v3553
    %3564 = vmatprep.subr.mxu0 0.0
    %3565 = vmatpush1.msra.mxu0 %v3554
    %3566 = vmatprep.subr.mxu0 0.0
    %3567 = vmatpush1.msra.mxu0 %v3555
    %3568 = vmatprep.subr.mxu0 0.0
    %3569 = vmatpush1.msra.mxu0 0.0
    %3570 = vmatprep.subr.mxu0 0.0
    %3571 = vmatpush1.msra.mxu0 0.0
    %3572 = vmatprep.subr.mxu0 0.0
    %3573 = vmatpush1.msra.mxu0 0.0
    %3574 = vmatprep.subr.mxu0 0.0
    %3575 = vmatpush1.msra.mxu0 0.0
    %3576 = vmatprep.subr.mxu0 0.0
    %3577 = vmatpush1.msra.mxu0 0.0
    %3578 = vmatprep.subr.mxu0 0.0
    %3579 = vmatpush1.msra.mxu0 0.0
    %3580 = vmatprep.subr.mxu0 0.0
    %3581 = vmatpush1.msra.mxu0 0.0
    %3582 = vmatprep.subr.mxu0 0.0
    %3583 = vmatpush1.msra.mxu0 0.0
    %3584 = vmatprep.subr.mxu0 0.0
    %3585 = vmatpush1.msra.mxu0 0.0
    %3586 = vmatprep.subr.mxu0 0.0
    %3587 = vmatpush1.msra.mxu0 0.0
    %3588 = vmatprep.subr.mxu0 0.0
    %3589 = vmatpush1.msra.mxu0 0.0
    %3590 = vmatprep.subr.mxu0 0.0
    %3591 = vmatpush1.msra.mxu0 0.0
    %3592 = vmatprep.subr.mxu0 0.0
    %3593 = vmatpush1.msra.mxu0 0.0
    %3594 = vmatprep.subr.mxu0 0.0
    %3595 = vmatpush1.msra.mxu0 0.0
    %3596 = vmatprep.subr.mxu0 0.0
    %3597 = vmatpush1.msra.mxu0 0.0
    %3598 = vmatprep.subr.mxu0 0.0
    %3599 = vmatpush1.msra.mxu0 0.0
    %3600 = vmatprep.subr.mxu0 0.0
    %3601 = vmatpush1.msra.mxu0 0.0
    %3602 = vmatprep.subr.mxu0 0.0
    %3603 = vmatpush1.msra.mxu0 0.0
    %3604 = vmatprep.subr.mxu0 0.0
    %3605 = vmatpush1.msra.mxu0 0.0
    %3606 = vmatprep.subr.mxu0 0.0
    %3607 = vmatpush1.msra.mxu0 0.0
    %3608 = vmatprep.subr.mxu0 0.0
    %3609 = vmatpush1.msra.mxu0 0.0
    %3610 = vmatprep.subr.mxu0 0.0
    %3611 = vmatpush1.msra.mxu0 0.0
    %3612 = vmatprep.subr.mxu0 0.0
    %3613 = vmatpush1.msra.mxu0 0.0
    %3614 = vmatprep.subr.mxu0 0.0
    %3615 = vmatpush1.msra.mxu0 0.0
    %3616 = vmatprep.subr.mxu0 0.0
    %3617 = vmatpush1.msra.mxu0 0.0
    %3618 = vmatprep.subr.mxu0 0.0
    %3619 = vmatpush1.msra.mxu0 0.0
    %3620 = vmatprep.subr.mxu0 0.0
    %3621 = vmatpush1.msra.mxu0 0.0
    %3622 = vmatprep.subr.mxu0 0.0
    %3623 = vmatpush1.msra.mxu0 0.0
    %3624 = vmatprep.mubr.f32.mxu0 0.0
    %3625 = vmatmul.mubr.f32.gmra.mrb[0].mxu0 %v183
    %v3626 = vpop.f32.mrb[0].mxu0
    %v3627 = vadd.f32 0.0, %v3626
    %v3628 = vpop.f32.mrb[0].mxu0
    %3629 = vdwg.mxu0
    %v3630 = vadd.f32 %v3548, %v3627
    %3631 = vmatprep.subr.mxu0 0.0
    %3632 = vmatpush1.msra.mxu0 %v3556
    %3633 = vmatprep.subr.mxu0 0.0
    %3634 = vmatpush1.msra.mxu0 %v3557
    %3635 = vmatprep.subr.mxu0 0.0
    %3636 = vmatpush1.msra.mxu0 %v3558
    %3637 = vmatprep.subr.mxu0 0.0
    %3638 = vmatpush1.msra.mxu0 %v3559
    %3639 = vmatprep.subr.mxu0 0.0
    %3640 = vmatpush1.msra.mxu0 0.0
    %3641 = vmatprep.subr.mxu0 0.0
    %3642 = vmatpush1.msra.mxu0 0.0
    %3643 = vmatprep.subr.mxu0 0.0
    %3644 = vmatpush1.msra.mxu0 0.0
    %3645 = vmatprep.subr.mxu0 0.0
    %3646 = vmatpush1.msra.mxu0 0.0
    %3647 = vmatprep.subr.mxu0 0.0
    %3648 = vmatpush1.msra.mxu0 0.0
    %3649 = vmatprep.subr.mxu0 0.0
    %3650 = vmatpush1.msra.mxu0 0.0
    %3651 = vmatprep.subr.mxu0 0.0
    %3652 = vmatpush1.msra.mxu0 0.0
    %3653 = vmatprep.subr.mxu0 0.0
    %3654 = vmatpush1.msra.mxu0 0.0
    %3655 = vmatprep.subr.mxu0 0.0
    %3656 = vmatpush1.msra.mxu0 0.0
    %3657 = vmatprep.subr.mxu0 0.0
    %3658 = vmatpush1.msra.mxu0 0.0
    %3659 = vmatprep.subr.mxu0 0.0
    %3660 = vmatpush1.msra.mxu0 0.0
    %3661 = vmatprep.subr.mxu0 0.0
    %3662 = vmatpush1.msra.mxu0 0.0
    %3663 = vmatprep.subr.mxu0 0.0
    %3664 = vmatpush1.msra.mxu0 0.0
    %3665 = vmatprep.subr.mxu0 0.0
    %3666 = vmatpush1.msra.mxu0 0.0
    %3667 = vmatprep.subr.mxu0 0.0
    %3668 = vmatpush1.msra.mxu0 0.0
    %3669 = vmatprep.subr.mxu0 0.0
    %3670 = vmatpush1.msra.mxu0 0.0
    %3671 = vmatprep.subr.mxu0 0.0
    %3672 = vmatpush1.msra.mxu0 0.0
    %3673 = vmatprep.subr.mxu0 0.0
    %3674 = vmatpush1.msra.mxu0 0.0
    %3675 = vmatprep.subr.mxu0 0.0
    %3676 = vmatpush1.msra.mxu0 0.0
    %3677 = vmatprep.subr.mxu0 0.0
    %3678 = vmatpush1.msra.mxu0 0.0
    %3679 = vmatprep.subr.mxu0 0.0
    %3680 = vmatpush1.msra.mxu0 0.0
    %3681 = vmatprep.subr.mxu0 0.0
    %3682 = vmatpush1.msra.mxu0 0.0
    %3683 = vmatprep.subr.mxu0 0.0
    %3684 = vmatpush1.msra.mxu0 0.0
    %3685 = vmatprep.subr.mxu0 0.0
    %3686 = vmatpush1.msra.mxu0 0.0
    %3687 = vmatprep.subr.mxu0 0.0
    %3688 = vmatpush1.msra.mxu0 0.0
    %3689 = vmatprep.subr.mxu0 0.0
    %3690 = vmatpush1.msra.mxu0 0.0
    %3691 = vmatprep.subr.mxu0 0.0
    %3692 = vmatpush1.msra.mxu0 0.0
    %3693 = vmatprep.subr.mxu0 0.0
    %3694 = vmatpush1.msra.mxu0 0.0
    %3695 = vmatprep.mubr.f32.mxu0 0.0
    %3696 = vmatmul.mubr.f32.gmra.mrb[0].mxu0 %v183
    %v3697 = vpop.f32.mrb[0].mxu0
    %v3698 = vadd.f32 0.0, %v3697
    %v3699 = vpop.f32.mrb[0].mxu0
    %3700 = vdwg.mxu0
    %v3702 = vrot.slane %v3698, 2
    %v3704 = vadd.f32 %v3551, %v3702
    %v3705 = vxor.u32 %v3630, 2147483648
    %v3706 = vmul.f32 %v3705, 1.442695
    %v3707 = vpow.pop %v3706
    %v3708 = vadd.f32 %v3707, 1.0
    %v3709 = vrcp.pop %v3708
    %v3710 = vmul.f32 1.0, %v3709
    %v3711 = vtanh.pop %v3630
    %v3712 = vmul.f32 %v3710, 0.0
    %3714 = vrot.lane.b32.xlu0 %v3711, 64
    %v3715 = vpop.permute.xlu0 %3714
    %v3717 = vmul.f32 %v3710, %v3715
    %3719 = vrot.lane.b32.xlu0 %v3717, 32
    %v3720 = vpop.permute.xlu0 %3719
    %v3722 = vadd.f32 %v3712, %v3720
    %v3723 = vtanh.pop %v3722
    %3725 = vrot.lane.b32.xlu0 %v3723, 64
    %v3726 = vpop.permute.xlu0 %3725
    %v3728 = vmul.f32 %v3710, %v3726
    %v3729 = vxor.u32 %v3704, 2147483648
    %v3730 = vmul.f32 %v3729, 1.442695
    %v3731 = vpow.pop %v3730
    %v3732 = vadd.f32 %v3731, 1.0
    %v3733 = vrcp.pop %v3732
    %v3734 = vmul.f32 1.0, %v3733
    %v3735 = vtanh.pop %v3704
    %v3736 = vmul.f32 %v3734, 0.0
    %3738 = vrot.lane.b32.xlu0 %v3735, 64
    %v3739 = vpop.permute.xlu0 %3738
    %v3741 = vmul.f32 %v3734, %v3739
    %3743 = vrot.lane.b32.xlu0 %v3741, 32
    %v3744 = vpop.permute.xlu0 %3743
    %v3746 = vadd.f32 %v3736, %v3744
    %v3747 = vtanh.pop %v3746
    %3749 = vrot.lane.b32.xlu0 %v3747, 64
    %v3750 = vpop.permute.xlu0 %3749
    %v3752 = vmul.f32 %v3734, %v3750
    %3754 = vrot.lane.b32.xlu0 %v3728, 32
    %v3755 = vpop.permute.xlu0 %3754
    %v3756 = vsel %vm96, %v3755, 0
    %3758 = vmatprep.subr.mxu0 0.0
    %3759 = vmatpush1.msra.mxu0 %v3552
    %3760 = vmatprep.subr.mxu0 0.0
    %3761 = vmatpush1.msra.mxu0 %v3553
    %3762 = vmatprep.subr.mxu0 0.0
    %3763 = vmatpush1.msra.mxu0 %v3554
    %3764 = vmatprep.subr.mxu0 0.0
    %3765 = vmatpush1.msra.mxu0 %v3555
    %3766 = vmatprep.subr.mxu0 0.0
    %3767 = vmatpush1.msra.mxu0 0.0
    %3768 = vmatprep.subr.mxu0 0.0
    %3769 = vmatpush1.msra.mxu0 0.0
    %3770 = vmatprep.subr.mxu0 0.0
    %3771 = vmatpush1.msra.mxu0 0.0
    %3772 = vmatprep.subr.mxu0 0.0
    %3773 = vmatpush1.msra.mxu0 0.0
    %3774 = vmatprep.subr.mxu0 0.0
    %3775 = vmatpush1.msra.mxu0 0.0
    %3776 = vmatprep.subr.mxu0 0.0
    %3777 = vmatpush1.msra.mxu0 0.0
    %3778 = vmatprep.subr.mxu0 0.0
    %3779 = vmatpush1.msra.mxu0 0.0
    %3780 = vmatprep.subr.mxu0 0.0
    %3781 = vmatpush1.msra.mxu0 0.0
    %3782 = vmatprep.subr.mxu0 0.0
    %3783 = vmatpush1.msra.mxu0 0.0
    %3784 = vmatprep.subr.mxu0 0.0
    %3785 = vmatpush1.msra.mxu0 0.0
    %3786 = vmatprep.subr.mxu0 0.0
    %3787 = vmatpush1.msra.mxu0 0.0
    %3788 = vmatprep.subr.mxu0 0.0
    %3789 = vmatpush1.msra.mxu0 0.0
    %3790 = vmatprep.subr.mxu0 0.0
    %3791 = vmatpush1.msra.mxu0 0.0
    %3792 = vmatprep.subr.mxu0 0.0
    %3793 = vmatpush1.msra.mxu0 0.0
    %3794 = vmatprep.subr.mxu0 0.0
    %3795 = vmatpush1.msra.mxu0 0.0
    %3796 = vmatprep.subr.mxu0 0.0
    %3797 = vmatpush1.msra.mxu0 0.0
    %3798 = vmatprep.subr.mxu0 0.0
    %3799 = vmatpush1.msra.mxu0 0.0
    %3800 = vmatprep.subr.mxu0 0.0
    %3801 = vmatpush1.msra.mxu0 0.0
    %3802 = vmatprep.subr.mxu0 0.0
    %3803 = vmatpush1.msra.mxu0 0.0
    %3804 = vmatprep.subr.mxu0 0.0
    %3805 = vmatpush1.msra.mxu0 0.0
    %3806 = vmatprep.subr.mxu0 0.0
    %3807 = vmatpush1.msra.mxu0 0.0
    %3808 = vmatprep.subr.mxu0 0.0
    %3809 = vmatpush1.msra.mxu0 0.0
    %3810 = vmatprep.subr.mxu0 0.0
    %3811 = vmatpush1.msra.mxu0 0.0
    %3812 = vmatprep.subr.mxu0 0.0
    %3813 = vmatpush1.msra.mxu0 0.0
    %3814 = vmatprep.subr.mxu0 0.0
    %3815 = vmatpush1.msra.mxu0 0.0
    %3816 = vmatprep.subr.mxu0 0.0
    %3817 = vmatpush1.msra.mxu0 0.0
    %3818 = vmatprep.subr.mxu0 0.0
    %3819 = vmatpush1.msra.mxu0 0.0
    %3820 = vmatprep.subr.mxu0 0.0
    %3821 = vmatpush1.msra.mxu0 0.0
    %3822 = vmatprep.mubr.f32.mxu0 0.0
    %3823 = vmatmul.mubr.f32.gmra.mrb[0].mxu0 %v3756
    %v3824 = vpop.f32.mrb[0].mxu0
    %v3825 = vadd.f32 0.0, %v3824
    %v3826 = vpop.f32.mrb[0].mxu0
    %3827 = vdwg.mxu0
    %v3829 = vrot.slane %v3825, 6
    %v3831 = vadd.f32 %v3548, %v3829
    %v3833 = vrot.slane %v3752, 6
    %3834 = vrot.lane.b32.xlu0 %v3833, 32
    %v3835 = vpop.permute.xlu0 %3834
    %v3836 = vsel %vm96, %v3835, 0
    %3838 = vmatprep.subr.mxu0 0.0
    %3839 = vmatpush1.msra.mxu0 %v3556
    %3840 = vmatprep.subr.mxu0 0.0
    %3841 = vmatpush1.msra.mxu0 %v3557
    %3842 = vmatprep.subr.mxu0 0.0
    %3843 = vmatpush1.msra.mxu0 %v3558
    %3844 = vmatprep.subr.mxu0 0.0
    %3845 = vmatpush1.msra.mxu0 %v3559
    %3846 = vmatprep.subr.mxu0 0.0
    %3847 = vmatpush1.msra.mxu0 0.0
    %3848 = vmatprep.subr.mxu0 0.0
    %3849 = vmatpush1.msra.mxu0 0.0
    %3850 = vmatprep.subr.mxu0 0.0
    %3851 = vmatpush1.msra.mxu0 0.0
    %3852 = vmatprep.subr.mxu0 0.0
    %3853 = vmatpush1.msra.mxu0 0.0
    %3854 = vmatprep.subr.mxu0 0.0
    %3855 = vmatpush1.msra.mxu0 0.0
    %3856 = vmatprep.subr.mxu0 0.0
    %3857 = vmatpush1.msra.mxu0 0.0
    %3858 = vmatprep.subr.mxu0 0.0
    %3859 = vmatpush1.msra.mxu0 0.0
    %3860 = vmatprep.subr.mxu0 0.0
    %3861 = vmatpush1.msra.mxu0 0.0
    %3862 = vmatprep.subr.mxu0 0.0
    %3863 = vmatpush1.msra.mxu0 0.0
    %3864 = vmatprep.subr.mxu0 0.0
    %3865 = vmatpush1.msra.mxu0 0.0
    %3866 = vmatprep.subr.mxu0 0.0
    %3867 = vmatpush1.msra.mxu0 0.0
    %3868 = vmatprep.subr.mxu0 0.0
    %3869 = vmatpush1.msra.mxu0 0.0
    %3870 = vmatprep.subr.mxu0 0.0
    %3871 = vmatpush1.msra.mxu0 0.0
    %3872 = vmatprep.subr.mxu0 0.0
    %3873 = vmatpush1.msra.mxu0 0.0
    %3874 = vmatprep.subr.mxu0 0.0
    %3875 = vmatpush1.msra.mxu0 0.0
    %3876 = vmatprep.subr.mxu0 0.0
    %3877 = vmatpush1.msra.mxu0 0.0
    %3878 = vmatprep.subr.mxu0 0.0
    %3879 = vmatpush1.msra.mxu0 0.0
    %3880 = vmatprep.subr.mxu0 0.0
    %3881 = vmatpush1.msra.mxu0 0.0
    %3882 = vmatprep.subr.mxu0 0.0
    %3883 = vmatpush1.msra.mxu0 0.0
    %3884 = vmatprep.subr.mxu0 0.0
    %3885 = vmatpush1.msra.mxu0 0.0
    %3886 = vmatprep.subr.mxu0 0.0
    %3887 = vmatpush1.msra.mxu0 0.0
    %3888 = vmatprep.subr.mxu0 0.0
    %3889 = vmatpush1.msra.mxu0 0.0
    %3890 = vmatprep.subr.mxu0 0.0
    %3891 = vmatpush1.msra.mxu0 0.0
    %3892 = vmatprep.subr.mxu0 0.0
    %3893 = vmatpush1.msra.mxu0 0.0
    %3894 = vmatprep.subr.mxu0 0.0
    %3895 = vmatpush1.msra.mxu0 0.0
    %3896 = vmatprep.subr.mxu0 0.0
    %3897 = vmatpush1.msra.mxu0 0.0
    %3898 = vmatprep.subr.mxu0 0.0
    %3899 = vmatpush1.msra.mxu0 0.0
    %3900 = vmatprep.subr.mxu0 0.0
    %3901 = vmatpush1.msra.mxu0 0.0
    %3902 = vmatprep.mubr.f32.mxu0 0.0
    %3903 = vmatmul.mubr.f32.gmra.mrb[0].mxu0 %v3836
    %v3904 = vpop.f32.mrb[0].mxu0
    %v3905 = vadd.f32 0.0, %v3904
    %v3906 = vpop.f32.mrb[0].mxu0
    %3907 = vdwg.mxu0
    %v3909 = vrot.slane %v3905, 4
    %v3911 = vadd.f32 %v3551, %v3909
    %v3912 = vxor.u32 %v3831, 2147483648
    %v3913 = vmul.f32 %v3912, 1.442695
    %v3914 = vpow.pop %v3913
    %v3915 = vadd.f32 %v3914, 1.0
    %v3916 = vrcp.pop %v3915
    %v3917 = vmul.f32 1.0, %v3916
    %v3918 = vtanh.pop %v3831
    %v3920 = vrot.slane %v3722, 6
    %v3922 = vmul.f32 %v3917, %v3920
    %3924 = vrot.lane.b32.xlu0 %v3918, 64
    %v3925 = vpop.permute.xlu0 %3924
    %v3927 = vmul.f32 %v3917, %v3925
    %3929 = vrot.lane.b32.xlu0 %v3927, 32
    %v3930 = vpop.permute.xlu0 %3929
    %v3932 = vadd.f32 %v3922, %v3930
    %v3933 = vtanh.pop %v3932
    %3935 = vrot.lane.b32.xlu0 %v3933, 64
    %v3936 = vpop.permute.xlu0 %3935
    %v3938 = vmul.f32 %v3917, %v3936
    %v3939 = vxor.u32 %v3911, 2147483648
    %v3940 = vmul.f32 %v3939, 1.442695
    %v3941 = vpow.pop %v3940
    %v3942 = vadd.f32 %v3941, 1.0
    %v3943 = vrcp.pop %v3942
    %v3944 = vmul.f32 1.0, %v3943
    %v3945 = vtanh.pop %v3911
    %v3947 = vrot.slane %v3746, 2
    %v3949 = vmul.f32 %v3944, %v3947
    %3951 = vrot.lane.b32.xlu0 %v3945, 64
    %v3952 = vpop.permute.xlu0 %3951
    %v3954 = vmul.f32 %v3944, %v3952
    %3956 = vrot.lane.b32.xlu0 %v3954, 32
    %v3957 = vpop.permute.xlu0 %3956
    %v3959 = vadd.f32 %v3949, %v3957
    %v3960 = vtanh.pop %v3959
    %3962 = vrot.lane.b32.xlu0 %v3960, 64
    %v3963 = vpop.permute.xlu0 %3962
    %v3965 = vmul.f32 %v3944, %v3963
    %v3967 = vrot.slane %v3938, 2
    %3968 = vrot.lane.b32.xlu0 %v3967, 32
    %v3969 = vpop.permute.xlu0 %3968
    %v3970 = vsel %vm96, %v3969, 0
    %3972 = vmatprep.subr.mxu0 0.0
    %3973 = vmatpush1.msra.mxu0 %v3552
    %3974 = vmatprep.subr.mxu0 0.0
    %3975 = vmatpush1.msra.mxu0 %v3553
    %3976 = vmatprep.subr.mxu0 0.0
    %3977 = vmatpush1.msra.mxu0 %v3554
    %3978 = vmatprep.subr.mxu0 0.0
    %3979 = vmatpush1.msra.mxu0 %v3555
    %3980 = vmatprep.subr.mxu0 0.0
    %3981 = vmatpush1.msra.mxu0 0.0
    %3982 = vmatprep.subr.mxu0 0.0
    %3983 = vmatpush1.msra.mxu0 0.0
    %3984 = vmatprep.subr.mxu0 0.0
    %3985 = vmatpush1.msra.mxu0 0.0
    %3986 = vmatprep.subr.mxu0 0.0
    %3987 = vmatpush1.msra.mxu0 0.0
    %3988 = vmatprep.subr.mxu0 0.0
    %3989 = vmatpush1.msra.mxu0 0.0
    %3990 = vmatprep.subr.mxu0 0.0
    %3991 = vmatpush1.msra.mxu0 0.0
    %3992 = vmatprep.subr.mxu0 0.0
    %3993 = vmatpush1.msra.mxu0 0.0
    %3994 = vmatprep.subr.mxu0 0.0
    %3995 = vmatpush1.msra.mxu0 0.0
    %3996 = vmatprep.subr.mxu0 0.0
    %3997 = vmatpush1.msra.mxu0 0.0
    %3998 = vmatprep.subr.mxu0 0.0
    %3999 = vmatpush1.msra.mxu0 0.0
    %4000 = vmatprep.subr.mxu0 0.0
    %4001 = vmatpush1.msra.mxu0 0.0
    %4002 = vmatprep.subr.mxu0 0.0
    %4003 = vmatpush1.msra.mxu0 0.0
    %4004 = vmatprep.subr.mxu0 0.0
    %4005 = vmatpush1.msra.mxu0 0.0
    %4006 = vmatprep.subr.mxu0 0.0
    %4007 = vmatpush1.msra.mxu0 0.0
    %4008 = vmatprep.subr.mxu0 0.0
    %4009 = vmatpush1.msra.mxu0 0.0
    %4010 = vmatprep.subr.mxu0 0.0
    %4011 = vmatpush1.msra.mxu0 0.0
    %4012 = vmatprep.subr.mxu0 0.0
    %4013 = vmatpush1.msra.mxu0 0.0
    %4014 = vmatprep.subr.mxu0 0.0
    %4015 = vmatpush1.msra.mxu0 0.0
    %4016 = vmatprep.subr.mxu0 0.0
    %4017 = vmatpush1.msra.mxu0 0.0
    %4018 = vmatprep.subr.mxu0 0.0
    %4019 = vmatpush1.msra.mxu0 0.0
    %4020 = vmatprep.subr.mxu0 0.0
    %4021 = vmatpush1.msra.mxu0 0.0
    %4022 = vmatprep.subr.mxu0 0.0
    %4023 = vmatpush1.msra.mxu0 0.0
    %4024 = vmatprep.subr.mxu0 0.0
    %4025 = vmatpush1.msra.mxu0 0.0
    %4026 = vmatprep.subr.mxu0 0.0
    %4027 = vmatpush1.msra.mxu0 0.0
    %4028 = vmatprep.subr.mxu0 0.0
    %4029 = vmatpush1.msra.mxu0 0.0
    %4030 = vmatprep.subr.mxu0 0.0
    %4031 = vmatpush1.msra.mxu0 0.0
    %4032 = vmatprep.subr.mxu0 0.0
    %4033 = vmatpush1.msra.mxu0 0.0
    %4034 = vmatprep.subr.mxu0 0.0
    %4035 = vmatpush1.msra.mxu0 0.0
    %4036 = vmatprep.mubr.f32.mxu0 0.0
    %4037 = vmatmul.mubr.f32.gmra.mrb[0].mxu0 %v3970
    %v4038 = vpop.f32.mrb[0].mxu0
    %v4039 = vadd.f32 0.0, %v4038
    %v4040 = vpop.f32.mrb[0].mxu0
    %4041 = vdwg.mxu0
    %v4043 = vrot.slane %v4039, 4
    %v4045 = vadd.f32 %v3548, %v4043
    %v4047 = vrot.slane %v3965, 4
    %4048 = vrot.lane.b32.xlu0 %v4047, 32
    %v4049 = vpop.permute.xlu0 %4048
    %v4050 = vsel %vm96, %v4049, 0
    %4052 = vmatprep.subr.mxu0 0.0
    %4053 = vmatpush1.msra.mxu0 %v3556
    %4054 = vmatprep.subr.mxu0 0.0
    %4055 = vmatpush1.msra.mxu0 %v3557
    %4056 = vmatprep.subr.mxu0 0.0
    %4057 = vmatpush1.msra.mxu0 %v3558
    %4058 = vmatprep.subr.mxu0 0.0
    %4059 = vmatpush1.msra.mxu0 %v3559
    %4060 = vmatprep.subr.mxu0 0.0
    %4061 = vmatpush1.msra.mxu0 0.0
    %4062 = vmatprep.subr.mxu0 0.0
    %4063 = vmatpush1.msra.mxu0 0.0
    %4064 = vmatprep.subr.mxu0 0.0
    %4065 = vmatpush1.msra.mxu0 0.0
    %4066 = vmatprep.subr.mxu0 0.0
    %4067 = vmatpush1.msra.mxu0 0.0
    %4068 = vmatprep.subr.mxu0 0.0
    %4069 = vmatpush1.msra.mxu0 0.0
    %4070 = vmatprep.subr.mxu0 0.0
    %4071 = vmatpush1.msra.mxu0 0.0
    %4072 = vmatprep.subr.mxu0 0.0
    %4073 = vmatpush1.msra.mxu0 0.0
    %4074 = vmatprep.subr.mxu0 0.0
    %4075 = vmatpush1.msra.mxu0 0.0
    %4076 = vmatprep.subr.mxu0 0.0
    %4077 = vmatpush1.msra.mxu0 0.0
    %4078 = vmatprep.subr.mxu0 0.0
    %4079 = vmatpush1.msra.mxu0 0.0
    %4080 = vmatprep.subr.mxu0 0.0
    %4081 = vmatpush1.msra.mxu0 0.0
    %4082 = vmatprep.subr.mxu0 0.0
    %4083 = vmatpush1.msra.mxu0 0.0
    %4084 = vmatprep.subr.mxu0 0.0
    %4085 = vmatpush1.msra.mxu0 0.0
    %4086 = vmatprep.subr.mxu0 0.0
    %4087 = vmatpush1.msra.mxu0 0.0
    %4088 = vmatprep.subr.mxu0 0.0
    %4089 = vmatpush1.msra.mxu0 0.0
    %4090 = vmatprep.subr.mxu0 0.0
    %4091 = vmatpush1.msra.mxu0 0.0
    %4092 = vmatprep.subr.mxu0 0.0
    %4093 = vmatpush1.msra.mxu0 0.0
    %4094 = vmatprep.subr.mxu0 0.0
    %4095 = vmatpush1.msra.mxu0 0.0
    %4096 = vmatprep.subr.mxu0 0.0
    %4097 = vmatpush1.msra.mxu0 0.0
    %4098 = vmatprep.subr.mxu0 0.0
    %4099 = vmatpush1.msra.mxu0 0.0
    %4100 = vmatprep.subr.mxu0 0.0
    %4101 = vmatpush1.msra.mxu0 0.0
    %4102 = vmatprep.subr.mxu0 0.0
    %4103 = vmatpush1.msra.mxu0 0.0
    %4104 = vmatprep.subr.mxu0 0.0
    %4105 = vmatpush1.msra.mxu0 0.0
    %4106 = vmatprep.subr.mxu0 0.0
    %4107 = vmatpush1.msra.mxu0 0.0
    %4108 = vmatprep.subr.mxu0 0.0
    %4109 = vmatpush1.msra.mxu0 0.0
    %4110 = vmatprep.subr.mxu0 0.0
    %4111 = vmatpush1.msra.mxu0 0.0
    %4112 = vmatprep.subr.mxu0 0.0
    %4113 = vmatpush1.msra.mxu0 0.0
    %4114 = vmatprep.subr.mxu0 0.0
    %4115 = vmatpush1.msra.mxu0 0.0
    %4116 = vmatprep.mubr.f32.mxu0 0.0
    %4117 = vmatmul.mubr.f32.gmra.mrb[0].mxu0 %v4050
    %v4118 = vpop.f32.mrb[0].mxu0
    %v4119 = vadd.f32 0.0, %v4118
    %v4120 = vpop.f32.mrb[0].mxu0
    %4121 = vdwg.mxu0
    %v4123 = vrot.slane %v4119, 6
    %v4125 = vadd.f32 %v3551, %v4123
    %v4126 = vxor.u32 %v4045, 2147483648
    %v4127 = vmul.f32 %v4126, 1.442695
    %v4128 = vpow.pop %v4127
    %v4129 = vadd.f32 %v4128, 1.0
    %v4130 = vrcp.pop %v4129
    %v4131 = vmul.f32 1.0, %v4130
    %v4132 = vtanh.pop %v4045
    %v4134 = vrot.slane %v3932, 6
    %v4136 = vmul.f32 %v4131, %v4134
    %4138 = vrot.lane.b32.xlu0 %v4132, 64
    %v4139 = vpop.permute.xlu0 %4138
    %v4141 = vmul.f32 %v4131, %v4139
    %4143 = vrot.lane.b32.xlu0 %v4141, 32
    %v4144 = vpop.permute.xlu0 %4143
    %v4146 = vadd.f32 %v4136, %v4144
    %v4147 = vtanh.pop %v4146
    %4149 = vrot.lane.b32.xlu0 %v4147, 64
    %v4150 = vpop.permute.xlu0 %4149
    %v4152 = vmul.f32 %v4131, %v4150
    %v4153 = vxor.u32 %v4125, 2147483648
    %v4154 = vmul.f32 %v4153, 1.442695
    %v4155 = vpow.pop %v4154
    %v4156 = vadd.f32 %v4155, 1.0
    %v4157 = vrcp.pop %v4156
    %v4158 = vmul.f32 1.0, %v4157
    %v4159 = vtanh.pop %v4125
    %v4161 = vrot.slane %v3959, 2
    %v4163 = vmul.f32 %v4158, %v4161
    %4165 = vrot.lane.b32.xlu0 %v4159, 64
    %v4166 = vpop.permute.xlu0 %4165
    %v4168 = vmul.f32 %v4158, %v4166
    %4170 = vrot.lane.b32.xlu0 %v4168, 32
    %v4171 = vpop.permute.xlu0 %4170
    %v4173 = vadd.f32 %v4163, %v4171
    %v4174 = vtanh.pop %v4173
    %4176 = vrot.lane.b32.xlu0 %v4174, 64
    %v4177 = vpop.permute.xlu0 %4176
    %v4179 = vmul.f32 %v4158, %v4177
    %v4181 = vrot.slane %v4152, 4
    %4182 = vrot.lane.b32.xlu0 %v4181, 32
    %v4183 = vpop.permute.xlu0 %4182
    %v4184 = vsel %vm96, %v4183, 0
    %4186 = vmatprep.subr.mxu0 0.0
    %4187 = vmatpush1.msra.mxu0 %v3552
    %4188 = vmatprep.subr.mxu0 0.0
    %4189 = vmatpush1.msra.mxu0 %v3553
    %4190 = vmatprep.subr.mxu0 0.0
    %4191 = vmatpush1.msra.mxu0 %v3554
    %4192 = vmatprep.subr.mxu0 0.0
    %4193 = vmatpush1.msra.mxu0 %v3555
    %4194 = vmatprep.subr.mxu0 0.0
    %4195 = vmatpush1.msra.mxu0 0.0
    %4196 = vmatprep.subr.mxu0 0.0
    %4197 = vmatpush1.msra.mxu0 0.0
    %4198 = vmatprep.subr.mxu0 0.0
    %4199 = vmatpush1.msra.mxu0 0.0
    %4200 = vmatprep.subr.mxu0 0.0
    %4201 = vmatpush1.msra.mxu0 0.0
    %4202 = vmatprep.subr.mxu0 0.0
    %4203 = vmatpush1.msra.mxu0 0.0
    %4204 = vmatprep.subr.mxu0 0.0
    %4205 = vmatpush1.msra.mxu0 0.0
    %4206 = vmatprep.subr.mxu0 0.0
    %4207 = vmatpush1.msra.mxu0 0.0
    %4208 = vmatprep.subr.mxu0 0.0
    %4209 = vmatpush1.msra.mxu0 0.0
    %4210 = vmatprep.subr.mxu0 0.0
    %4211 = vmatpush1.msra.mxu0 0.0
    %4212 = vmatprep.subr.mxu0 0.0
    %4213 = vmatpush1.msra.mxu0 0.0
    %4214 = vmatprep.subr.mxu0 0.0
    %4215 = vmatpush1.msra.mxu0 0.0
    %4216 = vmatprep.subr.mxu0 0.0
    %4217 = vmatpush1.msra.mxu0 0.0
    %4218 = vmatprep.subr.mxu0 0.0
    %4219 = vmatpush1.msra.mxu0 0.0
    %4220 = vmatprep.subr.mxu0 0.0
    %4221 = vmatpush1.msra.mxu0 0.0
    %4222 = vmatprep.subr.mxu0 0.0
    %4223 = vmatpush1.msra.mxu0 0.0
    %4224 = vmatprep.subr.mxu0 0.0
    %4225 = vmatpush1.msra.mxu0 0.0
    %4226 = vmatprep.subr.mxu0 0.0
    %4227 = vmatpush1.msra.mxu0 0.0
    %4228 = vmatprep.subr.mxu0 0.0
    %4229 = vmatpush1.msra.mxu0 0.0
    %4230 = vmatprep.subr.mxu0 0.0
    %4231 = vmatpush1.msra.mxu0 0.0
    %4232 = vmatprep.subr.mxu0 0.0
    %4233 = vmatpush1.msra.mxu0 0.0
    %4234 = vmatprep.subr.mxu0 0.0
    %4235 = vmatpush1.msra.mxu0 0.0
    %4236 = vmatprep.subr.mxu0 0.0
    %4237 = vmatpush1.msra.mxu0 0.0
    %4238 = vmatprep.subr.mxu0 0.0
    %4239 = vmatpush1.msra.mxu0 0.0
    %4240 = vmatprep.subr.mxu0 0.0
    %4241 = vmatpush1.msra.mxu0 0.0
    %4242 = vmatprep.subr.mxu0 0.0
    %4243 = vmatpush1.msra.mxu0 0.0
    %4244 = vmatprep.subr.mxu0 0.0
    %4245 = vmatpush1.msra.mxu0 0.0
    %4246 = vmatprep.subr.mxu0 0.0
    %4247 = vmatpush1.msra.mxu0 0.0
    %4248 = vmatprep.subr.mxu0 0.0
    %4249 = vmatpush1.msra.mxu0 0.0
    %4250 = vmatprep.mubr.f32.mxu0 0.0
    %4251 = vmatmul.mubr.f32.gmra.mrb[0].mxu0 %v4184
    %v4252 = vpop.f32.mrb[0].mxu0
    %v4253 = vadd.f32 0.0, %v4252
    %v4254 = vpop.f32.mrb[0].mxu0
    %4255 = vdwg.mxu0
    %v4257 = vrot.slane %v4253, 2
    %v4259 = vadd.f32 %v3548, %v4257
    %v4261 = vrot.slane %v4179, 2
    %4262 = vrot.lane.b32.xlu0 %v4261, 32
    %v4263 = vpop.permute.xlu0 %4262
    %v4264 = vsel %vm96, %v4263, 0
    %4266 = vmatprep.subr.mxu0 0.0
    %4267 = vmatpush1.msra.mxu0 %v3556
    %4268 = vmatprep.subr.mxu0 0.0
    %4269 = vmatpush1.msra.mxu0 %v3557
    %4270 = vmatprep.subr.mxu0 0.0
    %4271 = vmatpush1.msra.mxu0 %v3558
    %4272 = vmatprep.subr.mxu0 0.0
    %4273 = vmatpush1.msra.mxu0 %v3559
    %4274 = vmatprep.subr.mxu0 0.0
    %4275 = vmatpush1.msra.mxu0 0.0
    %4276 = vmatprep.subr.mxu0 0.0
    %4277 = vmatpush1.msra.mxu0 0.0
    %4278 = vmatprep.subr.mxu0 0.0
    %4279 = vmatpush1.msra.mxu0 0.0
    %4280 = vmatprep.subr.mxu0 0.0
    %4281 = vmatpush1.msra.mxu0 0.0
    %4282 = vmatprep.subr.mxu0 0.0
    %4283 = vmatpush1.msra.mxu0 0.0
    %4284 = vmatprep.subr.mxu0 0.0
    %4285 = vmatpush1.msra.mxu0 0.0
    %4286 = vmatprep.subr.mxu0 0.0
    %4287 = vmatpush1.msra.mxu0 0.0
    %4288 = vmatprep.subr.mxu0 0.0
    %4289 = vmatpush1.msra.mxu0 0.0
    %4290 = vmatprep.subr.mxu0 0.0
    %4291 = vmatpush1.msra.mxu0 0.0
    %4292 = vmatprep.subr.mxu0 0.0
    %4293 = vmatpush1.msra.mxu0 0.0
    %4294 = vmatprep.subr.mxu0 0.0
    %4295 = vmatpush1.msra.mxu0 0.0
    %4296 = vmatprep.subr.mxu0 0.0
    %4297 = vmatpush1.msra.mxu0 0.0
    %4298 = vmatprep.subr.mxu0 0.0
    %4299 = vmatpush1.msra.mxu0 0.0
    %4300 = vmatprep.subr.mxu0 0.0
    %4301 = vmatpush1.msra.mxu0 0.0
    %4302 = vmatprep.subr.mxu0 0.0
    %4303 = vmatpush1.msra.mxu0 0.0
    %4304 = vmatprep.subr.mxu0 0.0
    %4305 = vmatpush1.msra.mxu0 0.0
    %4306 = vmatprep.subr.mxu0 0.0
    %4307 = vmatpush1.msra.mxu0 0.0
    %4308 = vmatprep.subr.mxu0 0.0
    %4309 = vmatpush1.msra.mxu0 0.0
    %4310 = vmatprep.subr.mxu0 0.0
    %4311 = vmatpush1.msra.mxu0 0.0
    %4312 = vmatprep.subr.mxu0 0.0
    %4313 = vmatpush1.msra.mxu0 0.0
    %4314 = vmatprep.subr.mxu0 0.0
    %4315 = vmatpush1.msra.mxu0 0.0
    %4316 = vmatprep.subr.mxu0 0.0
    %4317 = vmatpush1.msra.mxu0 0.0
    %4318 = vmatprep.subr.mxu0 0.0
    %4319 = vmatpush1.msra.mxu0 0.0
    %4320 = vmatprep.subr.mxu0 0.0
    %4321 = vmatpush1.msra.mxu0 0.0
    %4322 = vmatprep.subr.mxu0 0.0
    %4323 = vmatpush1.msra.mxu0 0.0
    %4324 = vmatprep.subr.mxu0 0.0
    %4325 = vmatpush1.msra.mxu0 0.0
    %4326 = vmatprep.subr.mxu0 0.0
    %4327 = vmatpush1.msra.mxu0 0.0
    %4328 = vmatprep.subr.mxu0 0.0
    %4329 = vmatpush1.msra.mxu0 0.0
    %4330 = vmatprep.mubr.f32.mxu0 0.0
    %4331 = vmatmul.mubr.f32.gmra.mrb[0].mxu0 %v4264
    %v4332 = vpop.f32.mrb[0].mxu0
    %v4333 = vadd.f32 0.0, %v4332
    %v4334 = vpop.f32.mrb[0].mxu0
    %4335 = vdwg.mxu0
    %v4336 = vadd.f32 %v3551, %v4333
    %v4337 = vxor.u32 %v4259, 2147483648
    %v4338 = vmul.f32 %v4337, 1.442695
    %v4339 = vpow.pop %v4338
    %v4340 = vadd.f32 %v4339, 1.0
    %v4341 = vrcp.pop %v4340
    %v4342 = vmul.f32 1.0, %v4341
    %v4343 = vtanh.pop %v4259
    %v4345 = vrot.slane %v4146, 6
    %v4347 = vmul.f32 %v4342, %v4345
    %4349 = vrot.lane.b32.xlu0 %v4343, 64
    %v4350 = vpop.permute.xlu0 %4349
    %v4352 = vmul.f32 %v4342, %v4350
    %4354 = vrot.lane.b32.xlu0 %v4352, 32
    %v4355 = vpop.permute.xlu0 %4354
    %v4357 = vadd.f32 %v4347, %v4355
    %v4358 = vtanh.pop %v4357
    %4360 = vrot.lane.b32.xlu0 %v4358, 64
    %v4361 = vpop.permute.xlu0 %4360
    %v4363 = vmul.f32 %v4342, %v4361
    %v4364 = vxor.u32 %v4336, 2147483648
    %v4365 = vmul.f32 %v4364, 1.442695
    %v4366 = vpow.pop %v4365
    %v4367 = vadd.f32 %v4366, 1.0
    %v4368 = vrcp.pop %v4367
    %v4369 = vmul.f32 1.0, %v4368
    %v4370 = vtanh.pop %v4336
    %v4372 = vrot.slane %v4173, 2
    %v4374 = vmul.f32 %v4369, %v4372
    %4376 = vrot.lane.b32.xlu0 %v4370, 64
    %v4377 = vpop.permute.xlu0 %4376
    %v4379 = vmul.f32 %v4369, %v4377
    %4381 = vrot.lane.b32.xlu0 %v4379, 32
    %v4382 = vpop.permute.xlu0 %4381
    %v4384 = vadd.f32 %v4374, %v4382
    %v4385 = vtanh.pop %v4384
    %4387 = vrot.lane.b32.xlu0 %v4385, 64
    %v4388 = vpop.permute.xlu0 %4387
    %v4390 = vmul.f32 %v4369, %v4388
    %v4392 = vrot.slane %v4363, 6
    %4393 = vrot.lane.b32.xlu0 %v4392, 32
    %v4394 = vpop.permute.xlu0 %4393
    %v4395 = vsel %vm96, %v4394, 0
    %4397 = vmatprep.subr.mxu0 0.0
    %4398 = vmatpush1.msra.mxu0 %v3552
    %4399 = vmatprep.subr.mxu0 0.0
    %4400 = vmatpush1.msra.mxu0 %v3553
    %4401 = vmatprep.subr.mxu0 0.0
    %4402 = vmatpush1.msra.mxu0 %v3554
    %4403 = vmatprep.subr.mxu0 0.0
    %4404 = vmatpush1.msra.mxu0 %v3555
    %4405 = vmatprep.subr.mxu0 0.0
    %4406 = vmatpush1.msra.mxu0 0.0
    %4407 = vmatprep.subr.mxu0 0.0
    %4408 = vmatpush1.msra.mxu0 0.0
    %4409 = vmatprep.subr.mxu0 0.0
    %4410 = vmatpush1.msra.mxu0 0.0
    %4411 = vmatprep.subr.mxu0 0.0
    %4412 = vmatpush1.msra.mxu0 0.0
    %4413 = vmatprep.subr.mxu0 0.0
    %4414 = vmatpush1.msra.mxu0 0.0
    %4415 = vmatprep.subr.mxu0 0.0
    %4416 = vmatpush1.msra.mxu0 0.0
    %4417 = vmatprep.subr.mxu0 0.0
    %4418 = vmatpush1.msra.mxu0 0.0
    %4419 = vmatprep.subr.mxu0 0.0
    %4420 = vmatpush1.msra.mxu0 0.0
    %4421 = vmatprep.subr.mxu0 0.0
    %4422 = vmatpush1.msra.mxu0 0.0
    %4423 = vmatprep.subr.mxu0 0.0
    %4424 = vmatpush1.msra.mxu0 0.0
    %4425 = vmatprep.subr.mxu0 0.0
    %4426 = vmatpush1.msra.mxu0 0.0
    %4427 = vmatprep.subr.mxu0 0.0
    %4428 = vmatpush1.msra.mxu0 0.0
    %4429 = vmatprep.subr.mxu0 0.0
    %4430 = vmatpush1.msra.mxu0 0.0
    %4431 = vmatprep.subr.mxu0 0.0
    %4432 = vmatpush1.msra.mxu0 0.0
    %4433 = vmatprep.subr.mxu0 0.0
    %4434 = vmatpush1.msra.mxu0 0.0
    %4435 = vmatprep.subr.mxu0 0.0
    %4436 = vmatpush1.msra.mxu0 0.0
    %4437 = vmatprep.subr.mxu0 0.0
    %4438 = vmatpush1.msra.mxu0 0.0
    %4439 = vmatprep.subr.mxu0 0.0
    %4440 = vmatpush1.msra.mxu0 0.0
    %4441 = vmatprep.subr.mxu0 0.0
    %4442 = vmatpush1.msra.mxu0 0.0
    %4443 = vmatprep.subr.mxu0 0.0
    %4444 = vmatpush1.msra.mxu0 0.0
    %4445 = vmatprep.subr.mxu0 0.0
    %4446 = vmatpush1.msra.mxu0 0.0
    %4447 = vmatprep.subr.mxu0 0.0
    %4448 = vmatpush1.msra.mxu0 0.0
    %4449 = vmatprep.subr.mxu0 0.0
    %4450 = vmatpush1.msra.mxu0 0.0
    %4451 = vmatprep.subr.mxu0 0.0
    %4452 = vmatpush1.msra.mxu0 0.0
    %4453 = vmatprep.subr.mxu0 0.0
    %4454 = vmatpush1.msra.mxu0 0.0
    %4455 = vmatprep.subr.mxu0 0.0
    %4456 = vmatpush1.msra.mxu0 0.0
    %4457 = vmatprep.subr.mxu0 0.0
    %4458 = vmatpush1.msra.mxu0 0.0
    %4459 = vmatprep.subr.mxu0 0.0
    %4460 = vmatpush1.msra.mxu0 0.0
    %4461 = vmatprep.mubr.f32.mxu0 0.0
    %4462 = vmatmul.mubr.f32.gmra.mrb[0].mxu0 %v4395
    %v4463 = vpop.f32.mrb[0].mxu0
    %v4464 = vadd.f32 0.0, %v4463
    %v4465 = vpop.f32.mrb[0].mxu0
    %4466 = vdwg.mxu0
    %v4467 = vadd.f32 %v3550, %v4464
    %4469 = vrot.lane.b32.xlu0 %v4390, 32
    %v4470 = vpop.permute.xlu0 %4469
    %v4471 = vsel %vm96, %v4470, 0
    %4473 = vmatprep.subr.mxu0 0.0
    %4474 = vmatpush1.msra.mxu0 %v3556
    %4475 = vmatprep.subr.mxu0 0.0
    %4476 = vmatpush1.msra.mxu0 %v3557
    %4477 = vmatprep.subr.mxu0 0.0
    %4478 = vmatpush1.msra.mxu0 %v3558
    %4479 = vmatprep.subr.mxu0 0.0
    %4480 = vmatpush1.msra.mxu0 %v3559
    %4481 = vmatprep.subr.mxu0 0.0
    %4482 = vmatpush1.msra.mxu0 0.0
    %4483 = vmatprep.subr.mxu0 0.0
    %4484 = vmatpush1.msra.mxu0 0.0
    %4485 = vmatprep.subr.mxu0 0.0
    %4486 = vmatpush1.msra.mxu0 0.0
    %4487 = vmatprep.subr.mxu0 0.0
    %4488 = vmatpush1.msra.mxu0 0.0
    %4489 = vmatprep.subr.mxu0 0.0
    %4490 = vmatpush1.msra.mxu0 0.0
    %4491 = vmatprep.subr.mxu0 0.0
    %4492 = vmatpush1.msra.mxu0 0.0
    %4493 = vmatprep.subr.mxu0 0.0
    %4494 = vmatpush1.msra.mxu0 0.0
    %4495 = vmatprep.subr.mxu0 0.0
    %4496 = vmatpush1.msra.mxu0 0.0
    %4497 = vmatprep.subr.mxu0 0.0
    %4498 = vmatpush1.msra.mxu0 0.0
    %4499 = vmatprep.subr.mxu0 0.0
    %4500 = vmatpush1.msra.mxu0 0.0
    %4501 = vmatprep.subr.mxu0 0.0
    %4502 = vmatpush1.msra.mxu0 0.0
    %4503 = vmatprep.subr.mxu0 0.0
    %4504 = vmatpush1.msra.mxu0 0.0
    %4505 = vmatprep.subr.mxu0 0.0
    %4506 = vmatpush1.msra.mxu0 0.0
    %4507 = vmatprep.subr.mxu0 0.0
    %4508 = vmatpush1.msra.mxu0 0.0
    %4509 = vmatprep.subr.mxu0 0.0
    %4510 = vmatpush1.msra.mxu0 0.0
    %4511 = vmatprep.subr.mxu0 0.0
    %4512 = vmatpush1.msra.mxu0 0.0
    %4513 = vmatprep.subr.mxu0 0.0
    %4514 = vmatpush1.msra.mxu0 0.0
    %4515 = vmatprep.subr.mxu0 0.0
    %4516 = vmatpush1.msra.mxu0 0.0
    %4517 = vmatprep.subr.mxu0 0.0
    %4518 = vmatpush1.msra.mxu0 0.0
    %4519 = vmatprep.subr.mxu0 0.0
    %4520 = vmatpush1.msra.mxu0 0.0
    %4521 = vmatprep.subr.mxu0 0.0
    %4522 = vmatpush1.msra.mxu0 0.0
    %4523 = vmatprep.subr.mxu0 0.0
    %4524 = vmatpush1.msra.mxu0 0.0
    %4525 = vmatprep.subr.mxu0 0.0
    %4526 = vmatpush1.msra.mxu0 0.0
    %4527 = vmatprep.subr.mxu0 0.0
    %4528 = vmatpush1.msra.mxu0 0.0
    %4529 = vmatprep.subr.mxu0 0.0
    %4530 = vmatpush1.msra.mxu0 0.0
    %4531 = vmatprep.subr.mxu0 0.0
    %4532 = vmatpush1.msra.mxu0 0.0
    %4533 = vmatprep.subr.mxu0 0.0
    %4534 = vmatpush1.msra.mxu0 0.0
    %4535 = vmatprep.subr.mxu0 0.0
    %4536 = vmatpush1.msra.mxu0 0.0
    %4537 = vmatprep.mubr.f32.mxu0 0.0
    %4538 = vmatmul.mubr.f32.gmra.mrb[0].mxu0 %v4471
    %v4539 = vpop.f32.mrb[0].mxu0
    %v4540 = vadd.f32 0.0, %v4539
    %v4541 = vpop.f32.mrb[0].mxu0
    %4542 = vdwg.mxu0
    %v4544 = vrot.slane %v4540, 2
    %v4546 = vadd.f32 %v3549, %v4544
    %v4547 = vxor.u32 %v4467, 2147483648
    %v4548 = vmul.f32 %v4547, 1.442695
    %v4549 = vpow.pop %v4548
    %v4550 = vadd.f32 %v4549, 1.0
    %v4551 = vrcp.pop %v4550
    %v4552 = vmul.f32 1.0, %v4551
    %v4553 = vtanh.pop %v4467
    %v4555 = vrot.slane %v4357, 6
    %v4557 = vmul.f32 %v4552, %v4555
    %4559 = vrot.lane.b32.xlu0 %v4553, 64
    %v4560 = vpop.permute.xlu0 %4559
    %v4562 = vmul.f32 %v4552, %v4560
    %4564 = vrot.lane.b32.xlu0 %v4562, 32
    %v4565 = vpop.permute.xlu0 %4564
    %v4567 = vadd.f32 %v4557, %v4565
    %v4568 = vtanh.pop %v4567
    %4570 = vrot.lane.b32.xlu0 %v4568, 64
    %v4571 = vpop.permute.xlu0 %4570
    %v4573 = vmul.f32 %v4552, %v4571
    %v4574 = vxor.u32 %v4546, 2147483648
    %v4575 = vmul.f32 %v4574, 1.442695
    %v4576 = vpow.pop %v4575
    %v4577 = vadd.f32 %v4576, 1.0
    %v4578 = vrcp.pop %v4577
    %v4579 = vmul.f32 1.0, %v4578
    %v4580 = vtanh.pop %v4546
    %v4582 = vrot.slane %v4384, 2
    %v4584 = vmul.f32 %v4579, %v4582
    %4586 = vrot.lane.b32.xlu0 %v4580, 64
    %v4587 = vpop.permute.xlu0 %4586
    %v4589 = vmul.f32 %v4579, %v4587
    %4591 = vrot.lane.b32.xlu0 %v4589, 32
    %v4592 = vpop.permute.xlu0 %4591
    %v4594 = vadd.f32 %v4584, %v4592
    %v4595 = vtanh.pop %v4594
    %4597 = vrot.lane.b32.xlu0 %v4595, 64
    %v4598 = vpop.permute.xlu0 %4597
    %v4600 = vmul.f32 %v4579, %v4598
    %4602 = vrot.lane.b32.xlu0 %v4573, 32
    %v4603 = vpop.permute.xlu0 %4602
    %v4604 = vsel %vm96, %v4603, 0
    %4606 = vmatprep.subr.mxu0 0.0
    %4607 = vmatpush1.msra.mxu0 %v3552
    %4608 = vmatprep.subr.mxu0 0.0
    %4609 = vmatpush1.msra.mxu0 %v3553
    %4610 = vmatprep.subr.mxu0 0.0
    %4611 = vmatpush1.msra.mxu0 %v3554
    %4612 = vmatprep.subr.mxu0 0.0
    %4613 = vmatpush1.msra.mxu0 %v3555
    %4614 = vmatprep.subr.mxu0 0.0
    %4615 = vmatpush1.msra.mxu0 0.0
    %4616 = vmatprep.subr.mxu0 0.0
    %4617 = vmatpush1.msra.mxu0 0.0
    %4618 = vmatprep.subr.mxu0 0.0
    %4619 = vmatpush1.msra.mxu0 0.0
    %4620 = vmatprep.subr.mxu0 0.0
    %4621 = vmatpush1.msra.mxu0 0.0
    %4622 = vmatprep.subr.mxu0 0.0
    %4623 = vmatpush1.msra.mxu0 0.0
    %4624 = vmatprep.subr.mxu0 0.0
    %4625 = vmatpush1.msra.mxu0 0.0
    %4626 = vmatprep.subr.mxu0 0.0
    %4627 = vmatpush1.msra.mxu0 0.0
    %4628 = vmatprep.subr.mxu0 0.0
    %4629 = vmatpush1.msra.mxu0 0.0
    %4630 = vmatprep.subr.mxu0 0.0
    %4631 = vmatpush1.msra.mxu0 0.0
    %4632 = vmatprep.subr.mxu0 0.0
    %4633 = vmatpush1.msra.mxu0 0.0
    %4634 = vmatprep.subr.mxu0 0.0
    %4635 = vmatpush1.msra.mxu0 0.0
    %4636 = vmatprep.subr.mxu0 0.0
    %4637 = vmatpush1.msra.mxu0 0.0
    %4638 = vmatprep.subr.mxu0 0.0
    %4639 = vmatpush1.msra.mxu0 0.0
    %4640 = vmatprep.subr.mxu0 0.0
    %4641 = vmatpush1.msra.mxu0 0.0
    %4642 = vmatprep.subr.mxu0 0.0
    %4643 = vmatpush1.msra.mxu0 0.0
    %4644 = vmatprep.subr.mxu0 0.0
    %4645 = vmatpush1.msra.mxu0 0.0
    %4646 = vmatprep.subr.mxu0 0.0
    %4647 = vmatpush1.msra.mxu0 0.0
    %4648 = vmatprep.subr.mxu0 0.0
    %4649 = vmatpush1.msra.mxu0 0.0
    %4650 = vmatprep.subr.mxu0 0.0
    %4651 = vmatpush1.msra.mxu0 0.0
    %4652 = vmatprep.subr.mxu0 0.0
    %4653 = vmatpush1.msra.mxu0 0.0
    %4654 = vmatprep.subr.mxu0 0.0
    %4655 = vmatpush1.msra.mxu0 0.0
    %4656 = vmatprep.subr.mxu0 0.0
    %4657 = vmatpush1.msra.mxu0 0.0
    %4658 = vmatprep.subr.mxu0 0.0
    %4659 = vmatpush1.msra.mxu0 0.0
    %4660 = vmatprep.subr.mxu0 0.0
    %4661 = vmatpush1.msra.mxu0 0.0
    %4662 = vmatprep.subr.mxu0 0.0
    %4663 = vmatpush1.msra.mxu0 0.0
    %4664 = vmatprep.subr.mxu0 0.0
    %4665 = vmatpush1.msra.mxu0 0.0
    %4666 = vmatprep.subr.mxu0 0.0
    %4667 = vmatpush1.msra.mxu0 0.0
    %4668 = vmatprep.subr.mxu0 0.0
    %4669 = vmatpush1.msra.mxu0 0.0
    %4670 = vmatprep.mubr.f32.mxu0 0.0
    %4671 = vmatmul.mubr.f32.gmra.mrb[0].mxu0 %v4604
    %v4672 = vpop.f32.mrb[0].mxu0
    %v4673 = vadd.f32 0.0, %v4672
    %v4674 = vpop.f32.mrb[0].mxu0
    %4675 = vdwg.mxu0
    %v4677 = vrot.slane %v4673, 6
    %v4679 = vadd.f32 %v3550, %v4677
    %v4681 = vrot.slane %v4600, 6
    %4682 = vrot.lane.b32.xlu0 %v4681, 32
    %v4683 = vpop.permute.xlu0 %4682
    %v4684 = vsel %vm96, %v4683, 0
    %4686 = vmatprep.subr.mxu0 0.0
    %4687 = vmatpush1.msra.mxu0 %v3556
    %4688 = vmatprep.subr.mxu0 0.0
    %4689 = vmatpush1.msra.mxu0 %v3557
    %4690 = vmatprep.subr.mxu0 0.0
    %4691 = vmatpush1.msra.mxu0 %v3558
    %4692 = vmatprep.subr.mxu0 0.0
    %4693 = vmatpush1.msra.mxu0 %v3559
    %4694 = vmatprep.subr.mxu0 0.0
    %4695 = vmatpush1.msra.mxu0 0.0
    %4696 = vmatprep.subr.mxu0 0.0
    %4697 = vmatpush1.msra.mxu0 0.0
    %4698 = vmatprep.subr.mxu0 0.0
    %4699 = vmatpush1.msra.mxu0 0.0
    %4700 = vmatprep.subr.mxu0 0.0
    %4701 = vmatpush1.msra.mxu0 0.0
    %4702 = vmatprep.subr.mxu0 0.0
    %4703 = vmatpush1.msra.mxu0 0.0
    %4704 = vmatprep.subr.mxu0 0.0
    %4705 = vmatpush1.msra.mxu0 0.0
    %4706 = vmatprep.subr.mxu0 0.0
    %4707 = vmatpush1.msra.mxu0 0.0
    %4708 = vmatprep.subr.mxu0 0.0
    %4709 = vmatpush1.msra.mxu0 0.0
    %4710 = vmatprep.subr.mxu0 0.0
    %4711 = vmatpush1.msra.mxu0 0.0
    %4712 = vmatprep.subr.mxu0 0.0
    %4713 = vmatpush1.msra.mxu0 0.0
    %4714 = vmatprep.subr.mxu0 0.0
    %4715 = vmatpush1.msra.mxu0 0.0
    %4716 = vmatprep.subr.mxu0 0.0
    %4717 = vmatpush1.msra.mxu0 0.0
    %4718 = vmatprep.subr.mxu0 0.0
    %4719 = vmatpush1.msra.mxu0 0.0
    %4720 = vmatprep.subr.mxu0 0.0
    %4721 = vmatpush1.msra.mxu0 0.0
    %4722 = vmatprep.subr.mxu0 0.0
    %4723 = vmatpush1.msra.mxu0 0.0
    %4724 = vmatprep.subr.mxu0 0.0
    %4725 = vmatpush1.msra.mxu0 0.0
    %4726 = vmatprep.subr.mxu0 0.0
    %4727 = vmatpush1.msra.mxu0 0.0
    %4728 = vmatprep.subr.mxu0 0.0
    %4729 = vmatpush1.msra.mxu0 0.0
    %4730 = vmatprep.subr.mxu0 0.0
    %4731 = vmatpush1.msra.mxu0 0.0
    %4732 = vmatprep.subr.mxu0 0.0
    %4733 = vmatpush1.msra.mxu0 0.0
    %4734 = vmatprep.subr.mxu0 0.0
    %4735 = vmatpush1.msra.mxu0 0.0
    %4736 = vmatprep.subr.mxu0 0.0
    %4737 = vmatpush1.msra.mxu0 0.0
    %4738 = vmatprep.subr.mxu0 0.0
    %4739 = vmatpush1.msra.mxu0 0.0
    %4740 = vmatprep.subr.mxu0 0.0
    %4741 = vmatpush1.msra.mxu0 0.0
    %4742 = vmatprep.subr.mxu0 0.0
    %4743 = vmatpush1.msra.mxu0 0.0
    %4744 = vmatprep.subr.mxu0 0.0
    %4745 = vmatpush1.msra.mxu0 0.0
    %4746 = vmatprep.subr.mxu0 0.0
    %4747 = vmatpush1.msra.mxu0 0.0
    %4748 = vmatprep.subr.mxu0 0.0
    %4749 = vmatpush1.msra.mxu0 0.0
    %4750 = vmatprep.mubr.f32.mxu0 0.0
    %4751 = vmatmul.mubr.f32.gmra.mrb[0].mxu0 %v4684
    %v4752 = vpop.f32.mrb[0].mxu0
    %v4753 = vadd.f32 0.0, %v4752
    %v4754 = vpop.f32.mrb[0].mxu0
    %4755 = vdwg.mxu0
    %v4757 = vrot.slane %v4753, 4
    %v4759 = vadd.f32 %v3549, %v4757
    %v4760 = vxor.u32 %v4679, 2147483648
    %v4761 = vmul.f32 %v4760, 1.442695
    %v4762 = vpow.pop %v4761
    %v4763 = vadd.f32 %v4762, 1.0
    %v4764 = vrcp.pop %v4763
    %v4765 = vmul.f32 1.0, %v4764
    %v4766 = vtanh.pop %v4679
    %v4768 = vrot.slane %v4567, 6
    %v4770 = vmul.f32 %v4765, %v4768
    %4772 = vrot.lane.b32.xlu0 %v4766, 64
    %v4773 = vpop.permute.xlu0 %4772
    %v4775 = vmul.f32 %v4765, %v4773
    %4777 = vrot.lane.b32.xlu0 %v4775, 32
    %v4778 = vpop.permute.xlu0 %4777
    %v4780 = vadd.f32 %v4770, %v4778
    %v4781 = vtanh.pop %v4780
    %4783 = vrot.lane.b32.xlu0 %v4781, 64
    %v4784 = vpop.permute.xlu0 %4783
    %v4786 = vmul.f32 %v4765, %v4784
    %v4787 = vxor.u32 %v4759, 2147483648
    %v4788 = vmul.f32 %v4787, 1.442695
    %v4789 = vpow.pop %v4788
    %v4790 = vadd.f32 %v4789, 1.0
    %v4791 = vrcp.pop %v4790
    %v4792 = vmul.f32 1.0, %v4791
    %v4793 = vtanh.pop %v4759
    %v4795 = vrot.slane %v4594, 2
    %v4797 = vmul.f32 %v4792, %v4795
    %4799 = vrot.lane.b32.xlu0 %v4793, 64
    %v4800 = vpop.permute.xlu0 %4799
    %v4802 = vmul.f32 %v4792, %v4800
    %4804 = vrot.lane.b32.xlu0 %v4802, 32
    %v4805 = vpop.permute.xlu0 %4804
    %v4807 = vadd.f32 %v4797, %v4805
    %v4808 = vtanh.pop %v4807
    %4810 = vrot.lane.b32.xlu0 %v4808, 64
    %v4811 = vpop.permute.xlu0 %4810
    %v4813 = vmul.f32 %v4792, %v4811
    %v4815 = vrot.slane %v4786, 2
    %4816 = vrot.lane.b32.xlu0 %v4815, 32
    %v4817 = vpop.permute.xlu0 %4816
    %v4818 = vsel %vm96, %v4817, 0
    %4820 = vmatprep.subr.mxu0 0.0
    %4821 = vmatpush1.msra.mxu0 %v3552
    %4822 = vmatprep.subr.mxu0 0.0
    %4823 = vmatpush1.msra.mxu0 %v3553
    %4824 = vmatprep.subr.mxu0 0.0
    %4825 = vmatpush1.msra.mxu0 %v3554
    %4826 = vmatprep.subr.mxu0 0.0
    %4827 = vmatpush1.msra.mxu0 %v3555
    %4828 = vmatprep.subr.mxu0 0.0
    %4829 = vmatpush1.msra.mxu0 0.0
    %4830 = vmatprep.subr.mxu0 0.0
    %4831 = vmatpush1.msra.mxu0 0.0
    %4832 = vmatprep.subr.mxu0 0.0
    %4833 = vmatpush1.msra.mxu0 0.0
    %4834 = vmatprep.subr.mxu0 0.0
    %4835 = vmatpush1.msra.mxu0 0.0
    %4836 = vmatprep.subr.mxu0 0.0
    %4837 = vmatpush1.msra.mxu0 0.0
    %4838 = vmatprep.subr.mxu0 0.0
    %4839 = vmatpush1.msra.mxu0 0.0
    %4840 = vmatprep.subr.mxu0 0.0
    %4841 = vmatpush1.msra.mxu0 0.0
    %4842 = vmatprep.subr.mxu0 0.0
    %4843 = vmatpush1.msra.mxu0 0.0
    %4844 = vmatprep.subr.mxu0 0.0
    %4845 = vmatpush1.msra.mxu0 0.0
    %4846 = vmatprep.subr.mxu0 0.0
    %4847 = vmatpush1.msra.mxu0 0.0
    %4848 = vmatprep.subr.mxu0 0.0
    %4849 = vmatpush1.msra.mxu0 0.0
    %4850 = vmatprep.subr.mxu0 0.0
    %4851 = vmatpush1.msra.mxu0 0.0
    %4852 = vmatprep.subr.mxu0 0.0
    %4853 = vmatpush1.msra.mxu0 0.0
    %4854 = vmatprep.subr.mxu0 0.0
    %4855 = vmatpush1.msra.mxu0 0.0
    %4856 = vmatprep.subr.mxu0 0.0
    %4857 = vmatpush1.msra.mxu0 0.0
    %4858 = vmatprep.subr.mxu0 0.0
    %4859 = vmatpush1.msra.mxu0 0.0
    %4860 = vmatprep.subr.mxu0 0.0
    %4861 = vmatpush1.msra.mxu0 0.0
    %4862 = vmatprep.subr.mxu0 0.0
    %4863 = vmatpush1.msra.mxu0 0.0
    %4864 = vmatprep.subr.mxu0 0.0
    %4865 = vmatpush1.msra.mxu0 0.0
    %4866 = vmatprep.subr.mxu0 0.0
    %4867 = vmatpush1.msra.mxu0 0.0
    %4868 = vmatprep.subr.mxu0 0.0
    %4869 = vmatpush1.msra.mxu0 0.0
    %4870 = vmatprep.subr.mxu0 0.0
    %4871 = vmatpush1.msra.mxu0 0.0
    %4872 = vmatprep.subr.mxu0 0.0
    %4873 = vmatpush1.msra.mxu0 0.0
    %4874 = vmatprep.subr.mxu0 0.0
    %4875 = vmatpush1.msra.mxu0 0.0
    %4876 = vmatprep.subr.mxu0 0.0
    %4877 = vmatpush1.msra.mxu0 0.0
    %4878 = vmatprep.subr.mxu0 0.0
    %4879 = vmatpush1.msra.mxu0 0.0
    %4880 = vmatprep.subr.mxu0 0.0
    %4881 = vmatpush1.msra.mxu0 0.0
    %4882 = vmatprep.subr.mxu0 0.0
    %4883 = vmatpush1.msra.mxu0 0.0
    %4884 = vmatprep.mubr.f32.mxu0 0.0
    %4885 = vmatmul.mubr.f32.gmra.mrb[0].mxu0 %v4818
    %v4886 = vpop.f32.mrb[0].mxu0
    %v4887 = vadd.f32 0.0, %v4886
    %v4888 = vpop.f32.mrb[0].mxu0
    %4889 = vdwg.mxu0
    %v4891 = vrot.slane %v4887, 4
    %v4893 = vadd.f32 %v3550, %v4891
    %v4895 = vrot.slane %v4813, 4
    %4896 = vrot.lane.b32.xlu0 %v4895, 32
    %v4897 = vpop.permute.xlu0 %4896
    %v4898 = vsel %vm96, %v4897, 0
    %4900 = vmatprep.subr.mxu0 0.0
    %4901 = vmatpush1.msra.mxu0 %v3556
    %4902 = vmatprep.subr.mxu0 0.0
    %4903 = vmatpush1.msra.mxu0 %v3557
    %4904 = vmatprep.subr.mxu0 0.0
    %4905 = vmatpush1.msra.mxu0 %v3558
    %4906 = vmatprep.subr.mxu0 0.0
    %4907 = vmatpush1.msra.mxu0 %v3559
    %4908 = vmatprep.subr.mxu0 0.0
    %4909 = vmatpush1.msra.mxu0 0.0
    %4910 = vmatprep.subr.mxu0 0.0
    %4911 = vmatpush1.msra.mxu0 0.0
    %4912 = vmatprep.subr.mxu0 0.0
    %4913 = vmatpush1.msra.mxu0 0.0
    %4914 = vmatprep.subr.mxu0 0.0
    %4915 = vmatpush1.msra.mxu0 0.0
    %4916 = vmatprep.subr.mxu0 0.0
    %4917 = vmatpush1.msra.mxu0 0.0
    %4918 = vmatprep.subr.mxu0 0.0
    %4919 = vmatpush1.msra.mxu0 0.0
    %4920 = vmatprep.subr.mxu0 0.0
    %4921 = vmatpush1.msra.mxu0 0.0
    %4922 = vmatprep.subr.mxu0 0.0
    %4923 = vmatpush1.msra.mxu0 0.0
    %4924 = vmatprep.subr.mxu0 0.0
    %4925 = vmatpush1.msra.mxu0 0.0
    %4926 = vmatprep.subr.mxu0 0.0
    %4927 = vmatpush1.msra.mxu0 0.0
    %4928 = vmatprep.subr.mxu0 0.0
    %4929 = vmatpush1.msra.mxu0 0.0
    %4930 = vmatprep.subr.mxu0 0.0
    %4931 = vmatpush1.msra.mxu0 0.0
    %4932 = vmatprep.subr.mxu0 0.0
    %4933 = vmatpush1.msra.mxu0 0.0
    %4934 = vmatprep.subr.mxu0 0.0
    %4935 = vmatpush1.msra.mxu0 0.0
    %4936 = vmatprep.subr.mxu0 0.0
    %4937 = vmatpush1.msra.mxu0 0.0
    %4938 = vmatprep.subr.mxu0 0.0
    %4939 = vmatpush1.msra.mxu0 0.0
    %4940 = vmatprep.subr.mxu0 0.0
    %4941 = vmatpush1.msra.mxu0 0.0
    %4942 = vmatprep.subr.mxu0 0.0
    %4943 = vmatpush1.msra.mxu0 0.0
    %4944 = vmatprep.subr.mxu0 0.0
    %4945 = vmatpush1.msra.mxu0 0.0
    %4946 = vmatprep.subr.mxu0 0.0
    %4947 = vmatpush1.msra.mxu0 0.0
    %4948 = vmatprep.subr.mxu0 0.0
    %4949 = vmatpush1.msra.mxu0 0.0
    %4950 = vmatprep.subr.mxu0 0.0
    %4951 = vmatpush1.msra.mxu0 0.0
    %4952 = vmatprep.subr.mxu0 0.0
    %4953 = vmatpush1.msra.mxu0 0.0
    %4954 = vmatprep.subr.mxu0 0.0
    %4955 = vmatpush1.msra.mxu0 0.0
    %4956 = vmatprep.subr.mxu0 0.0
    %4957 = vmatpush1.msra.mxu0 0.0
    %4958 = vmatprep.subr.mxu0 0.0
    %4959 = vmatpush1.msra.mxu0 0.0
    %4960 = vmatprep.subr.mxu0 0.0
    %4961 = vmatpush1.msra.mxu0 0.0
    %4962 = vmatprep.subr.mxu0 0.0
    %4963 = vmatpush1.msra.mxu0 0.0
    %4964 = vmatprep.mubr.f32.mxu0 0.0
    %4965 = vmatmul.mubr.f32.gmra.mrb[0].mxu0 %v4898
    %v4966 = vpop.f32.mrb[0].mxu0
    %v4967 = vadd.f32 0.0, %v4966
    %v4968 = vpop.f32.mrb[0].mxu0
    %4969 = vdwg.mxu0
    %v4971 = vrot.slane %v4967, 6
    %v4973 = vadd.f32 %v3549, %v4971
    %v4974 = vxor.u32 %v4893, 2147483648
    %v4975 = vmul.f32 %v4974, 1.442695
    %v4976 = vpow.pop %v4975
    %v4977 = vadd.f32 %v4976, 1.0
    %v4978 = vrcp.pop %v4977
    %v4979 = vmul.f32 1.0, %v4978
    %v4980 = vtanh.pop %v4893
    %v4982 = vrot.slane %v4780, 6
    %v4984 = vmul.f32 %v4979, %v4982
    %4986 = vrot.lane.b32.xlu0 %v4980, 64
    %v4987 = vpop.permute.xlu0 %4986
    %v4989 = vmul.f32 %v4979, %v4987
    %4991 = vrot.lane.b32.xlu0 %v4989, 32
    %v4992 = vpop.permute.xlu0 %4991
    %v4994 = vadd.f32 %v4984, %v4992
    %v4995 = vtanh.pop %v4994
    %4997 = vrot.lane.b32.xlu0 %v4995, 64
    %v4998 = vpop.permute.xlu0 %4997
    %v5000 = vmul.f32 %v4979, %v4998
    %v5001 = vxor.u32 %v4973, 2147483648
    %v5002 = vmul.f32 %v5001, 1.442695
    %v5003 = vpow.pop %v5002
    %v5004 = vadd.f32 %v5003, 1.0
    %v5005 = vrcp.pop %v5004
    %v5006 = vmul.f32 1.0, %v5005
    %v5007 = vtanh.pop %v4973
    %v5009 = vrot.slane %v4807, 2
    %v5011 = vmul.f32 %v5006, %v5009
    %5013 = vrot.lane.b32.xlu0 %v5007, 64
    %v5014 = vpop.permute.xlu0 %5013
    %v5016 = vmul.f32 %v5006, %v5014
    %5018 = vrot.lane.b32.xlu0 %v5016, 32
    %v5019 = vpop.permute.xlu0 %5018
    %v5021 = vadd.f32 %v5011, %v5019
    %v5022 = vtanh.pop %v5021
    %5024 = vrot.lane.b32.xlu0 %v5022, 64
    %v5025 = vpop.permute.xlu0 %5024
    %v5027 = vmul.f32 %v5006, %v5025
    %v5029 = vrot.slane %v5000, 4
    %5030 = vrot.lane.b32.xlu0 %v5029, 32
    %v5031 = vpop.permute.xlu0 %5030
    %v5032 = vsel %vm96, %v5031, 0
    %5034 = vmatprep.subr.mxu0 0.0
    %5035 = vmatpush1.msra.mxu0 %v3552
    %5036 = vmatprep.subr.mxu0 0.0
    %5037 = vmatpush1.msra.mxu0 %v3553
    %5038 = vmatprep.subr.mxu0 0.0
    %5039 = vmatpush1.msra.mxu0 %v3554
    %5040 = vmatprep.subr.mxu0 0.0
    %5041 = vmatpush1.msra.mxu0 %v3555
    %5042 = vmatprep.subr.mxu0 0.0
    %5043 = vmatpush1.msra.mxu0 0.0
    %5044 = vmatprep.subr.mxu0 0.0
    %5045 = vmatpush1.msra.mxu0 0.0
    %5046 = vmatprep.subr.mxu0 0.0
    %5047 = vmatpush1.msra.mxu0 0.0
    %5048 = vmatprep.subr.mxu0 0.0
    %5049 = vmatpush1.msra.mxu0 0.0
    %5050 = vmatprep.subr.mxu0 0.0
    %5051 = vmatpush1.msra.mxu0 0.0
    %5052 = vmatprep.subr.mxu0 0.0
    %5053 = vmatpush1.msra.mxu0 0.0
    %5054 = vmatprep.subr.mxu0 0.0
    %5055 = vmatpush1.msra.mxu0 0.0
    %5056 = vmatprep.subr.mxu0 0.0
    %5057 = vmatpush1.msra.mxu0 0.0
    %5058 = vmatprep.subr.mxu0 0.0
    %5059 = vmatpush1.msra.mxu0 0.0
    %5060 = vmatprep.subr.mxu0 0.0
    %5061 = vmatpush1.msra.mxu0 0.0
    %5062 = vmatprep.subr.mxu0 0.0
    %5063 = vmatpush1.msra.mxu0 0.0
    %5064 = vmatprep.subr.mxu0 0.0
    %5065 = vmatpush1.msra.mxu0 0.0
    %5066 = vmatprep.subr.mxu0 0.0
    %5067 = vmatpush1.msra.mxu0 0.0
    %5068 = vmatprep.subr.mxu0 0.0
    %5069 = vmatpush1.msra.mxu0 0.0
    %5070 = vmatprep.subr.mxu0 0.0
    %5071 = vmatpush1.msra.mxu0 0.0
    %5072 = vmatprep.subr.mxu0 0.0
    %5073 = vmatpush1.msra.mxu0 0.0
    %5074 = vmatprep.subr.mxu0 0.0
    %5075 = vmatpush1.msra.mxu0 0.0
    %5076 = vmatprep.subr.mxu0 0.0
    %5077 = vmatpush1.msra.mxu0 0.0
    %5078 = vmatprep.subr.mxu0 0.0
    %5079 = vmatpush1.msra.mxu0 0.0
    %5080 = vmatprep.subr.mxu0 0.0
    %5081 = vmatpush1.msra.mxu0 0.0
    %5082 = vmatprep.subr.mxu0 0.0
    %5083 = vmatpush1.msra.mxu0 0.0
    %5084 = vmatprep.subr.mxu0 0.0
    %5085 = vmatpush1.msra.mxu0 0.0
    %5086 = vmatprep.subr.mxu0 0.0
    %5087 = vmatpush1.msra.mxu0 0.0
    %5088 = vmatprep.subr.mxu0 0.0
    %5089 = vmatpush1.msra.mxu0 0.0
    %5090 = vmatprep.subr.mxu0 0.0
    %5091 = vmatpush1.msra.mxu0 0.0
    %5092 = vmatprep.subr.mxu0 0.0
    %5093 = vmatpush1.msra.mxu0 0.0
    %5094 = vmatprep.subr.mxu0 0.0
    %5095 = vmatpush1.msra.mxu0 0.0
    %5096 = vmatprep.subr.mxu0 0.0
    %5097 = vmatpush1.msra.mxu0 0.0
    %5098 = vmatprep.mubr.f32.mxu0 0.0
    %5099 = vmatmul.mubr.f32.gmra.mrb[0].mxu0 %v5032
    %v5100 = vpop.f32.mrb[0].mxu0
    %v5101 = vadd.f32 0.0, %v5100
    %v5102 = vpop.f32.mrb[0].mxu0
    %5103 = vdwg.mxu0
    %v5105 = vrot.slane %v5101, 2
    %v5107 = vadd.f32 %v3550, %v5105
    %v5109 = vrot.slane %v5027, 2
    %5110 = vrot.lane.b32.xlu0 %v5109, 32
    %v5111 = vpop.permute.xlu0 %5110
    %v5112 = vsel %vm96, %v5111, 0
    %5114 = vmatprep.subr.mxu0 0.0
    %5115 = vmatpush1.msra.mxu0 %v3556
    %5116 = vmatprep.subr.mxu0 0.0
    %5117 = vmatpush1.msra.mxu0 %v3557
    %5118 = vmatprep.subr.mxu0 0.0
    %5119 = vmatpush1.msra.mxu0 %v3558
    %5120 = vmatprep.subr.mxu0 0.0
    %5121 = vmatpush1.msra.mxu0 %v3559
    %5122 = vmatprep.subr.mxu0 0.0
    %5123 = vmatpush1.msra.mxu0 0.0
    %5124 = vmatprep.subr.mxu0 0.0
    %5125 = vmatpush1.msra.mxu0 0.0
    %5126 = vmatprep.subr.mxu0 0.0
    %5127 = vmatpush1.msra.mxu0 0.0
    %5128 = vmatprep.subr.mxu0 0.0
    %5129 = vmatpush1.msra.mxu0 0.0
    %5130 = vmatprep.subr.mxu0 0.0
    %5131 = vmatpush1.msra.mxu0 0.0
    %5132 = vmatprep.subr.mxu0 0.0
    %5133 = vmatpush1.msra.mxu0 0.0
    %5134 = vmatprep.subr.mxu0 0.0
    %5135 = vmatpush1.msra.mxu0 0.0
    %5136 = vmatprep.subr.mxu0 0.0
    %5137 = vmatpush1.msra.mxu0 0.0
    %5138 = vmatprep.subr.mxu0 0.0
    %5139 = vmatpush1.msra.mxu0 0.0
    %5140 = vmatprep.subr.mxu0 0.0
    %5141 = vmatpush1.msra.mxu0 0.0
    %5142 = vmatprep.subr.mxu0 0.0
    %5143 = vmatpush1.msra.mxu0 0.0
    %5144 = vmatprep.subr.mxu0 0.0
    %5145 = vmatpush1.msra.mxu0 0.0
    %5146 = vmatprep.subr.mxu0 0.0
    %5147 = vmatpush1.msra.mxu0 0.0
    %5148 = vmatprep.subr.mxu0 0.0
    %5149 = vmatpush1.msra.mxu0 0.0
    %5150 = vmatprep.subr.mxu0 0.0
    %5151 = vmatpush1.msra.mxu0 0.0
    %5152 = vmatprep.subr.mxu0 0.0
    %5153 = vmatpush1.msra.mxu0 0.0
    %5154 = vmatprep.subr.mxu0 0.0
    %5155 = vmatpush1.msra.mxu0 0.0
    %5156 = vmatprep.subr.mxu0 0.0
    %5157 = vmatpush1.msra.mxu0 0.0
    %5158 = vmatprep.subr.mxu0 0.0
    %5159 = vmatpush1.msra.mxu0 0.0
    %5160 = vmatprep.subr.mxu0 0.0
    %5161 = vmatpush1.msra.mxu0 0.0
    %5162 = vmatprep.subr.mxu0 0.0
    %5163 = vmatpush1.msra.mxu0 0.0
    %5164 = vmatprep.subr.mxu0 0.0
    %5165 = vmatpush1.msra.mxu0 0.0
    %5166 = vmatprep.subr.mxu0 0.0
    %5167 = vmatpush1.msra.mxu0 0.0
    %5168 = vmatprep.subr.mxu0 0.0
    %5169 = vmatpush1.msra.mxu0 0.0
    %5170 = vmatprep.subr.mxu0 0.0
    %5171 = vmatpush1.msra.mxu0 0.0
    %5172 = vmatprep.subr.mxu0 0.0
    %5173 = vmatpush1.msra.mxu0 0.0
    %5174 = vmatprep.subr.mxu0 0.0
    %5175 = vmatpush1.msra.mxu0 0.0
    %5176 = vmatprep.subr.mxu0 0.0
    %5177 = vmatpush1.msra.mxu0 0.0
    %5178 = vmatprep.mubr.f32.mxu0 0.0
    %5179 = vmatmul.mubr.f32.gmra.mrb[0].mxu0 %v5112
    %v5180 = vpop.f32.mrb[0].mxu0
    %v5181 = vadd.f32 0.0, %v5180
    %v5182 = vpop.f32.mrb[0].mxu0
    %5183 = vdwg.mxu0
    %v5184 = vadd.f32 %v3549, %v5181
    %v5185 = vxor.u32 %v5107, 2147483648
    %v5186 = vmul.f32 %v5185, 1.442695
    %v5187 = vpow.pop %v5186
    %v5188 = vadd.f32 %v5187, 1.0
    %v5189 = vrcp.pop %v5188
    %v5190 = vmul.f32 1.0, %v5189
    %v5191 = vtanh.pop %v5107
    %v5193 = vrot.slane %v4994, 6
    %v5195 = vmul.f32 %v5190, %v5193
    %5197 = vrot.lane.b32.xlu0 %v5191, 64
    %v5198 = vpop.permute.xlu0 %5197
    %v5200 = vmul.f32 %v5190, %v5198
    %5202 = vrot.lane.b32.xlu0 %v5200, 32
    %v5203 = vpop.permute.xlu0 %5202
    %v5205 = vadd.f32 %v5195, %v5203
    %v5206 = vtanh.pop %v5205
    %5208 = vrot.lane.b32.xlu0 %v5206, 64
    %v5209 = vpop.permute.xlu0 %5208
    %v5211 = vmul.f32 %v5190, %v5209
    %v5212 = vxor.u32 %v5184, 2147483648
    %v5213 = vmul.f32 %v5212, 1.442695
    %v5214 = vpow.pop %v5213
    %v5215 = vadd.f32 %v5214, 1.0
    %v5216 = vrcp.pop %v5215
    %v5217 = vmul.f32 1.0, %v5216
    %v5218 = vtanh.pop %v5184
    %v5220 = vrot.slane %v5021, 2
    %v5222 = vmul.f32 %v5217, %v5220
    %5224 = vrot.lane.b32.xlu0 %v5218, 64
    %v5225 = vpop.permute.xlu0 %5224
    %v5227 = vmul.f32 %v5217, %v5225
    %5229 = vrot.lane.b32.xlu0 %v5227, 32
    %v5230 = vpop.permute.xlu0 %5229
    %v5232 = vadd.f32 %v5222, %v5230
    %v5233 = vtanh.pop %v5232
    %5235 = vrot.lane.b32.xlu0 %v5233, 64
    %v5236 = vpop.permute.xlu0 %5235
    %v5238 = vmul.f32 %v5217, %v5236
    %v5240 = vrot.slane %v5211, 6
    %v5242 = vadd.f32 %v3728, %v5240
    %v5244 = vrot.slane %v5238, 2
    %v5246 = vadd.f32 %v3752, %v5244
    %v5247 = vld [vmem:[%s2] sm:$0x3]
    %s5248 = scalar_lea.vmem %s2, 2
    %v5249 = vld [vmem:[%s5248] sm:$0x3]
    %v5250 = vadd.f32 %v5247, %v5249
    %s5251 = scalar_lea.vmem %s2, 4
    %v5252 = vld [vmem:[%s5251] sm:$0x3]
    %v5253 = vadd.f32 %v5250, %v5252
    %s5254 = scalar_lea.vmem %s2, 6
    %v5255 = vld [vmem:[%s5254] sm:$0x3]
    %v5256 = vadd.f32 %v5253, %v5255
    %v5257 = vmul.f32 %v5256, 0.25
    %v5258 = vld [vmem:[%s18] sm:$0xff]
    %v5259 = vld [vmem:[%s18 + $0x8] sm:$0xff]
    %v5260 = vld [vmem:[%s18 + $0x10] sm:$0xff]
    %v5261 = vld [vmem:[%s18 + $0x18] sm:$0xff]
    %v5262 = vld [vmem:[%s19] sm:$0x1]
    %v5264 = vlaneseq
    %v5265 = vshrl.u32 %v5264, 7
    %v5266 = vsub.s32 0, %v5265
    %v5267 = vrot.slane %v5262, %v5266
    %v5270 = vsel %vm96, %v5257, 0
    %5272 = vmatprep.subr.mxu0 0.0
    %5273 = vmatpush1.msra.mxu0 %v5258
    %5274 = vmatprep.subr.mxu0 0.0
    %5275 = vmatpush1.msra.mxu0 %v5259
    %5276 = vmatprep.subr.mxu0 0.0
    %5277 = vmatpush1.msra.mxu0 %v5260
    %5278 = vmatprep.subr.mxu0 0.0
    %5279 = vmatpush1.msra.mxu0 %v5261
    %5280 = vmatprep.subr.mxu0 0.0
    %5281 = vmatpush1.msra.mxu0 0.0
    %5282 = vmatprep.subr.mxu0 0.0
    %5283 = vmatpush1.msra.mxu0 0.0
    %5284 = vmatprep.subr.mxu0 0.0
    %5285 = vmatpush1.msra.mxu0 0.0
    %5286 = vmatprep.subr.mxu0 0.0
    %5287 = vmatpush1.msra.mxu0 0.0
    %5288 = vmatprep.subr.mxu0 0.0
    %5289 = vmatpush1.msra.mxu0 0.0
    %5290 = vmatprep.subr.mxu0 0.0
    %5291 = vmatpush1.msra.mxu0 0.0
    %5292 = vmatprep.subr.mxu0 0.0
    %5293 = vmatpush1.msra.mxu0 0.0
    %5294 = vmatprep.subr.mxu0 0.0
    %5295 = vmatpush1.msra.mxu0 0.0
    %5296 = vmatprep.subr.mxu0 0.0
    %5297 = vmatpush1.msra.mxu0 0.0
    %5298 = vmatprep.subr.mxu0 0.0
    %5299 = vmatpush1.msra.mxu0 0.0
    %5300 = vmatprep.subr.mxu0 0.0
    %5301 = vmatpush1.msra.mxu0 0.0
    %5302 = vmatprep.subr.mxu0 0.0
    %5303 = vmatpush1.msra.mxu0 0.0
    %5304 = vmatprep.subr.mxu0 0.0
    %5305 = vmatpush1.msra.mxu0 0.0
    %5306 = vmatprep.subr.mxu0 0.0
    %5307 = vmatpush1.msra.mxu0 0.0
    %5308 = vmatprep.subr.mxu0 0.0
    %5309 = vmatpush1.msra.mxu0 0.0
    %5310 = vmatprep.subr.mxu0 0.0
    %5311 = vmatpush1.msra.mxu0 0.0
    %5312 = vmatprep.subr.mxu0 0.0
    %5313 = vmatpush1.msra.mxu0 0.0
    %5314 = vmatprep.subr.mxu0 0.0
    %5315 = vmatpush1.msra.mxu0 0.0
    %5316 = vmatprep.subr.mxu0 0.0
    %5317 = vmatpush1.msra.mxu0 0.0
    %5318 = vmatprep.subr.mxu0 0.0
    %5319 = vmatpush1.msra.mxu0 0.0
    %5320 = vmatprep.subr.mxu0 0.0
    %5321 = vmatpush1.msra.mxu0 0.0
    %5322 = vmatprep.subr.mxu0 0.0
    %5323 = vmatpush1.msra.mxu0 0.0
    %5324 = vmatprep.subr.mxu0 0.0
    %5325 = vmatpush1.msra.mxu0 0.0
    %5326 = vmatprep.subr.mxu0 0.0
    %5327 = vmatpush1.msra.mxu0 0.0
    %5328 = vmatprep.subr.mxu0 0.0
    %5329 = vmatpush1.msra.mxu0 0.0
    %5330 = vmatprep.subr.mxu0 0.0
    %5331 = vmatpush1.msra.mxu0 0.0
    %5332 = vmatprep.subr.mxu0 0.0
    %5333 = vmatpush1.msra.mxu0 0.0
    %5334 = vmatprep.subr.mxu0 0.0
    %5335 = vmatpush1.msra.mxu0 0.0
    %5336 = vmatprep.mubr.f32.mxu0 0.0
    %5337 = vmatmul.mubr.f32.gmra.mrb[0].mxu0 %v5270
    %v5338 = vpop.f32.mrb[0].mxu0
    %v5339 = vadd.f32 %v5267, %v5338
    %v5340 = vpop.f32.mrb[0].mxu0
    %5341 = vdwg.mxu0
    %v5342 = vld [vmem:[%s20] sm:$0x1]
    %v5343 = vld [vmem:[#allocation2] sm:$0x1]
    %v5345 = vlaneseq
    %v5346 = vshrl.u32 %v5345, 7
    %v5347 = vsub.s32 0, %v5346
    %v5348 = vrot.slane %v5342, %v5347
    %5349 = vrot.lane.b32.xlu0 %v5348, 96
    %v5350 = vpop.permute.xlu0 %5349
    %v5352 = vmul.f32 %v5242, %v5350
    %5354 = vrot.lane.b32.xlu0 %v5352, 32
    %v5355 = vpop.permute.xlu0 %5354
    %vm5357 = vcmask 254976
    %v5358 = vsel %vm5357, %v5355, 0.0
    %5359 = vadd.xlane.f32.xlu0 %v5358
    %v5360 = vpop.xlane.xlu0 %5359
    %v5362 = vlaneseq
    %v5363 = vshrl.u32 %v5362, 7
    %v5364 = vsub.s32 0, %v5363
    %v5365 = vrot.slane %v5343, %v5364
    %v5367 = vadd.f32 %v5360, %v5365
    %v5368 = vmul.f32 %v5246, %v5350
    %5370 = vrot.lane.b32.xlu0 %v5368, 32
    %v5371 = vpop.permute.xlu0 %5370
    %vm5373 = vcmask 261126
    %v5374 = vsel %vm5373, %v5371, 0.0
    %5375 = vadd.xlane.f32.xlu0 %v5374
    %v5376 = vpop.xlane.xlu0 %5375
    %v5377 = vadd.f32 %v5376, %v5365
    %v5379 = vrot.slane %v5377, 6
    %v5381 = vmax.f32 %v5367, %v5379
    %v5382 = vsub.f32 %v5367, %v5381
    %v5383 = vmul.f32 %v5382, 1.442695
    %v5384 = vpow.pop %v5383
    %v5386 = vrot.slane %v5381, 2
    %v5388 = vsub.f32 %v5377, %v5386
    %v5389 = vmul.f32 %v5388, 1.442695
    %v5390 = vpow.pop %v5389
    %v5392 = vrot.slane %v5390, 6
    %v5394 = vadd.f32 %v5384, %v5392
    %v5395 = vrcp.pop %v5394
    %v5396 = vmul.f32 %v5384, %v5395
    %5398 = vset.pattern.permute.xlu0 0
    %5399 = vperm.xlu0 %5398, %v5396
    %v5400 = vpop.permute.xlu0 %5399
    %v5402 = vmul.f32 %v5400, %v5242
    %v5404 = vrot.slane %v5395, 2
    %v5406 = vmul.f32 %v5390, %v5404
    %5408 = vset.pattern.permute.xlu0 0
    %5409 = vperm.xlu0 %5408, %v5406
    %v5410 = vpop.permute.xlu0 %5409
    %v5412 = vmul.f32 %v5410, %v5246
    %v5413 = vmax.f32 %v5402, 0.0
    %5415 = vrot.lane.b32.xlu0 %v5413, 32
    %v5416 = vpop.permute.xlu0 %5415
    %v5418 = vsel %vm5357, %v5416, 0.0
    %5419 = vadd.xlane.f32.xlu0 %v5418
    %v5420 = vpop.xlane.xlu0 %5419
    %v5421 = vsel %vm810, %v5420, 0.0
    %v5422 = vrot.slane %v5421, 4
    %v5423 = vadd.f32 %v5421, %v5422
    %v5424 = vrot.slane %v5423, 2
    %v5425 = vadd.f32 %v5423, %v5424
    %v5426 = vrot.slane %v5425, 1
    %v5427 = vadd.f32 %v5425, %v5426
    %v5428 = vmul.f32 %v5427, 0.015625
    %v5429 = vsub.f32 %v5413, %v5428
    %v5430 = vmul.f32 %v5429, %v5429
    %5432 = vrot.lane.b32.xlu0 %v5430, 32
    %v5433 = vpop.permute.xlu0 %5432
    %v5435 = vsel %vm5357, %v5433, 0.0
    %5436 = vadd.xlane.f32.xlu0 %v5435
    %v5437 = vpop.xlane.xlu0 %5436
    %v5438 = vsel %vm810, %v5437, 0.0
    %v5439 = vrot.slane %v5438, 4
    %v5440 = vadd.f32 %v5438, %v5439
    %v5441 = vrot.slane %v5440, 2
    %v5442 = vadd.f32 %v5440, %v5441
    %v5443 = vrot.slane %v5442, 1
    %v5444 = vadd.f32 %v5442, %v5443
    %v5445 = vmul.f32 %v5444, 0.015625
    %v5446 = vadd.f32 %v5445, 1e-05
    %v5447 = vrsqrt.pop %v5446
    %v5448 = vmul.f32 %v5429, %v5447
    %v5449 = vmax.f32 %v5412, 0.0
    %5451 = vrot.lane.b32.xlu0 %v5449, 32
    %v5452 = vpop.permute.xlu0 %5451
    %v5454 = vsel %vm5373, %v5452, 0.0
    %5455 = vadd.xlane.f32.xlu0 %v5454
    %v5456 = vpop.xlane.xlu0 %5455
    %v5458 = vrot.slane %v5456, 6
    %v5460 = vsel %vm810, %v5458, 0.0
    %v5461 = vrot.slane %v5460, 4
    %v5462 = vadd.f32 %v5460, %v5461
    %v5463 = vrot.slane %v5462, 2
    %v5464 = vadd.f32 %v5462, %v5463
    %v5465 = vrot.slane %v5464, 1
    %v5466 = vadd.f32 %v5464, %v5465
    %v5467 = vmul.f32 %v5466, 0.015625
    %v5468 = vsub.f32 %v5449, %v5467
    %v5469 = vmul.f32 %v5468, %v5468
    %5471 = vrot.lane.b32.xlu0 %v5469, 32
    %v5472 = vpop.permute.xlu0 %5471
    %v5474 = vsel %vm5373, %v5472, 0.0
    %5475 = vadd.xlane.f32.xlu0 %v5474
    %v5476 = vpop.xlane.xlu0 %5475
    %v5478 = vrot.slane %v5476, 6
    %v5480 = vsel %vm810, %v5478, 0.0
    %v5481 = vrot.slane %v5480, 4
    %v5482 = vadd.f32 %v5480, %v5481
    %v5483 = vrot.slane %v5482, 2
    %v5484 = vadd.f32 %v5482, %v5483
    %v5485 = vrot.slane %v5484, 1
    %v5486 = vadd.f32 %v5484, %v5485
    %v5487 = vmul.f32 %v5486, 0.015625
    %v5488 = vadd.f32 %v5487, 1e-05
    %v5489 = vrsqrt.pop %v5488
    %v5490 = vmul.f32 %v5468, %v5489
    %v5491 = vmax.f32 %v5339, 0.0
    %v5492 = vsel %vm5357, %v5491, 0.0
    %5493 = vadd.xlane.f32.xlu0 %v5492
    %v5494 = vpop.xlane.xlu0 %5493
    %v5495 = vsel %vm810, %v5494, 0.0
    %v5496 = vrot.slane %v5495, 4
    %v5497 = vadd.f32 %v5495, %v5496
    %v5498 = vrot.slane %v5497, 2
    %v5499 = vadd.f32 %v5497, %v5498
    %v5500 = vrot.slane %v5499, 1
    %v5501 = vadd.f32 %v5499, %v5500
    %v5502 = vmul.f32 %v5501, 0.015625
    %v5503 = vsub.f32 %v5491, %v5502
    %v5504 = vmul.f32 %v5503, %v5503
    %v5505 = vsel %vm5357, %v5504, 0.0
    %5506 = vadd.xlane.f32.xlu0 %v5505
    %v5507 = vpop.xlane.xlu0 %5506
    %v5508 = vsel %vm810, %v5507, 0.0
    %v5509 = vrot.slane %v5508, 4
    %v5510 = vadd.f32 %v5508, %v5509
    %v5511 = vrot.slane %v5510, 2
    %v5512 = vadd.f32 %v5510, %v5511
    %v5513 = vrot.slane %v5512, 1
    %v5514 = vadd.f32 %v5512, %v5513
    %v5515 = vmul.f32 %v5514, 0.015625
    %v5516 = vadd.f32 %v5515, 1e-05
    %v5517 = vrsqrt.pop %v5516
    %v5518 = vmul.f32 %v5503, %v5517
    %v5519 = vmax.f32 %v1541, 0.0
    %5521 = vrot.lane.b32.xlu0 %v5519, 32
    %v5522 = vpop.permute.xlu0 %5521
    %vm5524 = vcmask 257026
    %v5525 = vsel %vm5524, %v5522, 0.0
    %5526 = vadd.xlane.f32.xlu0 %v5525
    %v5527 = vpop.xlane.xlu0 %5526
    %v5529 = vrot.slane %v5527, 2
    %v5531 = vsel %vm810, %v5529, 0.0
    %v5532 = vrot.slane %v5531, 4
    %v5533 = vadd.f32 %v5531, %v5532
    %v5534 = vrot.slane %v5533, 2
    %v5535 = vadd.f32 %v5533, %v5534
    %v5536 = vrot.slane %v5535, 1
    %v5537 = vadd.f32 %v5535, %v5536
    %v5538 = vmul.f32 %v5537, 0.015625
    %v5539 = vsub.f32 %v5519, %v5538
    %v5540 = vmul.f32 %v5539, %v5539
    %5542 = vrot.lane.b32.xlu0 %v5540, 32
    %v5543 = vpop.permute.xlu0 %5542
    %v5545 = vsel %vm5524, %v5543, 0.0
    %5546 = vadd.xlane.f32.xlu0 %v5545
    %v5547 = vpop.xlane.xlu0 %5546
    %v5549 = vrot.slane %v5547, 2
    %v5551 = vsel %vm810, %v5549, 0.0
    %v5552 = vrot.slane %v5551, 4
    %v5553 = vadd.f32 %v5551, %v5552
    %v5554 = vrot.slane %v5553, 2
    %v5555 = vadd.f32 %v5553, %v5554
    %v5556 = vrot.slane %v5555, 1
    %v5557 = vadd.f32 %v5555, %v5556
    %v5558 = vmul.f32 %v5557, 0.015625
    %v5559 = vadd.f32 %v5558, 1e-05
    %v5560 = vrsqrt.pop %v5559
    %v5561 = vmul.f32 %v5539, %v5560
    %5563 = vrot.lane.b32.xlu0 %v5448, 32
    %v5564 = vpop.permute.xlu0 %5563
    %v5567 = vrot.slane %v5490, 6
    %5568 = vrot.lane.b32.xlu0 %v5567, 64
    %v5569 = vpop.permute.xlu0 %5568
    %5572 = vrot.lane.b32.xlu0 %v5518, 64
    %v5573 = vpop.permute.xlu0 %5572
    %v5576 = vrot.slane %v5561, 2
    %v5578 = vsel %vm96, %v5564, %v5569
    %vm5579 = vcmask 523264
    %v5580 = vsel %vm5579, %v5578, %v5573
    %vm5581 = vcmask 785408
    %v5582 = vsel %vm5581, %v5580, %v5576
    %v5583 = vld [vmem:[%s22] sm:$0xff]
    %v5584 = vld [vmem:[%s22 + $0x8] sm:$0xff]
    %v5585 = vld [vmem:[%s22 + $0x10] sm:$0xff]
    %v5586 = vld [vmem:[%s22 + $0x18] sm:$0xff]
    %v5587 = vld [vmem:[%s22 + $0x20] sm:$0xff]
    %v5588 = vld [vmem:[%s22 + $0x28] sm:$0xff]
    %v5589 = vld [vmem:[%s22 + $0x30] sm:$0xff]
    %v5590 = vld [vmem:[%s22 + $0x38] sm:$0xff]
    %v5591 = vld [vmem:[%s22 + $0x40] sm:$0xff]
    %v5592 = vld [vmem:[%s22 + $0x48] sm:$0xff]
    %v5593 = vld [vmem:[%s22 + $0x50] sm:$0xff]
    %v5594 = vld [vmem:[%s22 + $0x58] sm:$0xff]
    %v5595 = vld [vmem:[%s22 + $0x60] sm:$0xff]
    %v5596 = vld [vmem:[%s22 + $0x68] sm:$0xff]
    %v5597 = vld [vmem:[%s22 + $0x70] sm:$0xff]
    %v5598 = vld [vmem:[%s22 + $0x78] sm:$0xff]
    %v5599 = vld [vmem:[%s23] sm:$0x1]
    %v5601 = vlaneseq
    %v5602 = vshrl.u32 %v5601, 7
    %v5603 = vsub.s32 0, %v5602
    %v5604 = vrot.slane %v5599, %v5603
    %5606 = vmatprep.subr.mxu0 0.0
    %5607 = vmatpush1.msra.mxu0 %v5583
    %5608 = vmatprep.subr.mxu0 0.0
    %5609 = vmatpush1.msra.mxu0 %v5584
    %5610 = vmatprep.subr.mxu0 0.0
    %5611 = vmatpush1.msra.mxu0 %v5585
    %5612 = vmatprep.subr.mxu0 0.0
    %5613 = vmatpush1.msra.mxu0 %v5586
    %5614 = vmatprep.subr.mxu0 0.0
    %5615 = vmatpush1.msra.mxu0 %v5587
    %5616 = vmatprep.subr.mxu0 0.0
    %5617 = vmatpush1.msra.mxu0 %v5588
    %5618 = vmatprep.subr.mxu0 0.0
    %5619 = vmatpush1.msra.mxu0 %v5589
    %5620 = vmatprep.subr.mxu0 0.0
    %5621 = vmatpush1.msra.mxu0 %v5590
    %5622 = vmatprep.subr.mxu0 0.0
    %5623 = vmatpush1.msra.mxu0 %v5591
    %5624 = vmatprep.subr.mxu0 0.0
    %5625 = vmatpush1.msra.mxu0 %v5592
    %5626 = vmatprep.subr.mxu0 0.0
    %5627 = vmatpush1.msra.mxu0 %v5593
    %5628 = vmatprep.subr.mxu0 0.0
    %5629 = vmatpush1.msra.mxu0 %v5594
    %5630 = vmatprep.subr.mxu0 0.0
    %5631 = vmatpush1.msra.mxu0 %v5595
    %5632 = vmatprep.subr.mxu0 0.0
    %5633 = vmatpush1.msra.mxu0 %v5596
    %5634 = vmatprep.subr.mxu0 0.0
    %5635 = vmatpush1.msra.mxu0 %v5597
    %5636 = vmatprep.subr.mxu0 0.0
    %5637 = vmatpush1.msra.mxu0 %v5598
    %5638 = vmatprep.subr.mxu0 0.0
    %5639 = vmatpush1.msra.mxu0 0.0
    %5640 = vmatprep.subr.mxu0 0.0
    %5641 = vmatpush1.msra.mxu0 0.0
    %5642 = vmatprep.subr.mxu0 0.0
    %5643 = vmatpush1.msra.mxu0 0.0
    %5644 = vmatprep.subr.mxu0 0.0
    %5645 = vmatpush1.msra.mxu0 0.0
    %5646 = vmatprep.subr.mxu0 0.0
    %5647 = vmatpush1.msra.mxu0 0.0
    %5648 = vmatprep.subr.mxu0 0.0
    %5649 = vmatpush1.msra.mxu0 0.0
    %5650 = vmatprep.subr.mxu0 0.0
    %5651 = vmatpush1.msra.mxu0 0.0
    %5652 = vmatprep.subr.mxu0 0.0
    %5653 = vmatpush1.msra.mxu0 0.0
    %5654 = vmatprep.subr.mxu0 0.0
    %5655 = vmatpush1.msra.mxu0 0.0
    %5656 = vmatprep.subr.mxu0 0.0
    %5657 = vmatpush1.msra.mxu0 0.0
    %5658 = vmatprep.subr.mxu0 0.0
    %5659 = vmatpush1.msra.mxu0 0.0
    %5660 = vmatprep.subr.mxu0 0.0
    %5661 = vmatpush1.msra.mxu0 0.0
    %5662 = vmatprep.subr.mxu0 0.0
    %5663 = vmatpush1.msra.mxu0 0.0
    %5664 = vmatprep.subr.mxu0 0.0
    %5665 = vmatpush1.msra.mxu0 0.0
    %5666 = vmatprep.subr.mxu0 0.0
    %5667 = vmatpush1.msra.mxu0 0.0
    %5668 = vmatprep.subr.mxu0 0.0
    %5669 = vmatpush1.msra.mxu0 0.0
    %5670 = vmatprep.mubr.f32.mxu0 0.0
    %5671 = vmatmul.mubr.f32.gmra.mrb[0].mxu0 %v5582
    %v5672 = vpop.f32.mrb[0].mxu0
    %v5673 = vadd.f32 %v5604, %v5672
    %v5674 = vpop.f32.mrb[0].mxu0
    %5675 = vdwg.mxu0
    %vm5676 = vcmask 123904
    %v5677 = vsel %vm5676, %v5673, -inf
    %5678 = vmax.xlane.f32.xlu0 %v5677
    %v5679 = vpop.xlane.xlu0 %5678
    %v5680 = vsub.f32 %v5673, %v5679
    %v5681 = vmul.f32 %v5680, 1.442695
    %v5682 = vpow.pop %v5681
    %v5683 = vsel %vm5676, %v5682, 0.0
    %5684 = vadd.xlane.f32.xlu0 %v5683
    %v5685 = vpop.xlane.xlu0 %5684
    %v5686 = vrcp.pop %v5685
    %v5687 = vmul.f32 %v5682, %v5686
    %v5688 = vld [vmem:[%s24] sm:$0xff]
    %v5689 = vld [vmem:[%s24 + $0x8] sm:$0xff]
    %vm5690 = vcmask 130048
    %v5692 = vsel %vm5690, %v5687, 0
    %5694 = vmatprep.subr.mxu0 0.0
    %5695 = vmatpush1.msra.mxu0 %v5688
    %5696 = vmatprep.subr.mxu0 0.0
    %5697 = vmatpush1.msra.mxu0 %v5689
    %5698 = vmatprep.subr.mxu0 0.0
    %5699 = vmatpush1.msra.mxu0 0.0
    %5700 = vmatprep.subr.mxu0 0.0
    %5701 = vmatpush1.msra.mxu0 0.0
    %5702 = vmatprep.subr.mxu0 0.0
    %5703 = vmatpush1.msra.mxu0 0.0
    %5704 = vmatprep.subr.mxu0 0.0
    %5705 = vmatpush1.msra.mxu0 0.0
    %5706 = vmatprep.subr.mxu0 0.0
    %5707 = vmatpush1.msra.mxu0 0.0
    %5708 = vmatprep.subr.mxu0 0.0
    %5709 = vmatpush1.msra.mxu0 0.0
    %5710 = vmatprep.subr.mxu0 0.0
    %5711 = vmatpush1.msra.mxu0 0.0
    %5712 = vmatprep.subr.mxu0 0.0
    %5713 = vmatpush1.msra.mxu0 0.0
    %5714 = vmatprep.subr.mxu0 0.0
    %5715 = vmatpush1.msra.mxu0 0.0
    %5716 = vmatprep.subr.mxu0 0.0
    %5717 = vmatpush1.msra.mxu0 0.0
    %5718 = vmatprep.subr.mxu0 0.0
    %5719 = vmatpush1.msra.mxu0 0.0
    %5720 = vmatprep.subr.mxu0 0.0
    %5721 = vmatpush1.msra.mxu0 0.0
    %5722 = vmatprep.subr.mxu0 0.0
    %5723 = vmatpush1.msra.mxu0 0.0
    %5724 = vmatprep.subr.mxu0 0.0
    %5725 = vmatpush1.msra.mxu0 0.0
    %5726 = vmatprep.subr.mxu0 0.0
    %5727 = vmatpush1.msra.mxu0 0.0
    %5728 = vmatprep.subr.mxu0 0.0
    %5729 = vmatpush1.msra.mxu0 0.0
    %5730 = vmatprep.subr.mxu0 0.0
    %5731 = vmatpush1.msra.mxu0 0.0
    %5732 = vmatprep.subr.mxu0 0.0
    %5733 = vmatpush1.msra.mxu0 0.0
    %5734 = vmatprep.subr.mxu0 0.0
    %5735 = vmatpush1.msra.mxu0 0.0
    %5736 = vmatprep.subr.mxu0 0.0
    %5737 = vmatpush1.msra.mxu0 0.0
    %5738 = vmatprep.subr.mxu0 0.0
    %5739 = vmatpush1.msra.mxu0 0.0
    %5740 = vmatprep.subr.mxu0 0.0
    %5741 = vmatpush1.msra.mxu0 0.0
    %5742 = vmatprep.subr.mxu0 0.0
    %5743 = vmatpush1.msra.mxu0 0.0
    %5744 = vmatprep.subr.mxu0 0.0
    %5745 = vmatpush1.msra.mxu0 0.0
    %5746 = vmatprep.subr.mxu0 0.0
    %5747 = vmatpush1.msra.mxu0 0.0
    %5748 = vmatprep.subr.mxu0 0.0
    %5749 = vmatpush1.msra.mxu0 0.0
    %5750 = vmatprep.subr.mxu0 0.0
    %5751 = vmatpush1.msra.mxu0 0.0
    %5752 = vmatprep.subr.mxu0 0.0
    %5753 = vmatpush1.msra.mxu0 0.0
    %5754 = vmatprep.subr.mxu0 0.0
    %5755 = vmatpush1.msra.mxu0 0.0
    %5756 = vmatprep.subr.mxu0 0.0
    %5757 = vmatpush1.msra.mxu0 0.0
    %5758 = vmatprep.mubr.f32.mxu0 0.0
    %5759 = vmatmul.mubr.f32.gmra.mrb[0].mxu0 %v5692
    %v5760 = vpop.f32.mrb[0].mxu0
    %v5761 = vadd.f32 0.0, %v5760
    %v5762 = vpop.f32.mrb[0].mxu0
    %5763 = vdwg.mxu0
    %v5764 = vmax.f32 %v5761, 1e-10
    %v5765 = vmin.f32 %v5764, 1.0
    %5766 = vst.msk [vmem:[#allocation3] sm:$0x3] %vm5676, %v5765
    // Predicated region
    $region102: #{nfetc_forward.1} parent=1 // pred_check
      _
    $region103: #{nfetc_forward.1} parent=1 // pred_check_branch
      %5768 = sbr.rel (0) target = $region105
    $region104: #{nfetc_forward.1} parent=1 // pred_region
      %s5770 = ssub.s32 32, 32
      %5771 = vsyncadd [#allocation4], %s5770
      %s5773 = sshll.u32 [#allocation3], 4
      %s5774 = int_to_ptr.vmem [resolvable:$true] %s5773
      %5776 = dma.vmem_to_hbm [thread:$0]  %s5774, 32, %s25, [#allocation4]
    $region105: #{nfetc_forward.1} parent=1 // pred_fallthru
      _
    // Predicated region
    $region106: #{nfetc_forward.1} parent=1 // pred_check
      _
    $region107: #{nfetc_forward.1} parent=1 // pred_check_branch
      %5778 = sbr.rel (0) target = $region109
    $region108: #{nfetc_forward.1} parent=1 // pred_region
      %5779 = dma.done [#allocation4], 32
    $region109: #{nfetc_forward.1} parent=1 // pred_fallthru
      _
    %5780 = vsyncpa [#allocation4], 1

</llo_original>
